<compile_context>
chip_gen: v6e
topology: v6e:2x2x1
jax: 0.10.0
libtpu: 0.0.40
codegen_flags: <defaults>
</compile_context>

<pallas_src>
import functools

import jax
import jax.numpy as jnp
from jax import lax
from jax.experimental import pallas as pl
from jax.experimental.pallas import tpu as pltpu


def _resnet_block_kernel(w1_ref, b1_ref, w2_ref, b2_ref, x_ref, o_ref, xp_ref, *,
                         K, C, H, W, d1, d2, p1, p2, slope):
    """x_ref: (1, C, H, W) NCHW block.  xp_ref: (C, H+2P, W+2P) VMEM scratch (P=p1+p2).
    w*_ref: (K*K*C*C,) HWIO-flattened weights in SMEM; b*_ref: (C,) in SMEM.
    o_ref: (1, C, H, W)."""
    f32 = jnp.float32
    P = p1 + p2
    H1, W1 = H + 2 * p2, W + 2 * p2   # conv1 is evaluated on conv2's halo region

    # In-kernel zero padding: zero-fill the tiny scratch, store the interior.  The
    # padded slab never exists in HBM; the wrapper ships only the raw (H, W) input.
    xp_ref[...] = jnp.zeros_like(xp_ref)
    xp_ref[:, P:P + H, P:P + W] = x_ref[0].astype(f32)

    # Load each padded channel once; every conv tap below is a value slice of these.
    xc = [xp_ref[ci] for ci in range(C)]                          # C x (H+2P, W+2P)

    # ---- conv1 (dilation d1): shifted scalar-FMA accumulation on the VPU ----
    h = [None] * C
    for kh in range(K):
        for kw in range(K):
            for ci in range(C):
                xs = xc[ci][kh * d1:kh * d1 + H1, kw * d1:kw * d1 + W1]
                base = (kh * K + kw) * C * C + ci * C
                for co in range(C):
                    t = w1_ref[base + co] * xs
                    h[co] = t if h[co] is None else h[co] + t

    # bias + LeakyReLU(0.1), then zero the halo region: equivalent to zero-padding the
    # true (H, W) intermediate by p2 before conv2.
    rows = lax.broadcasted_iota(jnp.int32, (H1, W1), 0)
    cols = lax.broadcasted_iota(jnp.int32, (H1, W1), 1)
    interior = (rows >= p2) & (rows < p2 + H) & (cols >= p2) & (cols < p2 + W)
    for co in range(C):
        a = h[co] + b1_ref[co]
        a = jnp.where(a >= 0, a, slope * a)          # LeakyReLU(0.1)
        h[co] = jnp.where(interior, a, 0.0)

    # ---- conv2 (dilation d2) + bias + residual ----
    y = [None] * C
    for kh in range(K):
        for kw in range(K):
            for ci in range(C):
                hs = h[ci][kh * d2:kh * d2 + H, kw * d2:kw * d2 + W]
                base = (kh * K + kw) * C * C + ci * C
                for co in range(C):
                    t = w2_ref[base + co] * hs
                    y[co] = t if y[co] is None else y[co] + t

    for co in range(C):
        res = x_ref[0, co].astype(f32)               # residual straight from the input block
        o_ref[0, co] = (y[co] + b2_ref[co] + res).astype(o_ref.dtype)


def resnet_block(x_nchw, params, dilation):
    """Pallas implementation of ResnetBlock.forward (NCHW in / NCHW out)."""
    N, C, H, W = x_nchw.shape
    K = params["w1"].shape[0]
    assert K % 2 == 1, "same-padding formula (K-1)//2*dil assumes odd kernel_size"
    assert params["w1"].shape == (K, K, C, C) and params["w2"].shape == (K, K, C, C)
    d1, d2 = int(dilation[0]), int(dilation[1])
    p1 = (K - 1) // 2 * d1
    p2 = (K - 1) // 2 * d2
    P = p1 + p2

    w1 = params["w1"].reshape(-1).astype(jnp.float32)   # HWIO flattened -> SMEM scalars
    b1 = params["b1"].astype(jnp.float32)
    w2 = params["w2"].reshape(-1).astype(jnp.float32)
    b2 = params["b2"].astype(jnp.float32)

    kern = functools.partial(_resnet_block_kernel, K=K, C=C, H=H, W=W,
                             d1=d1, d2=d2, p1=p1, p2=p2, slope=0.1)
    smem = pl.BlockSpec(memory_space=pltpu.MemorySpace.SMEM)

    return pl.pallas_call(
        kern,
        out_shape=jax.ShapeDtypeStruct((N, C, H, W), x_nchw.dtype),
        grid=(N,),
        in_specs=[smem, smem, smem, smem,
                  pl.BlockSpec((1, C, H, W), lambda n: (n, 0, 0, 0))],
        out_specs=pl.BlockSpec((1, C, H, W), lambda n: (n, 0, 0, 0)),
        scratch_shapes=[pltpu.VMEM((C, H + 2 * P, W + 2 * P), jnp.float32)],
        compiler_params=pltpu.CompilerParams(
            dimension_semantics=("parallel",),
            vmem_limit_bytes=32 * 1024 * 1024),
    )(w1, b1, w2, b2, x_nchw)


def resnet_block_ref(x_nchw, params, dilation):
    """Pure-JAX reference (lax.conv_general_dilated) for correctness check."""
    def conv(z, w, b, d):
        pad = (w.shape[0] - 1) // 2 * d
        y = lax.conv_general_dilated(
            z, w, window_strides=(1, 1), padding=[(pad, pad), (pad, pad)],
            rhs_dilation=(d, d), dimension_numbers=("NCHW", "HWIO", "NCHW"))
        return y + b.reshape(1, -1, 1, 1)

    h = conv(x_nchw, params["w1"], params["b1"], dilation[0])
    h = jnp.where(h >= 0, h, 0.1 * h)
    return conv(h, params["w2"], params["b2"], dilation[1]) + x_nchw


def make_params(key, in_channels, kernel_size):
    k1, k2, k3, k4 = jax.random.split(key, 4)
    shape_w = (kernel_size, kernel_size, in_channels, in_channels)  # HWIO
    return {
        "w1": jax.random.normal(k1, shape_w, jnp.float32) * 0.1,
        "b1": jax.random.normal(k2, (in_channels,), jnp.float32) * 0.1,
        "w2": jax.random.normal(k3, shape_w, jnp.float32) * 0.1,
        "b2": jax.random.normal(k4, (in_channels,), jnp.float32) * 0.1,
    }


if __name__ == "__main__":
    # Module config: ResnetBlock(in_channels=4, kernel_size=3, dilation=(1, 2), bias=True)
    in_channels = 4
    kernel_size = 3
    dilation = (1, 2)

    key = jax.random.PRNGKey(0)
    kx, kp = jax.random.split(key)
    x = jax.random.normal(kx, (2, in_channels, 16, 16), jnp.float32)  # NCHW like PyTorch
    params = make_params(kp, in_channels, kernel_size)

    out = jax.block_until_ready(resnet_block(x, params, dilation))
    ref = jax.block_until_ready(resnet_block_ref(x, params, dilation))

    assert out.shape == x.shape and out.dtype == x.dtype
    assert jnp.allclose(out, ref, atol=1e-5, rtol=1e-5), "mismatch vs reference conv"
    print("KERNEL_OK")
</pallas_src>

<mosaic_0001>
module attributes {stable_mosaic.version = 11 : i64} {
  func.func @_resnet_block_kernel(%arg0: i32, %arg1: memref<144xf32, #tpu.memory_space<smem>>, %arg2: memref<4xf32, #tpu.memory_space<smem>>, %arg3: memref<144xf32, #tpu.memory_space<smem>>, %arg4: memref<4xf32, #tpu.memory_space<smem>>, %arg5: memref<1x4x16x16xf32, #tpu.memory_space<vmem>>, %arg6: memref<1x4x16x16xf32, #tpu.memory_space<vmem>>, %arg7: memref<4x22x22xf32, #tpu.memory_space<vmem>>) attributes {dimension_semantics = [#tpu.dimension_semantics<parallel>], iteration_bounds = array<i64: 2>, scalar_prefetch = 0 : i64, scratch_operands = 1 : i64, tpu.core_type = #tpu.core_type<tc>, window_params = [{transform_indices = @transform_0, window_bounds = array<i64: 144>}, {transform_indices = @transform_1, window_bounds = array<i64: 4>}, {transform_indices = @transform_2, window_bounds = array<i64: 144>}, {transform_indices = @transform_3, window_bounds = array<i64: 4>}, {transform_indices = @transform_4, window_bounds = array<i64: 1, 4, 16, 16>}, {transform_indices = @transform_5, window_bounds = array<i64: 1, 4, 16, 16>}]} {
    %cst = arith.constant 0.000000e+00 : f32
    %0 = vector.broadcast %cst : f32 to vector<4x22x22xf32>
    %c0 = arith.constant 0 : index
    %c0_0 = arith.constant 0 : index
    %c0_1 = arith.constant 0 : index
    %1 = vector.load %arg7[%c0, %c0_0, %c0_1] : memref<4x22x22xf32, #tpu.memory_space<vmem>>, vector<4x22x22xf32>
    tpu.vector_store %arg7[%c0, %c0_0, %c0_1], %0 {strides = array<i32>} : memref<4x22x22xf32, #tpu.memory_space<vmem>>, vector<4x22x22xf32>,
    %c0_2 = arith.constant 0 : index
    %c0_3 = arith.constant 0 : index
    %c0_4 = arith.constant 0 : index
    %c0_5 = arith.constant 0 : index
    %2 = vector.load %arg5[%c0_2, %c0_3, %c0_4, %c0_5] : memref<1x4x16x16xf32, #tpu.memory_space<vmem>>, vector<1x4x16x16xf32>
    %3 = vector.shape_cast %2 : vector<1x4x16x16xf32> to vector<4x16x16xf32>
    %c0_6 = arith.constant 0 : index
    %c3 = arith.constant 3 : index
    %c3_7 = arith.constant 3 : index
    %4 = vector.load %arg7[%c0_6, %c3, %c3_7] : memref<4x22x22xf32, #tpu.memory_space<vmem>>, vector<4x16x16xf32>
    tpu.vector_store %arg7[%c0_6, %c3, %c3_7], %3 {strides = array<i32>} : memref<4x22x22xf32, #tpu.memory_space<vmem>>, vector<4x16x16xf32>,
    %c0_8 = arith.constant 0 : index
    %c0_9 = arith.constant 0 : index
    %c0_10 = arith.constant 0 : index
    %5 = vector.load %arg7[%c0_8, %c0_9, %c0_10] : memref<4x22x22xf32, #tpu.memory_space<vmem>>, vector<1x22x22xf32>
    %6 = vector.shape_cast %5 : vector<1x22x22xf32> to vector<22x22xf32>
    %c1 = arith.constant 1 : index
    %c0_11 = arith.constant 0 : index
    %c0_12 = arith.constant 0 : index
    %7 = vector.load %arg7[%c1, %c0_11, %c0_12] : memref<4x22x22xf32, #tpu.memory_space<vmem>>, vector<1x22x22xf32>
    %8 = vector.shape_cast %7 : vector<1x22x22xf32> to vector<22x22xf32>
    %c2 = arith.constant 2 : index
    %c0_13 = arith.constant 0 : index
    %c0_14 = arith.constant 0 : index
    %9 = vector.load %arg7[%c2, %c0_13, %c0_14] : memref<4x22x22xf32, #tpu.memory_space<vmem>>, vector<1x22x22xf32>
    %10 = vector.shape_cast %9 : vector<1x22x22xf32> to vector<22x22xf32>
    %c3_15 = arith.constant 3 : index
    %c0_16 = arith.constant 0 : index
    %c0_17 = arith.constant 0 : index
    %11 = vector.load %arg7[%c3_15, %c0_16, %c0_17] : memref<4x22x22xf32, #tpu.memory_space<vmem>>, vector<1x22x22xf32>
    %12 = vector.shape_cast %11 : vector<1x22x22xf32> to vector<22x22xf32>
    %13 = vector.extract_strided_slice %6 {offsets = [0, 0], sizes = [20, 20], strides = [1, 1]} : vector<22x22xf32> to vector<20x20xf32>
    %c0_18 = arith.constant 0 : index
    %14 = memref.load %arg1[%c0_18] : memref<144xf32, #tpu.memory_space<smem>>
    %15 = vector.broadcast %14 : f32 to vector<20x20xf32>
    %16 = arith.mulf %15, %13 : vector<20x20xf32>
    %c1_19 = arith.constant 1 : index
    %17 = memref.load %arg1[%c1_19] : memref<144xf32, #tpu.memory_space<smem>>
    %18 = vector.broadcast %17 : f32 to vector<20x20xf32>
    %19 = arith.mulf %18, %13 : vector<20x20xf32>
    %c2_20 = arith.constant 2 : index
    %20 = memref.load %arg1[%c2_20] : memref<144xf32, #tpu.memory_space<smem>>
    %21 = vector.broadcast %20 : f32 to vector<20x20xf32>
    %22 = arith.mulf %21, %13 : vector<20x20xf32>
    %c3_21 = arith.constant 3 : index
    %23 = memref.load %arg1[%c3_21] : memref<144xf32, #tpu.memory_space<smem>>
    %24 = vector.broadcast %23 : f32 to vector<20x20xf32>
    %25 = arith.mulf %24, %13 : vector<20x20xf32>
    %26 = vector.extract_strided_slice %8 {offsets = [0, 0], sizes = [20, 20], strides = [1, 1]} : vector<22x22xf32> to vector<20x20xf32>
    %c4 = arith.constant 4 : index
    %27 = memref.load %arg1[%c4] : memref<144xf32, #tpu.memory_space<smem>>
    %28 = vector.broadcast %27 : f32 to vector<20x20xf32>
    %29 = arith.mulf %28, %26 : vector<20x20xf32>
    %30 = arith.addf %16, %29 : vector<20x20xf32>
    %c5 = arith.constant 5 : index
    %31 = memref.load %arg1[%c5] : memref<144xf32, #tpu.memory_space<smem>>
    %32 = vector.broadcast %31 : f32 to vector<20x20xf32>
    %33 = arith.mulf %32, %26 : vector<20x20xf32>
    %34 = arith.addf %19, %33 : vector<20x20xf32>
    %c6 = arith.constant 6 : index
    %35 = memref.load %arg1[%c6] : memref<144xf32, #tpu.memory_space<smem>>
    %36 = vector.broadcast %35 : f32 to vector<20x20xf32>
    %37 = arith.mulf %36, %26 : vector<20x20xf32>
    %38 = arith.addf %22, %37 : vector<20x20xf32>
    %c7 = arith.constant 7 : index
    %39 = memref.load %arg1[%c7] : memref<144xf32, #tpu.memory_space<smem>>
    %40 = vector.broadcast %39 : f32 to vector<20x20xf32>
    %41 = arith.mulf %40, %26 : vector<20x20xf32>
    %42 = arith.addf %25, %41 : vector<20x20xf32>
    %43 = vector.extract_strided_slice %10 {offsets = [0, 0], sizes = [20, 20], strides = [1, 1]} : vector<22x22xf32> to vector<20x20xf32>
    %c8 = arith.constant 8 : index
    %44 = memref.load %arg1[%c8] : memref<144xf32, #tpu.memory_space<smem>>
    %45 = vector.broadcast %44 : f32 to vector<20x20xf32>
    %46 = arith.mulf %45, %43 : vector<20x20xf32>
    %47 = arith.addf %30, %46 : vector<20x20xf32>
    %c9 = arith.constant 9 : index
    %48 = memref.load %arg1[%c9] : memref<144xf32, #tpu.memory_space<smem>>
    %49 = vector.broadcast %48 : f32 to vector<20x20xf32>
    %50 = arith.mulf %49, %43 : vector<20x20xf32>
    %51 = arith.addf %34, %50 : vector<20x20xf32>
    %c10 = arith.constant 10 : index
    %52 = memref.load %arg1[%c10] : memref<144xf32, #tpu.memory_space<smem>>
    %53 = vector.broadcast %52 : f32 to vector<20x20xf32>
    %54 = arith.mulf %53, %43 : vector<20x20xf32>
    %55 = arith.addf %38, %54 : vector<20x20xf32>
    %c11 = arith.constant 11 : index
    %56 = memref.load %arg1[%c11] : memref<144xf32, #tpu.memory_space<smem>>
    %57 = vector.broadcast %56 : f32 to vector<20x20xf32>
    %58 = arith.mulf %57, %43 : vector<20x20xf32>
    %59 = arith.addf %42, %58 : vector<20x20xf32>
    %60 = vector.extract_strided_slice %12 {offsets = [0, 0], sizes = [20, 20], strides = [1, 1]} : vector<22x22xf32> to vector<20x20xf32>
    %c12 = arith.constant 12 : index
    %61 = memref.load %arg1[%c12] : memref<144xf32, #tpu.memory_space<smem>>
    %62 = vector.broadcast %61 : f32 to vector<20x20xf32>
    %63 = arith.mulf %62, %60 : vector<20x20xf32>
    %64 = arith.addf %47, %63 : vector<20x20xf32>
    %c13 = arith.constant 13 : index
    %65 = memref.load %arg1[%c13] : memref<144xf32, #tpu.memory_space<smem>>
    %66 = vector.broadcast %65 : f32 to vector<20x20xf32>
    %67 = arith.mulf %66, %60 : vector<20x20xf32>
    %68 = arith.addf %51, %67 : vector<20x20xf32>
    %c14 = arith.constant 14 : index
    %69 = memref.load %arg1[%c14] : memref<144xf32, #tpu.memory_space<smem>>
    %70 = vector.broadcast %69 : f32 to vector<20x20xf32>
    %71 = arith.mulf %70, %60 : vector<20x20xf32>
    %72 = arith.addf %55, %71 : vector<20x20xf32>
    %c15 = arith.constant 15 : index
    %73 = memref.load %arg1[%c15] : memref<144xf32, #tpu.memory_space<smem>>
    %74 = vector.broadcast %73 : f32 to vector<20x20xf32>
    %75 = arith.mulf %74, %60 : vector<20x20xf32>
    %76 = arith.addf %59, %75 : vector<20x20xf32>
    %77 = vector.extract_strided_slice %6 {offsets = [0, 1], sizes = [20, 20], strides = [1, 1]} : vector<22x22xf32> to vector<20x20xf32>
    %c16 = arith.constant 16 : index
    %78 = memref.load %arg1[%c16] : memref<144xf32, #tpu.memory_space<smem>>
    %79 = vector.broadcast %78 : f32 to vector<20x20xf32>
    %80 = arith.mulf %79, %77 : vector<20x20xf32>
    %81 = arith.addf %64, %80 : vector<20x20xf32>
    %c17 = arith.constant 17 : index
    %82 = memref.load %arg1[%c17] : memref<144xf32, #tpu.memory_space<smem>>
    %83 = vector.broadcast %82 : f32 to vector<20x20xf32>
    %84 = arith.mulf %83, %77 : vector<20x20xf32>
    %85 = arith.addf %68, %84 : vector<20x20xf32>
    %c18 = arith.constant 18 : index
    %86 = memref.load %arg1[%c18] : memref<144xf32, #tpu.memory_space<smem>>
    %87 = vector.broadcast %86 : f32 to vector<20x20xf32>
    %88 = arith.mulf %87, %77 : vector<20x20xf32>
    %89 = arith.addf %72, %88 : vector<20x20xf32>
    %c19 = arith.constant 19 : index
    %90 = memref.load %arg1[%c19] : memref<144xf32, #tpu.memory_space<smem>>
    %91 = vector.broadcast %90 : f32 to vector<20x20xf32>
    %92 = arith.mulf %91, %77 : vector<20x20xf32>
    %93 = arith.addf %76, %92 : vector<20x20xf32>
    %94 = vector.extract_strided_slice %8 {offsets = [0, 1], sizes = [20, 20], strides = [1, 1]} : vector<22x22xf32> to vector<20x20xf32>
    %c20 = arith.constant 20 : index
    %95 = memref.load %arg1[%c20] : memref<144xf32, #tpu.memory_space<smem>>
    %96 = vector.broadcast %95 : f32 to vector<20x20xf32>
    %97 = arith.mulf %96, %94 : vector<20x20xf32>
    %98 = arith.addf %81, %97 : vector<20x20xf32>
    %c21 = arith.constant 21 : index
    %99 = memref.load %arg1[%c21] : memref<144xf32, #tpu.memory_space<smem>>
    %100 = vector.broadcast %99 : f32 to vector<20x20xf32>
    %101 = arith.mulf %100, %94 : vector<20x20xf32>
    %102 = arith.addf %85, %101 : vector<20x20xf32>
    %c22 = arith.constant 22 : index
    %103 = memref.load %arg1[%c22] : memref<144xf32, #tpu.memory_space<smem>>
    %104 = vector.broadcast %103 : f32 to vector<20x20xf32>
    %105 = arith.mulf %104, %94 : vector<20x20xf32>
    %106 = arith.addf %89, %105 : vector<20x20xf32>
    %c23 = arith.constant 23 : index
    %107 = memref.load %arg1[%c23] : memref<144xf32, #tpu.memory_space<smem>>
    %108 = vector.broadcast %107 : f32 to vector<20x20xf32>
    %109 = arith.mulf %108, %94 : vector<20x20xf32>
    %110 = arith.addf %93, %109 : vector<20x20xf32>
    %111 = vector.extract_strided_slice %10 {offsets = [0, 1], sizes = [20, 20], strides = [1, 1]} : vector<22x22xf32> to vector<20x20xf32>
    %c24 = arith.constant 24 : index
    %112 = memref.load %arg1[%c24] : memref<144xf32, #tpu.memory_space<smem>>
    %113 = vector.broadcast %112 : f32 to vector<20x20xf32>
    %114 = arith.mulf %113, %111 : vector<20x20xf32>
    %115 = arith.addf %98, %114 : vector<20x20xf32>
    %c25 = arith.constant 25 : index
    %116 = memref.load %arg1[%c25] : memref<144xf32, #tpu.memory_space<smem>>
    %117 = vector.broadcast %116 : f32 to vector<20x20xf32>
    %118 = arith.mulf %117, %111 : vector<20x20xf32>
    %119 = arith.addf %102, %118 : vector<20x20xf32>
    %c26 = arith.constant 26 : index
    %120 = memref.load %arg1[%c26] : memref<144xf32, #tpu.memory_space<smem>>
    %121 = vector.broadcast %120 : f32 to vector<20x20xf32>
    %122 = arith.mulf %121, %111 : vector<20x20xf32>
    %123 = arith.addf %106, %122 : vector<20x20xf32>
    %c27 = arith.constant 27 : index
    %124 = memref.load %arg1[%c27] : memref<144xf32, #tpu.memory_space<smem>>
    %125 = vector.broadcast %124 : f32 to vector<20x20xf32>
    %126 = arith.mulf %125, %111 : vector<20x20xf32>
    %127 = arith.addf %110, %126 : vector<20x20xf32>
    %128 = vector.extract_strided_slice %12 {offsets = [0, 1], sizes = [20, 20], strides = [1, 1]} : vector<22x22xf32> to vector<20x20xf32>
    %c28 = arith.constant 28 : index
    %129 = memref.load %arg1[%c28] : memref<144xf32, #tpu.memory_space<smem>>
    %130 = vector.broadcast %129 : f32 to vector<20x20xf32>
    %131 = arith.mulf %130, %128 : vector<20x20xf32>
    %132 = arith.addf %115, %131 : vector<20x20xf32>
    %c29 = arith.constant 29 : index
    %133 = memref.load %arg1[%c29] : memref<144xf32, #tpu.memory_space<smem>>
    %134 = vector.broadcast %133 : f32 to vector<20x20xf32>
    %135 = arith.mulf %134, %128 : vector<20x20xf32>
    %136 = arith.addf %119, %135 : vector<20x20xf32>
    %c30 = arith.constant 30 : index
    %137 = memref.load %arg1[%c30] : memref<144xf32, #tpu.memory_space<smem>>
    %138 = vector.broadcast %137 : f32 to vector<20x20xf32>
    %139 = arith.mulf %138, %128 : vector<20x20xf32>
    %140 = arith.addf %123, %139 : vector<20x20xf32>
    %c31 = arith.constant 31 : index
    %141 = memref.load %arg1[%c31] : memref<144xf32, #tpu.memory_space<smem>>
    %142 = vector.broadcast %141 : f32 to vector<20x20xf32>
    %143 = arith.mulf %142, %128 : vector<20x20xf32>
    %144 = arith.addf %127, %143 : vector<20x20xf32>
    %145 = vector.extract_strided_slice %6 {offsets = [0, 2], sizes = [20, 20], strides = [1, 1]} : vector<22x22xf32> to vector<20x20xf32>
    %c32 = arith.constant 32 : index
    %146 = memref.load %arg1[%c32] : memref<144xf32, #tpu.memory_space<smem>>
    %147 = vector.broadcast %146 : f32 to vector<20x20xf32>
    %148 = arith.mulf %147, %145 : vector<20x20xf32>
    %149 = arith.addf %132, %148 : vector<20x20xf32>
    %c33 = arith.constant 33 : index
    %150 = memref.load %arg1[%c33] : memref<144xf32, #tpu.memory_space<smem>>
    %151 = vector.broadcast %150 : f32 to vector<20x20xf32>
    %152 = arith.mulf %151, %145 : vector<20x20xf32>
    %153 = arith.addf %136, %152 : vector<20x20xf32>
    %c34 = arith.constant 34 : index
    %154 = memref.load %arg1[%c34] : memref<144xf32, #tpu.memory_space<smem>>
    %155 = vector.broadcast %154 : f32 to vector<20x20xf32>
    %156 = arith.mulf %155, %145 : vector<20x20xf32>
    %157 = arith.addf %140, %156 : vector<20x20xf32>
    %c35 = arith.constant 35 : index
    %158 = memref.load %arg1[%c35] : memref<144xf32, #tpu.memory_space<smem>>
    %159 = vector.broadcast %158 : f32 to vector<20x20xf32>
    %160 = arith.mulf %159, %145 : vector<20x20xf32>
    %161 = arith.addf %144, %160 : vector<20x20xf32>
    %162 = vector.extract_strided_slice %8 {offsets = [0, 2], sizes = [20, 20], strides = [1, 1]} : vector<22x22xf32> to vector<20x20xf32>
    %c36 = arith.constant 36 : index
    %163 = memref.load %arg1[%c36] : memref<144xf32, #tpu.memory_space<smem>>
    %164 = vector.broadcast %163 : f32 to vector<20x20xf32>
    %165 = arith.mulf %164, %162 : vector<20x20xf32>
    %166 = arith.addf %149, %165 : vector<20x20xf32>
    %c37 = arith.constant 37 : index
    %167 = memref.load %arg1[%c37] : memref<144xf32, #tpu.memory_space<smem>>
    %168 = vector.broadcast %167 : f32 to vector<20x20xf32>
    %169 = arith.mulf %168, %162 : vector<20x20xf32>
    %170 = arith.addf %153, %169 : vector<20x20xf32>
    %c38 = arith.constant 38 : index
    %171 = memref.load %arg1[%c38] : memref<144xf32, #tpu.memory_space<smem>>
    %172 = vector.broadcast %171 : f32 to vector<20x20xf32>
    %173 = arith.mulf %172, %162 : vector<20x20xf32>
    %174 = arith.addf %157, %173 : vector<20x20xf32>
    %c39 = arith.constant 39 : index
    %175 = memref.load %arg1[%c39] : memref<144xf32, #tpu.memory_space<smem>>
    %176 = vector.broadcast %175 : f32 to vector<20x20xf32>
    %177 = arith.mulf %176, %162 : vector<20x20xf32>
    %178 = arith.addf %161, %177 : vector<20x20xf32>
    %179 = vector.extract_strided_slice %10 {offsets = [0, 2], sizes = [20, 20], strides = [1, 1]} : vector<22x22xf32> to vector<20x20xf32>
    %c40 = arith.constant 40 : index
    %180 = memref.load %arg1[%c40] : memref<144xf32, #tpu.memory_space<smem>>
    %181 = vector.broadcast %180 : f32 to vector<20x20xf32>
    %182 = arith.mulf %181, %179 : vector<20x20xf32>
    %183 = arith.addf %166, %182 : vector<20x20xf32>
    %c41 = arith.constant 41 : index
    %184 = memref.load %arg1[%c41] : memref<144xf32, #tpu.memory_space<smem>>
    %185 = vector.broadcast %184 : f32 to vector<20x20xf32>
    %186 = arith.mulf %185, %179 : vector<20x20xf32>
    %187 = arith.addf %170, %186 : vector<20x20xf32>
    %c42 = arith.constant 42 : index
    %188 = memref.load %arg1[%c42] : memref<144xf32, #tpu.memory_space<smem>>
    %189 = vector.broadcast %188 : f32 to vector<20x20xf32>
    %190 = arith.mulf %189, %179 : vector<20x20xf32>
    %191 = arith.addf %174, %190 : vector<20x20xf32>
    %c43 = arith.constant 43 : index
    %192 = memref.load %arg1[%c43] : memref<144xf32, #tpu.memory_space<smem>>
    %193 = vector.broadcast %192 : f32 to vector<20x20xf32>
    %194 = arith.mulf %193, %179 : vector<20x20xf32>
    %195 = arith.addf %178, %194 : vector<20x20xf32>
    %196 = vector.extract_strided_slice %12 {offsets = [0, 2], sizes = [20, 20], strides = [1, 1]} : vector<22x22xf32> to vector<20x20xf32>
    %c44 = arith.constant 44 : index
    %197 = memref.load %arg1[%c44] : memref<144xf32, #tpu.memory_space<smem>>
    %198 = vector.broadcast %197 : f32 to vector<20x20xf32>
    %199 = arith.mulf %198, %196 : vector<20x20xf32>
    %200 = arith.addf %183, %199 : vector<20x20xf32>
    %c45 = arith.constant 45 : index
    %201 = memref.load %arg1[%c45] : memref<144xf32, #tpu.memory_space<smem>>
    %202 = vector.broadcast %201 : f32 to vector<20x20xf32>
    %203 = arith.mulf %202, %196 : vector<20x20xf32>
    %204 = arith.addf %187, %203 : vector<20x20xf32>
    %c46 = arith.constant 46 : index
    %205 = memref.load %arg1[%c46] : memref<144xf32, #tpu.memory_space<smem>>
    %206 = vector.broadcast %205 : f32 to vector<20x20xf32>
    %207 = arith.mulf %206, %196 : vector<20x20xf32>
    %208 = arith.addf %191, %207 : vector<20x20xf32>
    %c47 = arith.constant 47 : index
    %209 = memref.load %arg1[%c47] : memref<144xf32, #tpu.memory_space<smem>>
    %210 = vector.broadcast %209 : f32 to vector<20x20xf32>
    %211 = arith.mulf %210, %196 : vector<20x20xf32>
    %212 = arith.addf %195, %211 : vector<20x20xf32>
    %213 = vector.extract_strided_slice %6 {offsets = [1, 0], sizes = [20, 20], strides = [1, 1]} : vector<22x22xf32> to vector<20x20xf32>
    %c48 = arith.constant 48 : index
    %214 = memref.load %arg1[%c48] : memref<144xf32, #tpu.memory_space<smem>>
    %215 = vector.broadcast %214 : f32 to vector<20x20xf32>
    %216 = arith.mulf %215, %213 : vector<20x20xf32>
    %217 = arith.addf %200, %216 : vector<20x20xf32>
    %c49 = arith.constant 49 : index
    %218 = memref.load %arg1[%c49] : memref<144xf32, #tpu.memory_space<smem>>
    %219 = vector.broadcast %218 : f32 to vector<20x20xf32>
    %220 = arith.mulf %219, %213 : vector<20x20xf32>
    %221 = arith.addf %204, %220 : vector<20x20xf32>
    %c50 = arith.constant 50 : index
    %222 = memref.load %arg1[%c50] : memref<144xf32, #tpu.memory_space<smem>>
    %223 = vector.broadcast %222 : f32 to vector<20x20xf32>
    %224 = arith.mulf %223, %213 : vector<20x20xf32>
    %225 = arith.addf %208, %224 : vector<20x20xf32>
    %c51 = arith.constant 51 : index
    %226 = memref.load %arg1[%c51] : memref<144xf32, #tpu.memory_space<smem>>
    %227 = vector.broadcast %226 : f32 to vector<20x20xf32>
    %228 = arith.mulf %227, %213 : vector<20x20xf32>
    %229 = arith.addf %212, %228 : vector<20x20xf32>
    %230 = vector.extract_strided_slice %8 {offsets = [1, 0], sizes = [20, 20], strides = [1, 1]} : vector<22x22xf32> to vector<20x20xf32>
    %c52 = arith.constant 52 : index
    %231 = memref.load %arg1[%c52] : memref<144xf32, #tpu.memory_space<smem>>
    %232 = vector.broadcast %231 : f32 to vector<20x20xf32>
    %233 = arith.mulf %232, %230 : vector<20x20xf32>
    %234 = arith.addf %217, %233 : vector<20x20xf32>
    %c53 = arith.constant 53 : index
    %235 = memref.load %arg1[%c53] : memref<144xf32, #tpu.memory_space<smem>>
    %236 = vector.broadcast %235 : f32 to vector<20x20xf32>
    %237 = arith.mulf %236, %230 : vector<20x20xf32>
    %238 = arith.addf %221, %237 : vector<20x20xf32>
    %c54 = arith.constant 54 : index
    %239 = memref.load %arg1[%c54] : memref<144xf32, #tpu.memory_space<smem>>
    %240 = vector.broadcast %239 : f32 to vector<20x20xf32>
    %241 = arith.mulf %240, %230 : vector<20x20xf32>
    %242 = arith.addf %225, %241 : vector<20x20xf32>
    %c55 = arith.constant 55 : index
    %243 = memref.load %arg1[%c55] : memref<144xf32, #tpu.memory_space<smem>>
    %244 = vector.broadcast %243 : f32 to vector<20x20xf32>
    %245 = arith.mulf %244, %230 : vector<20x20xf32>
    %246 = arith.addf %229, %245 : vector<20x20xf32>
    %247 = vector.extract_strided_slice %10 {offsets = [1, 0], sizes = [20, 20], strides = [1, 1]} : vector<22x22xf32> to vector<20x20xf32>
    %c56 = arith.constant 56 : index
    %248 = memref.load %arg1[%c56] : memref<144xf32, #tpu.memory_space<smem>>
    %249 = vector.broadcast %248 : f32 to vector<20x20xf32>
    %250 = arith.mulf %249, %247 : vector<20x20xf32>
    %251 = arith.addf %234, %250 : vector<20x20xf32>
    %c57 = arith.constant 57 : index
    %252 = memref.load %arg1[%c57] : memref<144xf32, #tpu.memory_space<smem>>
    %253 = vector.broadcast %252 : f32 to vector<20x20xf32>
    %254 = arith.mulf %253, %247 : vector<20x20xf32>
    %255 = arith.addf %238, %254 : vector<20x20xf32>
    %c58 = arith.constant 58 : index
    %256 = memref.load %arg1[%c58] : memref<144xf32, #tpu.memory_space<smem>>
    %257 = vector.broadcast %256 : f32 to vector<20x20xf32>
    %258 = arith.mulf %257, %247 : vector<20x20xf32>
    %259 = arith.addf %242, %258 : vector<20x20xf32>
    %c59 = arith.constant 59 : index
    %260 = memref.load %arg1[%c59] : memref<144xf32, #tpu.memory_space<smem>>
    %261 = vector.broadcast %260 : f32 to vector<20x20xf32>
    %262 = arith.mulf %261, %247 : vector<20x20xf32>
    %263 = arith.addf %246, %262 : vector<20x20xf32>
    %264 = vector.extract_strided_slice %12 {offsets = [1, 0], sizes = [20, 20], strides = [1, 1]} : vector<22x22xf32> to vector<20x20xf32>
    %c60 = arith.constant 60 : index
    %265 = memref.load %arg1[%c60] : memref<144xf32, #tpu.memory_space<smem>>
    %266 = vector.broadcast %265 : f32 to vector<20x20xf32>
    %267 = arith.mulf %266, %264 : vector<20x20xf32>
    %268 = arith.addf %251, %267 : vector<20x20xf32>
    %c61 = arith.constant 61 : index
    %269 = memref.load %arg1[%c61] : memref<144xf32, #tpu.memory_space<smem>>
    %270 = vector.broadcast %269 : f32 to vector<20x20xf32>
    %271 = arith.mulf %270, %264 : vector<20x20xf32>
    %272 = arith.addf %255, %271 : vector<20x20xf32>
    %c62 = arith.constant 62 : index
    %273 = memref.load %arg1[%c62] : memref<144xf32, #tpu.memory_space<smem>>
    %274 = vector.broadcast %273 : f32 to vector<20x20xf32>
    %275 = arith.mulf %274, %264 : vector<20x20xf32>
    %276 = arith.addf %259, %275 : vector<20x20xf32>
    %c63 = arith.constant 63 : index
    %277 = memref.load %arg1[%c63] : memref<144xf32, #tpu.memory_space<smem>>
    %278 = vector.broadcast %277 : f32 to vector<20x20xf32>
    %279 = arith.mulf %278, %264 : vector<20x20xf32>
    %280 = arith.addf %263, %279 : vector<20x20xf32>
    %281 = vector.extract_strided_slice %6 {offsets = [1, 1], sizes = [20, 20], strides = [1, 1]} : vector<22x22xf32> to vector<20x20xf32>
    %c64 = arith.constant 64 : index
    %282 = memref.load %arg1[%c64] : memref<144xf32, #tpu.memory_space<smem>>
    %283 = vector.broadcast %282 : f32 to vector<20x20xf32>
    %284 = arith.mulf %283, %281 : vector<20x20xf32>
    %285 = arith.addf %268, %284 : vector<20x20xf32>
    %c65 = arith.constant 65 : index
    %286 = memref.load %arg1[%c65] : memref<144xf32, #tpu.memory_space<smem>>
    %287 = vector.broadcast %286 : f32 to vector<20x20xf32>
    %288 = arith.mulf %287, %281 : vector<20x20xf32>
    %289 = arith.addf %272, %288 : vector<20x20xf32>
    %c66 = arith.constant 66 : index
    %290 = memref.load %arg1[%c66] : memref<144xf32, #tpu.memory_space<smem>>
    %291 = vector.broadcast %290 : f32 to vector<20x20xf32>
    %292 = arith.mulf %291, %281 : vector<20x20xf32>
    %293 = arith.addf %276, %292 : vector<20x20xf32>
    %c67 = arith.constant 67 : index
    %294 = memref.load %arg1[%c67] : memref<144xf32, #tpu.memory_space<smem>>
    %295 = vector.broadcast %294 : f32 to vector<20x20xf32>
    %296 = arith.mulf %295, %281 : vector<20x20xf32>
    %297 = arith.addf %280, %296 : vector<20x20xf32>
    %298 = vector.extract_strided_slice %8 {offsets = [1, 1], sizes = [20, 20], strides = [1, 1]} : vector<22x22xf32> to vector<20x20xf32>
    %c68 = arith.constant 68 : index
    %299 = memref.load %arg1[%c68] : memref<144xf32, #tpu.memory_space<smem>>
    %300 = vector.broadcast %299 : f32 to vector<20x20xf32>
    %301 = arith.mulf %300, %298 : vector<20x20xf32>
    %302 = arith.addf %285, %301 : vector<20x20xf32>
    %c69 = arith.constant 69 : index
    %303 = memref.load %arg1[%c69] : memref<144xf32, #tpu.memory_space<smem>>
    %304 = vector.broadcast %303 : f32 to vector<20x20xf32>
    %305 = arith.mulf %304, %298 : vector<20x20xf32>
    %306 = arith.addf %289, %305 : vector<20x20xf32>
    %c70 = arith.constant 70 : index
    %307 = memref.load %arg1[%c70] : memref<144xf32, #tpu.memory_space<smem>>
    %308 = vector.broadcast %307 : f32 to vector<20x20xf32>
    %309 = arith.mulf %308, %298 : vector<20x20xf32>
    %310 = arith.addf %293, %309 : vector<20x20xf32>
    %c71 = arith.constant 71 : index
    %311 = memref.load %arg1[%c71] : memref<144xf32, #tpu.memory_space<smem>>
    %312 = vector.broadcast %311 : f32 to vector<20x20xf32>
    %313 = arith.mulf %312, %298 : vector<20x20xf32>
    %314 = arith.addf %297, %313 : vector<20x20xf32>
    %315 = vector.extract_strided_slice %10 {offsets = [1, 1], sizes = [20, 20], strides = [1, 1]} : vector<22x22xf32> to vector<20x20xf32>
    %c72 = arith.constant 72 : index
    %316 = memref.load %arg1[%c72] : memref<144xf32, #tpu.memory_space<smem>>
    %317 = vector.broadcast %316 : f32 to vector<20x20xf32>
    %318 = arith.mulf %317, %315 : vector<20x20xf32>
    %319 = arith.addf %302, %318 : vector<20x20xf32>
    %c73 = arith.constant 73 : index
    %320 = memref.load %arg1[%c73] : memref<144xf32, #tpu.memory_space<smem>>
    %321 = vector.broadcast %320 : f32 to vector<20x20xf32>
    %322 = arith.mulf %321, %315 : vector<20x20xf32>
    %323 = arith.addf %306, %322 : vector<20x20xf32>
    %c74 = arith.constant 74 : index
    %324 = memref.load %arg1[%c74] : memref<144xf32, #tpu.memory_space<smem>>
    %325 = vector.broadcast %324 : f32 to vector<20x20xf32>
    %326 = arith.mulf %325, %315 : vector<20x20xf32>
    %327 = arith.addf %310, %326 : vector<20x20xf32>
    %c75 = arith.constant 75 : index
    %328 = memref.load %arg1[%c75] : memref<144xf32, #tpu.memory_space<smem>>
    %329 = vector.broadcast %328 : f32 to vector<20x20xf32>
    %330 = arith.mulf %329, %315 : vector<20x20xf32>
    %331 = arith.addf %314, %330 : vector<20x20xf32>
    %332 = vector.extract_strided_slice %12 {offsets = [1, 1], sizes = [20, 20], strides = [1, 1]} : vector<22x22xf32> to vector<20x20xf32>
    %c76 = arith.constant 76 : index
    %333 = memref.load %arg1[%c76] : memref<144xf32, #tpu.memory_space<smem>>
    %334 = vector.broadcast %333 : f32 to vector<20x20xf32>
    %335 = arith.mulf %334, %332 : vector<20x20xf32>
    %336 = arith.addf %319, %335 : vector<20x20xf32>
    %c77 = arith.constant 77 : index
    %337 = memref.load %arg1[%c77] : memref<144xf32, #tpu.memory_space<smem>>
    %338 = vector.broadcast %337 : f32 to vector<20x20xf32>
    %339 = arith.mulf %338, %332 : vector<20x20xf32>
    %340 = arith.addf %323, %339 : vector<20x20xf32>
    %c78 = arith.constant 78 : index
    %341 = memref.load %arg1[%c78] : memref<144xf32, #tpu.memory_space<smem>>
    %342 = vector.broadcast %341 : f32 to vector<20x20xf32>
    %343 = arith.mulf %342, %332 : vector<20x20xf32>
    %344 = arith.addf %327, %343 : vector<20x20xf32>
    %c79 = arith.constant 79 : index
    %345 = memref.load %arg1[%c79] : memref<144xf32, #tpu.memory_space<smem>>
    %346 = vector.broadcast %345 : f32 to vector<20x20xf32>
    %347 = arith.mulf %346, %332 : vector<20x20xf32>
    %348 = arith.addf %331, %347 : vector<20x20xf32>
    %349 = vector.extract_strided_slice %6 {offsets = [1, 2], sizes = [20, 20], strides = [1, 1]} : vector<22x22xf32> to vector<20x20xf32>
    %c80 = arith.constant 80 : index
    %350 = memref.load %arg1[%c80] : memref<144xf32, #tpu.memory_space<smem>>
    %351 = vector.broadcast %350 : f32 to vector<20x20xf32>
    %352 = arith.mulf %351, %349 : vector<20x20xf32>
    %353 = arith.addf %336, %352 : vector<20x20xf32>
    %c81 = arith.constant 81 : index
    %354 = memref.load %arg1[%c81] : memref<144xf32, #tpu.memory_space<smem>>
    %355 = vector.broadcast %354 : f32 to vector<20x20xf32>
    %356 = arith.mulf %355, %349 : vector<20x20xf32>
    %357 = arith.addf %340, %356 : vector<20x20xf32>
    %c82 = arith.constant 82 : index
    %358 = memref.load %arg1[%c82] : memref<144xf32, #tpu.memory_space<smem>>
    %359 = vector.broadcast %358 : f32 to vector<20x20xf32>
    %360 = arith.mulf %359, %349 : vector<20x20xf32>
    %361 = arith.addf %344, %360 : vector<20x20xf32>
    %c83 = arith.constant 83 : index
    %362 = memref.load %arg1[%c83] : memref<144xf32, #tpu.memory_space<smem>>
    %363 = vector.broadcast %362 : f32 to vector<20x20xf32>
    %364 = arith.mulf %363, %349 : vector<20x20xf32>
    %365 = arith.addf %348, %364 : vector<20x20xf32>
    %366 = vector.extract_strided_slice %8 {offsets = [1, 2], sizes = [20, 20], strides = [1, 1]} : vector<22x22xf32> to vector<20x20xf32>
    %c84 = arith.constant 84 : index
    %367 = memref.load %arg1[%c84] : memref<144xf32, #tpu.memory_space<smem>>
    %368 = vector.broadcast %367 : f32 to vector<20x20xf32>
    %369 = arith.mulf %368, %366 : vector<20x20xf32>
    %370 = arith.addf %353, %369 : vector<20x20xf32>
    %c85 = arith.constant 85 : index
    %371 = memref.load %arg1[%c85] : memref<144xf32, #tpu.memory_space<smem>>
    %372 = vector.broadcast %371 : f32 to vector<20x20xf32>
    %373 = arith.mulf %372, %366 : vector<20x20xf32>
    %374 = arith.addf %357, %373 : vector<20x20xf32>
    %c86 = arith.constant 86 : index
    %375 = memref.load %arg1[%c86] : memref<144xf32, #tpu.memory_space<smem>>
    %376 = vector.broadcast %375 : f32 to vector<20x20xf32>
    %377 = arith.mulf %376, %366 : vector<20x20xf32>
    %378 = arith.addf %361, %377 : vector<20x20xf32>
    %c87 = arith.constant 87 : index
    %379 = memref.load %arg1[%c87] : memref<144xf32, #tpu.memory_space<smem>>
    %380 = vector.broadcast %379 : f32 to vector<20x20xf32>
    %381 = arith.mulf %380, %366 : vector<20x20xf32>
    %382 = arith.addf %365, %381 : vector<20x20xf32>
    %383 = vector.extract_strided_slice %10 {offsets = [1, 2], sizes = [20, 20], strides = [1, 1]} : vector<22x22xf32> to vector<20x20xf32>
    %c88 = arith.constant 88 : index
    %384 = memref.load %arg1[%c88] : memref<144xf32, #tpu.memory_space<smem>>
    %385 = vector.broadcast %384 : f32 to vector<20x20xf32>
    %386 = arith.mulf %385, %383 : vector<20x20xf32>
    %387 = arith.addf %370, %386 : vector<20x20xf32>
    %c89 = arith.constant 89 : index
    %388 = memref.load %arg1[%c89] : memref<144xf32, #tpu.memory_space<smem>>
    %389 = vector.broadcast %388 : f32 to vector<20x20xf32>
    %390 = arith.mulf %389, %383 : vector<20x20xf32>
    %391 = arith.addf %374, %390 : vector<20x20xf32>
    %c90 = arith.constant 90 : index
    %392 = memref.load %arg1[%c90] : memref<144xf32, #tpu.memory_space<smem>>
    %393 = vector.broadcast %392 : f32 to vector<20x20xf32>
    %394 = arith.mulf %393, %383 : vector<20x20xf32>
    %395 = arith.addf %378, %394 : vector<20x20xf32>
    %c91 = arith.constant 91 : index
    %396 = memref.load %arg1[%c91] : memref<144xf32, #tpu.memory_space<smem>>
    %397 = vector.broadcast %396 : f32 to vector<20x20xf32>
    %398 = arith.mulf %397, %383 : vector<20x20xf32>
    %399 = arith.addf %382, %398 : vector<20x20xf32>
    %400 = vector.extract_strided_slice %12 {offsets = [1, 2], sizes = [20, 20], strides = [1, 1]} : vector<22x22xf32> to vector<20x20xf32>
    %c92 = arith.constant 92 : index
    %401 = memref.load %arg1[%c92] : memref<144xf32, #tpu.memory_space<smem>>
    %402 = vector.broadcast %401 : f32 to vector<20x20xf32>
    %403 = arith.mulf %402, %400 : vector<20x20xf32>
    %404 = arith.addf %387, %403 : vector<20x20xf32>
    %c93 = arith.constant 93 : index
    %405 = memref.load %arg1[%c93] : memref<144xf32, #tpu.memory_space<smem>>
    %406 = vector.broadcast %405 : f32 to vector<20x20xf32>
    %407 = arith.mulf %406, %400 : vector<20x20xf32>
    %408 = arith.addf %391, %407 : vector<20x20xf32>
    %c94 = arith.constant 94 : index
    %409 = memref.load %arg1[%c94] : memref<144xf32, #tpu.memory_space<smem>>
    %410 = vector.broadcast %409 : f32 to vector<20x20xf32>
    %411 = arith.mulf %410, %400 : vector<20x20xf32>
    %412 = arith.addf %395, %411 : vector<20x20xf32>
    %c95 = arith.constant 95 : index
    %413 = memref.load %arg1[%c95] : memref<144xf32, #tpu.memory_space<smem>>
    %414 = vector.broadcast %413 : f32 to vector<20x20xf32>
    %415 = arith.mulf %414, %400 : vector<20x20xf32>
    %416 = arith.addf %399, %415 : vector<20x20xf32>
    %417 = vector.extract_strided_slice %6 {offsets = [2, 0], sizes = [20, 20], strides = [1, 1]} : vector<22x22xf32> to vector<20x20xf32>
    %c96 = arith.constant 96 : index
    %418 = memref.load %arg1[%c96] : memref<144xf32, #tpu.memory_space<smem>>
    %419 = vector.broadcast %418 : f32 to vector<20x20xf32>
    %420 = arith.mulf %419, %417 : vector<20x20xf32>
    %421 = arith.addf %404, %420 : vector<20x20xf32>
    %c97 = arith.constant 97 : index
    %422 = memref.load %arg1[%c97] : memref<144xf32, #tpu.memory_space<smem>>
    %423 = vector.broadcast %422 : f32 to vector<20x20xf32>
    %424 = arith.mulf %423, %417 : vector<20x20xf32>
    %425 = arith.addf %408, %424 : vector<20x20xf32>
    %c98 = arith.constant 98 : index
    %426 = memref.load %arg1[%c98] : memref<144xf32, #tpu.memory_space<smem>>
    %427 = vector.broadcast %426 : f32 to vector<20x20xf32>
    %428 = arith.mulf %427, %417 : vector<20x20xf32>
    %429 = arith.addf %412, %428 : vector<20x20xf32>
    %c99 = arith.constant 99 : index
    %430 = memref.load %arg1[%c99] : memref<144xf32, #tpu.memory_space<smem>>
    %431 = vector.broadcast %430 : f32 to vector<20x20xf32>
    %432 = arith.mulf %431, %417 : vector<20x20xf32>
    %433 = arith.addf %416, %432 : vector<20x20xf32>
    %434 = vector.extract_strided_slice %8 {offsets = [2, 0], sizes = [20, 20], strides = [1, 1]} : vector<22x22xf32> to vector<20x20xf32>
    %c100 = arith.constant 100 : index
    %435 = memref.load %arg1[%c100] : memref<144xf32, #tpu.memory_space<smem>>
    %436 = vector.broadcast %435 : f32 to vector<20x20xf32>
    %437 = arith.mulf %436, %434 : vector<20x20xf32>
    %438 = arith.addf %421, %437 : vector<20x20xf32>
    %c101 = arith.constant 101 : index
    %439 = memref.load %arg1[%c101] : memref<144xf32, #tpu.memory_space<smem>>
    %440 = vector.broadcast %439 : f32 to vector<20x20xf32>
    %441 = arith.mulf %440, %434 : vector<20x20xf32>
    %442 = arith.addf %425, %441 : vector<20x20xf32>
    %c102 = arith.constant 102 : index
    %443 = memref.load %arg1[%c102] : memref<144xf32, #tpu.memory_space<smem>>
    %444 = vector.broadcast %443 : f32 to vector<20x20xf32>
    %445 = arith.mulf %444, %434 : vector<20x20xf32>
    %446 = arith.addf %429, %445 : vector<20x20xf32>
    %c103 = arith.constant 103 : index
    %447 = memref.load %arg1[%c103] : memref<144xf32, #tpu.memory_space<smem>>
    %448 = vector.broadcast %447 : f32 to vector<20x20xf32>
    %449 = arith.mulf %448, %434 : vector<20x20xf32>
    %450 = arith.addf %433, %449 : vector<20x20xf32>
    %451 = vector.extract_strided_slice %10 {offsets = [2, 0], sizes = [20, 20], strides = [1, 1]} : vector<22x22xf32> to vector<20x20xf32>
    %c104 = arith.constant 104 : index
    %452 = memref.load %arg1[%c104] : memref<144xf32, #tpu.memory_space<smem>>
    %453 = vector.broadcast %452 : f32 to vector<20x20xf32>
    %454 = arith.mulf %453, %451 : vector<20x20xf32>
    %455 = arith.addf %438, %454 : vector<20x20xf32>
    %c105 = arith.constant 105 : index
    %456 = memref.load %arg1[%c105] : memref<144xf32, #tpu.memory_space<smem>>
    %457 = vector.broadcast %456 : f32 to vector<20x20xf32>
    %458 = arith.mulf %457, %451 : vector<20x20xf32>
    %459 = arith.addf %442, %458 : vector<20x20xf32>
    %c106 = arith.constant 106 : index
    %460 = memref.load %arg1[%c106] : memref<144xf32, #tpu.memory_space<smem>>
    %461 = vector.broadcast %460 : f32 to vector<20x20xf32>
    %462 = arith.mulf %461, %451 : vector<20x20xf32>
    %463 = arith.addf %446, %462 : vector<20x20xf32>
    %c107 = arith.constant 107 : index
    %464 = memref.load %arg1[%c107] : memref<144xf32, #tpu.memory_space<smem>>
    %465 = vector.broadcast %464 : f32 to vector<20x20xf32>
    %466 = arith.mulf %465, %451 : vector<20x20xf32>
    %467 = arith.addf %450, %466 : vector<20x20xf32>
    %468 = vector.extract_strided_slice %12 {offsets = [2, 0], sizes = [20, 20], strides = [1, 1]} : vector<22x22xf32> to vector<20x20xf32>
    %c108 = arith.constant 108 : index
    %469 = memref.load %arg1[%c108] : memref<144xf32, #tpu.memory_space<smem>>
    %470 = vector.broadcast %469 : f32 to vector<20x20xf32>
    %471 = arith.mulf %470, %468 : vector<20x20xf32>
    %472 = arith.addf %455, %471 : vector<20x20xf32>
    %c109 = arith.constant 109 : index
    %473 = memref.load %arg1[%c109] : memref<144xf32, #tpu.memory_space<smem>>
    %474 = vector.broadcast %473 : f32 to vector<20x20xf32>
    %475 = arith.mulf %474, %468 : vector<20x20xf32>
    %476 = arith.addf %459, %475 : vector<20x20xf32>
    %c110 = arith.constant 110 : index
    %477 = memref.load %arg1[%c110] : memref<144xf32, #tpu.memory_space<smem>>
    %478 = vector.broadcast %477 : f32 to vector<20x20xf32>
    %479 = arith.mulf %478, %468 : vector<20x20xf32>
    %480 = arith.addf %463, %479 : vector<20x20xf32>
    %c111 = arith.constant 111 : index
    %481 = memref.load %arg1[%c111] : memref<144xf32, #tpu.memory_space<smem>>
    %482 = vector.broadcast %481 : f32 to vector<20x20xf32>
    %483 = arith.mulf %482, %468 : vector<20x20xf32>
    %484 = arith.addf %467, %483 : vector<20x20xf32>
    %485 = vector.extract_strided_slice %6 {offsets = [2, 1], sizes = [20, 20], strides = [1, 1]} : vector<22x22xf32> to vector<20x20xf32>
    %c112 = arith.constant 112 : index
    %486 = memref.load %arg1[%c112] : memref<144xf32, #tpu.memory_space<smem>>
    %487 = vector.broadcast %486 : f32 to vector<20x20xf32>
    %488 = arith.mulf %487, %485 : vector<20x20xf32>
    %489 = arith.addf %472, %488 : vector<20x20xf32>
    %c113 = arith.constant 113 : index
    %490 = memref.load %arg1[%c113] : memref<144xf32, #tpu.memory_space<smem>>
    %491 = vector.broadcast %490 : f32 to vector<20x20xf32>
    %492 = arith.mulf %491, %485 : vector<20x20xf32>
    %493 = arith.addf %476, %492 : vector<20x20xf32>
    %c114 = arith.constant 114 : index
    %494 = memref.load %arg1[%c114] : memref<144xf32, #tpu.memory_space<smem>>
    %495 = vector.broadcast %494 : f32 to vector<20x20xf32>
    %496 = arith.mulf %495, %485 : vector<20x20xf32>
    %497 = arith.addf %480, %496 : vector<20x20xf32>
    %c115 = arith.constant 115 : index
    %498 = memref.load %arg1[%c115] : memref<144xf32, #tpu.memory_space<smem>>
    %499 = vector.broadcast %498 : f32 to vector<20x20xf32>
    %500 = arith.mulf %499, %485 : vector<20x20xf32>
    %501 = arith.addf %484, %500 : vector<20x20xf32>
    %502 = vector.extract_strided_slice %8 {offsets = [2, 1], sizes = [20, 20], strides = [1, 1]} : vector<22x22xf32> to vector<20x20xf32>
    %c116 = arith.constant 116 : index
    %503 = memref.load %arg1[%c116] : memref<144xf32, #tpu.memory_space<smem>>
    %504 = vector.broadcast %503 : f32 to vector<20x20xf32>
    %505 = arith.mulf %504, %502 : vector<20x20xf32>
    %506 = arith.addf %489, %505 : vector<20x20xf32>
    %c117 = arith.constant 117 : index
    %507 = memref.load %arg1[%c117] : memref<144xf32, #tpu.memory_space<smem>>
    %508 = vector.broadcast %507 : f32 to vector<20x20xf32>
    %509 = arith.mulf %508, %502 : vector<20x20xf32>
    %510 = arith.addf %493, %509 : vector<20x20xf32>
    %c118 = arith.constant 118 : index
    %511 = memref.load %arg1[%c118] : memref<144xf32, #tpu.memory_space<smem>>
    %512 = vector.broadcast %511 : f32 to vector<20x20xf32>
    %513 = arith.mulf %512, %502 : vector<20x20xf32>
    %514 = arith.addf %497, %513 : vector<20x20xf32>
    %c119 = arith.constant 119 : index
    %515 = memref.load %arg1[%c119] : memref<144xf32, #tpu.memory_space<smem>>
    %516 = vector.broadcast %515 : f32 to vector<20x20xf32>
    %517 = arith.mulf %516, %502 : vector<20x20xf32>
    %518 = arith.addf %501, %517 : vector<20x20xf32>
    %519 = vector.extract_strided_slice %10 {offsets = [2, 1], sizes = [20, 20], strides = [1, 1]} : vector<22x22xf32> to vector<20x20xf32>
    %c120 = arith.constant 120 : index
    %520 = memref.load %arg1[%c120] : memref<144xf32, #tpu.memory_space<smem>>
    %521 = vector.broadcast %520 : f32 to vector<20x20xf32>
    %522 = arith.mulf %521, %519 : vector<20x20xf32>
    %523 = arith.addf %506, %522 : vector<20x20xf32>
    %c121 = arith.constant 121 : index
    %524 = memref.load %arg1[%c121] : memref<144xf32, #tpu.memory_space<smem>>
    %525 = vector.broadcast %524 : f32 to vector<20x20xf32>
    %526 = arith.mulf %525, %519 : vector<20x20xf32>
    %527 = arith.addf %510, %526 : vector<20x20xf32>
    %c122 = arith.constant 122 : index
    %528 = memref.load %arg1[%c122] : memref<144xf32, #tpu.memory_space<smem>>
    %529 = vector.broadcast %528 : f32 to vector<20x20xf32>
    %530 = arith.mulf %529, %519 : vector<20x20xf32>
    %531 = arith.addf %514, %530 : vector<20x20xf32>
    %c123 = arith.constant 123 : index
    %532 = memref.load %arg1[%c123] : memref<144xf32, #tpu.memory_space<smem>>
    %533 = vector.broadcast %532 : f32 to vector<20x20xf32>
    %534 = arith.mulf %533, %519 : vector<20x20xf32>
    %535 = arith.addf %518, %534 : vector<20x20xf32>
    %536 = vector.extract_strided_slice %12 {offsets = [2, 1], sizes = [20, 20], strides = [1, 1]} : vector<22x22xf32> to vector<20x20xf32>
    %c124 = arith.constant 124 : index
    %537 = memref.load %arg1[%c124] : memref<144xf32, #tpu.memory_space<smem>>
    %538 = vector.broadcast %537 : f32 to vector<20x20xf32>
    %539 = arith.mulf %538, %536 : vector<20x20xf32>
    %540 = arith.addf %523, %539 : vector<20x20xf32>
    %c125 = arith.constant 125 : index
    %541 = memref.load %arg1[%c125] : memref<144xf32, #tpu.memory_space<smem>>
    %542 = vector.broadcast %541 : f32 to vector<20x20xf32>
    %543 = arith.mulf %542, %536 : vector<20x20xf32>
    %544 = arith.addf %527, %543 : vector<20x20xf32>
    %c126 = arith.constant 126 : index
    %545 = memref.load %arg1[%c126] : memref<144xf32, #tpu.memory_space<smem>>
    %546 = vector.broadcast %545 : f32 to vector<20x20xf32>
    %547 = arith.mulf %546, %536 : vector<20x20xf32>
    %548 = arith.addf %531, %547 : vector<20x20xf32>
    %c127 = arith.constant 127 : index
    %549 = memref.load %arg1[%c127] : memref<144xf32, #tpu.memory_space<smem>>
    %550 = vector.broadcast %549 : f32 to vector<20x20xf32>
    %551 = arith.mulf %550, %536 : vector<20x20xf32>
    %552 = arith.addf %535, %551 : vector<20x20xf32>
    %553 = vector.extract_strided_slice %6 {offsets = [2, 2], sizes = [20, 20], strides = [1, 1]} : vector<22x22xf32> to vector<20x20xf32>
    %c128 = arith.constant 128 : index
    %554 = memref.load %arg1[%c128] : memref<144xf32, #tpu.memory_space<smem>>
    %555 = vector.broadcast %554 : f32 to vector<20x20xf32>
    %556 = arith.mulf %555, %553 : vector<20x20xf32>
    %557 = arith.addf %540, %556 : vector<20x20xf32>
    %c129 = arith.constant 129 : index
    %558 = memref.load %arg1[%c129] : memref<144xf32, #tpu.memory_space<smem>>
    %559 = vector.broadcast %558 : f32 to vector<20x20xf32>
    %560 = arith.mulf %559, %553 : vector<20x20xf32>
    %561 = arith.addf %544, %560 : vector<20x20xf32>
    %c130 = arith.constant 130 : index
    %562 = memref.load %arg1[%c130] : memref<144xf32, #tpu.memory_space<smem>>
    %563 = vector.broadcast %562 : f32 to vector<20x20xf32>
    %564 = arith.mulf %563, %553 : vector<20x20xf32>
    %565 = arith.addf %548, %564 : vector<20x20xf32>
    %c131 = arith.constant 131 : index
    %566 = memref.load %arg1[%c131] : memref<144xf32, #tpu.memory_space<smem>>
    %567 = vector.broadcast %566 : f32 to vector<20x20xf32>
    %568 = arith.mulf %567, %553 : vector<20x20xf32>
    %569 = arith.addf %552, %568 : vector<20x20xf32>
    %570 = vector.extract_strided_slice %8 {offsets = [2, 2], sizes = [20, 20], strides = [1, 1]} : vector<22x22xf32> to vector<20x20xf32>
    %c132 = arith.constant 132 : index
    %571 = memref.load %arg1[%c132] : memref<144xf32, #tpu.memory_space<smem>>
    %572 = vector.broadcast %571 : f32 to vector<20x20xf32>
    %573 = arith.mulf %572, %570 : vector<20x20xf32>
    %574 = arith.addf %557, %573 : vector<20x20xf32>
    %c133 = arith.constant 133 : index
    %575 = memref.load %arg1[%c133] : memref<144xf32, #tpu.memory_space<smem>>
    %576 = vector.broadcast %575 : f32 to vector<20x20xf32>
    %577 = arith.mulf %576, %570 : vector<20x20xf32>
    %578 = arith.addf %561, %577 : vector<20x20xf32>
    %c134 = arith.constant 134 : index
    %579 = memref.load %arg1[%c134] : memref<144xf32, #tpu.memory_space<smem>>
    %580 = vector.broadcast %579 : f32 to vector<20x20xf32>
    %581 = arith.mulf %580, %570 : vector<20x20xf32>
    %582 = arith.addf %565, %581 : vector<20x20xf32>
    %c135 = arith.constant 135 : index
    %583 = memref.load %arg1[%c135] : memref<144xf32, #tpu.memory_space<smem>>
    %584 = vector.broadcast %583 : f32 to vector<20x20xf32>
    %585 = arith.mulf %584, %570 : vector<20x20xf32>
    %586 = arith.addf %569, %585 : vector<20x20xf32>
    %587 = vector.extract_strided_slice %10 {offsets = [2, 2], sizes = [20, 20], strides = [1, 1]} : vector<22x22xf32> to vector<20x20xf32>
    %c136 = arith.constant 136 : index
    %588 = memref.load %arg1[%c136] : memref<144xf32, #tpu.memory_space<smem>>
    %589 = vector.broadcast %588 : f32 to vector<20x20xf32>
    %590 = arith.mulf %589, %587 : vector<20x20xf32>
    %591 = arith.addf %574, %590 : vector<20x20xf32>
    %c137 = arith.constant 137 : index
    %592 = memref.load %arg1[%c137] : memref<144xf32, #tpu.memory_space<smem>>
    %593 = vector.broadcast %592 : f32 to vector<20x20xf32>
    %594 = arith.mulf %593, %587 : vector<20x20xf32>
    %595 = arith.addf %578, %594 : vector<20x20xf32>
    %c138 = arith.constant 138 : index
    %596 = memref.load %arg1[%c138] : memref<144xf32, #tpu.memory_space<smem>>
    %597 = vector.broadcast %596 : f32 to vector<20x20xf32>
    %598 = arith.mulf %597, %587 : vector<20x20xf32>
    %599 = arith.addf %582, %598 : vector<20x20xf32>
    %c139 = arith.constant 139 : index
    %600 = memref.load %arg1[%c139] : memref<144xf32, #tpu.memory_space<smem>>
    %601 = vector.broadcast %600 : f32 to vector<20x20xf32>
    %602 = arith.mulf %601, %587 : vector<20x20xf32>
    %603 = arith.addf %586, %602 : vector<20x20xf32>
    %604 = vector.extract_strided_slice %12 {offsets = [2, 2], sizes = [20, 20], strides = [1, 1]} : vector<22x22xf32> to vector<20x20xf32>
    %c140 = arith.constant 140 : index
    %605 = memref.load %arg1[%c140] : memref<144xf32, #tpu.memory_space<smem>>
    %606 = vector.broadcast %605 : f32 to vector<20x20xf32>
    %607 = arith.mulf %606, %604 : vector<20x20xf32>
    %608 = arith.addf %591, %607 : vector<20x20xf32>
    %c141 = arith.constant 141 : index
    %609 = memref.load %arg1[%c141] : memref<144xf32, #tpu.memory_space<smem>>
    %610 = vector.broadcast %609 : f32 to vector<20x20xf32>
    %611 = arith.mulf %610, %604 : vector<20x20xf32>
    %612 = arith.addf %595, %611 : vector<20x20xf32>
    %c142 = arith.constant 142 : index
    %613 = memref.load %arg1[%c142] : memref<144xf32, #tpu.memory_space<smem>>
    %614 = vector.broadcast %613 : f32 to vector<20x20xf32>
    %615 = arith.mulf %614, %604 : vector<20x20xf32>
    %616 = arith.addf %599, %615 : vector<20x20xf32>
    %c143 = arith.constant 143 : index
    %617 = memref.load %arg1[%c143] : memref<144xf32, #tpu.memory_space<smem>>
    %618 = vector.broadcast %617 : f32 to vector<20x20xf32>
    %619 = arith.mulf %618, %604 : vector<20x20xf32>
    %620 = arith.addf %603, %619 : vector<20x20xf32>
    %621 = tpu.iota {dimensions = array<i32: 0>} : vector<20x20xi32>
    %622 = tpu.iota {dimensions = array<i32: 1>} : vector<20x20xi32>
    %c2_i32 = arith.constant 2 : i32
    %623 = vector.broadcast %c2_i32 : i32 to vector<20x20xi32>
    %624 = arith.cmpi sge, %621, %623 : vector<20x20xi32>
    %c18_i32 = arith.constant 18 : i32
    %625 = vector.broadcast %c18_i32 : i32 to vector<20x20xi32>
    %626 = arith.cmpi slt, %621, %625 : vector<20x20xi32>
    %627 = arith.andi %624, %626 : vector<20x20xi1>
    %c2_i32_22 = arith.constant 2 : i32
    %628 = vector.broadcast %c2_i32_22 : i32 to vector<20x20xi32>
    %629 = arith.cmpi sge, %622, %628 : vector<20x20xi32>
    %630 = arith.andi %627, %629 : vector<20x20xi1>
    %c18_i32_23 = arith.constant 18 : i32
    %631 = vector.broadcast %c18_i32_23 : i32 to vector<20x20xi32>
    %632 = arith.cmpi slt, %622, %631 : vector<20x20xi32>
    %633 = arith.andi %630, %632 : vector<20x20xi1>
    %c0_24 = arith.constant 0 : index
    %634 = memref.load %arg2[%c0_24] : memref<4xf32, #tpu.memory_space<smem>>
    %635 = vector.broadcast %634 : f32 to vector<20x20xf32>
    %636 = arith.addf %608, %635 : vector<20x20xf32>
    %cst_25 = arith.constant 0.000000e+00 : f32
    %637 = vector.broadcast %cst_25 : f32 to vector<20x20xf32>
    %638 = arith.cmpf oge, %636, %637 : vector<20x20xf32>
    %cst_26 = arith.constant 1.000000e-01 : f32
    %639 = vector.broadcast %cst_26 : f32 to vector<20x20xf32>
    %640 = arith.mulf %639, %636 : vector<20x20xf32>
    %641 = arith.select %638, %636, %640 : vector<20x20xi1>, vector<20x20xf32>
    %cst_27 = arith.constant 0.000000e+00 : f32
    %642 = vector.broadcast %cst_27 : f32 to vector<20x20xf32>
    %643 = arith.select %633, %641, %642 : vector<20x20xi1>, vector<20x20xf32>
    %c1_28 = arith.constant 1 : index
    %644 = memref.load %arg2[%c1_28] : memref<4xf32, #tpu.memory_space<smem>>
    %645 = vector.broadcast %644 : f32 to vector<20x20xf32>
    %646 = arith.addf %612, %645 : vector<20x20xf32>
    %cst_29 = arith.constant 0.000000e+00 : f32
    %647 = vector.broadcast %cst_29 : f32 to vector<20x20xf32>
    %648 = arith.cmpf oge, %646, %647 : vector<20x20xf32>
    %cst_30 = arith.constant 1.000000e-01 : f32
    %649 = vector.broadcast %cst_30 : f32 to vector<20x20xf32>
    %650 = arith.mulf %649, %646 : vector<20x20xf32>
    %651 = arith.select %648, %646, %650 : vector<20x20xi1>, vector<20x20xf32>
    %cst_31 = arith.constant 0.000000e+00 : f32
    %652 = vector.broadcast %cst_31 : f32 to vector<20x20xf32>
    %653 = arith.select %633, %651, %652 : vector<20x20xi1>, vector<20x20xf32>
    %c2_32 = arith.constant 2 : index
    %654 = memref.load %arg2[%c2_32] : memref<4xf32, #tpu.memory_space<smem>>
    %655 = vector.broadcast %654 : f32 to vector<20x20xf32>
    %656 = arith.addf %616, %655 : vector<20x20xf32>
    %cst_33 = arith.constant 0.000000e+00 : f32
    %657 = vector.broadcast %cst_33 : f32 to vector<20x20xf32>
    %658 = arith.cmpf oge, %656, %657 : vector<20x20xf32>
    %cst_34 = arith.constant 1.000000e-01 : f32
    %659 = vector.broadcast %cst_34 : f32 to vector<20x20xf32>
    %660 = arith.mulf %659, %656 : vector<20x20xf32>
    %661 = arith.select %658, %656, %660 : vector<20x20xi1>, vector<20x20xf32>
    %cst_35 = arith.constant 0.000000e+00 : f32
    %662 = vector.broadcast %cst_35 : f32 to vector<20x20xf32>
    %663 = arith.select %633, %661, %662 : vector<20x20xi1>, vector<20x20xf32>
    %c3_36 = arith.constant 3 : index
    %664 = memref.load %arg2[%c3_36] : memref<4xf32, #tpu.memory_space<smem>>
    %665 = vector.broadcast %664 : f32 to vector<20x20xf32>
    %666 = arith.addf %620, %665 : vector<20x20xf32>
    %cst_37 = arith.constant 0.000000e+00 : f32
    %667 = vector.broadcast %cst_37 : f32 to vector<20x20xf32>
    %668 = arith.cmpf oge, %666, %667 : vector<20x20xf32>
    %cst_38 = arith.constant 1.000000e-01 : f32
    %669 = vector.broadcast %cst_38 : f32 to vector<20x20xf32>
    %670 = arith.mulf %669, %666 : vector<20x20xf32>
    %671 = arith.select %668, %666, %670 : vector<20x20xi1>, vector<20x20xf32>
    %cst_39 = arith.constant 0.000000e+00 : f32
    %672 = vector.broadcast %cst_39 : f32 to vector<20x20xf32>
    %673 = arith.select %633, %671, %672 : vector<20x20xi1>, vector<20x20xf32>
    %674 = vector.extract_strided_slice %643 {offsets = [0, 0], sizes = [16, 16], strides = [1, 1]} : vector<20x20xf32> to vector<16x16xf32>
    %c0_40 = arith.constant 0 : index
    %675 = memref.load %arg3[%c0_40] : memref<144xf32, #tpu.memory_space<smem>>
    %676 = vector.broadcast %675 : f32 to vector<16x16xf32>
    %677 = arith.mulf %676, %674 : vector<16x16xf32>
    %c1_41 = arith.constant 1 : index
    %678 = memref.load %arg3[%c1_41] : memref<144xf32, #tpu.memory_space<smem>>
    %679 = vector.broadcast %678 : f32 to vector<16x16xf32>
    %680 = arith.mulf %679, %674 : vector<16x16xf32>
    %c2_42 = arith.constant 2 : index
    %681 = memref.load %arg3[%c2_42] : memref<144xf32, #tpu.memory_space<smem>>
    %682 = vector.broadcast %681 : f32 to vector<16x16xf32>
    %683 = arith.mulf %682, %674 : vector<16x16xf32>
    %c3_43 = arith.constant 3 : index
    %684 = memref.load %arg3[%c3_43] : memref<144xf32, #tpu.memory_space<smem>>
    %685 = vector.broadcast %684 : f32 to vector<16x16xf32>
    %686 = arith.mulf %685, %674 : vector<16x16xf32>
    %687 = vector.extract_strided_slice %653 {offsets = [0, 0], sizes = [16, 16], strides = [1, 1]} : vector<20x20xf32> to vector<16x16xf32>
    %c4_44 = arith.constant 4 : index
    %688 = memref.load %arg3[%c4_44] : memref<144xf32, #tpu.memory_space<smem>>
    %689 = vector.broadcast %688 : f32 to vector<16x16xf32>
    %690 = arith.mulf %689, %687 : vector<16x16xf32>
    %691 = arith.addf %677, %690 : vector<16x16xf32>
    %c5_45 = arith.constant 5 : index
    %692 = memref.load %arg3[%c5_45] : memref<144xf32, #tpu.memory_space<smem>>
    %693 = vector.broadcast %692 : f32 to vector<16x16xf32>
    %694 = arith.mulf %693, %687 : vector<16x16xf32>
    %695 = arith.addf %680, %694 : vector<16x16xf32>
    %c6_46 = arith.constant 6 : index
    %696 = memref.load %arg3[%c6_46] : memref<144xf32, #tpu.memory_space<smem>>
    %697 = vector.broadcast %696 : f32 to vector<16x16xf32>
    %698 = arith.mulf %697, %687 : vector<16x16xf32>
    %699 = arith.addf %683, %698 : vector<16x16xf32>
    %c7_47 = arith.constant 7 : index
    %700 = memref.load %arg3[%c7_47] : memref<144xf32, #tpu.memory_space<smem>>
    %701 = vector.broadcast %700 : f32 to vector<16x16xf32>
    %702 = arith.mulf %701, %687 : vector<16x16xf32>
    %703 = arith.addf %686, %702 : vector<16x16xf32>
    %704 = vector.extract_strided_slice %663 {offsets = [0, 0], sizes = [16, 16], strides = [1, 1]} : vector<20x20xf32> to vector<16x16xf32>
    %c8_48 = arith.constant 8 : index
    %705 = memref.load %arg3[%c8_48] : memref<144xf32, #tpu.memory_space<smem>>
    %706 = vector.broadcast %705 : f32 to vector<16x16xf32>
    %707 = arith.mulf %706, %704 : vector<16x16xf32>
    %708 = arith.addf %691, %707 : vector<16x16xf32>
    %c9_49 = arith.constant 9 : index
    %709 = memref.load %arg3[%c9_49] : memref<144xf32, #tpu.memory_space<smem>>
    %710 = vector.broadcast %709 : f32 to vector<16x16xf32>
    %711 = arith.mulf %710, %704 : vector<16x16xf32>
    %712 = arith.addf %695, %711 : vector<16x16xf32>
    %c10_50 = arith.constant 10 : index
    %713 = memref.load %arg3[%c10_50] : memref<144xf32, #tpu.memory_space<smem>>
    %714 = vector.broadcast %713 : f32 to vector<16x16xf32>
    %715 = arith.mulf %714, %704 : vector<16x16xf32>
    %716 = arith.addf %699, %715 : vector<16x16xf32>
    %c11_51 = arith.constant 11 : index
    %717 = memref.load %arg3[%c11_51] : memref<144xf32, #tpu.memory_space<smem>>
    %718 = vector.broadcast %717 : f32 to vector<16x16xf32>
    %719 = arith.mulf %718, %704 : vector<16x16xf32>
    %720 = arith.addf %703, %719 : vector<16x16xf32>
    %721 = vector.extract_strided_slice %673 {offsets = [0, 0], sizes = [16, 16], strides = [1, 1]} : vector<20x20xf32> to vector<16x16xf32>
    %c12_52 = arith.constant 12 : index
    %722 = memref.load %arg3[%c12_52] : memref<144xf32, #tpu.memory_space<smem>>
    %723 = vector.broadcast %722 : f32 to vector<16x16xf32>
    %724 = arith.mulf %723, %721 : vector<16x16xf32>
    %725 = arith.addf %708, %724 : vector<16x16xf32>
    %c13_53 = arith.constant 13 : index
    %726 = memref.load %arg3[%c13_53] : memref<144xf32, #tpu.memory_space<smem>>
    %727 = vector.broadcast %726 : f32 to vector<16x16xf32>
    %728 = arith.mulf %727, %721 : vector<16x16xf32>
    %729 = arith.addf %712, %728 : vector<16x16xf32>
    %c14_54 = arith.constant 14 : index
    %730 = memref.load %arg3[%c14_54] : memref<144xf32, #tpu.memory_space<smem>>
    %731 = vector.broadcast %730 : f32 to vector<16x16xf32>
    %732 = arith.mulf %731, %721 : vector<16x16xf32>
    %733 = arith.addf %716, %732 : vector<16x16xf32>
    %c15_55 = arith.constant 15 : index
    %734 = memref.load %arg3[%c15_55] : memref<144xf32, #tpu.memory_space<smem>>
    %735 = vector.broadcast %734 : f32 to vector<16x16xf32>
    %736 = arith.mulf %735, %721 : vector<16x16xf32>
    %737 = arith.addf %720, %736 : vector<16x16xf32>
    %738 = vector.extract_strided_slice %643 {offsets = [0, 2], sizes = [16, 16], strides = [1, 1]} : vector<20x20xf32> to vector<16x16xf32>
    %c16_56 = arith.constant 16 : index
    %739 = memref.load %arg3[%c16_56] : memref<144xf32, #tpu.memory_space<smem>>
    %740 = vector.broadcast %739 : f32 to vector<16x16xf32>
    %741 = arith.mulf %740, %738 : vector<16x16xf32>
    %742 = arith.addf %725, %741 : vector<16x16xf32>
    %c17_57 = arith.constant 17 : index
    %743 = memref.load %arg3[%c17_57] : memref<144xf32, #tpu.memory_space<smem>>
    %744 = vector.broadcast %743 : f32 to vector<16x16xf32>
    %745 = arith.mulf %744, %738 : vector<16x16xf32>
    %746 = arith.addf %729, %745 : vector<16x16xf32>
    %c18_58 = arith.constant 18 : index
    %747 = memref.load %arg3[%c18_58] : memref<144xf32, #tpu.memory_space<smem>>
    %748 = vector.broadcast %747 : f32 to vector<16x16xf32>
    %749 = arith.mulf %748, %738 : vector<16x16xf32>
    %750 = arith.addf %733, %749 : vector<16x16xf32>
    %c19_59 = arith.constant 19 : index
    %751 = memref.load %arg3[%c19_59] : memref<144xf32, #tpu.memory_space<smem>>
    %752 = vector.broadcast %751 : f32 to vector<16x16xf32>
    %753 = arith.mulf %752, %738 : vector<16x16xf32>
    %754 = arith.addf %737, %753 : vector<16x16xf32>
    %755 = vector.extract_strided_slice %653 {offsets = [0, 2], sizes = [16, 16], strides = [1, 1]} : vector<20x20xf32> to vector<16x16xf32>
    %c20_60 = arith.constant 20 : index
    %756 = memref.load %arg3[%c20_60] : memref<144xf32, #tpu.memory_space<smem>>
    %757 = vector.broadcast %756 : f32 to vector<16x16xf32>
    %758 = arith.mulf %757, %755 : vector<16x16xf32>
    %759 = arith.addf %742, %758 : vector<16x16xf32>
    %c21_61 = arith.constant 21 : index
    %760 = memref.load %arg3[%c21_61] : memref<144xf32, #tpu.memory_space<smem>>
    %761 = vector.broadcast %760 : f32 to vector<16x16xf32>
    %762 = arith.mulf %761, %755 : vector<16x16xf32>
    %763 = arith.addf %746, %762 : vector<16x16xf32>
    %c22_62 = arith.constant 22 : index
    %764 = memref.load %arg3[%c22_62] : memref<144xf32, #tpu.memory_space<smem>>
    %765 = vector.broadcast %764 : f32 to vector<16x16xf32>
    %766 = arith.mulf %765, %755 : vector<16x16xf32>
    %767 = arith.addf %750, %766 : vector<16x16xf32>
    %c23_63 = arith.constant 23 : index
    %768 = memref.load %arg3[%c23_63] : memref<144xf32, #tpu.memory_space<smem>>
    %769 = vector.broadcast %768 : f32 to vector<16x16xf32>
    %770 = arith.mulf %769, %755 : vector<16x16xf32>
    %771 = arith.addf %754, %770 : vector<16x16xf32>
    %772 = vector.extract_strided_slice %663 {offsets = [0, 2], sizes = [16, 16], strides = [1, 1]} : vector<20x20xf32> to vector<16x16xf32>
    %c24_64 = arith.constant 24 : index
    %773 = memref.load %arg3[%c24_64] : memref<144xf32, #tpu.memory_space<smem>>
    %774 = vector.broadcast %773 : f32 to vector<16x16xf32>
    %775 = arith.mulf %774, %772 : vector<16x16xf32>
    %776 = arith.addf %759, %775 : vector<16x16xf32>
    %c25_65 = arith.constant 25 : index
    %777 = memref.load %arg3[%c25_65] : memref<144xf32, #tpu.memory_space<smem>>
    %778 = vector.broadcast %777 : f32 to vector<16x16xf32>
    %779 = arith.mulf %778, %772 : vector<16x16xf32>
    %780 = arith.addf %763, %779 : vector<16x16xf32>
    %c26_66 = arith.constant 26 : index
    %781 = memref.load %arg3[%c26_66] : memref<144xf32, #tpu.memory_space<smem>>
    %782 = vector.broadcast %781 : f32 to vector<16x16xf32>
    %783 = arith.mulf %782, %772 : vector<16x16xf32>
    %784 = arith.addf %767, %783 : vector<16x16xf32>
    %c27_67 = arith.constant 27 : index
    %785 = memref.load %arg3[%c27_67] : memref<144xf32, #tpu.memory_space<smem>>
    %786 = vector.broadcast %785 : f32 to vector<16x16xf32>
    %787 = arith.mulf %786, %772 : vector<16x16xf32>
    %788 = arith.addf %771, %787 : vector<16x16xf32>
    %789 = vector.extract_strided_slice %673 {offsets = [0, 2], sizes = [16, 16], strides = [1, 1]} : vector<20x20xf32> to vector<16x16xf32>
    %c28_68 = arith.constant 28 : index
    %790 = memref.load %arg3[%c28_68] : memref<144xf32, #tpu.memory_space<smem>>
    %791 = vector.broadcast %790 : f32 to vector<16x16xf32>
    %792 = arith.mulf %791, %789 : vector<16x16xf32>
    %793 = arith.addf %776, %792 : vector<16x16xf32>
    %c29_69 = arith.constant 29 : index
    %794 = memref.load %arg3[%c29_69] : memref<144xf32, #tpu.memory_space<smem>>
    %795 = vector.broadcast %794 : f32 to vector<16x16xf32>
    %796 = arith.mulf %795, %789 : vector<16x16xf32>
    %797 = arith.addf %780, %796 : vector<16x16xf32>
    %c30_70 = arith.constant 30 : index
    %798 = memref.load %arg3[%c30_70] : memref<144xf32, #tpu.memory_space<smem>>
    %799 = vector.broadcast %798 : f32 to vector<16x16xf32>
    %800 = arith.mulf %799, %789 : vector<16x16xf32>
    %801 = arith.addf %784, %800 : vector<16x16xf32>
    %c31_71 = arith.constant 31 : index
    %802 = memref.load %arg3[%c31_71] : memref<144xf32, #tpu.memory_space<smem>>
    %803 = vector.broadcast %802 : f32 to vector<16x16xf32>
    %804 = arith.mulf %803, %789 : vector<16x16xf32>
    %805 = arith.addf %788, %804 : vector<16x16xf32>
    %806 = vector.extract_strided_slice %643 {offsets = [0, 4], sizes = [16, 16], strides = [1, 1]} : vector<20x20xf32> to vector<16x16xf32>
    %c32_72 = arith.constant 32 : index
    %807 = memref.load %arg3[%c32_72] : memref<144xf32, #tpu.memory_space<smem>>
    %808 = vector.broadcast %807 : f32 to vector<16x16xf32>
    %809 = arith.mulf %808, %806 : vector<16x16xf32>
    %810 = arith.addf %793, %809 : vector<16x16xf32>
    %c33_73 = arith.constant 33 : index
    %811 = memref.load %arg3[%c33_73] : memref<144xf32, #tpu.memory_space<smem>>
    %812 = vector.broadcast %811 : f32 to vector<16x16xf32>
    %813 = arith.mulf %812, %806 : vector<16x16xf32>
    %814 = arith.addf %797, %813 : vector<16x16xf32>
    %c34_74 = arith.constant 34 : index
    %815 = memref.load %arg3[%c34_74] : memref<144xf32, #tpu.memory_space<smem>>
    %816 = vector.broadcast %815 : f32 to vector<16x16xf32>
    %817 = arith.mulf %816, %806 : vector<16x16xf32>
    %818 = arith.addf %801, %817 : vector<16x16xf32>
    %c35_75 = arith.constant 35 : index
    %819 = memref.load %arg3[%c35_75] : memref<144xf32, #tpu.memory_space<smem>>
    %820 = vector.broadcast %819 : f32 to vector<16x16xf32>
    %821 = arith.mulf %820, %806 : vector<16x16xf32>
    %822 = arith.addf %805, %821 : vector<16x16xf32>
    %823 = vector.extract_strided_slice %653 {offsets = [0, 4], sizes = [16, 16], strides = [1, 1]} : vector<20x20xf32> to vector<16x16xf32>
    %c36_76 = arith.constant 36 : index
    %824 = memref.load %arg3[%c36_76] : memref<144xf32, #tpu.memory_space<smem>>
    %825 = vector.broadcast %824 : f32 to vector<16x16xf32>
    %826 = arith.mulf %825, %823 : vector<16x16xf32>
    %827 = arith.addf %810, %826 : vector<16x16xf32>
    %c37_77 = arith.constant 37 : index
    %828 = memref.load %arg3[%c37_77] : memref<144xf32, #tpu.memory_space<smem>>
    %829 = vector.broadcast %828 : f32 to vector<16x16xf32>
    %830 = arith.mulf %829, %823 : vector<16x16xf32>
    %831 = arith.addf %814, %830 : vector<16x16xf32>
    %c38_78 = arith.constant 38 : index
    %832 = memref.load %arg3[%c38_78] : memref<144xf32, #tpu.memory_space<smem>>
    %833 = vector.broadcast %832 : f32 to vector<16x16xf32>
    %834 = arith.mulf %833, %823 : vector<16x16xf32>
    %835 = arith.addf %818, %834 : vector<16x16xf32>
    %c39_79 = arith.constant 39 : index
    %836 = memref.load %arg3[%c39_79] : memref<144xf32, #tpu.memory_space<smem>>
    %837 = vector.broadcast %836 : f32 to vector<16x16xf32>
    %838 = arith.mulf %837, %823 : vector<16x16xf32>
    %839 = arith.addf %822, %838 : vector<16x16xf32>
    %840 = vector.extract_strided_slice %663 {offsets = [0, 4], sizes = [16, 16], strides = [1, 1]} : vector<20x20xf32> to vector<16x16xf32>
    %c40_80 = arith.constant 40 : index
    %841 = memref.load %arg3[%c40_80] : memref<144xf32, #tpu.memory_space<smem>>
    %842 = vector.broadcast %841 : f32 to vector<16x16xf32>
    %843 = arith.mulf %842, %840 : vector<16x16xf32>
    %844 = arith.addf %827, %843 : vector<16x16xf32>
    %c41_81 = arith.constant 41 : index
    %845 = memref.load %arg3[%c41_81] : memref<144xf32, #tpu.memory_space<smem>>
    %846 = vector.broadcast %845 : f32 to vector<16x16xf32>
    %847 = arith.mulf %846, %840 : vector<16x16xf32>
    %848 = arith.addf %831, %847 : vector<16x16xf32>
    %c42_82 = arith.constant 42 : index
    %849 = memref.load %arg3[%c42_82] : memref<144xf32, #tpu.memory_space<smem>>
    %850 = vector.broadcast %849 : f32 to vector<16x16xf32>
    %851 = arith.mulf %850, %840 : vector<16x16xf32>
    %852 = arith.addf %835, %851 : vector<16x16xf32>
    %c43_83 = arith.constant 43 : index
    %853 = memref.load %arg3[%c43_83] : memref<144xf32, #tpu.memory_space<smem>>
    %854 = vector.broadcast %853 : f32 to vector<16x16xf32>
    %855 = arith.mulf %854, %840 : vector<16x16xf32>
    %856 = arith.addf %839, %855 : vector<16x16xf32>
    %857 = vector.extract_strided_slice %673 {offsets = [0, 4], sizes = [16, 16], strides = [1, 1]} : vector<20x20xf32> to vector<16x16xf32>
    %c44_84 = arith.constant 44 : index
    %858 = memref.load %arg3[%c44_84] : memref<144xf32, #tpu.memory_space<smem>>
    %859 = vector.broadcast %858 : f32 to vector<16x16xf32>
    %860 = arith.mulf %859, %857 : vector<16x16xf32>
    %861 = arith.addf %844, %860 : vector<16x16xf32>
    %c45_85 = arith.constant 45 : index
    %862 = memref.load %arg3[%c45_85] : memref<144xf32, #tpu.memory_space<smem>>
    %863 = vector.broadcast %862 : f32 to vector<16x16xf32>
    %864 = arith.mulf %863, %857 : vector<16x16xf32>
    %865 = arith.addf %848, %864 : vector<16x16xf32>
    %c46_86 = arith.constant 46 : index
    %866 = memref.load %arg3[%c46_86] : memref<144xf32, #tpu.memory_space<smem>>
    %867 = vector.broadcast %866 : f32 to vector<16x16xf32>
    %868 = arith.mulf %867, %857 : vector<16x16xf32>
    %869 = arith.addf %852, %868 : vector<16x16xf32>
    %c47_87 = arith.constant 47 : index
    %870 = memref.load %arg3[%c47_87] : memref<144xf32, #tpu.memory_space<smem>>
    %871 = vector.broadcast %870 : f32 to vector<16x16xf32>
    %872 = arith.mulf %871, %857 : vector<16x16xf32>
    %873 = arith.addf %856, %872 : vector<16x16xf32>
    %874 = vector.extract_strided_slice %643 {offsets = [2, 0], sizes = [16, 16], strides = [1, 1]} : vector<20x20xf32> to vector<16x16xf32>
    %c48_88 = arith.constant 48 : index
    %875 = memref.load %arg3[%c48_88] : memref<144xf32, #tpu.memory_space<smem>>
    %876 = vector.broadcast %875 : f32 to vector<16x16xf32>
    %877 = arith.mulf %876, %874 : vector<16x16xf32>
    %878 = arith.addf %861, %877 : vector<16x16xf32>
    %c49_89 = arith.constant 49 : index
    %879 = memref.load %arg3[%c49_89] : memref<144xf32, #tpu.memory_space<smem>>
    %880 = vector.broadcast %879 : f32 to vector<16x16xf32>
    %881 = arith.mulf %880, %874 : vector<16x16xf32>
    %882 = arith.addf %865, %881 : vector<16x16xf32>
    %c50_90 = arith.constant 50 : index
    %883 = memref.load %arg3[%c50_90] : memref<144xf32, #tpu.memory_space<smem>>
    %884 = vector.broadcast %883 : f32 to vector<16x16xf32>
    %885 = arith.mulf %884, %874 : vector<16x16xf32>
    %886 = arith.addf %869, %885 : vector<16x16xf32>
    %c51_91 = arith.constant 51 : index
    %887 = memref.load %arg3[%c51_91] : memref<144xf32, #tpu.memory_space<smem>>
    %888 = vector.broadcast %887 : f32 to vector<16x16xf32>
    %889 = arith.mulf %888, %874 : vector<16x16xf32>
    %890 = arith.addf %873, %889 : vector<16x16xf32>
    %891 = vector.extract_strided_slice %653 {offsets = [2, 0], sizes = [16, 16], strides = [1, 1]} : vector<20x20xf32> to vector<16x16xf32>
    %c52_92 = arith.constant 52 : index
    %892 = memref.load %arg3[%c52_92] : memref<144xf32, #tpu.memory_space<smem>>
    %893 = vector.broadcast %892 : f32 to vector<16x16xf32>
    %894 = arith.mulf %893, %891 : vector<16x16xf32>
    %895 = arith.addf %878, %894 : vector<16x16xf32>
    %c53_93 = arith.constant 53 : index
    %896 = memref.load %arg3[%c53_93] : memref<144xf32, #tpu.memory_space<smem>>
    %897 = vector.broadcast %896 : f32 to vector<16x16xf32>
    %898 = arith.mulf %897, %891 : vector<16x16xf32>
    %899 = arith.addf %882, %898 : vector<16x16xf32>
    %c54_94 = arith.constant 54 : index
    %900 = memref.load %arg3[%c54_94] : memref<144xf32, #tpu.memory_space<smem>>
    %901 = vector.broadcast %900 : f32 to vector<16x16xf32>
    %902 = arith.mulf %901, %891 : vector<16x16xf32>
    %903 = arith.addf %886, %902 : vector<16x16xf32>
    %c55_95 = arith.constant 55 : index
    %904 = memref.load %arg3[%c55_95] : memref<144xf32, #tpu.memory_space<smem>>
    %905 = vector.broadcast %904 : f32 to vector<16x16xf32>
    %906 = arith.mulf %905, %891 : vector<16x16xf32>
    %907 = arith.addf %890, %906 : vector<16x16xf32>
    %908 = vector.extract_strided_slice %663 {offsets = [2, 0], sizes = [16, 16], strides = [1, 1]} : vector<20x20xf32> to vector<16x16xf32>
    %c56_96 = arith.constant 56 : index
    %909 = memref.load %arg3[%c56_96] : memref<144xf32, #tpu.memory_space<smem>>
    %910 = vector.broadcast %909 : f32 to vector<16x16xf32>
    %911 = arith.mulf %910, %908 : vector<16x16xf32>
    %912 = arith.addf %895, %911 : vector<16x16xf32>
    %c57_97 = arith.constant 57 : index
    %913 = memref.load %arg3[%c57_97] : memref<144xf32, #tpu.memory_space<smem>>
    %914 = vector.broadcast %913 : f32 to vector<16x16xf32>
    %915 = arith.mulf %914, %908 : vector<16x16xf32>
    %916 = arith.addf %899, %915 : vector<16x16xf32>
    %c58_98 = arith.constant 58 : index
    %917 = memref.load %arg3[%c58_98] : memref<144xf32, #tpu.memory_space<smem>>
    %918 = vector.broadcast %917 : f32 to vector<16x16xf32>
    %919 = arith.mulf %918, %908 : vector<16x16xf32>
    %920 = arith.addf %903, %919 : vector<16x16xf32>
    %c59_99 = arith.constant 59 : index
    %921 = memref.load %arg3[%c59_99] : memref<144xf32, #tpu.memory_space<smem>>
    %922 = vector.broadcast %921 : f32 to vector<16x16xf32>
    %923 = arith.mulf %922, %908 : vector<16x16xf32>
    %924 = arith.addf %907, %923 : vector<16x16xf32>
    %925 = vector.extract_strided_slice %673 {offsets = [2, 0], sizes = [16, 16], strides = [1, 1]} : vector<20x20xf32> to vector<16x16xf32>
    %c60_100 = arith.constant 60 : index
    %926 = memref.load %arg3[%c60_100] : memref<144xf32, #tpu.memory_space<smem>>
    %927 = vector.broadcast %926 : f32 to vector<16x16xf32>
    %928 = arith.mulf %927, %925 : vector<16x16xf32>
    %929 = arith.addf %912, %928 : vector<16x16xf32>
    %c61_101 = arith.constant 61 : index
    %930 = memref.load %arg3[%c61_101] : memref<144xf32, #tpu.memory_space<smem>>
    %931 = vector.broadcast %930 : f32 to vector<16x16xf32>
    %932 = arith.mulf %931, %925 : vector<16x16xf32>
    %933 = arith.addf %916, %932 : vector<16x16xf32>
    %c62_102 = arith.constant 62 : index
    %934 = memref.load %arg3[%c62_102] : memref<144xf32, #tpu.memory_space<smem>>
    %935 = vector.broadcast %934 : f32 to vector<16x16xf32>
    %936 = arith.mulf %935, %925 : vector<16x16xf32>
    %937 = arith.addf %920, %936 : vector<16x16xf32>
    %c63_103 = arith.constant 63 : index
    %938 = memref.load %arg3[%c63_103] : memref<144xf32, #tpu.memory_space<smem>>
    %939 = vector.broadcast %938 : f32 to vector<16x16xf32>
    %940 = arith.mulf %939, %925 : vector<16x16xf32>
    %941 = arith.addf %924, %940 : vector<16x16xf32>
    %942 = vector.extract_strided_slice %643 {offsets = [2, 2], sizes = [16, 16], strides = [1, 1]} : vector<20x20xf32> to vector<16x16xf32>
    %c64_104 = arith.constant 64 : index
    %943 = memref.load %arg3[%c64_104] : memref<144xf32, #tpu.memory_space<smem>>
    %944 = vector.broadcast %943 : f32 to vector<16x16xf32>
    %945 = arith.mulf %944, %942 : vector<16x16xf32>
    %946 = arith.addf %929, %945 : vector<16x16xf32>
    %c65_105 = arith.constant 65 : index
    %947 = memref.load %arg3[%c65_105] : memref<144xf32, #tpu.memory_space<smem>>
    %948 = vector.broadcast %947 : f32 to vector<16x16xf32>
    %949 = arith.mulf %948, %942 : vector<16x16xf32>
    %950 = arith.addf %933, %949 : vector<16x16xf32>
    %c66_106 = arith.constant 66 : index
    %951 = memref.load %arg3[%c66_106] : memref<144xf32, #tpu.memory_space<smem>>
    %952 = vector.broadcast %951 : f32 to vector<16x16xf32>
    %953 = arith.mulf %952, %942 : vector<16x16xf32>
    %954 = arith.addf %937, %953 : vector<16x16xf32>
    %c67_107 = arith.constant 67 : index
    %955 = memref.load %arg3[%c67_107] : memref<144xf32, #tpu.memory_space<smem>>
    %956 = vector.broadcast %955 : f32 to vector<16x16xf32>
    %957 = arith.mulf %956, %942 : vector<16x16xf32>
    %958 = arith.addf %941, %957 : vector<16x16xf32>
    %959 = vector.extract_strided_slice %653 {offsets = [2, 2], sizes = [16, 16], strides = [1, 1]} : vector<20x20xf32> to vector<16x16xf32>
    %c68_108 = arith.constant 68 : index
    %960 = memref.load %arg3[%c68_108] : memref<144xf32, #tpu.memory_space<smem>>
    %961 = vector.broadcast %960 : f32 to vector<16x16xf32>
    %962 = arith.mulf %961, %959 : vector<16x16xf32>
    %963 = arith.addf %946, %962 : vector<16x16xf32>
    %c69_109 = arith.constant 69 : index
    %964 = memref.load %arg3[%c69_109] : memref<144xf32, #tpu.memory_space<smem>>
    %965 = vector.broadcast %964 : f32 to vector<16x16xf32>
    %966 = arith.mulf %965, %959 : vector<16x16xf32>
    %967 = arith.addf %950, %966 : vector<16x16xf32>
    %c70_110 = arith.constant 70 : index
    %968 = memref.load %arg3[%c70_110] : memref<144xf32, #tpu.memory_space<smem>>
    %969 = vector.broadcast %968 : f32 to vector<16x16xf32>
    %970 = arith.mulf %969, %959 : vector<16x16xf32>
    %971 = arith.addf %954, %970 : vector<16x16xf32>
    %c71_111 = arith.constant 71 : index
    %972 = memref.load %arg3[%c71_111] : memref<144xf32, #tpu.memory_space<smem>>
    %973 = vector.broadcast %972 : f32 to vector<16x16xf32>
    %974 = arith.mulf %973, %959 : vector<16x16xf32>
    %975 = arith.addf %958, %974 : vector<16x16xf32>
    %976 = vector.extract_strided_slice %663 {offsets = [2, 2], sizes = [16, 16], strides = [1, 1]} : vector<20x20xf32> to vector<16x16xf32>
    %c72_112 = arith.constant 72 : index
    %977 = memref.load %arg3[%c72_112] : memref<144xf32, #tpu.memory_space<smem>>
    %978 = vector.broadcast %977 : f32 to vector<16x16xf32>
    %979 = arith.mulf %978, %976 : vector<16x16xf32>
    %980 = arith.addf %963, %979 : vector<16x16xf32>
    %c73_113 = arith.constant 73 : index
    %981 = memref.load %arg3[%c73_113] : memref<144xf32, #tpu.memory_space<smem>>
    %982 = vector.broadcast %981 : f32 to vector<16x16xf32>
    %983 = arith.mulf %982, %976 : vector<16x16xf32>
    %984 = arith.addf %967, %983 : vector<16x16xf32>
    %c74_114 = arith.constant 74 : index
    %985 = memref.load %arg3[%c74_114] : memref<144xf32, #tpu.memory_space<smem>>
    %986 = vector.broadcast %985 : f32 to vector<16x16xf32>
    %987 = arith.mulf %986, %976 : vector<16x16xf32>
    %988 = arith.addf %971, %987 : vector<16x16xf32>
    %c75_115 = arith.constant 75 : index
    %989 = memref.load %arg3[%c75_115] : memref<144xf32, #tpu.memory_space<smem>>
    %990 = vector.broadcast %989 : f32 to vector<16x16xf32>
    %991 = arith.mulf %990, %976 : vector<16x16xf32>
    %992 = arith.addf %975, %991 : vector<16x16xf32>
    %993 = vector.extract_strided_slice %673 {offsets = [2, 2], sizes = [16, 16], strides = [1, 1]} : vector<20x20xf32> to vector<16x16xf32>
    %c76_116 = arith.constant 76 : index
    %994 = memref.load %arg3[%c76_116] : memref<144xf32, #tpu.memory_space<smem>>
    %995 = vector.broadcast %994 : f32 to vector<16x16xf32>
    %996 = arith.mulf %995, %993 : vector<16x16xf32>
    %997 = arith.addf %980, %996 : vector<16x16xf32>
    %c77_117 = arith.constant 77 : index
    %998 = memref.load %arg3[%c77_117] : memref<144xf32, #tpu.memory_space<smem>>
    %999 = vector.broadcast %998 : f32 to vector<16x16xf32>
    %1000 = arith.mulf %999, %993 : vector<16x16xf32>
    %1001 = arith.addf %984, %1000 : vector<16x16xf32>
    %c78_118 = arith.constant 78 : index
    %1002 = memref.load %arg3[%c78_118] : memref<144xf32, #tpu.memory_space<smem>>
    %1003 = vector.broadcast %1002 : f32 to vector<16x16xf32>
    %1004 = arith.mulf %1003, %993 : vector<16x16xf32>
    %1005 = arith.addf %988, %1004 : vector<16x16xf32>
    %c79_119 = arith.constant 79 : index
    %1006 = memref.load %arg3[%c79_119] : memref<144xf32, #tpu.memory_space<smem>>
    %1007 = vector.broadcast %1006 : f32 to vector<16x16xf32>
    %1008 = arith.mulf %1007, %993 : vector<16x16xf32>
    %1009 = arith.addf %992, %1008 : vector<16x16xf32>
    %1010 = vector.extract_strided_slice %643 {offsets = [2, 4], sizes = [16, 16], strides = [1, 1]} : vector<20x20xf32> to vector<16x16xf32>
    %c80_120 = arith.constant 80 : index
    %1011 = memref.load %arg3[%c80_120] : memref<144xf32, #tpu.memory_space<smem>>
    %1012 = vector.broadcast %1011 : f32 to vector<16x16xf32>
    %1013 = arith.mulf %1012, %1010 : vector<16x16xf32>
    %1014 = arith.addf %997, %1013 : vector<16x16xf32>
    %c81_121 = arith.constant 81 : index
    %1015 = memref.load %arg3[%c81_121] : memref<144xf32, #tpu.memory_space<smem>>
    %1016 = vector.broadcast %1015 : f32 to vector<16x16xf32>
    %1017 = arith.mulf %1016, %1010 : vector<16x16xf32>
    %1018 = arith.addf %1001, %1017 : vector<16x16xf32>
    %c82_122 = arith.constant 82 : index
    %1019 = memref.load %arg3[%c82_122] : memref<144xf32, #tpu.memory_space<smem>>
    %1020 = vector.broadcast %1019 : f32 to vector<16x16xf32>
    %1021 = arith.mulf %1020, %1010 : vector<16x16xf32>
    %1022 = arith.addf %1005, %1021 : vector<16x16xf32>
    %c83_123 = arith.constant 83 : index
    %1023 = memref.load %arg3[%c83_123] : memref<144xf32, #tpu.memory_space<smem>>
    %1024 = vector.broadcast %1023 : f32 to vector<16x16xf32>
    %1025 = arith.mulf %1024, %1010 : vector<16x16xf32>
    %1026 = arith.addf %1009, %1025 : vector<16x16xf32>
    %1027 = vector.extract_strided_slice %653 {offsets = [2, 4], sizes = [16, 16], strides = [1, 1]} : vector<20x20xf32> to vector<16x16xf32>
    %c84_124 = arith.constant 84 : index
    %1028 = memref.load %arg3[%c84_124] : memref<144xf32, #tpu.memory_space<smem>>
    %1029 = vector.broadcast %1028 : f32 to vector<16x16xf32>
    %1030 = arith.mulf %1029, %1027 : vector<16x16xf32>
    %1031 = arith.addf %1014, %1030 : vector<16x16xf32>
    %c85_125 = arith.constant 85 : index
    %1032 = memref.load %arg3[%c85_125] : memref<144xf32, #tpu.memory_space<smem>>
    %1033 = vector.broadcast %1032 : f32 to vector<16x16xf32>
    %1034 = arith.mulf %1033, %1027 : vector<16x16xf32>
    %1035 = arith.addf %1018, %1034 : vector<16x16xf32>
    %c86_126 = arith.constant 86 : index
    %1036 = memref.load %arg3[%c86_126] : memref<144xf32, #tpu.memory_space<smem>>
    %1037 = vector.broadcast %1036 : f32 to vector<16x16xf32>
    %1038 = arith.mulf %1037, %1027 : vector<16x16xf32>
    %1039 = arith.addf %1022, %1038 : vector<16x16xf32>
    %c87_127 = arith.constant 87 : index
    %1040 = memref.load %arg3[%c87_127] : memref<144xf32, #tpu.memory_space<smem>>
    %1041 = vector.broadcast %1040 : f32 to vector<16x16xf32>
    %1042 = arith.mulf %1041, %1027 : vector<16x16xf32>
    %1043 = arith.addf %1026, %1042 : vector<16x16xf32>
    %1044 = vector.extract_strided_slice %663 {offsets = [2, 4], sizes = [16, 16], strides = [1, 1]} : vector<20x20xf32> to vector<16x16xf32>
    %c88_128 = arith.constant 88 : index
    %1045 = memref.load %arg3[%c88_128] : memref<144xf32, #tpu.memory_space<smem>>
    %1046 = vector.broadcast %1045 : f32 to vector<16x16xf32>
    %1047 = arith.mulf %1046, %1044 : vector<16x16xf32>
    %1048 = arith.addf %1031, %1047 : vector<16x16xf32>
    %c89_129 = arith.constant 89 : index
    %1049 = memref.load %arg3[%c89_129] : memref<144xf32, #tpu.memory_space<smem>>
    %1050 = vector.broadcast %1049 : f32 to vector<16x16xf32>
    %1051 = arith.mulf %1050, %1044 : vector<16x16xf32>
    %1052 = arith.addf %1035, %1051 : vector<16x16xf32>
    %c90_130 = arith.constant 90 : index
    %1053 = memref.load %arg3[%c90_130] : memref<144xf32, #tpu.memory_space<smem>>
    %1054 = vector.broadcast %1053 : f32 to vector<16x16xf32>
    %1055 = arith.mulf %1054, %1044 : vector<16x16xf32>
    %1056 = arith.addf %1039, %1055 : vector<16x16xf32>
    %c91_131 = arith.constant 91 : index
    %1057 = memref.load %arg3[%c91_131] : memref<144xf32, #tpu.memory_space<smem>>
    %1058 = vector.broadcast %1057 : f32 to vector<16x16xf32>
    %1059 = arith.mulf %1058, %1044 : vector<16x16xf32>
    %1060 = arith.addf %1043, %1059 : vector<16x16xf32>
    %1061 = vector.extract_strided_slice %673 {offsets = [2, 4], sizes = [16, 16], strides = [1, 1]} : vector<20x20xf32> to vector<16x16xf32>
    %c92_132 = arith.constant 92 : index
    %1062 = memref.load %arg3[%c92_132] : memref<144xf32, #tpu.memory_space<smem>>
    %1063 = vector.broadcast %1062 : f32 to vector<16x16xf32>
    %1064 = arith.mulf %1063, %1061 : vector<16x16xf32>
    %1065 = arith.addf %1048, %1064 : vector<16x16xf32>
    %c93_133 = arith.constant 93 : index
    %1066 = memref.load %arg3[%c93_133] : memref<144xf32, #tpu.memory_space<smem>>
    %1067 = vector.broadcast %1066 : f32 to vector<16x16xf32>
    %1068 = arith.mulf %1067, %1061 : vector<16x16xf32>
    %1069 = arith.addf %1052, %1068 : vector<16x16xf32>
    %c94_134 = arith.constant 94 : index
    %1070 = memref.load %arg3[%c94_134] : memref<144xf32, #tpu.memory_space<smem>>
    %1071 = vector.broadcast %1070 : f32 to vector<16x16xf32>
    %1072 = arith.mulf %1071, %1061 : vector<16x16xf32>
    %1073 = arith.addf %1056, %1072 : vector<16x16xf32>
    %c95_135 = arith.constant 95 : index
    %1074 = memref.load %arg3[%c95_135] : memref<144xf32, #tpu.memory_space<smem>>
    %1075 = vector.broadcast %1074 : f32 to vector<16x16xf32>
    %1076 = arith.mulf %1075, %1061 : vector<16x16xf32>
    %1077 = arith.addf %1060, %1076 : vector<16x16xf32>
    %1078 = vector.extract_strided_slice %643 {offsets = [4, 0], sizes = [16, 16], strides = [1, 1]} : vector<20x20xf32> to vector<16x16xf32>
    %c96_136 = arith.constant 96 : index
    %1079 = memref.load %arg3[%c96_136] : memref<144xf32, #tpu.memory_space<smem>>
    %1080 = vector.broadcast %1079 : f32 to vector<16x16xf32>
    %1081 = arith.mulf %1080, %1078 : vector<16x16xf32>
    %1082 = arith.addf %1065, %1081 : vector<16x16xf32>
    %c97_137 = arith.constant 97 : index
    %1083 = memref.load %arg3[%c97_137] : memref<144xf32, #tpu.memory_space<smem>>
    %1084 = vector.broadcast %1083 : f32 to vector<16x16xf32>
    %1085 = arith.mulf %1084, %1078 : vector<16x16xf32>
    %1086 = arith.addf %1069, %1085 : vector<16x16xf32>
    %c98_138 = arith.constant 98 : index
    %1087 = memref.load %arg3[%c98_138] : memref<144xf32, #tpu.memory_space<smem>>
    %1088 = vector.broadcast %1087 : f32 to vector<16x16xf32>
    %1089 = arith.mulf %1088, %1078 : vector<16x16xf32>
    %1090 = arith.addf %1073, %1089 : vector<16x16xf32>
    %c99_139 = arith.constant 99 : index
    %1091 = memref.load %arg3[%c99_139] : memref<144xf32, #tpu.memory_space<smem>>
    %1092 = vector.broadcast %1091 : f32 to vector<16x16xf32>
    %1093 = arith.mulf %1092, %1078 : vector<16x16xf32>
    %1094 = arith.addf %1077, %1093 : vector<16x16xf32>
    %1095 = vector.extract_strided_slice %653 {offsets = [4, 0], sizes = [16, 16], strides = [1, 1]} : vector<20x20xf32> to vector<16x16xf32>
    %c100_140 = arith.constant 100 : index
    %1096 = memref.load %arg3[%c100_140] : memref<144xf32, #tpu.memory_space<smem>>
    %1097 = vector.broadcast %1096 : f32 to vector<16x16xf32>
    %1098 = arith.mulf %1097, %1095 : vector<16x16xf32>
    %1099 = arith.addf %1082, %1098 : vector<16x16xf32>
    %c101_141 = arith.constant 101 : index
    %1100 = memref.load %arg3[%c101_141] : memref<144xf32, #tpu.memory_space<smem>>
    %1101 = vector.broadcast %1100 : f32 to vector<16x16xf32>
    %1102 = arith.mulf %1101, %1095 : vector<16x16xf32>
    %1103 = arith.addf %1086, %1102 : vector<16x16xf32>
    %c102_142 = arith.constant 102 : index
    %1104 = memref.load %arg3[%c102_142] : memref<144xf32, #tpu.memory_space<smem>>
    %1105 = vector.broadcast %1104 : f32 to vector<16x16xf32>
    %1106 = arith.mulf %1105, %1095 : vector<16x16xf32>
    %1107 = arith.addf %1090, %1106 : vector<16x16xf32>
    %c103_143 = arith.constant 103 : index
    %1108 = memref.load %arg3[%c103_143] : memref<144xf32, #tpu.memory_space<smem>>
    %1109 = vector.broadcast %1108 : f32 to vector<16x16xf32>
    %1110 = arith.mulf %1109, %1095 : vector<16x16xf32>
    %1111 = arith.addf %1094, %1110 : vector<16x16xf32>
    %1112 = vector.extract_strided_slice %663 {offsets = [4, 0], sizes = [16, 16], strides = [1, 1]} : vector<20x20xf32> to vector<16x16xf32>
    %c104_144 = arith.constant 104 : index
    %1113 = memref.load %arg3[%c104_144] : memref<144xf32, #tpu.memory_space<smem>>
    %1114 = vector.broadcast %1113 : f32 to vector<16x16xf32>
    %1115 = arith.mulf %1114, %1112 : vector<16x16xf32>
    %1116 = arith.addf %1099, %1115 : vector<16x16xf32>
    %c105_145 = arith.constant 105 : index
    %1117 = memref.load %arg3[%c105_145] : memref<144xf32, #tpu.memory_space<smem>>
    %1118 = vector.broadcast %1117 : f32 to vector<16x16xf32>
    %1119 = arith.mulf %1118, %1112 : vector<16x16xf32>
    %1120 = arith.addf %1103, %1119 : vector<16x16xf32>
    %c106_146 = arith.constant 106 : index
    %1121 = memref.load %arg3[%c106_146] : memref<144xf32, #tpu.memory_space<smem>>
    %1122 = vector.broadcast %1121 : f32 to vector<16x16xf32>
    %1123 = arith.mulf %1122, %1112 : vector<16x16xf32>
    %1124 = arith.addf %1107, %1123 : vector<16x16xf32>
    %c107_147 = arith.constant 107 : index
    %1125 = memref.load %arg3[%c107_147] : memref<144xf32, #tpu.memory_space<smem>>
    %1126 = vector.broadcast %1125 : f32 to vector<16x16xf32>
    %1127 = arith.mulf %1126, %1112 : vector<16x16xf32>
    %1128 = arith.addf %1111, %1127 : vector<16x16xf32>
    %1129 = vector.extract_strided_slice %673 {offsets = [4, 0], sizes = [16, 16], strides = [1, 1]} : vector<20x20xf32> to vector<16x16xf32>
    %c108_148 = arith.constant 108 : index
    %1130 = memref.load %arg3[%c108_148] : memref<144xf32, #tpu.memory_space<smem>>
    %1131 = vector.broadcast %1130 : f32 to vector<16x16xf32>
    %1132 = arith.mulf %1131, %1129 : vector<16x16xf32>
    %1133 = arith.addf %1116, %1132 : vector<16x16xf32>
    %c109_149 = arith.constant 109 : index
    %1134 = memref.load %arg3[%c109_149] : memref<144xf32, #tpu.memory_space<smem>>
    %1135 = vector.broadcast %1134 : f32 to vector<16x16xf32>
    %1136 = arith.mulf %1135, %1129 : vector<16x16xf32>
    %1137 = arith.addf %1120, %1136 : vector<16x16xf32>
    %c110_150 = arith.constant 110 : index
    %1138 = memref.load %arg3[%c110_150] : memref<144xf32, #tpu.memory_space<smem>>
    %1139 = vector.broadcast %1138 : f32 to vector<16x16xf32>
    %1140 = arith.mulf %1139, %1129 : vector<16x16xf32>
    %1141 = arith.addf %1124, %1140 : vector<16x16xf32>
    %c111_151 = arith.constant 111 : index
    %1142 = memref.load %arg3[%c111_151] : memref<144xf32, #tpu.memory_space<smem>>
    %1143 = vector.broadcast %1142 : f32 to vector<16x16xf32>
    %1144 = arith.mulf %1143, %1129 : vector<16x16xf32>
    %1145 = arith.addf %1128, %1144 : vector<16x16xf32>
    %1146 = vector.extract_strided_slice %643 {offsets = [4, 2], sizes = [16, 16], strides = [1, 1]} : vector<20x20xf32> to vector<16x16xf32>
    %c112_152 = arith.constant 112 : index
    %1147 = memref.load %arg3[%c112_152] : memref<144xf32, #tpu.memory_space<smem>>
    %1148 = vector.broadcast %1147 : f32 to vector<16x16xf32>
    %1149 = arith.mulf %1148, %1146 : vector<16x16xf32>
    %1150 = arith.addf %1133, %1149 : vector<16x16xf32>
    %c113_153 = arith.constant 113 : index
    %1151 = memref.load %arg3[%c113_153] : memref<144xf32, #tpu.memory_space<smem>>
    %1152 = vector.broadcast %1151 : f32 to vector<16x16xf32>
    %1153 = arith.mulf %1152, %1146 : vector<16x16xf32>
    %1154 = arith.addf %1137, %1153 : vector<16x16xf32>
    %c114_154 = arith.constant 114 : index
    %1155 = memref.load %arg3[%c114_154] : memref<144xf32, #tpu.memory_space<smem>>
    %1156 = vector.broadcast %1155 : f32 to vector<16x16xf32>
    %1157 = arith.mulf %1156, %1146 : vector<16x16xf32>
    %1158 = arith.addf %1141, %1157 : vector<16x16xf32>
    %c115_155 = arith.constant 115 : index
    %1159 = memref.load %arg3[%c115_155] : memref<144xf32, #tpu.memory_space<smem>>
    %1160 = vector.broadcast %1159 : f32 to vector<16x16xf32>
    %1161 = arith.mulf %1160, %1146 : vector<16x16xf32>
    %1162 = arith.addf %1145, %1161 : vector<16x16xf32>
    %1163 = vector.extract_strided_slice %653 {offsets = [4, 2], sizes = [16, 16], strides = [1, 1]} : vector<20x20xf32> to vector<16x16xf32>
    %c116_156 = arith.constant 116 : index
    %1164 = memref.load %arg3[%c116_156] : memref<144xf32, #tpu.memory_space<smem>>
    %1165 = vector.broadcast %1164 : f32 to vector<16x16xf32>
    %1166 = arith.mulf %1165, %1163 : vector<16x16xf32>
    %1167 = arith.addf %1150, %1166 : vector<16x16xf32>
    %c117_157 = arith.constant 117 : index
    %1168 = memref.load %arg3[%c117_157] : memref<144xf32, #tpu.memory_space<smem>>
    %1169 = vector.broadcast %1168 : f32 to vector<16x16xf32>
    %1170 = arith.mulf %1169, %1163 : vector<16x16xf32>
    %1171 = arith.addf %1154, %1170 : vector<16x16xf32>
    %c118_158 = arith.constant 118 : index
    %1172 = memref.load %arg3[%c118_158] : memref<144xf32, #tpu.memory_space<smem>>
    %1173 = vector.broadcast %1172 : f32 to vector<16x16xf32>
    %1174 = arith.mulf %1173, %1163 : vector<16x16xf32>
    %1175 = arith.addf %1158, %1174 : vector<16x16xf32>
    %c119_159 = arith.constant 119 : index
    %1176 = memref.load %arg3[%c119_159] : memref<144xf32, #tpu.memory_space<smem>>
    %1177 = vector.broadcast %1176 : f32 to vector<16x16xf32>
    %1178 = arith.mulf %1177, %1163 : vector<16x16xf32>
    %1179 = arith.addf %1162, %1178 : vector<16x16xf32>
    %1180 = vector.extract_strided_slice %663 {offsets = [4, 2], sizes = [16, 16], strides = [1, 1]} : vector<20x20xf32> to vector<16x16xf32>
    %c120_160 = arith.constant 120 : index
    %1181 = memref.load %arg3[%c120_160] : memref<144xf32, #tpu.memory_space<smem>>
    %1182 = vector.broadcast %1181 : f32 to vector<16x16xf32>
    %1183 = arith.mulf %1182, %1180 : vector<16x16xf32>
    %1184 = arith.addf %1167, %1183 : vector<16x16xf32>
    %c121_161 = arith.constant 121 : index
    %1185 = memref.load %arg3[%c121_161] : memref<144xf32, #tpu.memory_space<smem>>
    %1186 = vector.broadcast %1185 : f32 to vector<16x16xf32>
    %1187 = arith.mulf %1186, %1180 : vector<16x16xf32>
    %1188 = arith.addf %1171, %1187 : vector<16x16xf32>
    %c122_162 = arith.constant 122 : index
    %1189 = memref.load %arg3[%c122_162] : memref<144xf32, #tpu.memory_space<smem>>
    %1190 = vector.broadcast %1189 : f32 to vector<16x16xf32>
    %1191 = arith.mulf %1190, %1180 : vector<16x16xf32>
    %1192 = arith.addf %1175, %1191 : vector<16x16xf32>
    %c123_163 = arith.constant 123 : index
    %1193 = memref.load %arg3[%c123_163] : memref<144xf32, #tpu.memory_space<smem>>
    %1194 = vector.broadcast %1193 : f32 to vector<16x16xf32>
    %1195 = arith.mulf %1194, %1180 : vector<16x16xf32>
    %1196 = arith.addf %1179, %1195 : vector<16x16xf32>
    %1197 = vector.extract_strided_slice %673 {offsets = [4, 2], sizes = [16, 16], strides = [1, 1]} : vector<20x20xf32> to vector<16x16xf32>
    %c124_164 = arith.constant 124 : index
    %1198 = memref.load %arg3[%c124_164] : memref<144xf32, #tpu.memory_space<smem>>
    %1199 = vector.broadcast %1198 : f32 to vector<16x16xf32>
    %1200 = arith.mulf %1199, %1197 : vector<16x16xf32>
    %1201 = arith.addf %1184, %1200 : vector<16x16xf32>
    %c125_165 = arith.constant 125 : index
    %1202 = memref.load %arg3[%c125_165] : memref<144xf32, #tpu.memory_space<smem>>
    %1203 = vector.broadcast %1202 : f32 to vector<16x16xf32>
    %1204 = arith.mulf %1203, %1197 : vector<16x16xf32>
    %1205 = arith.addf %1188, %1204 : vector<16x16xf32>
    %c126_166 = arith.constant 126 : index
    %1206 = memref.load %arg3[%c126_166] : memref<144xf32, #tpu.memory_space<smem>>
    %1207 = vector.broadcast %1206 : f32 to vector<16x16xf32>
    %1208 = arith.mulf %1207, %1197 : vector<16x16xf32>
    %1209 = arith.addf %1192, %1208 : vector<16x16xf32>
    %c127_167 = arith.constant 127 : index
    %1210 = memref.load %arg3[%c127_167] : memref<144xf32, #tpu.memory_space<smem>>
    %1211 = vector.broadcast %1210 : f32 to vector<16x16xf32>
    %1212 = arith.mulf %1211, %1197 : vector<16x16xf32>
    %1213 = arith.addf %1196, %1212 : vector<16x16xf32>
    %1214 = vector.extract_strided_slice %643 {offsets = [4, 4], sizes = [16, 16], strides = [1, 1]} : vector<20x20xf32> to vector<16x16xf32>
    %c128_168 = arith.constant 128 : index
    %1215 = memref.load %arg3[%c128_168] : memref<144xf32, #tpu.memory_space<smem>>
    %1216 = vector.broadcast %1215 : f32 to vector<16x16xf32>
    %1217 = arith.mulf %1216, %1214 : vector<16x16xf32>
    %1218 = arith.addf %1201, %1217 : vector<16x16xf32>
    %c129_169 = arith.constant 129 : index
    %1219 = memref.load %arg3[%c129_169] : memref<144xf32, #tpu.memory_space<smem>>
    %1220 = vector.broadcast %1219 : f32 to vector<16x16xf32>
    %1221 = arith.mulf %1220, %1214 : vector<16x16xf32>
    %1222 = arith.addf %1205, %1221 : vector<16x16xf32>
    %c130_170 = arith.constant 130 : index
    %1223 = memref.load %arg3[%c130_170] : memref<144xf32, #tpu.memory_space<smem>>
    %1224 = vector.broadcast %1223 : f32 to vector<16x16xf32>
    %1225 = arith.mulf %1224, %1214 : vector<16x16xf32>
    %1226 = arith.addf %1209, %1225 : vector<16x16xf32>
    %c131_171 = arith.constant 131 : index
    %1227 = memref.load %arg3[%c131_171] : memref<144xf32, #tpu.memory_space<smem>>
    %1228 = vector.broadcast %1227 : f32 to vector<16x16xf32>
    %1229 = arith.mulf %1228, %1214 : vector<16x16xf32>
    %1230 = arith.addf %1213, %1229 : vector<16x16xf32>
    %1231 = vector.extract_strided_slice %653 {offsets = [4, 4], sizes = [16, 16], strides = [1, 1]} : vector<20x20xf32> to vector<16x16xf32>
    %c132_172 = arith.constant 132 : index
    %1232 = memref.load %arg3[%c132_172] : memref<144xf32, #tpu.memory_space<smem>>
    %1233 = vector.broadcast %1232 : f32 to vector<16x16xf32>
    %1234 = arith.mulf %1233, %1231 : vector<16x16xf32>
    %1235 = arith.addf %1218, %1234 : vector<16x16xf32>
    %c133_173 = arith.constant 133 : index
    %1236 = memref.load %arg3[%c133_173] : memref<144xf32, #tpu.memory_space<smem>>
    %1237 = vector.broadcast %1236 : f32 to vector<16x16xf32>
    %1238 = arith.mulf %1237, %1231 : vector<16x16xf32>
    %1239 = arith.addf %1222, %1238 : vector<16x16xf32>
    %c134_174 = arith.constant 134 : index
    %1240 = memref.load %arg3[%c134_174] : memref<144xf32, #tpu.memory_space<smem>>
    %1241 = vector.broadcast %1240 : f32 to vector<16x16xf32>
    %1242 = arith.mulf %1241, %1231 : vector<16x16xf32>
    %1243 = arith.addf %1226, %1242 : vector<16x16xf32>
    %c135_175 = arith.constant 135 : index
    %1244 = memref.load %arg3[%c135_175] : memref<144xf32, #tpu.memory_space<smem>>
    %1245 = vector.broadcast %1244 : f32 to vector<16x16xf32>
    %1246 = arith.mulf %1245, %1231 : vector<16x16xf32>
    %1247 = arith.addf %1230, %1246 : vector<16x16xf32>
    %1248 = vector.extract_strided_slice %663 {offsets = [4, 4], sizes = [16, 16], strides = [1, 1]} : vector<20x20xf32> to vector<16x16xf32>
    %c136_176 = arith.constant 136 : index
    %1249 = memref.load %arg3[%c136_176] : memref<144xf32, #tpu.memory_space<smem>>
    %1250 = vector.broadcast %1249 : f32 to vector<16x16xf32>
    %1251 = arith.mulf %1250, %1248 : vector<16x16xf32>
    %1252 = arith.addf %1235, %1251 : vector<16x16xf32>
    %c137_177 = arith.constant 137 : index
    %1253 = memref.load %arg3[%c137_177] : memref<144xf32, #tpu.memory_space<smem>>
    %1254 = vector.broadcast %1253 : f32 to vector<16x16xf32>
    %1255 = arith.mulf %1254, %1248 : vector<16x16xf32>
    %1256 = arith.addf %1239, %1255 : vector<16x16xf32>
    %c138_178 = arith.constant 138 : index
    %1257 = memref.load %arg3[%c138_178] : memref<144xf32, #tpu.memory_space<smem>>
    %1258 = vector.broadcast %1257 : f32 to vector<16x16xf32>
    %1259 = arith.mulf %1258, %1248 : vector<16x16xf32>
    %1260 = arith.addf %1243, %1259 : vector<16x16xf32>
    %c139_179 = arith.constant 139 : index
    %1261 = memref.load %arg3[%c139_179] : memref<144xf32, #tpu.memory_space<smem>>
    %1262 = vector.broadcast %1261 : f32 to vector<16x16xf32>
    %1263 = arith.mulf %1262, %1248 : vector<16x16xf32>
    %1264 = arith.addf %1247, %1263 : vector<16x16xf32>
    %1265 = vector.extract_strided_slice %673 {offsets = [4, 4], sizes = [16, 16], strides = [1, 1]} : vector<20x20xf32> to vector<16x16xf32>
    %c140_180 = arith.constant 140 : index
    %1266 = memref.load %arg3[%c140_180] : memref<144xf32, #tpu.memory_space<smem>>
    %1267 = vector.broadcast %1266 : f32 to vector<16x16xf32>
    %1268 = arith.mulf %1267, %1265 : vector<16x16xf32>
    %1269 = arith.addf %1252, %1268 : vector<16x16xf32>
    %c141_181 = arith.constant 141 : index
    %1270 = memref.load %arg3[%c141_181] : memref<144xf32, #tpu.memory_space<smem>>
    %1271 = vector.broadcast %1270 : f32 to vector<16x16xf32>
    %1272 = arith.mulf %1271, %1265 : vector<16x16xf32>
    %1273 = arith.addf %1256, %1272 : vector<16x16xf32>
    %c142_182 = arith.constant 142 : index
    %1274 = memref.load %arg3[%c142_182] : memref<144xf32, #tpu.memory_space<smem>>
    %1275 = vector.broadcast %1274 : f32 to vector<16x16xf32>
    %1276 = arith.mulf %1275, %1265 : vector<16x16xf32>
    %1277 = arith.addf %1260, %1276 : vector<16x16xf32>
    %c143_183 = arith.constant 143 : index
    %1278 = memref.load %arg3[%c143_183] : memref<144xf32, #tpu.memory_space<smem>>
    %1279 = vector.broadcast %1278 : f32 to vector<16x16xf32>
    %1280 = arith.mulf %1279, %1265 : vector<16x16xf32>
    %1281 = arith.addf %1264, %1280 : vector<16x16xf32>
    %c0_184 = arith.constant 0 : index
    %c0_185 = arith.constant 0 : index
    %c0_186 = arith.constant 0 : index
    %c0_187 = arith.constant 0 : index
    %1282 = vector.load %arg5[%c0_184, %c0_185, %c0_186, %c0_187] : memref<1x4x16x16xf32, #tpu.memory_space<vmem>>, vector<1x1x16x16xf32>
    %1283 = vector.shape_cast %1282 : vector<1x1x16x16xf32> to vector<16x16xf32>
    %c0_188 = arith.constant 0 : index
    %1284 = memref.load %arg4[%c0_188] : memref<4xf32, #tpu.memory_space<smem>>
    %1285 = vector.broadcast %1284 : f32 to vector<16x16xf32>
    %1286 = arith.addf %1269, %1285 : vector<16x16xf32>
    %1287 = arith.addf %1286, %1283 : vector<16x16xf32>
    %c0_189 = arith.constant 0 : index
    %c0_190 = arith.constant 0 : index
    %c0_191 = arith.constant 0 : index
    %c0_192 = arith.constant 0 : index
    %1288 = vector.load %arg6[%c0_189, %c0_190, %c0_191, %c0_192] : memref<1x4x16x16xf32, #tpu.memory_space<vmem>>, vector<1x1x16x16xf32>
    %1289 = vector.shape_cast %1288 : vector<1x1x16x16xf32> to vector<16x16xf32>
    %1290 = vector.shape_cast %1287 : vector<16x16xf32> to vector<1x1x16x16xf32>
    tpu.vector_store %arg6[%c0_189, %c0_190, %c0_191, %c0_192], %1290 {strides = array<i32>} : memref<1x4x16x16xf32, #tpu.memory_space<vmem>>, vector<1x1x16x16xf32>,
    %c0_193 = arith.constant 0 : index
    %c1_194 = arith.constant 1 : index
    %c0_195 = arith.constant 0 : index
    %c0_196 = arith.constant 0 : index
    %1291 = vector.load %arg5[%c0_193, %c1_194, %c0_195, %c0_196] : memref<1x4x16x16xf32, #tpu.memory_space<vmem>>, vector<1x1x16x16xf32>
    %1292 = vector.shape_cast %1291 : vector<1x1x16x16xf32> to vector<16x16xf32>
    %c1_197 = arith.constant 1 : index
    %1293 = memref.load %arg4[%c1_197] : memref<4xf32, #tpu.memory_space<smem>>
    %1294 = vector.broadcast %1293 : f32 to vector<16x16xf32>
    %1295 = arith.addf %1273, %1294 : vector<16x16xf32>
    %1296 = arith.addf %1295, %1292 : vector<16x16xf32>
    %c0_198 = arith.constant 0 : index
    %c1_199 = arith.constant 1 : index
    %c0_200 = arith.constant 0 : index
    %c0_201 = arith.constant 0 : index
    %1297 = vector.load %arg6[%c0_198, %c1_199, %c0_200, %c0_201] : memref<1x4x16x16xf32, #tpu.memory_space<vmem>>, vector<1x1x16x16xf32>
    %1298 = vector.shape_cast %1297 : vector<1x1x16x16xf32> to vector<16x16xf32>
    %1299 = vector.shape_cast %1296 : vector<16x16xf32> to vector<1x1x16x16xf32>
    tpu.vector_store %arg6[%c0_198, %c1_199, %c0_200, %c0_201], %1299 {strides = array<i32>} : memref<1x4x16x16xf32, #tpu.memory_space<vmem>>, vector<1x1x16x16xf32>,
    %c0_202 = arith.constant 0 : index
    %c2_203 = arith.constant 2 : index
    %c0_204 = arith.constant 0 : index
    %c0_205 = arith.constant 0 : index
    %1300 = vector.load %arg5[%c0_202, %c2_203, %c0_204, %c0_205] : memref<1x4x16x16xf32, #tpu.memory_space<vmem>>, vector<1x1x16x16xf32>
    %1301 = vector.shape_cast %1300 : vector<1x1x16x16xf32> to vector<16x16xf32>
    %c2_206 = arith.constant 2 : index
    %1302 = memref.load %arg4[%c2_206] : memref<4xf32, #tpu.memory_space<smem>>
    %1303 = vector.broadcast %1302 : f32 to vector<16x16xf32>
    %1304 = arith.addf %1277, %1303 : vector<16x16xf32>
    %1305 = arith.addf %1304, %1301 : vector<16x16xf32>
    %c0_207 = arith.constant 0 : index
    %c2_208 = arith.constant 2 : index
    %c0_209 = arith.constant 0 : index
    %c0_210 = arith.constant 0 : index
    %1306 = vector.load %arg6[%c0_207, %c2_208, %c0_209, %c0_210] : memref<1x4x16x16xf32, #tpu.memory_space<vmem>>, vector<1x1x16x16xf32>
    %1307 = vector.shape_cast %1306 : vector<1x1x16x16xf32> to vector<16x16xf32>
    %1308 = vector.shape_cast %1305 : vector<16x16xf32> to vector<1x1x16x16xf32>
    tpu.vector_store %arg6[%c0_207, %c2_208, %c0_209, %c0_210], %1308 {strides = array<i32>} : memref<1x4x16x16xf32, #tpu.memory_space<vmem>>, vector<1x1x16x16xf32>,
    %c0_211 = arith.constant 0 : index
    %c3_212 = arith.constant 3 : index
    %c0_213 = arith.constant 0 : index
    %c0_214 = arith.constant 0 : index
    %1309 = vector.load %arg5[%c0_211, %c3_212, %c0_213, %c0_214] : memref<1x4x16x16xf32, #tpu.memory_space<vmem>>, vector<1x1x16x16xf32>
    %1310 = vector.shape_cast %1309 : vector<1x1x16x16xf32> to vector<16x16xf32>
    %c3_215 = arith.constant 3 : index
    %1311 = memref.load %arg4[%c3_215] : memref<4xf32, #tpu.memory_space<smem>>
    %1312 = vector.broadcast %1311 : f32 to vector<16x16xf32>
    %1313 = arith.addf %1281, %1312 : vector<16x16xf32>
    %1314 = arith.addf %1313, %1310 : vector<16x16xf32>
    %c0_216 = arith.constant 0 : index
    %c3_217 = arith.constant 3 : index
    %c0_218 = arith.constant 0 : index
    %c0_219 = arith.constant 0 : index
    %1315 = vector.load %arg6[%c0_216, %c3_217, %c0_218, %c0_219] : memref<1x4x16x16xf32, #tpu.memory_space<vmem>>, vector<1x1x16x16xf32>
    %1316 = vector.shape_cast %1315 : vector<1x1x16x16xf32> to vector<16x16xf32>
    %1317 = vector.shape_cast %1314 : vector<16x16xf32> to vector<1x1x16x16xf32>
    tpu.vector_store %arg6[%c0_216, %c3_217, %c0_218, %c0_219], %1317 {strides = array<i32>} : memref<1x4x16x16xf32, #tpu.memory_space<vmem>>, vector<1x1x16x16xf32>,
    return
  }
  func.func @transform_0(%arg0: i32) -> i32 {
    %c0_i32 = arith.constant 0 : i32
    %c0_i32_0 = arith.constant 0 : i32
    return %c0_i32 : i32
  }
  func.func @transform_1(%arg0: i32) -> i32 {
    %c0_i32 = arith.constant 0 : i32
    %c0_i32_0 = arith.constant 0 : i32
    return %c0_i32 : i32
  }
  func.func @transform_2(%arg0: i32) -> i32 {
    %c0_i32 = arith.constant 0 : i32
    %c0_i32_0 = arith.constant 0 : i32
    return %c0_i32 : i32
  }
  func.func @transform_3(%arg0: i32) -> i32 {
    %c0_i32 = arith.constant 0 : i32
    %c0_i32_0 = arith.constant 0 : i32
    return %c0_i32 : i32
  }
  func.func @transform_4(%arg0: i32) -> (i32, i32, i32, i32) {
    %c0_i32 = arith.constant 0 : i32
    %c0_i32_0 = arith.constant 0 : i32
    %c0_i32_1 = arith.constant 0 : i32
    %c0_i32_2 = arith.constant 0 : i32
    return %arg0, %c0_i32, %c0_i32_0, %c0_i32_1 : i32, i32, i32, i32
  }
  func.func @transform_5(%arg0: i32) -> (i32, i32, i32, i32) {
    %c0_i32 = arith.constant 0 : i32
    %c0_i32_0 = arith.constant 0 : i32
    %c0_i32_1 = arith.constant 0 : i32
    %c0_i32_2 = arith.constant 0 : i32
    return %arg0, %c0_i32, %c0_i32_0, %c0_i32_1 : i32, i32, i32, i32
  }
}

</mosaic_0001>

<llo_original>
// kernel: tpu_custom_call.1
$region0: #{tpu_custom_call.1}
  #allocation0 [shape = 'u32[]', space=smem, size = 0x4, offset = 0x4, fixed_abs, tag = 'smem constant byte address 0x4 - core index']
  #allocation1 [shape = 'u32[144,128]{1,0:T(1,128)}', space=vmem, size = 0x12000, scoped, tag = 'internal scratch']
  #allocation2 [shape = 'f32[4,22,22]{2,1,0:T(8,128)}', space=vmem, size = 0xc000, scoped, tag = 'scratch operand']
  %s0 = inlined_call_operand.hbm [shape: f32[144], index: 0, kind: input, shape index: {}]
  %s1 = inlined_call_operand.vmem [shape: f32[4], index: 1, kind: input, shape index: {}]
  %s2 = inlined_call_operand.vmem [shape: f32[144], index: 2, kind: input, shape index: {}]
  %s3 = inlined_call_operand.vmem [shape: f32[4], index: 3, kind: input, shape index: {}]
  %s4 = inlined_call_operand.hbm [shape: f32[2,4,16,16], index: 4, kind: input, shape index: {}]
  %s5 = inlined_call_operand.hbm [shape: f32[2,4,16,16], index: 5, kind: output, shape index: {}]
  %s6 = sld [smem:[#allocation0]]
  $region73: #{tpu_custom_call.1} parent=0
    _
  %s8 = ssub.s32 1, %s6
  %s9 = scalar_select 0, %s8, %s6
  $region1: #{tpu_custom_call.1} parent=0
    #allocation3 [shape = 'u8[1024]{0}', space=smem, size = 0x400, scoped, tag = 'input window, operand 0, single buffered']
    #allocation4 [shape = 's32[2]{0}', space=sflag, size = 0x8, scoped, tag = 'scoped memory for tpu_custom_call.1']
    #allocation5 [shape = 's32[2]{0}', space=sflag, size = 0x8, scoped, tag = 'scoped memory for tpu_custom_call.1']
    #allocation6 [shape = 's32[2]{0}', space=sflag, size = 0x8, scoped, tag = 'scoped memory for tpu_custom_call.1']
    #allocation7 [shape = 's32[2]{0}', space=sflag, size = 0x8, scoped, tag = 'scoped memory for tpu_custom_call.1']
    #allocation8 [shape = 'u8[512]{0}', space=smem, size = 0x200, scoped, tag = 'input window, operand 1, single buffered']
    #allocation9 [shape = 'u8[1024]{0}', space=smem, size = 0x400, scoped, tag = 'input window, operand 2, single buffered']
    #allocation10 [shape = 's32[1]{0}', space=sflag, size = 0x4, scoped, tag = 'scoped memory for tpu_custom_call.1']
    #allocation11 [shape = 'u8[512]{0}', space=smem, size = 0x200, scoped, tag = 'input window, operand 3, single buffered']
    #allocation12 [shape = 'u8[65536]{0}', space=vmem, size = 0x10000, scoped, tag = 'input window, operand 4']
    #allocation13 [shape = 'u8[65536]{0}', space=vmem, size = 0x10000, scoped, tag = 'output window, operand 0']
    %10 = vsyncpa [#allocation6], 0
    %11 = vsyncpa [#allocation7], 0
    %12 = vsyncpa [#allocation10], 0
    %13 = vsyncpa [#allocation4], 0
    %s14 = scalar_lea.sflag [#allocation4], 1
    %15 = vsyncpa %s14, 0
    %16 = vsyncpa [#allocation5], 0
    %s17 = scalar_lea.sflag [#allocation5], 1
    %18 = vsyncpa %s17, 0
    loop: start=0, step=1, limit=4
    $region2: #{tpu_custom_call.1} parent=1 // loop_pre_header
      _
    $region3: #{tpu_custom_call.1} parent=1 // loop_header
      %s20 = sphi 0, %s24
      %p21 = scmp.ge.s32.totalorder %s20, 4
      %s28 = sphi 0, %s28
      %s30 = sphi 0, %s28
      %s31 = sphi 0, %s30
      %s45 = sphi 0, %s31
      %s49 = sphi 0, %s49
      %s51 = sphi 0, %s49
      %s52 = sphi 0, %s51
      %s66 = sphi 0, %s52
      %s70 = sphi 0, %s70
      %s72 = sphi 0, %s70
      %s73 = sphi 0, %s72
      %s87 = sphi 0, %s73
      %s91 = sphi 0, %s91
      %s93 = sphi 0, %s91
      %s94 = sphi 0, %s93
      %s108 = sphi 0, %s94
      %s114 = sphi 0, %s116
      %s117 = sphi 0, %s114
      %s118 = sphi 0, %s117
      %s134 = sphi 0, %s118
      %s140 = sphi 0, %s142
      %s143 = sphi 0, %s140
      %s144 = sphi 0, %s143
      %s160 = sphi 0, %s144
    $region4: #{tpu_custom_call.1} parent=1 // loop_header_branch
      %23 = sbr.rel (%p21) target = $region8
    $region5: #{tpu_custom_call.1} parent=1 // loop_body
      %s25 = ssub.s32 %s20, 1
      %s26 = ssub.s32 %s20, 2
      %s27 = sadd.s32 %s20, 1
      %s29 = sadd.s32 %s28, 1
      %p32 = scmp.eq.s32.totalorder %s20, 1
      %p33 = scmp.ne.s32.totalorder %s28, %s30
      %p34 = scmp.eq.s32.totalorder %s20, 0
      %p35 = por %p33, %p34
      %p36 = scmp.ne.s32.totalorder %s28, %s30
      %p37 = scmp.eq.s32.totalorder %s25, 1
      %p38 = por %p36, %p37
      %p39 = scmp.ne.s32.totalorder %s30, %s31
      %p40 = scmp.eq.s32.totalorder %s25, 0
      %p41 = por %p39, %p40
      %p42 = scmp.ne.s32.totalorder %s30, %s31
      %p43 = scmp.eq.s32.totalorder %s26, 1
      %p44 = por %p42, %p43
      %p46 = scmp.ne.s32.totalorder %s31, %s45
      %p47 = scmp.eq.s32.totalorder %s26, 0
      %p48 = por %p46, %p47
      %s50 = sadd.s32 %s49, 1
      %p53 = scmp.eq.s32.totalorder %s20, 1
      %p54 = scmp.ne.s32.totalorder %s49, %s51
      %p55 = scmp.eq.s32.totalorder %s20, 0
      %p56 = por %p54, %p55
      %p57 = scmp.ne.s32.totalorder %s49, %s51
      %p58 = scmp.eq.s32.totalorder %s25, 1
      %p59 = por %p57, %p58
      %p60 = scmp.ne.s32.totalorder %s51, %s52
      %p61 = scmp.eq.s32.totalorder %s25, 0
      %p62 = por %p60, %p61
      %p63 = scmp.ne.s32.totalorder %s51, %s52
      %p64 = scmp.eq.s32.totalorder %s26, 1
      %p65 = por %p63, %p64
      %p67 = scmp.ne.s32.totalorder %s52, %s66
      %p68 = scmp.eq.s32.totalorder %s26, 0
      %p69 = por %p67, %p68
      %s71 = sadd.s32 %s70, 1
      %p74 = scmp.eq.s32.totalorder %s20, 1
      %p75 = scmp.ne.s32.totalorder %s70, %s72
      %p76 = scmp.eq.s32.totalorder %s20, 0
      %p77 = por %p75, %p76
      %p78 = scmp.ne.s32.totalorder %s70, %s72
      %p79 = scmp.eq.s32.totalorder %s25, 1
      %p80 = por %p78, %p79
      %p81 = scmp.ne.s32.totalorder %s72, %s73
      %p82 = scmp.eq.s32.totalorder %s25, 0
      %p83 = por %p81, %p82
      %p84 = scmp.ne.s32.totalorder %s72, %s73
      %p85 = scmp.eq.s32.totalorder %s26, 1
      %p86 = por %p84, %p85
      %p88 = scmp.ne.s32.totalorder %s73, %s87
      %p89 = scmp.eq.s32.totalorder %s26, 0
      %p90 = por %p88, %p89
      %s92 = sadd.s32 %s91, 1
      %p95 = scmp.eq.s32.totalorder %s20, 1
      %p96 = scmp.ne.s32.totalorder %s91, %s93
      %p97 = scmp.eq.s32.totalorder %s20, 0
      %p98 = por %p96, %p97
      %p99 = scmp.ne.s32.totalorder %s91, %s93
      %p100 = scmp.eq.s32.totalorder %s25, 1
      %p101 = por %p99, %p100
      %p102 = scmp.ne.s32.totalorder %s93, %s94
      %p103 = scmp.eq.s32.totalorder %s25, 0
      %p104 = por %p102, %p103
      %p105 = scmp.ne.s32.totalorder %s93, %s94
      %p106 = scmp.eq.s32.totalorder %s26, 1
      %p107 = por %p105, %p106
      %p109 = scmp.ne.s32.totalorder %s94, %s108
      %p110 = scmp.eq.s32.totalorder %s26, 0
      %p111 = por %p109, %p110
      %s112 = ssub.s32 %s20, %s27
      %p113 = scmp.eq.s32.totalorder %s112, 0
      %s115 = sadd.s32 %s114, 1
      %s116 = scalar_select %p113, %s114, %s115
      %p119 = pneg %p113
      %p120 = scmp.eq.s32.totalorder %s20, 1
      %p121 = por %p119, %p120
      %p122 = scmp.ne.s32.totalorder %s114, %s117
      %p123 = scmp.eq.s32.totalorder %s20, 0
      %p124 = por %p122, %p123
      %p125 = scmp.ne.s32.totalorder %s114, %s117
      %p126 = scmp.eq.s32.totalorder %s25, 1
      %p127 = por %p125, %p126
      %p128 = scmp.ne.s32.totalorder %s117, %s118
      %p129 = scmp.eq.s32.totalorder %s25, 0
      %p130 = por %p128, %p129
      %p131 = scmp.ne.s32.totalorder %s117, %s118
      %p132 = scmp.eq.s32.totalorder %s26, 1
      %p133 = por %p131, %p132
      %p135 = scmp.ne.s32.totalorder %s118, %s134
      %p136 = scmp.eq.s32.totalorder %s26, 0
      %p137 = por %p135, %p136
      %s138 = ssub.s32 %s20, %s27
      %p139 = scmp.eq.s32.totalorder %s138, 0
      %s141 = sadd.s32 %s140, 1
      %s142 = scalar_select %p139, %s140, %s141
      %p145 = pneg %p139
      %p146 = scmp.eq.s32.totalorder %s20, 1
      %p147 = por %p145, %p146
      %p148 = scmp.ne.s32.totalorder %s140, %s143
      %p149 = scmp.eq.s32.totalorder %s20, 0
      %p150 = por %p148, %p149
      %p151 = scmp.ne.s32.totalorder %s140, %s143
      %p152 = scmp.eq.s32.totalorder %s25, 1
      %p153 = por %p151, %p152
      %p154 = scmp.ne.s32.totalorder %s143, %s144
      %p155 = scmp.eq.s32.totalorder %s25, 0
      %p156 = por %p154, %p155
      %p157 = scmp.ne.s32.totalorder %s143, %s144
      %p158 = scmp.eq.s32.totalorder %s26, 1
      %p159 = por %p157, %p158
      %p161 = scmp.ne.s32.totalorder %s144, %s160
      %p162 = scmp.eq.s32.totalorder %s26, 0
      %p163 = por %p161, %p162
      %p164 = scmp.le.s32.totalorder 1, %s20
      %p165 = scmp.lt.s32.totalorder %s20, 3
      %p166 = pnand %p164, %p165
      %p167 = pneg %p166
      // Predicated region
      $region9: #{tpu_custom_call.1} parent=5 // pred_check
        _
      $region10: #{tpu_custom_call.1} parent=5 // pred_check_branch
        %169 = sbr.rel (%p166) target = $region12
      $region11: #{tpu_custom_call.1} parent=5 // pred_region
        %s170 = ssub.s32 %s20, 1
        // Predicated region
        $region13: #{tpu_custom_call.1} parent=11 // pred_check
          %p171 = pneg %p41
        $region14: #{tpu_custom_call.1} parent=11 // pred_check_branch
          %173 = sbr.rel (%p171) target = $region16
        $region15: #{tpu_custom_call.1} parent=11 // pred_region
          %s175 = ssub.s32 32, 32
          %176 = vsyncadd [#allocation6], %s175
          %179 = dma.hbm_to_smem %s0, 32, [#allocation3], [#allocation6]
        $region16: #{tpu_custom_call.1} parent=11 // pred_fallthru
          _
        // Predicated region
        $region17: #{tpu_custom_call.1} parent=11 // pred_check
          %p180 = pneg %p62
        $region18: #{tpu_custom_call.1} parent=11 // pred_check_branch
          %182 = sbr.rel (%p180) target = $region20
        $region19: #{tpu_custom_call.1} parent=11 // pred_region
          %s184 = ssub.s32 16, 16
          %185 = vsyncadd [#allocation7], %s184
          %s187 = sshll.u32 %s1, 4
          %s188 = int_to_ptr.vmem [resolvable:$true] %s187
          %190 = dma.vmem_to_smem %s188, 16, [#allocation8], [#allocation7]
        $region20: #{tpu_custom_call.1} parent=11 // pred_fallthru
          _
        // Predicated region
        $region21: #{tpu_custom_call.1} parent=11 // pred_check
          %p191 = pneg %p83
        $region22: #{tpu_custom_call.1} parent=11 // pred_check_branch
          %193 = sbr.rel (%p191) target = $region24
        $region23: #{tpu_custom_call.1} parent=11 // pred_region
          %s195 = ssub.s32 32, 32
          %196 = vsyncadd [#allocation10], %s195
          %s198 = sshll.u32 %s2, 4
          %s199 = int_to_ptr.vmem [resolvable:$true] %s198
          %201 = dma.vmem_to_smem %s199, 32, [#allocation9], [#allocation10]
        $region24: #{tpu_custom_call.1} parent=11 // pred_fallthru
          _
        // Predicated region
        $region25: #{tpu_custom_call.1} parent=11 // pred_check
          %p202 = pneg %p104
        $region26: #{tpu_custom_call.1} parent=11 // pred_check_branch
          %204 = sbr.rel (%p202) target = $region28
        $region27: #{tpu_custom_call.1} parent=11 // pred_region
          %s206 = ssub.s32 16, 16
          %207 = vsyncadd [#allocation10], %s206
          %s209 = sshll.u32 %s3, 4
          %s210 = int_to_ptr.vmem [resolvable:$true] %s209
          %212 = dma.vmem_to_smem %s210, 16, [#allocation11], [#allocation10]
        $region28: #{tpu_custom_call.1} parent=11 // pred_fallthru
          _
      $region12: #{tpu_custom_call.1} parent=5 // pred_fallthru
        _
      %p213 = scmp.lt.s32.totalorder %s20, 2
      // Predicated region
      $region29: #{tpu_custom_call.1} parent=5 // pred_check
        %p214 = pneg %p213
      $region30: #{tpu_custom_call.1} parent=5 // pred_check_branch
        %216 = sbr.rel (%p214) target = $region32
      $region31: #{tpu_custom_call.1} parent=5 // pred_region
        // Predicated region
        $region33: #{tpu_custom_call.1} parent=31 // pred_check
          %p217 = pneg %p124
        $region34: #{tpu_custom_call.1} parent=31 // pred_check_branch
          %219 = sbr.rel (%p217) target = $region36
        $region35: #{tpu_custom_call.1} parent=31 // pred_region
          %s220 = sand.u32 %s114, 1
          %s221 = scalar_lea.sflag [#allocation4], %s220
          %s222 = sand.u32 %s114, 1
          %s223 = smul.addr %s222, 64
          %s224 = scalar_lea.vmem [#allocation12], %s223
          %s226 = ssub.s32 1024, 1024
          %227 = vsyncadd %s221, %s226
          %s228 = smul.addr %s20, 8
          %s229 = smul.addr %s228, 128
          %s230 = scalar_lea.hbm %s4, %s229
          %s231 = sshll.u32 %s224, 4
          %s232 = int_to_ptr.vmem [resolvable:$true] %s231
          %237 = dma.hbm_to_vmem [thread:$0]  %s230, 1024, %s232, %s221, 128, 128, 8
        $region36: #{tpu_custom_call.1} parent=31 // pred_fallthru
          _
      $region32: #{tpu_custom_call.1} parent=5 // pred_fallthru
        _
      %p238 = scmp.le.s32.totalorder 1, %s20
      %p239 = scmp.lt.s32.totalorder %s20, 3
      %p240 = pnand %p238, %p239
      %p241 = pneg %p240
      // Predicated region
      $region37: #{tpu_custom_call.1} parent=5 // pred_check
        _
      $region38: #{tpu_custom_call.1} parent=5 // pred_check_branch
        %243 = sbr.rel (%p240) target = $region40
      $region39: #{tpu_custom_call.1} parent=5 // pred_region
        %s244 = ssub.s32 %s20, 1
        // Predicated region
        $region41: #{tpu_custom_call.1} parent=39 // pred_check
          %p245 = pneg %p41
        $region42: #{tpu_custom_call.1} parent=39 // pred_check_branch
          %247 = sbr.rel (%p245) target = $region44
        $region43: #{tpu_custom_call.1} parent=39 // pred_region
          %248 = dma.done [#allocation6], 32
        $region44: #{tpu_custom_call.1} parent=39 // pred_fallthru
          _
        // Predicated region
        $region45: #{tpu_custom_call.1} parent=39 // pred_check
          %p249 = pneg %p62
        $region46: #{tpu_custom_call.1} parent=39 // pred_check_branch
          %251 = sbr.rel (%p249) target = $region48
        $region47: #{tpu_custom_call.1} parent=39 // pred_region
          %252 = dma.done [#allocation7], 16
        $region48: #{tpu_custom_call.1} parent=39 // pred_fallthru
          _
        // Predicated region
        $region49: #{tpu_custom_call.1} parent=39 // pred_check
          %p253 = pneg %p83
        $region50: #{tpu_custom_call.1} parent=39 // pred_check_branch
          %255 = sbr.rel (%p253) target = $region52
        $region51: #{tpu_custom_call.1} parent=39 // pred_region
          %256 = dma.done [#allocation10], 32
        $region52: #{tpu_custom_call.1} parent=39 // pred_fallthru
          _
        // Predicated region
        $region53: #{tpu_custom_call.1} parent=39 // pred_check
          %p257 = pneg %p104
        $region54: #{tpu_custom_call.1} parent=39 // pred_check_branch
          %259 = sbr.rel (%p257) target = $region56
        $region55: #{tpu_custom_call.1} parent=39 // pred_region
          %260 = dma.done [#allocation10], 16
        $region56: #{tpu_custom_call.1} parent=39 // pred_fallthru
          _
        %s261 = sand.u32 %s117, 1
        %s262 = scalar_lea.sflag [#allocation4], %s261
        %s263 = sand.u32 %s117, 1
        %s264 = smul.addr %s263, 64
        %s265 = scalar_lea.vmem [#allocation12], %s264
        // Predicated region
        $region57: #{tpu_custom_call.1} parent=39 // pred_check
          %p266 = pneg %p130
        $region58: #{tpu_custom_call.1} parent=39 // pred_check_branch
          %268 = sbr.rel (%p266) target = $region60
        $region59: #{tpu_custom_call.1} parent=39 // pred_region
          %269 = dma.done %s262, 1024
        $region60: #{tpu_custom_call.1} parent=39 // pred_fallthru
          _
        %270 = sfence
        %p271 = pneg %p41
        %p272 = pneg %p38
        %p273 = pneg %p62
        %p274 = pneg %p59
        %p275 = pneg %p83
        %p276 = pneg %p80
        %p277 = pneg %p104
        %p278 = pneg %p101
        %s279 = sand.u32 %s117, 1
        %s280 = scalar_lea.sflag [#allocation4], %s279
        %s281 = sand.u32 %s117, 1
        %s282 = smul.addr %s281, 64
        %s283 = scalar_lea.vmem [#allocation12], %s282
        %p284 = pneg %p130
        %p285 = pneg %p127
        %p286 = pneg %p156
        %p287 = pneg %p153
        %s288 = sand.u32 %s143, 1
        %s289 = scalar_lea.sflag [#allocation5], %s288
        %s290 = sand.u32 %s143, 1
        %s291 = smul.addr %s290, 64
        %s292 = scalar_lea.vmem [#allocation13], %s291
        %vm293 = vcmask 179200
        %294 = vst.msk [vmem:[#allocation2] sm:$0xff] %vm293, 0.0
        %295 = vst.msk [vmem:[#allocation2 + $0x8] sm:$0xff] %vm293, 0.0
        %vm296 = vcmask 177152
        %297 = vst.msk [vmem:[#allocation2 + $0x10] sm:$0x3f] %vm296, 0.0
        %298 = vst.msk [vmem:[#allocation2 + $0x18] sm:$0xff] %vm293, 0.0
        %299 = vst.msk [vmem:[#allocation2 + $0x20] sm:$0xff] %vm293, 0.0
        %300 = vst.msk [vmem:[#allocation2 + $0x28] sm:$0x3f] %vm296, 0.0
        %301 = vst.msk [vmem:[#allocation2 + $0x30] sm:$0xff] %vm293, 0.0
        %302 = vst.msk [vmem:[#allocation2 + $0x38] sm:$0xff] %vm293, 0.0
        %303 = vst.msk [vmem:[#allocation2 + $0x40] sm:$0x3f] %vm296, 0.0
        %304 = vst.msk [vmem:[#allocation2 + $0x48] sm:$0xff] %vm293, 0.0
        %305 = vst.msk [vmem:[#allocation2 + $0x50] sm:$0xff] %vm293, 0.0
        %306 = vst.msk [vmem:[#allocation2 + $0x58] sm:$0x3f] %vm296, 0.0
        %v307 = vld [vmem:[%s265] sm:$0xff]
        %v308 = vld [vmem:[%s265 + $0x8] sm:$0xff]
        %v309 = vld [vmem:[%s265 + $0x10] sm:$0xff]
        %v310 = vld [vmem:[%s265 + $0x18] sm:$0xff]
        %v311 = vld [vmem:[%s265 + $0x20] sm:$0xff]
        %v312 = vld [vmem:[%s265 + $0x28] sm:$0xff]
        %v313 = vld [vmem:[%s265 + $0x30] sm:$0xff]
        %v314 = vld [vmem:[%s265 + $0x38] sm:$0xff]
        %323 = vrot.lane.b32.xlu0 %v307, 3
        %v324 = vpop.permute.xlu0 %323
        %325 = vrot.lane.b32.xlu0 %v308, 3
        %v326 = vpop.permute.xlu0 %325
        %327 = vrot.lane.b32.xlu0 %v309, 3
        %v328 = vpop.permute.xlu0 %327
        %329 = vrot.lane.b32.xlu0 %v310, 3
        %v330 = vpop.permute.xlu0 %329
        %331 = vrot.lane.b32.xlu0 %v311, 3
        %v332 = vpop.permute.xlu0 %331
        %333 = vrot.lane.b32.xlu0 %v312, 3
        %v334 = vpop.permute.xlu0 %333
        %335 = vrot.lane.b32.xlu0 %v313, 3
        %v336 = vpop.permute.xlu0 %335
        %337 = vrot.lane.b32.xlu0 %v314, 3
        %v338 = vpop.permute.xlu0 %337
        %vm347 = vcmask 154648
        %348 = vst.msk [vmem:[#allocation2 + $0x3] sm:$0xff] %vm347, %v324
        %349 = vst.msk [vmem:[#allocation2 + $0xb] sm:$0xff] %vm347, %v326
        %350 = vst.msk [vmem:[#allocation2 + $0x1b] sm:$0xff] %vm347, %v328
        %351 = vst.msk [vmem:[#allocation2 + $0x23] sm:$0xff] %vm347, %v330
        %352 = vst.msk [vmem:[#allocation2 + $0x33] sm:$0xff] %vm347, %v332
        %353 = vst.msk [vmem:[#allocation2 + $0x3b] sm:$0xff] %vm347, %v334
        %354 = vst.msk [vmem:[#allocation2 + $0x4b] sm:$0xff] %vm347, %v336
        %355 = vst.msk [vmem:[#allocation2 + $0x53] sm:$0xff] %vm347, %v338
        %v356 = vld [vmem:[#allocation2] sm:$0xff]
        %v357 = vld [vmem:[#allocation2 + $0x8] sm:$0xff]
        %v358 = vld [vmem:[#allocation2 + $0x10] sm:$0x3f]
        %s359 = scalar_lea.vmem [#allocation2], 24
        %v360 = vld [vmem:[%s359] sm:$0xff]
        %v361 = vld [vmem:[%s359 + $0x8] sm:$0xff]
        %v362 = vld [vmem:[%s359 + $0x10] sm:$0x3f]
        %s363 = scalar_lea.vmem [#allocation2], 48
        %v364 = vld [vmem:[%s363] sm:$0xff]
        %v365 = vld [vmem:[%s363 + $0x8] sm:$0xff]
        %v366 = vld [vmem:[%s363 + $0x10] sm:$0x3f]
        %s367 = scalar_lea.vmem [#allocation2], 72
        %v368 = vld [vmem:[%s367] sm:$0xff]
        %v369 = vld [vmem:[%s367 + $0x8] sm:$0xff]
        %v370 = vld [vmem:[%s367 + $0x10] sm:$0x3f]
        %s371 = sld [smem:[#allocation3]]
        %v372 = vstv %s371
        %v373 = vmul.f32 %v372, %v356
        %v374 = vmul.f32 %v372, %v357
        %v375 = vmul.f32 %v372, %v358
        %s376 = sld [smem:[#allocation3 + $0x1]]
        %v377 = vstv %s376
        %v378 = vmul.f32 %v377, %v356
        %v379 = vmul.f32 %v377, %v357
        %v380 = vmul.f32 %v377, %v358
        %s381 = sld [smem:[#allocation3 + $0x2]]
        %v382 = vstv %s381
        %v383 = vmul.f32 %v382, %v356
        %v384 = vmul.f32 %v382, %v357
        %v385 = vmul.f32 %v382, %v358
        %s386 = sld [smem:[#allocation3 + $0x3]]
        %v387 = vstv %s386
        %v388 = vmul.f32 %v387, %v356
        %v389 = vmul.f32 %v387, %v357
        %v390 = vmul.f32 %v387, %v358
        %s391 = sld [smem:[#allocation3 + $0x4]]
        %v392 = vstv %s391
        %v393 = vmul.f32 %v392, %v360
        %v394 = vmul.f32 %v392, %v361
        %v395 = vmul.f32 %v392, %v362
        %v396 = vadd.f32 %v373, %v393
        %v397 = vadd.f32 %v374, %v394
        %v398 = vadd.f32 %v375, %v395
        %s399 = sld [smem:[#allocation3 + $0x5]]
        %v400 = vstv %s399
        %v401 = vmul.f32 %v400, %v360
        %v402 = vmul.f32 %v400, %v361
        %v403 = vmul.f32 %v400, %v362
        %v404 = vadd.f32 %v378, %v401
        %v405 = vadd.f32 %v379, %v402
        %v406 = vadd.f32 %v380, %v403
        %s407 = sld [smem:[#allocation3 + $0x6]]
        %v408 = vstv %s407
        %v409 = vmul.f32 %v408, %v360
        %v410 = vmul.f32 %v408, %v361
        %v411 = vmul.f32 %v408, %v362
        %v412 = vadd.f32 %v383, %v409
        %v413 = vadd.f32 %v384, %v410
        %v414 = vadd.f32 %v385, %v411
        %s415 = sld [smem:[#allocation3 + $0x7]]
        %v416 = vstv %s415
        %v417 = vmul.f32 %v416, %v360
        %v418 = vmul.f32 %v416, %v361
        %v419 = vmul.f32 %v416, %v362
        %v420 = vadd.f32 %v388, %v417
        %v421 = vadd.f32 %v389, %v418
        %v422 = vadd.f32 %v390, %v419
        %s423 = sld [smem:[#allocation3 + $0x8]]
        %v424 = vstv %s423
        %v425 = vmul.f32 %v424, %v364
        %v426 = vmul.f32 %v424, %v365
        %v427 = vmul.f32 %v424, %v366
        %v428 = vadd.f32 %v396, %v425
        %v429 = vadd.f32 %v397, %v426
        %v430 = vadd.f32 %v398, %v427
        %s431 = sld [smem:[#allocation3 + $0x9]]
        %v432 = vstv %s431
        %v433 = vmul.f32 %v432, %v364
        %v434 = vmul.f32 %v432, %v365
        %v435 = vmul.f32 %v432, %v366
        %v436 = vadd.f32 %v404, %v433
        %v437 = vadd.f32 %v405, %v434
        %v438 = vadd.f32 %v406, %v435
        %s439 = sld [smem:[#allocation3 + $0xa]]
        %v440 = vstv %s439
        %v441 = vmul.f32 %v440, %v364
        %v442 = vmul.f32 %v440, %v365
        %v443 = vmul.f32 %v440, %v366
        %v444 = vadd.f32 %v412, %v441
        %v445 = vadd.f32 %v413, %v442
        %v446 = vadd.f32 %v414, %v443
        %s447 = sld [smem:[#allocation3 + $0xb]]
        %v448 = vstv %s447
        %v449 = vmul.f32 %v448, %v364
        %v450 = vmul.f32 %v448, %v365
        %v451 = vmul.f32 %v448, %v366
        %v452 = vadd.f32 %v420, %v449
        %v453 = vadd.f32 %v421, %v450
        %v454 = vadd.f32 %v422, %v451
        %s455 = sld [smem:[#allocation3 + $0xc]]
        %v456 = vstv %s455
        %v457 = vmul.f32 %v456, %v368
        %v458 = vmul.f32 %v456, %v369
        %v459 = vmul.f32 %v456, %v370
        %v460 = vadd.f32 %v428, %v457
        %v461 = vadd.f32 %v429, %v458
        %v462 = vadd.f32 %v430, %v459
        %s463 = sld [smem:[#allocation3 + $0xd]]
        %v464 = vstv %s463
        %v465 = vmul.f32 %v464, %v368
        %v466 = vmul.f32 %v464, %v369
        %v467 = vmul.f32 %v464, %v370
        %v468 = vadd.f32 %v436, %v465
        %v469 = vadd.f32 %v437, %v466
        %v470 = vadd.f32 %v438, %v467
        %s471 = sld [smem:[#allocation3 + $0xe]]
        %v472 = vstv %s471
        %v473 = vmul.f32 %v472, %v368
        %v474 = vmul.f32 %v472, %v369
        %v475 = vmul.f32 %v472, %v370
        %v476 = vadd.f32 %v444, %v473
        %v477 = vadd.f32 %v445, %v474
        %v478 = vadd.f32 %v446, %v475
        %s479 = sld [smem:[#allocation3 + $0xf]]
        %v480 = vstv %s479
        %v481 = vmul.f32 %v480, %v368
        %v482 = vmul.f32 %v480, %v369
        %v483 = vmul.f32 %v480, %v370
        %v484 = vadd.f32 %v452, %v481
        %v485 = vadd.f32 %v453, %v482
        %v486 = vadd.f32 %v454, %v483
        %s487 = sld [smem:[#allocation3 + $0x10]]
        %v488 = vstv %s487
        %v489 = vmul.f32 %v488, %v356
        %v490 = vmul.f32 %v488, %v357
        %v491 = vmul.f32 %v488, %v358
        %495 = vrot.lane.b32.xlu0 %v489, 127
        %v496 = vpop.permute.xlu0 %495
        %497 = vrot.lane.b32.xlu0 %v490, 127
        %v498 = vpop.permute.xlu0 %497
        %499 = vrot.lane.b32.xlu0 %v491, 127
        %v500 = vpop.permute.xlu0 %499
        %v504 = vadd.f32 %v460, %v496
        %v505 = vadd.f32 %v461, %v498
        %v506 = vadd.f32 %v462, %v500
        %s507 = sld [smem:[#allocation3 + $0x11]]
        %v508 = vstv %s507
        %v509 = vmul.f32 %v508, %v356
        %v510 = vmul.f32 %v508, %v357
        %v511 = vmul.f32 %v508, %v358
        %515 = vrot.lane.b32.xlu0 %v509, 127
        %v516 = vpop.permute.xlu0 %515
        %517 = vrot.lane.b32.xlu0 %v510, 127
        %v518 = vpop.permute.xlu0 %517
        %519 = vrot.lane.b32.xlu0 %v511, 127
        %v520 = vpop.permute.xlu0 %519
        %v524 = vadd.f32 %v468, %v516
        %v525 = vadd.f32 %v469, %v518
        %v526 = vadd.f32 %v470, %v520
        %s527 = sld [smem:[#allocation3 + $0x12]]
        %v528 = vstv %s527
        %v529 = vmul.f32 %v528, %v356
        %v530 = vmul.f32 %v528, %v357
        %v531 = vmul.f32 %v528, %v358
        %535 = vrot.lane.b32.xlu0 %v529, 127
        %v536 = vpop.permute.xlu0 %535
        %537 = vrot.lane.b32.xlu0 %v530, 127
        %v538 = vpop.permute.xlu0 %537
        %539 = vrot.lane.b32.xlu0 %v531, 127
        %v540 = vpop.permute.xlu0 %539
        %v544 = vadd.f32 %v476, %v536
        %v545 = vadd.f32 %v477, %v538
        %v546 = vadd.f32 %v478, %v540
        %s547 = sld [smem:[#allocation3 + $0x13]]
        %v548 = vstv %s547
        %v549 = vmul.f32 %v548, %v356
        %v550 = vmul.f32 %v548, %v357
        %v551 = vmul.f32 %v548, %v358
        %555 = vrot.lane.b32.xlu0 %v549, 127
        %v556 = vpop.permute.xlu0 %555
        %557 = vrot.lane.b32.xlu0 %v550, 127
        %v558 = vpop.permute.xlu0 %557
        %559 = vrot.lane.b32.xlu0 %v551, 127
        %v560 = vpop.permute.xlu0 %559
        %v564 = vadd.f32 %v484, %v556
        %v565 = vadd.f32 %v485, %v558
        %v566 = vadd.f32 %v486, %v560
        %s567 = sld [smem:[#allocation3 + $0x14]]
        %v568 = vstv %s567
        %v569 = vmul.f32 %v568, %v360
        %v570 = vmul.f32 %v568, %v361
        %v571 = vmul.f32 %v568, %v362
        %575 = vrot.lane.b32.xlu0 %v569, 127
        %v576 = vpop.permute.xlu0 %575
        %577 = vrot.lane.b32.xlu0 %v570, 127
        %v578 = vpop.permute.xlu0 %577
        %579 = vrot.lane.b32.xlu0 %v571, 127
        %v580 = vpop.permute.xlu0 %579
        %v584 = vadd.f32 %v504, %v576
        %v585 = vadd.f32 %v505, %v578
        %v586 = vadd.f32 %v506, %v580
        %s587 = sld [smem:[#allocation3 + $0x15]]
        %v588 = vstv %s587
        %v589 = vmul.f32 %v588, %v360
        %v590 = vmul.f32 %v588, %v361
        %v591 = vmul.f32 %v588, %v362
        %595 = vrot.lane.b32.xlu0 %v589, 127
        %v596 = vpop.permute.xlu0 %595
        %597 = vrot.lane.b32.xlu0 %v590, 127
        %v598 = vpop.permute.xlu0 %597
        %599 = vrot.lane.b32.xlu0 %v591, 127
        %v600 = vpop.permute.xlu0 %599
        %v604 = vadd.f32 %v524, %v596
        %v605 = vadd.f32 %v525, %v598
        %v606 = vadd.f32 %v526, %v600
        %s607 = sld [smem:[#allocation3 + $0x16]]
        %v608 = vstv %s607
        %v609 = vmul.f32 %v608, %v360
        %v610 = vmul.f32 %v608, %v361
        %v611 = vmul.f32 %v608, %v362
        %615 = vrot.lane.b32.xlu0 %v609, 127
        %v616 = vpop.permute.xlu0 %615
        %617 = vrot.lane.b32.xlu0 %v610, 127
        %v618 = vpop.permute.xlu0 %617
        %619 = vrot.lane.b32.xlu0 %v611, 127
        %v620 = vpop.permute.xlu0 %619
        %v624 = vadd.f32 %v544, %v616
        %v625 = vadd.f32 %v545, %v618
        %v626 = vadd.f32 %v546, %v620
        %s627 = sld [smem:[#allocation3 + $0x17]]
        %v628 = vstv %s627
        %v629 = vmul.f32 %v628, %v360
        %v630 = vmul.f32 %v628, %v361
        %v631 = vmul.f32 %v628, %v362
        %635 = vrot.lane.b32.xlu0 %v629, 127
        %v636 = vpop.permute.xlu0 %635
        %637 = vrot.lane.b32.xlu0 %v630, 127
        %v638 = vpop.permute.xlu0 %637
        %639 = vrot.lane.b32.xlu0 %v631, 127
        %v640 = vpop.permute.xlu0 %639
        %v644 = vadd.f32 %v564, %v636
        %v645 = vadd.f32 %v565, %v638
        %v646 = vadd.f32 %v566, %v640
        %s647 = sld [smem:[#allocation3 + $0x18]]
        %v648 = vstv %s647
        %v649 = vmul.f32 %v648, %v364
        %v650 = vmul.f32 %v648, %v365
        %v651 = vmul.f32 %v648, %v366
        %655 = vrot.lane.b32.xlu0 %v649, 127
        %v656 = vpop.permute.xlu0 %655
        %657 = vrot.lane.b32.xlu0 %v650, 127
        %v658 = vpop.permute.xlu0 %657
        %659 = vrot.lane.b32.xlu0 %v651, 127
        %v660 = vpop.permute.xlu0 %659
        %v664 = vadd.f32 %v584, %v656
        %v665 = vadd.f32 %v585, %v658
        %v666 = vadd.f32 %v586, %v660
        %s667 = sld [smem:[#allocation3 + $0x19]]
        %v668 = vstv %s667
        %v669 = vmul.f32 %v668, %v364
        %v670 = vmul.f32 %v668, %v365
        %v671 = vmul.f32 %v668, %v366
        %675 = vrot.lane.b32.xlu0 %v669, 127
        %v676 = vpop.permute.xlu0 %675
        %677 = vrot.lane.b32.xlu0 %v670, 127
        %v678 = vpop.permute.xlu0 %677
        %679 = vrot.lane.b32.xlu0 %v671, 127
        %v680 = vpop.permute.xlu0 %679
        %v684 = vadd.f32 %v604, %v676
        %v685 = vadd.f32 %v605, %v678
        %v686 = vadd.f32 %v606, %v680
        %s687 = sld [smem:[#allocation3 + $0x1a]]
        %v688 = vstv %s687
        %v689 = vmul.f32 %v688, %v364
        %v690 = vmul.f32 %v688, %v365
        %v691 = vmul.f32 %v688, %v366
        %695 = vrot.lane.b32.xlu0 %v689, 127
        %v696 = vpop.permute.xlu0 %695
        %697 = vrot.lane.b32.xlu0 %v690, 127
        %v698 = vpop.permute.xlu0 %697
        %699 = vrot.lane.b32.xlu0 %v691, 127
        %v700 = vpop.permute.xlu0 %699
        %v704 = vadd.f32 %v624, %v696
        %v705 = vadd.f32 %v625, %v698
        %v706 = vadd.f32 %v626, %v700
        %s707 = sld [smem:[#allocation3 + $0x1b]]
        %v708 = vstv %s707
        %v709 = vmul.f32 %v708, %v364
        %v710 = vmul.f32 %v708, %v365
        %v711 = vmul.f32 %v708, %v366
        %715 = vrot.lane.b32.xlu0 %v709, 127
        %v716 = vpop.permute.xlu0 %715
        %717 = vrot.lane.b32.xlu0 %v710, 127
        %v718 = vpop.permute.xlu0 %717
        %719 = vrot.lane.b32.xlu0 %v711, 127
        %v720 = vpop.permute.xlu0 %719
        %v724 = vadd.f32 %v644, %v716
        %v725 = vadd.f32 %v645, %v718
        %v726 = vadd.f32 %v646, %v720
        %s727 = sld [smem:[#allocation3 + $0x1c]]
        %v728 = vstv %s727
        %v729 = vmul.f32 %v728, %v368
        %v730 = vmul.f32 %v728, %v369
        %v731 = vmul.f32 %v728, %v370
        %735 = vrot.lane.b32.xlu0 %v729, 127
        %v736 = vpop.permute.xlu0 %735
        %737 = vrot.lane.b32.xlu0 %v730, 127
        %v738 = vpop.permute.xlu0 %737
        %739 = vrot.lane.b32.xlu0 %v731, 127
        %v740 = vpop.permute.xlu0 %739
        %v744 = vadd.f32 %v664, %v736
        %v745 = vadd.f32 %v665, %v738
        %v746 = vadd.f32 %v666, %v740
        %s747 = sld [smem:[#allocation3 + $0x1d]]
        %v748 = vstv %s747
        %v749 = vmul.f32 %v748, %v368
        %v750 = vmul.f32 %v748, %v369
        %v751 = vmul.f32 %v748, %v370
        %755 = vrot.lane.b32.xlu0 %v749, 127
        %v756 = vpop.permute.xlu0 %755
        %757 = vrot.lane.b32.xlu0 %v750, 127
        %v758 = vpop.permute.xlu0 %757
        %759 = vrot.lane.b32.xlu0 %v751, 127
        %v760 = vpop.permute.xlu0 %759
        %v764 = vadd.f32 %v684, %v756
        %v765 = vadd.f32 %v685, %v758
        %v766 = vadd.f32 %v686, %v760
        %s767 = sld [smem:[#allocation3 + $0x1e]]
        %v768 = vstv %s767
        %v769 = vmul.f32 %v768, %v368
        %v770 = vmul.f32 %v768, %v369
        %v771 = vmul.f32 %v768, %v370
        %775 = vrot.lane.b32.xlu0 %v769, 127
        %v776 = vpop.permute.xlu0 %775
        %777 = vrot.lane.b32.xlu0 %v770, 127
        %v778 = vpop.permute.xlu0 %777
        %779 = vrot.lane.b32.xlu0 %v771, 127
        %v780 = vpop.permute.xlu0 %779
        %v784 = vadd.f32 %v704, %v776
        %v785 = vadd.f32 %v705, %v778
        %v786 = vadd.f32 %v706, %v780
        %s787 = sld [smem:[#allocation3 + $0x1f]]
        %v788 = vstv %s787
        %v789 = vmul.f32 %v788, %v368
        %v790 = vmul.f32 %v788, %v369
        %v791 = vmul.f32 %v788, %v370
        %795 = vrot.lane.b32.xlu0 %v789, 127
        %v796 = vpop.permute.xlu0 %795
        %797 = vrot.lane.b32.xlu0 %v790, 127
        %v798 = vpop.permute.xlu0 %797
        %799 = vrot.lane.b32.xlu0 %v791, 127
        %v800 = vpop.permute.xlu0 %799
        %v804 = vadd.f32 %v724, %v796
        %v805 = vadd.f32 %v725, %v798
        %v806 = vadd.f32 %v726, %v800
        %s807 = sld [smem:[#allocation3 + $0x20]]
        %v808 = vstv %s807
        %v809 = vmul.f32 %v808, %v356
        %v810 = vmul.f32 %v808, %v357
        %v811 = vmul.f32 %v808, %v358
        %815 = vrot.lane.b32.xlu0 %v809, 126
        %v816 = vpop.permute.xlu0 %815
        %817 = vrot.lane.b32.xlu0 %v810, 126
        %v818 = vpop.permute.xlu0 %817
        %819 = vrot.lane.b32.xlu0 %v811, 126
        %v820 = vpop.permute.xlu0 %819
        %v824 = vadd.f32 %v744, %v816
        %v825 = vadd.f32 %v745, %v818
        %v826 = vadd.f32 %v746, %v820
        %s827 = sld [smem:[#allocation3 + $0x21]]
        %v828 = vstv %s827
        %v829 = vmul.f32 %v828, %v356
        %v830 = vmul.f32 %v828, %v357
        %v831 = vmul.f32 %v828, %v358
        %835 = vrot.lane.b32.xlu0 %v829, 126
        %v836 = vpop.permute.xlu0 %835
        %837 = vrot.lane.b32.xlu0 %v830, 126
        %v838 = vpop.permute.xlu0 %837
        %839 = vrot.lane.b32.xlu0 %v831, 126
        %v840 = vpop.permute.xlu0 %839
        %v844 = vadd.f32 %v764, %v836
        %v845 = vadd.f32 %v765, %v838
        %v846 = vadd.f32 %v766, %v840
        %s847 = sld [smem:[#allocation3 + $0x22]]
        %v848 = vstv %s847
        %v849 = vmul.f32 %v848, %v356
        %v850 = vmul.f32 %v848, %v357
        %v851 = vmul.f32 %v848, %v358
        %855 = vrot.lane.b32.xlu0 %v849, 126
        %v856 = vpop.permute.xlu0 %855
        %857 = vrot.lane.b32.xlu0 %v850, 126
        %v858 = vpop.permute.xlu0 %857
        %859 = vrot.lane.b32.xlu0 %v851, 126
        %v860 = vpop.permute.xlu0 %859
        %v864 = vadd.f32 %v784, %v856
        %v865 = vadd.f32 %v785, %v858
        %v866 = vadd.f32 %v786, %v860
        %s867 = sld [smem:[#allocation3 + $0x23]]
        %v868 = vstv %s867
        %v869 = vmul.f32 %v868, %v356
        %v870 = vmul.f32 %v868, %v357
        %v871 = vmul.f32 %v868, %v358
        %875 = vrot.lane.b32.xlu0 %v869, 126
        %v876 = vpop.permute.xlu0 %875
        %877 = vrot.lane.b32.xlu0 %v870, 126
        %v878 = vpop.permute.xlu0 %877
        %879 = vrot.lane.b32.xlu0 %v871, 126
        %v880 = vpop.permute.xlu0 %879
        %v884 = vadd.f32 %v804, %v876
        %v885 = vadd.f32 %v805, %v878
        %v886 = vadd.f32 %v806, %v880
        %s887 = sld [smem:[#allocation3 + $0x24]]
        %v888 = vstv %s887
        %v889 = vmul.f32 %v888, %v360
        %v890 = vmul.f32 %v888, %v361
        %v891 = vmul.f32 %v888, %v362
        %895 = vrot.lane.b32.xlu0 %v889, 126
        %v896 = vpop.permute.xlu0 %895
        %897 = vrot.lane.b32.xlu0 %v890, 126
        %v898 = vpop.permute.xlu0 %897
        %899 = vrot.lane.b32.xlu0 %v891, 126
        %v900 = vpop.permute.xlu0 %899
        %v904 = vadd.f32 %v824, %v896
        %v905 = vadd.f32 %v825, %v898
        %v906 = vadd.f32 %v826, %v900
        %s907 = sld [smem:[#allocation3 + $0x25]]
        %v908 = vstv %s907
        %v909 = vmul.f32 %v908, %v360
        %v910 = vmul.f32 %v908, %v361
        %v911 = vmul.f32 %v908, %v362
        %915 = vrot.lane.b32.xlu0 %v909, 126
        %v916 = vpop.permute.xlu0 %915
        %917 = vrot.lane.b32.xlu0 %v910, 126
        %v918 = vpop.permute.xlu0 %917
        %919 = vrot.lane.b32.xlu0 %v911, 126
        %v920 = vpop.permute.xlu0 %919
        %v924 = vadd.f32 %v844, %v916
        %v925 = vadd.f32 %v845, %v918
        %v926 = vadd.f32 %v846, %v920
        %s927 = sld [smem:[#allocation3 + $0x26]]
        %v928 = vstv %s927
        %v929 = vmul.f32 %v928, %v360
        %v930 = vmul.f32 %v928, %v361
        %v931 = vmul.f32 %v928, %v362
        %935 = vrot.lane.b32.xlu0 %v929, 126
        %v936 = vpop.permute.xlu0 %935
        %937 = vrot.lane.b32.xlu0 %v930, 126
        %v938 = vpop.permute.xlu0 %937
        %939 = vrot.lane.b32.xlu0 %v931, 126
        %v940 = vpop.permute.xlu0 %939
        %v944 = vadd.f32 %v864, %v936
        %v945 = vadd.f32 %v865, %v938
        %v946 = vadd.f32 %v866, %v940
        %s947 = sld [smem:[#allocation3 + $0x27]]
        %v948 = vstv %s947
        %v949 = vmul.f32 %v948, %v360
        %v950 = vmul.f32 %v948, %v361
        %v951 = vmul.f32 %v948, %v362
        %955 = vrot.lane.b32.xlu0 %v949, 126
        %v956 = vpop.permute.xlu0 %955
        %957 = vrot.lane.b32.xlu0 %v950, 126
        %v958 = vpop.permute.xlu0 %957
        %959 = vrot.lane.b32.xlu0 %v951, 126
        %v960 = vpop.permute.xlu0 %959
        %v964 = vadd.f32 %v884, %v956
        %v965 = vadd.f32 %v885, %v958
        %v966 = vadd.f32 %v886, %v960
        %s967 = sld [smem:[#allocation3 + $0x28]]
        %v968 = vstv %s967
        %v969 = vmul.f32 %v968, %v364
        %v970 = vmul.f32 %v968, %v365
        %v971 = vmul.f32 %v968, %v366
        %975 = vrot.lane.b32.xlu0 %v969, 126
        %v976 = vpop.permute.xlu0 %975
        %977 = vrot.lane.b32.xlu0 %v970, 126
        %v978 = vpop.permute.xlu0 %977
        %979 = vrot.lane.b32.xlu0 %v971, 126
        %v980 = vpop.permute.xlu0 %979
        %v984 = vadd.f32 %v904, %v976
        %v985 = vadd.f32 %v905, %v978
        %v986 = vadd.f32 %v906, %v980
        %s987 = sld [smem:[#allocation3 + $0x29]]
        %v988 = vstv %s987
        %v989 = vmul.f32 %v988, %v364
        %v990 = vmul.f32 %v988, %v365
        %v991 = vmul.f32 %v988, %v366
        %995 = vrot.lane.b32.xlu0 %v989, 126
        %v996 = vpop.permute.xlu0 %995
        %997 = vrot.lane.b32.xlu0 %v990, 126
        %v998 = vpop.permute.xlu0 %997
        %999 = vrot.lane.b32.xlu0 %v991, 126
        %v1000 = vpop.permute.xlu0 %999
        %v1004 = vadd.f32 %v924, %v996
        %v1005 = vadd.f32 %v925, %v998
        %v1006 = vadd.f32 %v926, %v1000
        %s1007 = sld [smem:[#allocation3 + $0x2a]]
        %v1008 = vstv %s1007
        %v1009 = vmul.f32 %v1008, %v364
        %v1010 = vmul.f32 %v1008, %v365
        %v1011 = vmul.f32 %v1008, %v366
        %1015 = vrot.lane.b32.xlu0 %v1009, 126
        %v1016 = vpop.permute.xlu0 %1015
        %1017 = vrot.lane.b32.xlu0 %v1010, 126
        %v1018 = vpop.permute.xlu0 %1017
        %1019 = vrot.lane.b32.xlu0 %v1011, 126
        %v1020 = vpop.permute.xlu0 %1019
        %v1024 = vadd.f32 %v944, %v1016
        %v1025 = vadd.f32 %v945, %v1018
        %v1026 = vadd.f32 %v946, %v1020
        %s1027 = sld [smem:[#allocation3 + $0x2b]]
        %v1028 = vstv %s1027
        %v1029 = vmul.f32 %v1028, %v364
        %v1030 = vmul.f32 %v1028, %v365
        %v1031 = vmul.f32 %v1028, %v366
        %1035 = vrot.lane.b32.xlu0 %v1029, 126
        %v1036 = vpop.permute.xlu0 %1035
        %1037 = vrot.lane.b32.xlu0 %v1030, 126
        %v1038 = vpop.permute.xlu0 %1037
        %1039 = vrot.lane.b32.xlu0 %v1031, 126
        %v1040 = vpop.permute.xlu0 %1039
        %v1044 = vadd.f32 %v964, %v1036
        %v1045 = vadd.f32 %v965, %v1038
        %v1046 = vadd.f32 %v966, %v1040
        %s1047 = sld [smem:[#allocation3 + $0x2c]]
        %v1048 = vstv %s1047
        %v1049 = vmul.f32 %v1048, %v368
        %v1050 = vmul.f32 %v1048, %v369
        %v1051 = vmul.f32 %v1048, %v370
        %1055 = vrot.lane.b32.xlu0 %v1049, 126
        %v1056 = vpop.permute.xlu0 %1055
        %1057 = vrot.lane.b32.xlu0 %v1050, 126
        %v1058 = vpop.permute.xlu0 %1057
        %1059 = vrot.lane.b32.xlu0 %v1051, 126
        %v1060 = vpop.permute.xlu0 %1059
        %v1064 = vadd.f32 %v984, %v1056
        %v1065 = vadd.f32 %v985, %v1058
        %v1066 = vadd.f32 %v986, %v1060
        %s1067 = sld [smem:[#allocation3 + $0x2d]]
        %v1068 = vstv %s1067
        %v1069 = vmul.f32 %v1068, %v368
        %v1070 = vmul.f32 %v1068, %v369
        %v1071 = vmul.f32 %v1068, %v370
        %1075 = vrot.lane.b32.xlu0 %v1069, 126
        %v1076 = vpop.permute.xlu0 %1075
        %1077 = vrot.lane.b32.xlu0 %v1070, 126
        %v1078 = vpop.permute.xlu0 %1077
        %1079 = vrot.lane.b32.xlu0 %v1071, 126
        %v1080 = vpop.permute.xlu0 %1079
        %v1084 = vadd.f32 %v1004, %v1076
        %v1085 = vadd.f32 %v1005, %v1078
        %v1086 = vadd.f32 %v1006, %v1080
        %s1087 = sld [smem:[#allocation3 + $0x2e]]
        %v1088 = vstv %s1087
        %v1089 = vmul.f32 %v1088, %v368
        %v1090 = vmul.f32 %v1088, %v369
        %v1091 = vmul.f32 %v1088, %v370
        %1095 = vrot.lane.b32.xlu0 %v1089, 126
        %v1096 = vpop.permute.xlu0 %1095
        %1097 = vrot.lane.b32.xlu0 %v1090, 126
        %v1098 = vpop.permute.xlu0 %1097
        %1099 = vrot.lane.b32.xlu0 %v1091, 126
        %v1100 = vpop.permute.xlu0 %1099
        %v1104 = vadd.f32 %v1024, %v1096
        %v1105 = vadd.f32 %v1025, %v1098
        %v1106 = vadd.f32 %v1026, %v1100
        %s1107 = sld [smem:[#allocation3 + $0x2f]]
        %v1108 = vstv %s1107
        %v1109 = vmul.f32 %v1108, %v368
        %v1110 = vmul.f32 %v1108, %v369
        %v1111 = vmul.f32 %v1108, %v370
        %1115 = vrot.lane.b32.xlu0 %v1109, 126
        %v1116 = vpop.permute.xlu0 %1115
        %1117 = vrot.lane.b32.xlu0 %v1110, 126
        %v1118 = vpop.permute.xlu0 %1117
        %1119 = vrot.lane.b32.xlu0 %v1111, 126
        %v1120 = vpop.permute.xlu0 %1119
        %v1124 = vadd.f32 %v1044, %v1116
        %v1125 = vadd.f32 %v1045, %v1118
        %v1126 = vadd.f32 %v1046, %v1120
        %s1127 = sld [smem:[#allocation3 + $0x30]]
        %v1128 = vstv %s1127
        %v1129 = vmul.f32 %v1128, %v356
        %v1130 = vmul.f32 %v1128, %v357
        %v1131 = vmul.f32 %v1128, %v358
        %vm1135 = vcmask 1046528
        %v1136 = vrot.slane %v1129, 1
        %v1137 = vrot.slane %v1130, 1
        %v1138 = vsel %vm1135, %v1136, %v1137
        %v1139 = vrot.slane %v1131, 1
        %v1140 = vsel %vm1135, %v1137, %v1139
        %v1144 = vadd.f32 %v1064, %v1138
        %v1145 = vadd.f32 %v1065, %v1140
        %v1146 = vadd.f32 %v1066, %v1139
        %s1147 = sld [smem:[#allocation3 + $0x31]]
        %v1148 = vstv %s1147
        %v1149 = vmul.f32 %v1148, %v356
        %v1150 = vmul.f32 %v1148, %v357
        %v1151 = vmul.f32 %v1148, %v358
        %v1155 = vrot.slane %v1149, 1
        %v1156 = vrot.slane %v1150, 1
        %v1157 = vsel %vm1135, %v1155, %v1156
        %v1158 = vrot.slane %v1151, 1
        %v1159 = vsel %vm1135, %v1156, %v1158
        %v1163 = vadd.f32 %v1084, %v1157
        %v1164 = vadd.f32 %v1085, %v1159
        %v1165 = vadd.f32 %v1086, %v1158
        %s1166 = sld [smem:[#allocation3 + $0x32]]
        %v1167 = vstv %s1166
        %v1168 = vmul.f32 %v1167, %v356
        %v1169 = vmul.f32 %v1167, %v357
        %v1170 = vmul.f32 %v1167, %v358
        %v1174 = vrot.slane %v1168, 1
        %v1175 = vrot.slane %v1169, 1
        %v1176 = vsel %vm1135, %v1174, %v1175
        %v1177 = vrot.slane %v1170, 1
        %v1178 = vsel %vm1135, %v1175, %v1177
        %v1182 = vadd.f32 %v1104, %v1176
        %v1183 = vadd.f32 %v1105, %v1178
        %v1184 = vadd.f32 %v1106, %v1177
        %s1185 = sld [smem:[#allocation3 + $0x33]]
        %v1186 = vstv %s1185
        %v1187 = vmul.f32 %v1186, %v356
        %v1188 = vmul.f32 %v1186, %v357
        %v1189 = vmul.f32 %v1186, %v358
        %v1193 = vrot.slane %v1187, 1
        %v1194 = vrot.slane %v1188, 1
        %v1195 = vsel %vm1135, %v1193, %v1194
        %v1196 = vrot.slane %v1189, 1
        %v1197 = vsel %vm1135, %v1194, %v1196
        %v1201 = vadd.f32 %v1124, %v1195
        %v1202 = vadd.f32 %v1125, %v1197
        %v1203 = vadd.f32 %v1126, %v1196
        %s1204 = sld [smem:[#allocation3 + $0x34]]
        %v1205 = vstv %s1204
        %v1206 = vmul.f32 %v1205, %v360
        %v1207 = vmul.f32 %v1205, %v361
        %v1208 = vmul.f32 %v1205, %v362
        %v1212 = vrot.slane %v1206, 1
        %v1213 = vrot.slane %v1207, 1
        %v1214 = vsel %vm1135, %v1212, %v1213
        %v1215 = vrot.slane %v1208, 1
        %v1216 = vsel %vm1135, %v1213, %v1215
        %v1220 = vadd.f32 %v1144, %v1214
        %v1221 = vadd.f32 %v1145, %v1216
        %v1222 = vadd.f32 %v1146, %v1215
        %s1223 = sld [smem:[#allocation3 + $0x35]]
        %v1224 = vstv %s1223
        %v1225 = vmul.f32 %v1224, %v360
        %v1226 = vmul.f32 %v1224, %v361
        %v1227 = vmul.f32 %v1224, %v362
        %v1231 = vrot.slane %v1225, 1
        %v1232 = vrot.slane %v1226, 1
        %v1233 = vsel %vm1135, %v1231, %v1232
        %v1234 = vrot.slane %v1227, 1
        %v1235 = vsel %vm1135, %v1232, %v1234
        %v1239 = vadd.f32 %v1163, %v1233
        %v1240 = vadd.f32 %v1164, %v1235
        %v1241 = vadd.f32 %v1165, %v1234
        %s1242 = sld [smem:[#allocation3 + $0x36]]
        %v1243 = vstv %s1242
        %v1244 = vmul.f32 %v1243, %v360
        %v1245 = vmul.f32 %v1243, %v361
        %v1246 = vmul.f32 %v1243, %v362
        %v1250 = vrot.slane %v1244, 1
        %v1251 = vrot.slane %v1245, 1
        %v1252 = vsel %vm1135, %v1250, %v1251
        %v1253 = vrot.slane %v1246, 1
        %v1254 = vsel %vm1135, %v1251, %v1253
        %v1258 = vadd.f32 %v1182, %v1252
        %v1259 = vadd.f32 %v1183, %v1254
        %v1260 = vadd.f32 %v1184, %v1253
        %s1261 = sld [smem:[#allocation3 + $0x37]]
        %v1262 = vstv %s1261
        %v1263 = vmul.f32 %v1262, %v360
        %v1264 = vmul.f32 %v1262, %v361
        %v1265 = vmul.f32 %v1262, %v362
        %v1269 = vrot.slane %v1263, 1
        %v1270 = vrot.slane %v1264, 1
        %v1271 = vsel %vm1135, %v1269, %v1270
        %v1272 = vrot.slane %v1265, 1
        %v1273 = vsel %vm1135, %v1270, %v1272
        %v1277 = vadd.f32 %v1201, %v1271
        %v1278 = vadd.f32 %v1202, %v1273
        %v1279 = vadd.f32 %v1203, %v1272
        %s1280 = sld [smem:[#allocation3 + $0x38]]
        %v1281 = vstv %s1280
        %v1282 = vmul.f32 %v1281, %v364
        %v1283 = vmul.f32 %v1281, %v365
        %v1284 = vmul.f32 %v1281, %v366
        %v1288 = vrot.slane %v1282, 1
        %v1289 = vrot.slane %v1283, 1
        %v1290 = vsel %vm1135, %v1288, %v1289
        %v1291 = vrot.slane %v1284, 1
        %v1292 = vsel %vm1135, %v1289, %v1291
        %v1296 = vadd.f32 %v1220, %v1290
        %v1297 = vadd.f32 %v1221, %v1292
        %v1298 = vadd.f32 %v1222, %v1291
        %s1299 = sld [smem:[#allocation3 + $0x39]]
        %v1300 = vstv %s1299
        %v1301 = vmul.f32 %v1300, %v364
        %v1302 = vmul.f32 %v1300, %v365
        %v1303 = vmul.f32 %v1300, %v366
        %v1307 = vrot.slane %v1301, 1
        %v1308 = vrot.slane %v1302, 1
        %v1309 = vsel %vm1135, %v1307, %v1308
        %v1310 = vrot.slane %v1303, 1
        %v1311 = vsel %vm1135, %v1308, %v1310
        %v1315 = vadd.f32 %v1239, %v1309
        %v1316 = vadd.f32 %v1240, %v1311
        %v1317 = vadd.f32 %v1241, %v1310
        %s1318 = sld [smem:[#allocation3 + $0x3a]]
        %v1319 = vstv %s1318
        %v1320 = vmul.f32 %v1319, %v364
        %v1321 = vmul.f32 %v1319, %v365
        %v1322 = vmul.f32 %v1319, %v366
        %v1326 = vrot.slane %v1320, 1
        %v1327 = vrot.slane %v1321, 1
        %v1328 = vsel %vm1135, %v1326, %v1327
        %v1329 = vrot.slane %v1322, 1
        %v1330 = vsel %vm1135, %v1327, %v1329
        %v1334 = vadd.f32 %v1258, %v1328
        %v1335 = vadd.f32 %v1259, %v1330
        %v1336 = vadd.f32 %v1260, %v1329
        %s1337 = sld [smem:[#allocation3 + $0x3b]]
        %v1338 = vstv %s1337
        %v1339 = vmul.f32 %v1338, %v364
        %v1340 = vmul.f32 %v1338, %v365
        %v1341 = vmul.f32 %v1338, %v366
        %v1345 = vrot.slane %v1339, 1
        %v1346 = vrot.slane %v1340, 1
        %v1347 = vsel %vm1135, %v1345, %v1346
        %v1348 = vrot.slane %v1341, 1
        %v1349 = vsel %vm1135, %v1346, %v1348
        %v1353 = vadd.f32 %v1277, %v1347
        %v1354 = vadd.f32 %v1278, %v1349
        %v1355 = vadd.f32 %v1279, %v1348
        %s1356 = sld [smem:[#allocation3 + $0x3c]]
        %v1357 = vstv %s1356
        %v1358 = vmul.f32 %v1357, %v368
        %v1359 = vmul.f32 %v1357, %v369
        %v1360 = vmul.f32 %v1357, %v370
        %v1364 = vrot.slane %v1358, 1
        %v1365 = vrot.slane %v1359, 1
        %v1366 = vsel %vm1135, %v1364, %v1365
        %v1367 = vrot.slane %v1360, 1
        %v1368 = vsel %vm1135, %v1365, %v1367
        %v1372 = vadd.f32 %v1296, %v1366
        %v1373 = vadd.f32 %v1297, %v1368
        %v1374 = vadd.f32 %v1298, %v1367
        %s1375 = sld [smem:[#allocation3 + $0x3d]]
        %v1376 = vstv %s1375
        %v1377 = vmul.f32 %v1376, %v368
        %v1378 = vmul.f32 %v1376, %v369
        %v1379 = vmul.f32 %v1376, %v370
        %v1383 = vrot.slane %v1377, 1
        %v1384 = vrot.slane %v1378, 1
        %v1385 = vsel %vm1135, %v1383, %v1384
        %v1386 = vrot.slane %v1379, 1
        %v1387 = vsel %vm1135, %v1384, %v1386
        %v1391 = vadd.f32 %v1315, %v1385
        %v1392 = vadd.f32 %v1316, %v1387
        %v1393 = vadd.f32 %v1317, %v1386
        %s1394 = sld [smem:[#allocation3 + $0x3e]]
        %v1395 = vstv %s1394
        %v1396 = vmul.f32 %v1395, %v368
        %v1397 = vmul.f32 %v1395, %v369
        %v1398 = vmul.f32 %v1395, %v370
        %v1402 = vrot.slane %v1396, 1
        %v1403 = vrot.slane %v1397, 1
        %v1404 = vsel %vm1135, %v1402, %v1403
        %v1405 = vrot.slane %v1398, 1
        %v1406 = vsel %vm1135, %v1403, %v1405
        %v1410 = vadd.f32 %v1334, %v1404
        %v1411 = vadd.f32 %v1335, %v1406
        %v1412 = vadd.f32 %v1336, %v1405
        %s1413 = sld [smem:[#allocation3 + $0x3f]]
        %v1414 = vstv %s1413
        %v1415 = vmul.f32 %v1414, %v368
        %v1416 = vmul.f32 %v1414, %v369
        %v1417 = vmul.f32 %v1414, %v370
        %v1421 = vrot.slane %v1415, 1
        %v1422 = vrot.slane %v1416, 1
        %v1423 = vsel %vm1135, %v1421, %v1422
        %v1424 = vrot.slane %v1417, 1
        %v1425 = vsel %vm1135, %v1422, %v1424
        %v1429 = vadd.f32 %v1353, %v1423
        %v1430 = vadd.f32 %v1354, %v1425
        %v1431 = vadd.f32 %v1355, %v1424
        %s1432 = sld [smem:[#allocation3 + $0x40]]
        %v1433 = vstv %s1432
        %v1434 = vmul.f32 %v1433, %v356
        %v1435 = vmul.f32 %v1433, %v357
        %v1436 = vmul.f32 %v1433, %v358
        %v1440 = vrot.slane %v1434, 1
        %v1441 = vrot.slane %v1435, 1
        %v1442 = vsel %vm1135, %v1440, %v1441
        %v1443 = vrot.slane %v1436, 1
        %v1444 = vsel %vm1135, %v1441, %v1443
        %1445 = vrot.lane.b32.xlu0 %v1442, 127
        %v1446 = vpop.permute.xlu0 %1445
        %1447 = vrot.lane.b32.xlu0 %v1444, 127
        %v1448 = vpop.permute.xlu0 %1447
        %1449 = vrot.lane.b32.xlu0 %v1443, 127
        %v1450 = vpop.permute.xlu0 %1449
        %v1454 = vadd.f32 %v1372, %v1446
        %v1455 = vadd.f32 %v1373, %v1448
        %v1456 = vadd.f32 %v1374, %v1450
        %s1457 = sld [smem:[#allocation3 + $0x41]]
        %v1458 = vstv %s1457
        %v1459 = vmul.f32 %v1458, %v356
        %v1460 = vmul.f32 %v1458, %v357
        %v1461 = vmul.f32 %v1458, %v358
        %v1465 = vrot.slane %v1459, 1
        %v1466 = vrot.slane %v1460, 1
        %v1467 = vsel %vm1135, %v1465, %v1466
        %v1468 = vrot.slane %v1461, 1
        %v1469 = vsel %vm1135, %v1466, %v1468
        %1470 = vrot.lane.b32.xlu0 %v1467, 127
        %v1471 = vpop.permute.xlu0 %1470
        %1472 = vrot.lane.b32.xlu0 %v1469, 127
        %v1473 = vpop.permute.xlu0 %1472
        %1474 = vrot.lane.b32.xlu0 %v1468, 127
        %v1475 = vpop.permute.xlu0 %1474
        %v1479 = vadd.f32 %v1391, %v1471
        %v1480 = vadd.f32 %v1392, %v1473
        %v1481 = vadd.f32 %v1393, %v1475
        %s1482 = sld [smem:[#allocation3 + $0x42]]
        %v1483 = vstv %s1482
        %v1484 = vmul.f32 %v1483, %v356
        %v1485 = vmul.f32 %v1483, %v357
        %v1486 = vmul.f32 %v1483, %v358
        %v1490 = vrot.slane %v1484, 1
        %v1491 = vrot.slane %v1485, 1
        %v1492 = vsel %vm1135, %v1490, %v1491
        %v1493 = vrot.slane %v1486, 1
        %v1494 = vsel %vm1135, %v1491, %v1493
        %1495 = vrot.lane.b32.xlu0 %v1492, 127
        %v1496 = vpop.permute.xlu0 %1495
        %1497 = vrot.lane.b32.xlu0 %v1494, 127
        %v1498 = vpop.permute.xlu0 %1497
        %1499 = vrot.lane.b32.xlu0 %v1493, 127
        %v1500 = vpop.permute.xlu0 %1499
        %v1504 = vadd.f32 %v1410, %v1496
        %v1505 = vadd.f32 %v1411, %v1498
        %v1506 = vadd.f32 %v1412, %v1500
        %s1507 = sld [smem:[#allocation3 + $0x43]]
        %v1508 = vstv %s1507
        %v1509 = vmul.f32 %v1508, %v356
        %v1510 = vmul.f32 %v1508, %v357
        %v1511 = vmul.f32 %v1508, %v358
        %v1515 = vrot.slane %v1509, 1
        %v1516 = vrot.slane %v1510, 1
        %v1517 = vsel %vm1135, %v1515, %v1516
        %v1518 = vrot.slane %v1511, 1
        %v1519 = vsel %vm1135, %v1516, %v1518
        %1520 = vrot.lane.b32.xlu0 %v1517, 127
        %v1521 = vpop.permute.xlu0 %1520
        %1522 = vrot.lane.b32.xlu0 %v1519, 127
        %v1523 = vpop.permute.xlu0 %1522
        %1524 = vrot.lane.b32.xlu0 %v1518, 127
        %v1525 = vpop.permute.xlu0 %1524
        %v1529 = vadd.f32 %v1429, %v1521
        %v1530 = vadd.f32 %v1430, %v1523
        %v1531 = vadd.f32 %v1431, %v1525
        %s1532 = sld [smem:[#allocation3 + $0x44]]
        %v1533 = vstv %s1532
        %v1534 = vmul.f32 %v1533, %v360
        %v1535 = vmul.f32 %v1533, %v361
        %v1536 = vmul.f32 %v1533, %v362
        %v1540 = vrot.slane %v1534, 1
        %v1541 = vrot.slane %v1535, 1
        %v1542 = vsel %vm1135, %v1540, %v1541
        %v1543 = vrot.slane %v1536, 1
        %v1544 = vsel %vm1135, %v1541, %v1543
        %1545 = vrot.lane.b32.xlu0 %v1542, 127
        %v1546 = vpop.permute.xlu0 %1545
        %1547 = vrot.lane.b32.xlu0 %v1544, 127
        %v1548 = vpop.permute.xlu0 %1547
        %1549 = vrot.lane.b32.xlu0 %v1543, 127
        %v1550 = vpop.permute.xlu0 %1549
        %v1554 = vadd.f32 %v1454, %v1546
        %v1555 = vadd.f32 %v1455, %v1548
        %v1556 = vadd.f32 %v1456, %v1550
        %s1557 = sld [smem:[#allocation3 + $0x45]]
        %v1558 = vstv %s1557
        %v1559 = vmul.f32 %v1558, %v360
        %v1560 = vmul.f32 %v1558, %v361
        %v1561 = vmul.f32 %v1558, %v362
        %v1565 = vrot.slane %v1559, 1
        %v1566 = vrot.slane %v1560, 1
        %v1567 = vsel %vm1135, %v1565, %v1566
        %v1568 = vrot.slane %v1561, 1
        %v1569 = vsel %vm1135, %v1566, %v1568
        %1570 = vrot.lane.b32.xlu0 %v1567, 127
        %v1571 = vpop.permute.xlu0 %1570
        %1572 = vrot.lane.b32.xlu0 %v1569, 127
        %v1573 = vpop.permute.xlu0 %1572
        %1574 = vrot.lane.b32.xlu0 %v1568, 127
        %v1575 = vpop.permute.xlu0 %1574
        %v1579 = vadd.f32 %v1479, %v1571
        %v1580 = vadd.f32 %v1480, %v1573
        %v1581 = vadd.f32 %v1481, %v1575
        %s1582 = sld [smem:[#allocation3 + $0x46]]
        %v1583 = vstv %s1582
        %v1584 = vmul.f32 %v1583, %v360
        %v1585 = vmul.f32 %v1583, %v361
        %v1586 = vmul.f32 %v1583, %v362
        %v1590 = vrot.slane %v1584, 1
        %v1591 = vrot.slane %v1585, 1
        %v1592 = vsel %vm1135, %v1590, %v1591
        %v1593 = vrot.slane %v1586, 1
        %v1594 = vsel %vm1135, %v1591, %v1593
        %1595 = vrot.lane.b32.xlu0 %v1592, 127
        %v1596 = vpop.permute.xlu0 %1595
        %1597 = vrot.lane.b32.xlu0 %v1594, 127
        %v1598 = vpop.permute.xlu0 %1597
        %1599 = vrot.lane.b32.xlu0 %v1593, 127
        %v1600 = vpop.permute.xlu0 %1599
        %v1604 = vadd.f32 %v1504, %v1596
        %v1605 = vadd.f32 %v1505, %v1598
        %v1606 = vadd.f32 %v1506, %v1600
        %s1607 = sld [smem:[#allocation3 + $0x47]]
        %v1608 = vstv %s1607
        %v1609 = vmul.f32 %v1608, %v360
        %v1610 = vmul.f32 %v1608, %v361
        %v1611 = vmul.f32 %v1608, %v362
        %v1615 = vrot.slane %v1609, 1
        %v1616 = vrot.slane %v1610, 1
        %v1617 = vsel %vm1135, %v1615, %v1616
        %v1618 = vrot.slane %v1611, 1
        %v1619 = vsel %vm1135, %v1616, %v1618
        %1620 = vrot.lane.b32.xlu0 %v1617, 127
        %v1621 = vpop.permute.xlu0 %1620
        %1622 = vrot.lane.b32.xlu0 %v1619, 127
        %v1623 = vpop.permute.xlu0 %1622
        %1624 = vrot.lane.b32.xlu0 %v1618, 127
        %v1625 = vpop.permute.xlu0 %1624
        %v1629 = vadd.f32 %v1529, %v1621
        %v1630 = vadd.f32 %v1530, %v1623
        %v1631 = vadd.f32 %v1531, %v1625
        %s1632 = sld [smem:[#allocation3 + $0x48]]
        %v1633 = vstv %s1632
        %v1634 = vmul.f32 %v1633, %v364
        %v1635 = vmul.f32 %v1633, %v365
        %v1636 = vmul.f32 %v1633, %v366
        %v1640 = vrot.slane %v1634, 1
        %v1641 = vrot.slane %v1635, 1
        %v1642 = vsel %vm1135, %v1640, %v1641
        %v1643 = vrot.slane %v1636, 1
        %v1644 = vsel %vm1135, %v1641, %v1643
        %1645 = vrot.lane.b32.xlu0 %v1642, 127
        %v1646 = vpop.permute.xlu0 %1645
        %1647 = vrot.lane.b32.xlu0 %v1644, 127
        %v1648 = vpop.permute.xlu0 %1647
        %1649 = vrot.lane.b32.xlu0 %v1643, 127
        %v1650 = vpop.permute.xlu0 %1649
        %v1654 = vadd.f32 %v1554, %v1646
        %v1655 = vadd.f32 %v1555, %v1648
        %v1656 = vadd.f32 %v1556, %v1650
        %s1657 = sld [smem:[#allocation3 + $0x49]]
        %v1658 = vstv %s1657
        %v1659 = vmul.f32 %v1658, %v364
        %v1660 = vmul.f32 %v1658, %v365
        %v1661 = vmul.f32 %v1658, %v366
        %v1665 = vrot.slane %v1659, 1
        %v1666 = vrot.slane %v1660, 1
        %v1667 = vsel %vm1135, %v1665, %v1666
        %v1668 = vrot.slane %v1661, 1
        %v1669 = vsel %vm1135, %v1666, %v1668
        %1670 = vrot.lane.b32.xlu0 %v1667, 127
        %v1671 = vpop.permute.xlu0 %1670
        %1672 = vrot.lane.b32.xlu0 %v1669, 127
        %v1673 = vpop.permute.xlu0 %1672
        %1674 = vrot.lane.b32.xlu0 %v1668, 127
        %v1675 = vpop.permute.xlu0 %1674
        %v1679 = vadd.f32 %v1579, %v1671
        %v1680 = vadd.f32 %v1580, %v1673
        %v1681 = vadd.f32 %v1581, %v1675
        %s1682 = sld [smem:[#allocation3 + $0x4a]]
        %v1683 = vstv %s1682
        %v1684 = vmul.f32 %v1683, %v364
        %v1685 = vmul.f32 %v1683, %v365
        %v1686 = vmul.f32 %v1683, %v366
        %v1690 = vrot.slane %v1684, 1
        %v1691 = vrot.slane %v1685, 1
        %v1692 = vsel %vm1135, %v1690, %v1691
        %v1693 = vrot.slane %v1686, 1
        %v1694 = vsel %vm1135, %v1691, %v1693
        %1695 = vrot.lane.b32.xlu0 %v1692, 127
        %v1696 = vpop.permute.xlu0 %1695
        %1697 = vrot.lane.b32.xlu0 %v1694, 127
        %v1698 = vpop.permute.xlu0 %1697
        %1699 = vrot.lane.b32.xlu0 %v1693, 127
        %v1700 = vpop.permute.xlu0 %1699
        %v1704 = vadd.f32 %v1604, %v1696
        %v1705 = vadd.f32 %v1605, %v1698
        %v1706 = vadd.f32 %v1606, %v1700
        %s1707 = sld [smem:[#allocation3 + $0x4b]]
        %v1708 = vstv %s1707
        %v1709 = vmul.f32 %v1708, %v364
        %v1710 = vmul.f32 %v1708, %v365
        %v1711 = vmul.f32 %v1708, %v366
        %v1715 = vrot.slane %v1709, 1
        %v1716 = vrot.slane %v1710, 1
        %v1717 = vsel %vm1135, %v1715, %v1716
        %v1718 = vrot.slane %v1711, 1
        %v1719 = vsel %vm1135, %v1716, %v1718
        %1720 = vrot.lane.b32.xlu0 %v1717, 127
        %v1721 = vpop.permute.xlu0 %1720
        %1722 = vrot.lane.b32.xlu0 %v1719, 127
        %v1723 = vpop.permute.xlu0 %1722
        %1724 = vrot.lane.b32.xlu0 %v1718, 127
        %v1725 = vpop.permute.xlu0 %1724
        %v1729 = vadd.f32 %v1629, %v1721
        %v1730 = vadd.f32 %v1630, %v1723
        %v1731 = vadd.f32 %v1631, %v1725
        %s1732 = sld [smem:[#allocation3 + $0x4c]]
        %v1733 = vstv %s1732
        %v1734 = vmul.f32 %v1733, %v368
        %v1735 = vmul.f32 %v1733, %v369
        %v1736 = vmul.f32 %v1733, %v370
        %v1740 = vrot.slane %v1734, 1
        %v1741 = vrot.slane %v1735, 1
        %v1742 = vsel %vm1135, %v1740, %v1741
        %v1743 = vrot.slane %v1736, 1
        %v1744 = vsel %vm1135, %v1741, %v1743
        %1745 = vrot.lane.b32.xlu0 %v1742, 127
        %v1746 = vpop.permute.xlu0 %1745
        %1747 = vrot.lane.b32.xlu0 %v1744, 127
        %v1748 = vpop.permute.xlu0 %1747
        %1749 = vrot.lane.b32.xlu0 %v1743, 127
        %v1750 = vpop.permute.xlu0 %1749
        %v1754 = vadd.f32 %v1654, %v1746
        %v1755 = vadd.f32 %v1655, %v1748
        %v1756 = vadd.f32 %v1656, %v1750
        %s1757 = sld [smem:[#allocation3 + $0x4d]]
        %v1758 = vstv %s1757
        %v1759 = vmul.f32 %v1758, %v368
        %v1760 = vmul.f32 %v1758, %v369
        %v1761 = vmul.f32 %v1758, %v370
        %v1765 = vrot.slane %v1759, 1
        %v1766 = vrot.slane %v1760, 1
        %v1767 = vsel %vm1135, %v1765, %v1766
        %v1768 = vrot.slane %v1761, 1
        %v1769 = vsel %vm1135, %v1766, %v1768
        %1770 = vrot.lane.b32.xlu0 %v1767, 127
        %v1771 = vpop.permute.xlu0 %1770
        %1772 = vrot.lane.b32.xlu0 %v1769, 127
        %v1773 = vpop.permute.xlu0 %1772
        %1774 = vrot.lane.b32.xlu0 %v1768, 127
        %v1775 = vpop.permute.xlu0 %1774
        %v1779 = vadd.f32 %v1679, %v1771
        %v1780 = vadd.f32 %v1680, %v1773
        %v1781 = vadd.f32 %v1681, %v1775
        %s1782 = sld [smem:[#allocation3 + $0x4e]]
        %v1783 = vstv %s1782
        %v1784 = vmul.f32 %v1783, %v368
        %v1785 = vmul.f32 %v1783, %v369
        %v1786 = vmul.f32 %v1783, %v370
        %v1790 = vrot.slane %v1784, 1
        %v1791 = vrot.slane %v1785, 1
        %v1792 = vsel %vm1135, %v1790, %v1791
        %v1793 = vrot.slane %v1786, 1
        %v1794 = vsel %vm1135, %v1791, %v1793
        %1795 = vrot.lane.b32.xlu0 %v1792, 127
        %v1796 = vpop.permute.xlu0 %1795
        %1797 = vrot.lane.b32.xlu0 %v1794, 127
        %v1798 = vpop.permute.xlu0 %1797
        %1799 = vrot.lane.b32.xlu0 %v1793, 127
        %v1800 = vpop.permute.xlu0 %1799
        %v1804 = vadd.f32 %v1704, %v1796
        %v1805 = vadd.f32 %v1705, %v1798
        %v1806 = vadd.f32 %v1706, %v1800
        %s1807 = sld [smem:[#allocation3 + $0x4f]]
        %v1808 = vstv %s1807
        %v1809 = vmul.f32 %v1808, %v368
        %v1810 = vmul.f32 %v1808, %v369
        %v1811 = vmul.f32 %v1808, %v370
        %v1815 = vrot.slane %v1809, 1
        %v1816 = vrot.slane %v1810, 1
        %v1817 = vsel %vm1135, %v1815, %v1816
        %v1818 = vrot.slane %v1811, 1
        %v1819 = vsel %vm1135, %v1816, %v1818
        %1820 = vrot.lane.b32.xlu0 %v1817, 127
        %v1821 = vpop.permute.xlu0 %1820
        %1822 = vrot.lane.b32.xlu0 %v1819, 127
        %v1823 = vpop.permute.xlu0 %1822
        %1824 = vrot.lane.b32.xlu0 %v1818, 127
        %v1825 = vpop.permute.xlu0 %1824
        %v1829 = vadd.f32 %v1729, %v1821
        %v1830 = vadd.f32 %v1730, %v1823
        %v1831 = vadd.f32 %v1731, %v1825
        %s1832 = sld [smem:[#allocation3 + $0x50]]
        %v1833 = vstv %s1832
        %v1834 = vmul.f32 %v1833, %v356
        %v1835 = vmul.f32 %v1833, %v357
        %v1836 = vmul.f32 %v1833, %v358
        %v1840 = vrot.slane %v1834, 1
        %v1841 = vrot.slane %v1835, 1
        %v1842 = vsel %vm1135, %v1840, %v1841
        %v1843 = vrot.slane %v1836, 1
        %v1844 = vsel %vm1135, %v1841, %v1843
        %1845 = vrot.lane.b32.xlu0 %v1842, 126
        %v1846 = vpop.permute.xlu0 %1845
        %1847 = vrot.lane.b32.xlu0 %v1844, 126
        %v1848 = vpop.permute.xlu0 %1847
        %1849 = vrot.lane.b32.xlu0 %v1843, 126
        %v1850 = vpop.permute.xlu0 %1849
        %v1854 = vadd.f32 %v1754, %v1846
        %v1855 = vadd.f32 %v1755, %v1848
        %v1856 = vadd.f32 %v1756, %v1850
        %s1857 = sld [smem:[#allocation3 + $0x51]]
        %v1858 = vstv %s1857
        %v1859 = vmul.f32 %v1858, %v356
        %v1860 = vmul.f32 %v1858, %v357
        %v1861 = vmul.f32 %v1858, %v358
        %v1865 = vrot.slane %v1859, 1
        %v1866 = vrot.slane %v1860, 1
        %v1867 = vsel %vm1135, %v1865, %v1866
        %v1868 = vrot.slane %v1861, 1
        %v1869 = vsel %vm1135, %v1866, %v1868
        %1870 = vrot.lane.b32.xlu0 %v1867, 126
        %v1871 = vpop.permute.xlu0 %1870
        %1872 = vrot.lane.b32.xlu0 %v1869, 126
        %v1873 = vpop.permute.xlu0 %1872
        %1874 = vrot.lane.b32.xlu0 %v1868, 126
        %v1875 = vpop.permute.xlu0 %1874
        %v1879 = vadd.f32 %v1779, %v1871
        %v1880 = vadd.f32 %v1780, %v1873
        %v1881 = vadd.f32 %v1781, %v1875
        %s1882 = sld [smem:[#allocation3 + $0x52]]
        %v1883 = vstv %s1882
        %v1884 = vmul.f32 %v1883, %v356
        %v1885 = vmul.f32 %v1883, %v357
        %v1886 = vmul.f32 %v1883, %v358
        %v1890 = vrot.slane %v1884, 1
        %v1891 = vrot.slane %v1885, 1
        %v1892 = vsel %vm1135, %v1890, %v1891
        %v1893 = vrot.slane %v1886, 1
        %v1894 = vsel %vm1135, %v1891, %v1893
        %1895 = vrot.lane.b32.xlu0 %v1892, 126
        %v1896 = vpop.permute.xlu0 %1895
        %1897 = vrot.lane.b32.xlu0 %v1894, 126
        %v1898 = vpop.permute.xlu0 %1897
        %1899 = vrot.lane.b32.xlu0 %v1893, 126
        %v1900 = vpop.permute.xlu0 %1899
        %v1904 = vadd.f32 %v1804, %v1896
        %v1905 = vadd.f32 %v1805, %v1898
        %v1906 = vadd.f32 %v1806, %v1900
        %s1907 = sld [smem:[#allocation3 + $0x53]]
        %v1908 = vstv %s1907
        %v1909 = vmul.f32 %v1908, %v356
        %v1910 = vmul.f32 %v1908, %v357
        %v1911 = vmul.f32 %v1908, %v358
        %v1915 = vrot.slane %v1909, 1
        %v1916 = vrot.slane %v1910, 1
        %v1917 = vsel %vm1135, %v1915, %v1916
        %v1918 = vrot.slane %v1911, 1
        %v1919 = vsel %vm1135, %v1916, %v1918
        %1920 = vrot.lane.b32.xlu0 %v1917, 126
        %v1921 = vpop.permute.xlu0 %1920
        %1922 = vrot.lane.b32.xlu0 %v1919, 126
        %v1923 = vpop.permute.xlu0 %1922
        %1924 = vrot.lane.b32.xlu0 %v1918, 126
        %v1925 = vpop.permute.xlu0 %1924
        %v1929 = vadd.f32 %v1829, %v1921
        %v1930 = vadd.f32 %v1830, %v1923
        %v1931 = vadd.f32 %v1831, %v1925
        %s1932 = sld [smem:[#allocation3 + $0x54]]
        %v1933 = vstv %s1932
        %v1934 = vmul.f32 %v1933, %v360
        %v1935 = vmul.f32 %v1933, %v361
        %v1936 = vmul.f32 %v1933, %v362
        %v1940 = vrot.slane %v1934, 1
        %v1941 = vrot.slane %v1935, 1
        %v1942 = vsel %vm1135, %v1940, %v1941
        %v1943 = vrot.slane %v1936, 1
        %v1944 = vsel %vm1135, %v1941, %v1943
        %1945 = vrot.lane.b32.xlu0 %v1942, 126
        %v1946 = vpop.permute.xlu0 %1945
        %1947 = vrot.lane.b32.xlu0 %v1944, 126
        %v1948 = vpop.permute.xlu0 %1947
        %1949 = vrot.lane.b32.xlu0 %v1943, 126
        %v1950 = vpop.permute.xlu0 %1949
        %v1954 = vadd.f32 %v1854, %v1946
        %v1955 = vadd.f32 %v1855, %v1948
        %v1956 = vadd.f32 %v1856, %v1950
        %s1957 = sld [smem:[#allocation3 + $0x55]]
        %v1958 = vstv %s1957
        %v1959 = vmul.f32 %v1958, %v360
        %v1960 = vmul.f32 %v1958, %v361
        %v1961 = vmul.f32 %v1958, %v362
        %v1965 = vrot.slane %v1959, 1
        %v1966 = vrot.slane %v1960, 1
        %v1967 = vsel %vm1135, %v1965, %v1966
        %v1968 = vrot.slane %v1961, 1
        %v1969 = vsel %vm1135, %v1966, %v1968
        %1970 = vrot.lane.b32.xlu0 %v1967, 126
        %v1971 = vpop.permute.xlu0 %1970
        %1972 = vrot.lane.b32.xlu0 %v1969, 126
        %v1973 = vpop.permute.xlu0 %1972
        %1974 = vrot.lane.b32.xlu0 %v1968, 126
        %v1975 = vpop.permute.xlu0 %1974
        %v1979 = vadd.f32 %v1879, %v1971
        %v1980 = vadd.f32 %v1880, %v1973
        %v1981 = vadd.f32 %v1881, %v1975
        %s1982 = sld [smem:[#allocation3 + $0x56]]
        %v1983 = vstv %s1982
        %v1984 = vmul.f32 %v1983, %v360
        %v1985 = vmul.f32 %v1983, %v361
        %v1986 = vmul.f32 %v1983, %v362
        %v1990 = vrot.slane %v1984, 1
        %v1991 = vrot.slane %v1985, 1
        %v1992 = vsel %vm1135, %v1990, %v1991
        %v1993 = vrot.slane %v1986, 1
        %v1994 = vsel %vm1135, %v1991, %v1993
        %1995 = vrot.lane.b32.xlu0 %v1992, 126
        %v1996 = vpop.permute.xlu0 %1995
        %1997 = vrot.lane.b32.xlu0 %v1994, 126
        %v1998 = vpop.permute.xlu0 %1997
        %1999 = vrot.lane.b32.xlu0 %v1993, 126
        %v2000 = vpop.permute.xlu0 %1999
        %v2004 = vadd.f32 %v1904, %v1996
        %v2005 = vadd.f32 %v1905, %v1998
        %v2006 = vadd.f32 %v1906, %v2000
        %s2007 = sld [smem:[#allocation3 + $0x57]]
        %v2008 = vstv %s2007
        %v2009 = vmul.f32 %v2008, %v360
        %v2010 = vmul.f32 %v2008, %v361
        %v2011 = vmul.f32 %v2008, %v362
        %v2015 = vrot.slane %v2009, 1
        %v2016 = vrot.slane %v2010, 1
        %v2017 = vsel %vm1135, %v2015, %v2016
        %v2018 = vrot.slane %v2011, 1
        %v2019 = vsel %vm1135, %v2016, %v2018
        %2020 = vrot.lane.b32.xlu0 %v2017, 126
        %v2021 = vpop.permute.xlu0 %2020
        %2022 = vrot.lane.b32.xlu0 %v2019, 126
        %v2023 = vpop.permute.xlu0 %2022
        %2024 = vrot.lane.b32.xlu0 %v2018, 126
        %v2025 = vpop.permute.xlu0 %2024
        %v2029 = vadd.f32 %v1929, %v2021
        %v2030 = vadd.f32 %v1930, %v2023
        %v2031 = vadd.f32 %v1931, %v2025
        %s2032 = sld [smem:[#allocation3 + $0x58]]
        %v2033 = vstv %s2032
        %v2034 = vmul.f32 %v2033, %v364
        %v2035 = vmul.f32 %v2033, %v365
        %v2036 = vmul.f32 %v2033, %v366
        %v2040 = vrot.slane %v2034, 1
        %v2041 = vrot.slane %v2035, 1
        %v2042 = vsel %vm1135, %v2040, %v2041
        %v2043 = vrot.slane %v2036, 1
        %v2044 = vsel %vm1135, %v2041, %v2043
        %2045 = vrot.lane.b32.xlu0 %v2042, 126
        %v2046 = vpop.permute.xlu0 %2045
        %2047 = vrot.lane.b32.xlu0 %v2044, 126
        %v2048 = vpop.permute.xlu0 %2047
        %2049 = vrot.lane.b32.xlu0 %v2043, 126
        %v2050 = vpop.permute.xlu0 %2049
        %v2054 = vadd.f32 %v1954, %v2046
        %v2055 = vadd.f32 %v1955, %v2048
        %v2056 = vadd.f32 %v1956, %v2050
        %s2057 = sld [smem:[#allocation3 + $0x59]]
        %v2058 = vstv %s2057
        %v2059 = vmul.f32 %v2058, %v364
        %v2060 = vmul.f32 %v2058, %v365
        %v2061 = vmul.f32 %v2058, %v366
        %v2065 = vrot.slane %v2059, 1
        %v2066 = vrot.slane %v2060, 1
        %v2067 = vsel %vm1135, %v2065, %v2066
        %v2068 = vrot.slane %v2061, 1
        %v2069 = vsel %vm1135, %v2066, %v2068
        %2070 = vrot.lane.b32.xlu0 %v2067, 126
        %v2071 = vpop.permute.xlu0 %2070
        %2072 = vrot.lane.b32.xlu0 %v2069, 126
        %v2073 = vpop.permute.xlu0 %2072
        %2074 = vrot.lane.b32.xlu0 %v2068, 126
        %v2075 = vpop.permute.xlu0 %2074
        %v2079 = vadd.f32 %v1979, %v2071
        %v2080 = vadd.f32 %v1980, %v2073
        %v2081 = vadd.f32 %v1981, %v2075
        %s2082 = sld [smem:[#allocation3 + $0x5a]]
        %v2083 = vstv %s2082
        %v2084 = vmul.f32 %v2083, %v364
        %v2085 = vmul.f32 %v2083, %v365
        %v2086 = vmul.f32 %v2083, %v366
        %v2090 = vrot.slane %v2084, 1
        %v2091 = vrot.slane %v2085, 1
        %v2092 = vsel %vm1135, %v2090, %v2091
        %v2093 = vrot.slane %v2086, 1
        %v2094 = vsel %vm1135, %v2091, %v2093
        %2095 = vrot.lane.b32.xlu0 %v2092, 126
        %v2096 = vpop.permute.xlu0 %2095
        %2097 = vrot.lane.b32.xlu0 %v2094, 126
        %v2098 = vpop.permute.xlu0 %2097
        %2099 = vrot.lane.b32.xlu0 %v2093, 126
        %v2100 = vpop.permute.xlu0 %2099
        %v2104 = vadd.f32 %v2004, %v2096
        %v2105 = vadd.f32 %v2005, %v2098
        %v2106 = vadd.f32 %v2006, %v2100
        %s2107 = sld [smem:[#allocation3 + $0x5b]]
        %v2108 = vstv %s2107
        %v2109 = vmul.f32 %v2108, %v364
        %v2110 = vmul.f32 %v2108, %v365
        %v2111 = vmul.f32 %v2108, %v366
        %v2115 = vrot.slane %v2109, 1
        %v2116 = vrot.slane %v2110, 1
        %v2117 = vsel %vm1135, %v2115, %v2116
        %v2118 = vrot.slane %v2111, 1
        %v2119 = vsel %vm1135, %v2116, %v2118
        %2120 = vrot.lane.b32.xlu0 %v2117, 126
        %v2121 = vpop.permute.xlu0 %2120
        %2122 = vrot.lane.b32.xlu0 %v2119, 126
        %v2123 = vpop.permute.xlu0 %2122
        %2124 = vrot.lane.b32.xlu0 %v2118, 126
        %v2125 = vpop.permute.xlu0 %2124
        %v2129 = vadd.f32 %v2029, %v2121
        %v2130 = vadd.f32 %v2030, %v2123
        %v2131 = vadd.f32 %v2031, %v2125
        %s2132 = sld [smem:[#allocation3 + $0x5c]]
        %v2133 = vstv %s2132
        %v2134 = vmul.f32 %v2133, %v368
        %v2135 = vmul.f32 %v2133, %v369
        %v2136 = vmul.f32 %v2133, %v370
        %v2140 = vrot.slane %v2134, 1
        %v2141 = vrot.slane %v2135, 1
        %v2142 = vsel %vm1135, %v2140, %v2141
        %v2143 = vrot.slane %v2136, 1
        %v2144 = vsel %vm1135, %v2141, %v2143
        %2145 = vrot.lane.b32.xlu0 %v2142, 126
        %v2146 = vpop.permute.xlu0 %2145
        %2147 = vrot.lane.b32.xlu0 %v2144, 126
        %v2148 = vpop.permute.xlu0 %2147
        %2149 = vrot.lane.b32.xlu0 %v2143, 126
        %v2150 = vpop.permute.xlu0 %2149
        %v2154 = vadd.f32 %v2054, %v2146
        %v2155 = vadd.f32 %v2055, %v2148
        %v2156 = vadd.f32 %v2056, %v2150
        %s2157 = sld [smem:[#allocation3 + $0x5d]]
        %v2158 = vstv %s2157
        %v2159 = vmul.f32 %v2158, %v368
        %v2160 = vmul.f32 %v2158, %v369
        %v2161 = vmul.f32 %v2158, %v370
        %v2165 = vrot.slane %v2159, 1
        %v2166 = vrot.slane %v2160, 1
        %v2167 = vsel %vm1135, %v2165, %v2166
        %v2168 = vrot.slane %v2161, 1
        %v2169 = vsel %vm1135, %v2166, %v2168
        %2170 = vrot.lane.b32.xlu0 %v2167, 126
        %v2171 = vpop.permute.xlu0 %2170
        %2172 = vrot.lane.b32.xlu0 %v2169, 126
        %v2173 = vpop.permute.xlu0 %2172
        %2174 = vrot.lane.b32.xlu0 %v2168, 126
        %v2175 = vpop.permute.xlu0 %2174
        %v2179 = vadd.f32 %v2079, %v2171
        %v2180 = vadd.f32 %v2080, %v2173
        %v2181 = vadd.f32 %v2081, %v2175
        %s2182 = sld [smem:[#allocation3 + $0x5e]]
        %v2183 = vstv %s2182
        %v2184 = vmul.f32 %v2183, %v368
        %v2185 = vmul.f32 %v2183, %v369
        %v2186 = vmul.f32 %v2183, %v370
        %v2190 = vrot.slane %v2184, 1
        %v2191 = vrot.slane %v2185, 1
        %v2192 = vsel %vm1135, %v2190, %v2191
        %v2193 = vrot.slane %v2186, 1
        %v2194 = vsel %vm1135, %v2191, %v2193
        %2195 = vrot.lane.b32.xlu0 %v2192, 126
        %v2196 = vpop.permute.xlu0 %2195
        %2197 = vrot.lane.b32.xlu0 %v2194, 126
        %v2198 = vpop.permute.xlu0 %2197
        %2199 = vrot.lane.b32.xlu0 %v2193, 126
        %v2200 = vpop.permute.xlu0 %2199
        %v2204 = vadd.f32 %v2104, %v2196
        %v2205 = vadd.f32 %v2105, %v2198
        %v2206 = vadd.f32 %v2106, %v2200
        %s2207 = sld [smem:[#allocation3 + $0x5f]]
        %v2208 = vstv %s2207
        %v2209 = vmul.f32 %v2208, %v368
        %v2210 = vmul.f32 %v2208, %v369
        %v2211 = vmul.f32 %v2208, %v370
        %v2215 = vrot.slane %v2209, 1
        %v2216 = vrot.slane %v2210, 1
        %v2217 = vsel %vm1135, %v2215, %v2216
        %v2218 = vrot.slane %v2211, 1
        %v2219 = vsel %vm1135, %v2216, %v2218
        %2220 = vrot.lane.b32.xlu0 %v2217, 126
        %v2221 = vpop.permute.xlu0 %2220
        %2222 = vrot.lane.b32.xlu0 %v2219, 126
        %v2223 = vpop.permute.xlu0 %2222
        %2224 = vrot.lane.b32.xlu0 %v2218, 126
        %v2225 = vpop.permute.xlu0 %2224
        %v2229 = vadd.f32 %v2129, %v2221
        %v2230 = vadd.f32 %v2130, %v2223
        %v2231 = vadd.f32 %v2131, %v2225
        %s2232 = sld [smem:[#allocation3 + $0x60]]
        %v2233 = vstv %s2232
        %v2234 = vmul.f32 %v2233, %v356
        %v2235 = vmul.f32 %v2233, %v357
        %v2236 = vmul.f32 %v2233, %v358
        %vm2240 = vcmask 1045504
        %v2241 = vrot.slane %v2234, 2
        %v2242 = vrot.slane %v2235, 2
        %v2243 = vsel %vm2240, %v2241, %v2242
        %v2244 = vrot.slane %v2236, 2
        %v2245 = vsel %vm2240, %v2242, %v2244
        %v2249 = vadd.f32 %v2154, %v2243
        %v2250 = vadd.f32 %v2155, %v2245
        %v2251 = vadd.f32 %v2156, %v2244
        %s2252 = sld [smem:[#allocation3 + $0x61]]
        %v2253 = vstv %s2252
        %v2254 = vmul.f32 %v2253, %v356
        %v2255 = vmul.f32 %v2253, %v357
        %v2256 = vmul.f32 %v2253, %v358
        %v2260 = vrot.slane %v2254, 2
        %v2261 = vrot.slane %v2255, 2
        %v2262 = vsel %vm2240, %v2260, %v2261
        %v2263 = vrot.slane %v2256, 2
        %v2264 = vsel %vm2240, %v2261, %v2263
        %v2268 = vadd.f32 %v2179, %v2262
        %v2269 = vadd.f32 %v2180, %v2264
        %v2270 = vadd.f32 %v2181, %v2263
        %s2271 = sld [smem:[#allocation3 + $0x62]]
        %v2272 = vstv %s2271
        %v2273 = vmul.f32 %v2272, %v356
        %v2274 = vmul.f32 %v2272, %v357
        %v2275 = vmul.f32 %v2272, %v358
        %v2279 = vrot.slane %v2273, 2
        %v2280 = vrot.slane %v2274, 2
        %v2281 = vsel %vm2240, %v2279, %v2280
        %v2282 = vrot.slane %v2275, 2
        %v2283 = vsel %vm2240, %v2280, %v2282
        %v2287 = vadd.f32 %v2204, %v2281
        %v2288 = vadd.f32 %v2205, %v2283
        %v2289 = vadd.f32 %v2206, %v2282
        %s2290 = sld [smem:[#allocation3 + $0x63]]
        %v2291 = vstv %s2290
        %v2292 = vmul.f32 %v2291, %v356
        %v2293 = vmul.f32 %v2291, %v357
        %v2294 = vmul.f32 %v2291, %v358
        %v2298 = vrot.slane %v2292, 2
        %v2299 = vrot.slane %v2293, 2
        %v2300 = vsel %vm2240, %v2298, %v2299
        %v2301 = vrot.slane %v2294, 2
        %v2302 = vsel %vm2240, %v2299, %v2301
        %v2306 = vadd.f32 %v2229, %v2300
        %v2307 = vadd.f32 %v2230, %v2302
        %v2308 = vadd.f32 %v2231, %v2301
        %s2309 = sld [smem:[#allocation3 + $0x64]]
        %v2310 = vstv %s2309
        %v2311 = vmul.f32 %v2310, %v360
        %v2312 = vmul.f32 %v2310, %v361
        %v2313 = vmul.f32 %v2310, %v362
        %v2317 = vrot.slane %v2311, 2
        %v2318 = vrot.slane %v2312, 2
        %v2319 = vsel %vm2240, %v2317, %v2318
        %v2320 = vrot.slane %v2313, 2
        %v2321 = vsel %vm2240, %v2318, %v2320
        %v2325 = vadd.f32 %v2249, %v2319
        %v2326 = vadd.f32 %v2250, %v2321
        %v2327 = vadd.f32 %v2251, %v2320
        %s2328 = sld [smem:[#allocation3 + $0x65]]
        %v2329 = vstv %s2328
        %v2330 = vmul.f32 %v2329, %v360
        %v2331 = vmul.f32 %v2329, %v361
        %v2332 = vmul.f32 %v2329, %v362
        %v2336 = vrot.slane %v2330, 2
        %v2337 = vrot.slane %v2331, 2
        %v2338 = vsel %vm2240, %v2336, %v2337
        %v2339 = vrot.slane %v2332, 2
        %v2340 = vsel %vm2240, %v2337, %v2339
        %v2344 = vadd.f32 %v2268, %v2338
        %v2345 = vadd.f32 %v2269, %v2340
        %v2346 = vadd.f32 %v2270, %v2339
        %s2347 = sld [smem:[#allocation3 + $0x66]]
        %v2348 = vstv %s2347
        %v2349 = vmul.f32 %v2348, %v360
        %v2350 = vmul.f32 %v2348, %v361
        %v2351 = vmul.f32 %v2348, %v362
        %v2355 = vrot.slane %v2349, 2
        %v2356 = vrot.slane %v2350, 2
        %v2357 = vsel %vm2240, %v2355, %v2356
        %v2358 = vrot.slane %v2351, 2
        %v2359 = vsel %vm2240, %v2356, %v2358
        %v2363 = vadd.f32 %v2287, %v2357
        %v2364 = vadd.f32 %v2288, %v2359
        %v2365 = vadd.f32 %v2289, %v2358
        %s2366 = sld [smem:[#allocation3 + $0x67]]
        %v2367 = vstv %s2366
        %v2368 = vmul.f32 %v2367, %v360
        %v2369 = vmul.f32 %v2367, %v361
        %v2370 = vmul.f32 %v2367, %v362
        %v2374 = vrot.slane %v2368, 2
        %v2375 = vrot.slane %v2369, 2
        %v2376 = vsel %vm2240, %v2374, %v2375
        %v2377 = vrot.slane %v2370, 2
        %v2378 = vsel %vm2240, %v2375, %v2377
        %v2382 = vadd.f32 %v2306, %v2376
        %v2383 = vadd.f32 %v2307, %v2378
        %v2384 = vadd.f32 %v2308, %v2377
        %s2385 = sld [smem:[#allocation3 + $0x68]]
        %v2386 = vstv %s2385
        %v2387 = vmul.f32 %v2386, %v364
        %v2388 = vmul.f32 %v2386, %v365
        %v2389 = vmul.f32 %v2386, %v366
        %v2393 = vrot.slane %v2387, 2
        %v2394 = vrot.slane %v2388, 2
        %v2395 = vsel %vm2240, %v2393, %v2394
        %v2396 = vrot.slane %v2389, 2
        %v2397 = vsel %vm2240, %v2394, %v2396
        %v2401 = vadd.f32 %v2325, %v2395
        %v2402 = vadd.f32 %v2326, %v2397
        %v2403 = vadd.f32 %v2327, %v2396
        %s2404 = sld [smem:[#allocation3 + $0x69]]
        %v2405 = vstv %s2404
        %v2406 = vmul.f32 %v2405, %v364
        %v2407 = vmul.f32 %v2405, %v365
        %v2408 = vmul.f32 %v2405, %v366
        %v2412 = vrot.slane %v2406, 2
        %v2413 = vrot.slane %v2407, 2
        %v2414 = vsel %vm2240, %v2412, %v2413
        %v2415 = vrot.slane %v2408, 2
        %v2416 = vsel %vm2240, %v2413, %v2415
        %v2420 = vadd.f32 %v2344, %v2414
        %v2421 = vadd.f32 %v2345, %v2416
        %v2422 = vadd.f32 %v2346, %v2415
        %s2423 = sld [smem:[#allocation3 + $0x6a]]
        %v2424 = vstv %s2423
        %v2425 = vmul.f32 %v2424, %v364
        %v2426 = vmul.f32 %v2424, %v365
        %v2427 = vmul.f32 %v2424, %v366
        %v2431 = vrot.slane %v2425, 2
        %v2432 = vrot.slane %v2426, 2
        %v2433 = vsel %vm2240, %v2431, %v2432
        %v2434 = vrot.slane %v2427, 2
        %v2435 = vsel %vm2240, %v2432, %v2434
        %v2439 = vadd.f32 %v2363, %v2433
        %v2440 = vadd.f32 %v2364, %v2435
        %v2441 = vadd.f32 %v2365, %v2434
        %s2442 = sld [smem:[#allocation3 + $0x6b]]
        %v2443 = vstv %s2442
        %v2444 = vmul.f32 %v2443, %v364
        %v2445 = vmul.f32 %v2443, %v365
        %v2446 = vmul.f32 %v2443, %v366
        %v2450 = vrot.slane %v2444, 2
        %v2451 = vrot.slane %v2445, 2
        %v2452 = vsel %vm2240, %v2450, %v2451
        %v2453 = vrot.slane %v2446, 2
        %v2454 = vsel %vm2240, %v2451, %v2453
        %v2458 = vadd.f32 %v2382, %v2452
        %v2459 = vadd.f32 %v2383, %v2454
        %v2460 = vadd.f32 %v2384, %v2453
        %s2461 = sld [smem:[#allocation3 + $0x6c]]
        %v2462 = vstv %s2461
        %v2463 = vmul.f32 %v2462, %v368
        %v2464 = vmul.f32 %v2462, %v369
        %v2465 = vmul.f32 %v2462, %v370
        %v2469 = vrot.slane %v2463, 2
        %v2470 = vrot.slane %v2464, 2
        %v2471 = vsel %vm2240, %v2469, %v2470
        %v2472 = vrot.slane %v2465, 2
        %v2473 = vsel %vm2240, %v2470, %v2472
        %v2477 = vadd.f32 %v2401, %v2471
        %v2478 = vadd.f32 %v2402, %v2473
        %v2479 = vadd.f32 %v2403, %v2472
        %s2480 = sld [smem:[#allocation3 + $0x6d]]
        %v2481 = vstv %s2480
        %v2482 = vmul.f32 %v2481, %v368
        %v2483 = vmul.f32 %v2481, %v369
        %v2484 = vmul.f32 %v2481, %v370
        %v2488 = vrot.slane %v2482, 2
        %v2489 = vrot.slane %v2483, 2
        %v2490 = vsel %vm2240, %v2488, %v2489
        %v2491 = vrot.slane %v2484, 2
        %v2492 = vsel %vm2240, %v2489, %v2491
        %v2496 = vadd.f32 %v2420, %v2490
        %v2497 = vadd.f32 %v2421, %v2492
        %v2498 = vadd.f32 %v2422, %v2491
        %s2499 = sld [smem:[#allocation3 + $0x6e]]
        %v2500 = vstv %s2499
        %v2501 = vmul.f32 %v2500, %v368
        %v2502 = vmul.f32 %v2500, %v369
        %v2503 = vmul.f32 %v2500, %v370
        %v2507 = vrot.slane %v2501, 2
        %v2508 = vrot.slane %v2502, 2
        %v2509 = vsel %vm2240, %v2507, %v2508
        %v2510 = vrot.slane %v2503, 2
        %v2511 = vsel %vm2240, %v2508, %v2510
        %v2515 = vadd.f32 %v2439, %v2509
        %v2516 = vadd.f32 %v2440, %v2511
        %v2517 = vadd.f32 %v2441, %v2510
        %s2518 = sld [smem:[#allocation3 + $0x6f]]
        %v2519 = vstv %s2518
        %v2520 = vmul.f32 %v2519, %v368
        %v2521 = vmul.f32 %v2519, %v369
        %v2522 = vmul.f32 %v2519, %v370
        %v2526 = vrot.slane %v2520, 2
        %v2527 = vrot.slane %v2521, 2
        %v2528 = vsel %vm2240, %v2526, %v2527
        %v2529 = vrot.slane %v2522, 2
        %v2530 = vsel %vm2240, %v2527, %v2529
        %v2534 = vadd.f32 %v2458, %v2528
        %v2535 = vadd.f32 %v2459, %v2530
        %v2536 = vadd.f32 %v2460, %v2529
        %s2537 = sld [smem:[#allocation3 + $0x70]]
        %v2538 = vstv %s2537
        %v2539 = vmul.f32 %v2538, %v356
        %v2540 = vmul.f32 %v2538, %v357
        %v2541 = vmul.f32 %v2538, %v358
        %v2545 = vrot.slane %v2539, 2
        %v2546 = vrot.slane %v2540, 2
        %v2547 = vsel %vm2240, %v2545, %v2546
        %v2548 = vrot.slane %v2541, 2
        %v2549 = vsel %vm2240, %v2546, %v2548
        %2550 = vrot.lane.b32.xlu0 %v2547, 127
        %v2551 = vpop.permute.xlu0 %2550
        %2552 = vrot.lane.b32.xlu0 %v2549, 127
        %v2553 = vpop.permute.xlu0 %2552
        %2554 = vrot.lane.b32.xlu0 %v2548, 127
        %v2555 = vpop.permute.xlu0 %2554
        %v2559 = vadd.f32 %v2477, %v2551
        %v2560 = vadd.f32 %v2478, %v2553
        %v2561 = vadd.f32 %v2479, %v2555
        %s2562 = sld [smem:[#allocation3 + $0x71]]
        %v2563 = vstv %s2562
        %v2564 = vmul.f32 %v2563, %v356
        %v2565 = vmul.f32 %v2563, %v357
        %v2566 = vmul.f32 %v2563, %v358
        %v2570 = vrot.slane %v2564, 2
        %v2571 = vrot.slane %v2565, 2
        %v2572 = vsel %vm2240, %v2570, %v2571
        %v2573 = vrot.slane %v2566, 2
        %v2574 = vsel %vm2240, %v2571, %v2573
        %2575 = vrot.lane.b32.xlu0 %v2572, 127
        %v2576 = vpop.permute.xlu0 %2575
        %2577 = vrot.lane.b32.xlu0 %v2574, 127
        %v2578 = vpop.permute.xlu0 %2577
        %2579 = vrot.lane.b32.xlu0 %v2573, 127
        %v2580 = vpop.permute.xlu0 %2579
        %v2584 = vadd.f32 %v2496, %v2576
        %v2585 = vadd.f32 %v2497, %v2578
        %v2586 = vadd.f32 %v2498, %v2580
        %s2587 = sld [smem:[#allocation3 + $0x72]]
        %v2588 = vstv %s2587
        %v2589 = vmul.f32 %v2588, %v356
        %v2590 = vmul.f32 %v2588, %v357
        %v2591 = vmul.f32 %v2588, %v358
        %v2595 = vrot.slane %v2589, 2
        %v2596 = vrot.slane %v2590, 2
        %v2597 = vsel %vm2240, %v2595, %v2596
        %v2598 = vrot.slane %v2591, 2
        %v2599 = vsel %vm2240, %v2596, %v2598
        %2600 = vrot.lane.b32.xlu0 %v2597, 127
        %v2601 = vpop.permute.xlu0 %2600
        %2602 = vrot.lane.b32.xlu0 %v2599, 127
        %v2603 = vpop.permute.xlu0 %2602
        %2604 = vrot.lane.b32.xlu0 %v2598, 127
        %v2605 = vpop.permute.xlu0 %2604
        %v2609 = vadd.f32 %v2515, %v2601
        %v2610 = vadd.f32 %v2516, %v2603
        %v2611 = vadd.f32 %v2517, %v2605
        %s2612 = sld [smem:[#allocation3 + $0x73]]
        %v2613 = vstv %s2612
        %v2614 = vmul.f32 %v2613, %v356
        %v2615 = vmul.f32 %v2613, %v357
        %v2616 = vmul.f32 %v2613, %v358
        %v2620 = vrot.slane %v2614, 2
        %v2621 = vrot.slane %v2615, 2
        %v2622 = vsel %vm2240, %v2620, %v2621
        %v2623 = vrot.slane %v2616, 2
        %v2624 = vsel %vm2240, %v2621, %v2623
        %2625 = vrot.lane.b32.xlu0 %v2622, 127
        %v2626 = vpop.permute.xlu0 %2625
        %2627 = vrot.lane.b32.xlu0 %v2624, 127
        %v2628 = vpop.permute.xlu0 %2627
        %2629 = vrot.lane.b32.xlu0 %v2623, 127
        %v2630 = vpop.permute.xlu0 %2629
        %v2634 = vadd.f32 %v2534, %v2626
        %v2635 = vadd.f32 %v2535, %v2628
        %v2636 = vadd.f32 %v2536, %v2630
        %s2637 = sld [smem:[#allocation3 + $0x74]]
        %v2638 = vstv %s2637
        %v2639 = vmul.f32 %v2638, %v360
        %v2640 = vmul.f32 %v2638, %v361
        %v2641 = vmul.f32 %v2638, %v362
        %v2645 = vrot.slane %v2639, 2
        %v2646 = vrot.slane %v2640, 2
        %v2647 = vsel %vm2240, %v2645, %v2646
        %v2648 = vrot.slane %v2641, 2
        %v2649 = vsel %vm2240, %v2646, %v2648
        %2650 = vrot.lane.b32.xlu0 %v2647, 127
        %v2651 = vpop.permute.xlu0 %2650
        %2652 = vrot.lane.b32.xlu0 %v2649, 127
        %v2653 = vpop.permute.xlu0 %2652
        %2654 = vrot.lane.b32.xlu0 %v2648, 127
        %v2655 = vpop.permute.xlu0 %2654
        %v2659 = vadd.f32 %v2559, %v2651
        %v2660 = vadd.f32 %v2560, %v2653
        %v2661 = vadd.f32 %v2561, %v2655
        %s2662 = sld [smem:[#allocation3 + $0x75]]
        %v2663 = vstv %s2662
        %v2664 = vmul.f32 %v2663, %v360
        %v2665 = vmul.f32 %v2663, %v361
        %v2666 = vmul.f32 %v2663, %v362
        %v2670 = vrot.slane %v2664, 2
        %v2671 = vrot.slane %v2665, 2
        %v2672 = vsel %vm2240, %v2670, %v2671
        %v2673 = vrot.slane %v2666, 2
        %v2674 = vsel %vm2240, %v2671, %v2673
        %2675 = vrot.lane.b32.xlu0 %v2672, 127
        %v2676 = vpop.permute.xlu0 %2675
        %2677 = vrot.lane.b32.xlu0 %v2674, 127
        %v2678 = vpop.permute.xlu0 %2677
        %2679 = vrot.lane.b32.xlu0 %v2673, 127
        %v2680 = vpop.permute.xlu0 %2679
        %v2684 = vadd.f32 %v2584, %v2676
        %v2685 = vadd.f32 %v2585, %v2678
        %v2686 = vadd.f32 %v2586, %v2680
        %s2687 = sld [smem:[#allocation3 + $0x76]]
        %v2688 = vstv %s2687
        %v2689 = vmul.f32 %v2688, %v360
        %v2690 = vmul.f32 %v2688, %v361
        %v2691 = vmul.f32 %v2688, %v362
        %v2695 = vrot.slane %v2689, 2
        %v2696 = vrot.slane %v2690, 2
        %v2697 = vsel %vm2240, %v2695, %v2696
        %v2698 = vrot.slane %v2691, 2
        %v2699 = vsel %vm2240, %v2696, %v2698
        %2700 = vrot.lane.b32.xlu0 %v2697, 127
        %v2701 = vpop.permute.xlu0 %2700
        %2702 = vrot.lane.b32.xlu0 %v2699, 127
        %v2703 = vpop.permute.xlu0 %2702
        %2704 = vrot.lane.b32.xlu0 %v2698, 127
        %v2705 = vpop.permute.xlu0 %2704
        %v2709 = vadd.f32 %v2609, %v2701
        %v2710 = vadd.f32 %v2610, %v2703
        %v2711 = vadd.f32 %v2611, %v2705
        %s2712 = sld [smem:[#allocation3 + $0x77]]
        %v2713 = vstv %s2712
        %v2714 = vmul.f32 %v2713, %v360
        %v2715 = vmul.f32 %v2713, %v361
        %v2716 = vmul.f32 %v2713, %v362
        %v2720 = vrot.slane %v2714, 2
        %v2721 = vrot.slane %v2715, 2
        %v2722 = vsel %vm2240, %v2720, %v2721
        %v2723 = vrot.slane %v2716, 2
        %v2724 = vsel %vm2240, %v2721, %v2723
        %2725 = vrot.lane.b32.xlu0 %v2722, 127
        %v2726 = vpop.permute.xlu0 %2725
        %2727 = vrot.lane.b32.xlu0 %v2724, 127
        %v2728 = vpop.permute.xlu0 %2727
        %2729 = vrot.lane.b32.xlu0 %v2723, 127
        %v2730 = vpop.permute.xlu0 %2729
        %v2734 = vadd.f32 %v2634, %v2726
        %v2735 = vadd.f32 %v2635, %v2728
        %v2736 = vadd.f32 %v2636, %v2730
        %s2737 = sld [smem:[#allocation3 + $0x78]]
        %v2738 = vstv %s2737
        %v2739 = vmul.f32 %v2738, %v364
        %v2740 = vmul.f32 %v2738, %v365
        %v2741 = vmul.f32 %v2738, %v366
        %v2745 = vrot.slane %v2739, 2
        %v2746 = vrot.slane %v2740, 2
        %v2747 = vsel %vm2240, %v2745, %v2746
        %v2748 = vrot.slane %v2741, 2
        %v2749 = vsel %vm2240, %v2746, %v2748
        %2750 = vrot.lane.b32.xlu0 %v2747, 127
        %v2751 = vpop.permute.xlu0 %2750
        %2752 = vrot.lane.b32.xlu0 %v2749, 127
        %v2753 = vpop.permute.xlu0 %2752
        %2754 = vrot.lane.b32.xlu0 %v2748, 127
        %v2755 = vpop.permute.xlu0 %2754
        %v2759 = vadd.f32 %v2659, %v2751
        %v2760 = vadd.f32 %v2660, %v2753
        %v2761 = vadd.f32 %v2661, %v2755
        %s2762 = sld [smem:[#allocation3 + $0x79]]
        %v2763 = vstv %s2762
        %v2764 = vmul.f32 %v2763, %v364
        %v2765 = vmul.f32 %v2763, %v365
        %v2766 = vmul.f32 %v2763, %v366
        %v2770 = vrot.slane %v2764, 2
        %v2771 = vrot.slane %v2765, 2
        %v2772 = vsel %vm2240, %v2770, %v2771
        %v2773 = vrot.slane %v2766, 2
        %v2774 = vsel %vm2240, %v2771, %v2773
        %2775 = vrot.lane.b32.xlu0 %v2772, 127
        %v2776 = vpop.permute.xlu0 %2775
        %2777 = vrot.lane.b32.xlu0 %v2774, 127
        %v2778 = vpop.permute.xlu0 %2777
        %2779 = vrot.lane.b32.xlu0 %v2773, 127
        %v2780 = vpop.permute.xlu0 %2779
        %v2784 = vadd.f32 %v2684, %v2776
        %v2785 = vadd.f32 %v2685, %v2778
        %v2786 = vadd.f32 %v2686, %v2780
        %s2787 = sld [smem:[#allocation3 + $0x7a]]
        %v2788 = vstv %s2787
        %v2789 = vmul.f32 %v2788, %v364
        %v2790 = vmul.f32 %v2788, %v365
        %v2791 = vmul.f32 %v2788, %v366
        %v2795 = vrot.slane %v2789, 2
        %v2796 = vrot.slane %v2790, 2
        %v2797 = vsel %vm2240, %v2795, %v2796
        %v2798 = vrot.slane %v2791, 2
        %v2799 = vsel %vm2240, %v2796, %v2798
        %2800 = vrot.lane.b32.xlu0 %v2797, 127
        %v2801 = vpop.permute.xlu0 %2800
        %2802 = vrot.lane.b32.xlu0 %v2799, 127
        %v2803 = vpop.permute.xlu0 %2802
        %2804 = vrot.lane.b32.xlu0 %v2798, 127
        %v2805 = vpop.permute.xlu0 %2804
        %v2809 = vadd.f32 %v2709, %v2801
        %v2810 = vadd.f32 %v2710, %v2803
        %v2811 = vadd.f32 %v2711, %v2805
        %s2812 = sld [smem:[#allocation3 + $0x7b]]
        %v2813 = vstv %s2812
        %v2814 = vmul.f32 %v2813, %v364
        %v2815 = vmul.f32 %v2813, %v365
        %v2816 = vmul.f32 %v2813, %v366
        %v2820 = vrot.slane %v2814, 2
        %v2821 = vrot.slane %v2815, 2
        %v2822 = vsel %vm2240, %v2820, %v2821
        %v2823 = vrot.slane %v2816, 2
        %v2824 = vsel %vm2240, %v2821, %v2823
        %2825 = vrot.lane.b32.xlu0 %v2822, 127
        %v2826 = vpop.permute.xlu0 %2825
        %2827 = vrot.lane.b32.xlu0 %v2824, 127
        %v2828 = vpop.permute.xlu0 %2827
        %2829 = vrot.lane.b32.xlu0 %v2823, 127
        %v2830 = vpop.permute.xlu0 %2829
        %v2834 = vadd.f32 %v2734, %v2826
        %v2835 = vadd.f32 %v2735, %v2828
        %v2836 = vadd.f32 %v2736, %v2830
        %s2837 = sld [smem:[#allocation3 + $0x7c]]
        %v2838 = vstv %s2837
        %v2839 = vmul.f32 %v2838, %v368
        %v2840 = vmul.f32 %v2838, %v369
        %v2841 = vmul.f32 %v2838, %v370
        %v2845 = vrot.slane %v2839, 2
        %v2846 = vrot.slane %v2840, 2
        %v2847 = vsel %vm2240, %v2845, %v2846
        %v2848 = vrot.slane %v2841, 2
        %v2849 = vsel %vm2240, %v2846, %v2848
        %2850 = vrot.lane.b32.xlu0 %v2847, 127
        %v2851 = vpop.permute.xlu0 %2850
        %2852 = vrot.lane.b32.xlu0 %v2849, 127
        %v2853 = vpop.permute.xlu0 %2852
        %2854 = vrot.lane.b32.xlu0 %v2848, 127
        %v2855 = vpop.permute.xlu0 %2854
        %v2859 = vadd.f32 %v2759, %v2851
        %v2860 = vadd.f32 %v2760, %v2853
        %v2861 = vadd.f32 %v2761, %v2855
        %s2862 = sld [smem:[#allocation3 + $0x7d]]
        %v2863 = vstv %s2862
        %v2864 = vmul.f32 %v2863, %v368
        %v2865 = vmul.f32 %v2863, %v369
        %v2866 = vmul.f32 %v2863, %v370
        %v2870 = vrot.slane %v2864, 2
        %v2871 = vrot.slane %v2865, 2
        %v2872 = vsel %vm2240, %v2870, %v2871
        %v2873 = vrot.slane %v2866, 2
        %v2874 = vsel %vm2240, %v2871, %v2873
        %2875 = vrot.lane.b32.xlu0 %v2872, 127
        %v2876 = vpop.permute.xlu0 %2875
        %2877 = vrot.lane.b32.xlu0 %v2874, 127
        %v2878 = vpop.permute.xlu0 %2877
        %2879 = vrot.lane.b32.xlu0 %v2873, 127
        %v2880 = vpop.permute.xlu0 %2879
        %v2884 = vadd.f32 %v2784, %v2876
        %v2885 = vadd.f32 %v2785, %v2878
        %v2886 = vadd.f32 %v2786, %v2880
        %s2887 = sld [smem:[#allocation3 + $0x7e]]
        %v2888 = vstv %s2887
        %v2889 = vmul.f32 %v2888, %v368
        %v2890 = vmul.f32 %v2888, %v369
        %v2891 = vmul.f32 %v2888, %v370
        %v2895 = vrot.slane %v2889, 2
        %v2896 = vrot.slane %v2890, 2
        %v2897 = vsel %vm2240, %v2895, %v2896
        %v2898 = vrot.slane %v2891, 2
        %v2899 = vsel %vm2240, %v2896, %v2898
        %2900 = vrot.lane.b32.xlu0 %v2897, 127
        %v2901 = vpop.permute.xlu0 %2900
        %2902 = vrot.lane.b32.xlu0 %v2899, 127
        %v2903 = vpop.permute.xlu0 %2902
        %2904 = vrot.lane.b32.xlu0 %v2898, 127
        %v2905 = vpop.permute.xlu0 %2904
        %v2909 = vadd.f32 %v2809, %v2901
        %v2910 = vadd.f32 %v2810, %v2903
        %v2911 = vadd.f32 %v2811, %v2905
        %s2912 = sld [smem:[#allocation3 + $0x7f]]
        %v2913 = vstv %s2912
        %v2914 = vmul.f32 %v2913, %v368
        %v2915 = vmul.f32 %v2913, %v369
        %v2916 = vmul.f32 %v2913, %v370
        %v2920 = vrot.slane %v2914, 2
        %v2921 = vrot.slane %v2915, 2
        %v2922 = vsel %vm2240, %v2920, %v2921
        %v2923 = vrot.slane %v2916, 2
        %v2924 = vsel %vm2240, %v2921, %v2923
        %2925 = vrot.lane.b32.xlu0 %v2922, 127
        %v2926 = vpop.permute.xlu0 %2925
        %2927 = vrot.lane.b32.xlu0 %v2924, 127
        %v2928 = vpop.permute.xlu0 %2927
        %2929 = vrot.lane.b32.xlu0 %v2923, 127
        %v2930 = vpop.permute.xlu0 %2929
        %v2934 = vadd.f32 %v2834, %v2926
        %v2935 = vadd.f32 %v2835, %v2928
        %v2936 = vadd.f32 %v2836, %v2930
        %s2937 = sld [smem:[#allocation3 + $0x80]]
        %v2938 = vstv %s2937
        %v2939 = vmul.f32 %v2938, %v356
        %v2940 = vmul.f32 %v2938, %v357
        %v2941 = vmul.f32 %v2938, %v358
        %v2945 = vrot.slane %v2939, 2
        %v2946 = vrot.slane %v2940, 2
        %v2947 = vsel %vm2240, %v2945, %v2946
        %v2948 = vrot.slane %v2941, 2
        %v2949 = vsel %vm2240, %v2946, %v2948
        %2950 = vrot.lane.b32.xlu0 %v2947, 126
        %v2951 = vpop.permute.xlu0 %2950
        %2952 = vrot.lane.b32.xlu0 %v2949, 126
        %v2953 = vpop.permute.xlu0 %2952
        %2954 = vrot.lane.b32.xlu0 %v2948, 126
        %v2955 = vpop.permute.xlu0 %2954
        %v2959 = vadd.f32 %v2859, %v2951
        %v2960 = vadd.f32 %v2860, %v2953
        %v2961 = vadd.f32 %v2861, %v2955
        %s2962 = sld [smem:[#allocation3 + $0x81]]
        %v2963 = vstv %s2962
        %v2964 = vmul.f32 %v2963, %v356
        %v2965 = vmul.f32 %v2963, %v357
        %v2966 = vmul.f32 %v2963, %v358
        %v2970 = vrot.slane %v2964, 2
        %v2971 = vrot.slane %v2965, 2
        %v2972 = vsel %vm2240, %v2970, %v2971
        %v2973 = vrot.slane %v2966, 2
        %v2974 = vsel %vm2240, %v2971, %v2973
        %2975 = vrot.lane.b32.xlu0 %v2972, 126
        %v2976 = vpop.permute.xlu0 %2975
        %2977 = vrot.lane.b32.xlu0 %v2974, 126
        %v2978 = vpop.permute.xlu0 %2977
        %2979 = vrot.lane.b32.xlu0 %v2973, 126
        %v2980 = vpop.permute.xlu0 %2979
        %v2984 = vadd.f32 %v2884, %v2976
        %v2985 = vadd.f32 %v2885, %v2978
        %v2986 = vadd.f32 %v2886, %v2980
        %s2987 = sld [smem:[#allocation3 + $0x82]]
        %v2988 = vstv %s2987
        %v2989 = vmul.f32 %v2988, %v356
        %v2990 = vmul.f32 %v2988, %v357
        %v2991 = vmul.f32 %v2988, %v358
        %v2995 = vrot.slane %v2989, 2
        %v2996 = vrot.slane %v2990, 2
        %v2997 = vsel %vm2240, %v2995, %v2996
        %v2998 = vrot.slane %v2991, 2
        %v2999 = vsel %vm2240, %v2996, %v2998
        %3000 = vrot.lane.b32.xlu0 %v2997, 126
        %v3001 = vpop.permute.xlu0 %3000
        %3002 = vrot.lane.b32.xlu0 %v2999, 126
        %v3003 = vpop.permute.xlu0 %3002
        %3004 = vrot.lane.b32.xlu0 %v2998, 126
        %v3005 = vpop.permute.xlu0 %3004
        %v3009 = vadd.f32 %v2909, %v3001
        %v3010 = vadd.f32 %v2910, %v3003
        %v3011 = vadd.f32 %v2911, %v3005
        %s3012 = sld [smem:[#allocation3 + $0x83]]
        %v3013 = vstv %s3012
        %v3014 = vmul.f32 %v3013, %v356
        %v3015 = vmul.f32 %v3013, %v357
        %v3016 = vmul.f32 %v3013, %v358
        %v3020 = vrot.slane %v3014, 2
        %v3021 = vrot.slane %v3015, 2
        %v3022 = vsel %vm2240, %v3020, %v3021
        %v3023 = vrot.slane %v3016, 2
        %v3024 = vsel %vm2240, %v3021, %v3023
        %3025 = vrot.lane.b32.xlu0 %v3022, 126
        %v3026 = vpop.permute.xlu0 %3025
        %3027 = vrot.lane.b32.xlu0 %v3024, 126
        %v3028 = vpop.permute.xlu0 %3027
        %3029 = vrot.lane.b32.xlu0 %v3023, 126
        %v3030 = vpop.permute.xlu0 %3029
        %v3034 = vadd.f32 %v2934, %v3026
        %v3035 = vadd.f32 %v2935, %v3028
        %v3036 = vadd.f32 %v2936, %v3030
        %s3037 = sld [smem:[#allocation3 + $0x84]]
        %v3038 = vstv %s3037
        %v3039 = vmul.f32 %v3038, %v360
        %v3040 = vmul.f32 %v3038, %v361
        %v3041 = vmul.f32 %v3038, %v362
        %v3045 = vrot.slane %v3039, 2
        %v3046 = vrot.slane %v3040, 2
        %v3047 = vsel %vm2240, %v3045, %v3046
        %v3048 = vrot.slane %v3041, 2
        %v3049 = vsel %vm2240, %v3046, %v3048
        %3050 = vrot.lane.b32.xlu0 %v3047, 126
        %v3051 = vpop.permute.xlu0 %3050
        %3052 = vrot.lane.b32.xlu0 %v3049, 126
        %v3053 = vpop.permute.xlu0 %3052
        %3054 = vrot.lane.b32.xlu0 %v3048, 126
        %v3055 = vpop.permute.xlu0 %3054
        %v3059 = vadd.f32 %v2959, %v3051
        %v3060 = vadd.f32 %v2960, %v3053
        %v3061 = vadd.f32 %v2961, %v3055
        %s3062 = sld [smem:[#allocation3 + $0x85]]
        %v3063 = vstv %s3062
        %v3064 = vmul.f32 %v3063, %v360
        %v3065 = vmul.f32 %v3063, %v361
        %v3066 = vmul.f32 %v3063, %v362
        %v3070 = vrot.slane %v3064, 2
        %v3071 = vrot.slane %v3065, 2
        %v3072 = vsel %vm2240, %v3070, %v3071
        %v3073 = vrot.slane %v3066, 2
        %v3074 = vsel %vm2240, %v3071, %v3073
        %3075 = vrot.lane.b32.xlu0 %v3072, 126
        %v3076 = vpop.permute.xlu0 %3075
        %3077 = vrot.lane.b32.xlu0 %v3074, 126
        %v3078 = vpop.permute.xlu0 %3077
        %3079 = vrot.lane.b32.xlu0 %v3073, 126
        %v3080 = vpop.permute.xlu0 %3079
        %v3084 = vadd.f32 %v2984, %v3076
        %v3085 = vadd.f32 %v2985, %v3078
        %v3086 = vadd.f32 %v2986, %v3080
        %s3087 = sld [smem:[#allocation3 + $0x86]]
        %v3088 = vstv %s3087
        %v3089 = vmul.f32 %v3088, %v360
        %v3090 = vmul.f32 %v3088, %v361
        %v3091 = vmul.f32 %v3088, %v362
        %v3095 = vrot.slane %v3089, 2
        %v3096 = vrot.slane %v3090, 2
        %v3097 = vsel %vm2240, %v3095, %v3096
        %v3098 = vrot.slane %v3091, 2
        %v3099 = vsel %vm2240, %v3096, %v3098
        %3100 = vrot.lane.b32.xlu0 %v3097, 126
        %v3101 = vpop.permute.xlu0 %3100
        %3102 = vrot.lane.b32.xlu0 %v3099, 126
        %v3103 = vpop.permute.xlu0 %3102
        %3104 = vrot.lane.b32.xlu0 %v3098, 126
        %v3105 = vpop.permute.xlu0 %3104
        %v3109 = vadd.f32 %v3009, %v3101
        %v3110 = vadd.f32 %v3010, %v3103
        %v3111 = vadd.f32 %v3011, %v3105
        %s3112 = sld [smem:[#allocation3 + $0x87]]
        %v3113 = vstv %s3112
        %v3114 = vmul.f32 %v3113, %v360
        %v3115 = vmul.f32 %v3113, %v361
        %v3116 = vmul.f32 %v3113, %v362
        %v3120 = vrot.slane %v3114, 2
        %v3121 = vrot.slane %v3115, 2
        %v3122 = vsel %vm2240, %v3120, %v3121
        %v3123 = vrot.slane %v3116, 2
        %v3124 = vsel %vm2240, %v3121, %v3123
        %3125 = vrot.lane.b32.xlu0 %v3122, 126
        %v3126 = vpop.permute.xlu0 %3125
        %3127 = vrot.lane.b32.xlu0 %v3124, 126
        %v3128 = vpop.permute.xlu0 %3127
        %3129 = vrot.lane.b32.xlu0 %v3123, 126
        %v3130 = vpop.permute.xlu0 %3129
        %v3134 = vadd.f32 %v3034, %v3126
        %v3135 = vadd.f32 %v3035, %v3128
        %v3136 = vadd.f32 %v3036, %v3130
        %s3137 = sld [smem:[#allocation3 + $0x88]]
        %v3138 = vstv %s3137
        %v3139 = vmul.f32 %v3138, %v364
        %v3140 = vmul.f32 %v3138, %v365
        %v3141 = vmul.f32 %v3138, %v366
        %v3145 = vrot.slane %v3139, 2
        %v3146 = vrot.slane %v3140, 2
        %v3147 = vsel %vm2240, %v3145, %v3146
        %v3148 = vrot.slane %v3141, 2
        %v3149 = vsel %vm2240, %v3146, %v3148
        %3150 = vrot.lane.b32.xlu0 %v3147, 126
        %v3151 = vpop.permute.xlu0 %3150
        %3152 = vrot.lane.b32.xlu0 %v3149, 126
        %v3153 = vpop.permute.xlu0 %3152
        %3154 = vrot.lane.b32.xlu0 %v3148, 126
        %v3155 = vpop.permute.xlu0 %3154
        %v3159 = vadd.f32 %v3059, %v3151
        %v3160 = vadd.f32 %v3060, %v3153
        %v3161 = vadd.f32 %v3061, %v3155
        %s3162 = sld [smem:[#allocation3 + $0x89]]
        %v3163 = vstv %s3162
        %v3164 = vmul.f32 %v3163, %v364
        %v3165 = vmul.f32 %v3163, %v365
        %v3166 = vmul.f32 %v3163, %v366
        %v3170 = vrot.slane %v3164, 2
        %v3171 = vrot.slane %v3165, 2
        %v3172 = vsel %vm2240, %v3170, %v3171
        %v3173 = vrot.slane %v3166, 2
        %v3174 = vsel %vm2240, %v3171, %v3173
        %3175 = vrot.lane.b32.xlu0 %v3172, 126
        %v3176 = vpop.permute.xlu0 %3175
        %3177 = vrot.lane.b32.xlu0 %v3174, 126
        %v3178 = vpop.permute.xlu0 %3177
        %3179 = vrot.lane.b32.xlu0 %v3173, 126
        %v3180 = vpop.permute.xlu0 %3179
        %v3184 = vadd.f32 %v3084, %v3176
        %v3185 = vadd.f32 %v3085, %v3178
        %v3186 = vadd.f32 %v3086, %v3180
        %s3187 = sld [smem:[#allocation3 + $0x8a]]
        %v3188 = vstv %s3187
        %v3189 = vmul.f32 %v3188, %v364
        %v3190 = vmul.f32 %v3188, %v365
        %v3191 = vmul.f32 %v3188, %v366
        %v3195 = vrot.slane %v3189, 2
        %v3196 = vrot.slane %v3190, 2
        %v3197 = vsel %vm2240, %v3195, %v3196
        %v3198 = vrot.slane %v3191, 2
        %v3199 = vsel %vm2240, %v3196, %v3198
        %3200 = vrot.lane.b32.xlu0 %v3197, 126
        %v3201 = vpop.permute.xlu0 %3200
        %3202 = vrot.lane.b32.xlu0 %v3199, 126
        %v3203 = vpop.permute.xlu0 %3202
        %3204 = vrot.lane.b32.xlu0 %v3198, 126
        %v3205 = vpop.permute.xlu0 %3204
        %v3209 = vadd.f32 %v3109, %v3201
        %v3210 = vadd.f32 %v3110, %v3203
        %v3211 = vadd.f32 %v3111, %v3205
        %s3212 = sld [smem:[#allocation3 + $0x8b]]
        %v3213 = vstv %s3212
        %v3214 = vmul.f32 %v3213, %v364
        %v3215 = vmul.f32 %v3213, %v365
        %v3216 = vmul.f32 %v3213, %v366
        %v3220 = vrot.slane %v3214, 2
        %v3221 = vrot.slane %v3215, 2
        %v3222 = vsel %vm2240, %v3220, %v3221
        %v3223 = vrot.slane %v3216, 2
        %v3224 = vsel %vm2240, %v3221, %v3223
        %3225 = vrot.lane.b32.xlu0 %v3222, 126
        %v3226 = vpop.permute.xlu0 %3225
        %3227 = vrot.lane.b32.xlu0 %v3224, 126
        %v3228 = vpop.permute.xlu0 %3227
        %3229 = vrot.lane.b32.xlu0 %v3223, 126
        %v3230 = vpop.permute.xlu0 %3229
        %v3234 = vadd.f32 %v3134, %v3226
        %v3235 = vadd.f32 %v3135, %v3228
        %v3236 = vadd.f32 %v3136, %v3230
        %s3237 = sld [smem:[#allocation3 + $0x8c]]
        %v3238 = vstv %s3237
        %v3239 = vmul.f32 %v3238, %v368
        %v3240 = vmul.f32 %v3238, %v369
        %v3241 = vmul.f32 %v3238, %v370
        %v3245 = vrot.slane %v3239, 2
        %v3246 = vrot.slane %v3240, 2
        %v3247 = vsel %vm2240, %v3245, %v3246
        %v3248 = vrot.slane %v3241, 2
        %v3249 = vsel %vm2240, %v3246, %v3248
        %3250 = vrot.lane.b32.xlu0 %v3247, 126
        %v3251 = vpop.permute.xlu0 %3250
        %3252 = vrot.lane.b32.xlu0 %v3249, 126
        %v3253 = vpop.permute.xlu0 %3252
        %3254 = vrot.lane.b32.xlu0 %v3248, 126
        %v3255 = vpop.permute.xlu0 %3254
        %v3259 = vadd.f32 %v3159, %v3251
        %v3260 = vadd.f32 %v3160, %v3253
        %v3261 = vadd.f32 %v3161, %v3255
        %s3262 = sld [smem:[#allocation3 + $0x8d]]
        %v3263 = vstv %s3262
        %v3264 = vmul.f32 %v3263, %v368
        %v3265 = vmul.f32 %v3263, %v369
        %v3266 = vmul.f32 %v3263, %v370
        %v3270 = vrot.slane %v3264, 2
        %v3271 = vrot.slane %v3265, 2
        %v3272 = vsel %vm2240, %v3270, %v3271
        %v3273 = vrot.slane %v3266, 2
        %v3274 = vsel %vm2240, %v3271, %v3273
        %3275 = vrot.lane.b32.xlu0 %v3272, 126
        %v3276 = vpop.permute.xlu0 %3275
        %3277 = vrot.lane.b32.xlu0 %v3274, 126
        %v3278 = vpop.permute.xlu0 %3277
        %3279 = vrot.lane.b32.xlu0 %v3273, 126
        %v3280 = vpop.permute.xlu0 %3279
        %v3284 = vadd.f32 %v3184, %v3276
        %v3285 = vadd.f32 %v3185, %v3278
        %v3286 = vadd.f32 %v3186, %v3280
        %s3287 = sld [smem:[#allocation3 + $0x8e]]
        %v3288 = vstv %s3287
        %v3289 = vmul.f32 %v3288, %v368
        %v3290 = vmul.f32 %v3288, %v369
        %v3291 = vmul.f32 %v3288, %v370
        %v3295 = vrot.slane %v3289, 2
        %v3296 = vrot.slane %v3290, 2
        %v3297 = vsel %vm2240, %v3295, %v3296
        %v3298 = vrot.slane %v3291, 2
        %v3299 = vsel %vm2240, %v3296, %v3298
        %3300 = vrot.lane.b32.xlu0 %v3297, 126
        %v3301 = vpop.permute.xlu0 %3300
        %3302 = vrot.lane.b32.xlu0 %v3299, 126
        %v3303 = vpop.permute.xlu0 %3302
        %3304 = vrot.lane.b32.xlu0 %v3298, 126
        %v3305 = vpop.permute.xlu0 %3304
        %v3309 = vadd.f32 %v3209, %v3301
        %v3310 = vadd.f32 %v3210, %v3303
        %v3311 = vadd.f32 %v3211, %v3305
        %s3312 = sld [smem:[#allocation3 + $0x8f]]
        %v3313 = vstv %s3312
        %v3314 = vmul.f32 %v3313, %v368
        %v3315 = vmul.f32 %v3313, %v369
        %v3316 = vmul.f32 %v3313, %v370
        %v3320 = vrot.slane %v3314, 2
        %v3321 = vrot.slane %v3315, 2
        %v3322 = vsel %vm2240, %v3320, %v3321
        %v3323 = vrot.slane %v3316, 2
        %v3324 = vsel %vm2240, %v3321, %v3323
        %3325 = vrot.lane.b32.xlu0 %v3322, 126
        %v3326 = vpop.permute.xlu0 %3325
        %3327 = vrot.lane.b32.xlu0 %v3324, 126
        %v3328 = vpop.permute.xlu0 %3327
        %3329 = vrot.lane.b32.xlu0 %v3323, 126
        %v3330 = vpop.permute.xlu0 %3329
        %v3334 = vadd.f32 %v3234, %v3326
        %v3335 = vadd.f32 %v3235, %v3328
        %v3336 = vadd.f32 %v3236, %v3330
        %v3337 = vlaneseq
        %v3338 = vshrl.u32 %v3337, 7
        %v3339 = vadd.s32 %v3338, 8
        %v3340 = vadd.s32 %v3338, 16
        %v3341 = vlaneseq
        %v3342 = vand.u32 %v3341, 127
        %vm3343 = vcmp.ge.s32.totalorder %v3338, 2
        %vm3344 = vcmp.ge.s32.totalorder %v3339, 2
        %vm3345 = vcmp.ge.s32.totalorder %v3340, 2
        %vm3346 = vcmp.lt.s32.totalorder %v3338, 18
        %vm3347 = vcmp.lt.s32.totalorder %v3339, 18
        %vm3348 = vcmp.lt.s32.totalorder %v3340, 18
        %vm3349 = vmand %vm3343, %vm3346
        %vm3350 = vmand %vm3344, %vm3347
        %vm3351 = vmand %vm3345, %vm3348
        %vm3352 = vcmp.ge.s32.totalorder %v3342, 2
        %vm3353 = vmand %vm3349, %vm3352
        %vm3354 = vmand %vm3350, %vm3352
        %vm3355 = vmand %vm3351, %vm3352
        %vm3356 = vcmp.lt.s32.totalorder %v3342, 18
        %vm3357 = vmand %vm3353, %vm3356
        %vm3358 = vmand %vm3354, %vm3356
        %vm3359 = vmand %vm3355, %vm3356
        %s3360 = sld [smem:[#allocation8]]
        %v3361 = vstv %s3360
        %v3362 = vadd.f32 %v3259, %v3361
        %v3363 = vadd.f32 %v3260, %v3361
        %v3364 = vadd.f32 %v3261, %v3361
        %vm3365 = vcmp.ge.f32.partialorder %v3362, 0.0
        %vm3366 = vcmp.ge.f32.partialorder %v3363, 0.0
        %vm3367 = vcmp.ge.f32.partialorder %v3364, 0.0
        %v3368 = vmul.f32 %v3362, 0.1
        %v3369 = vmul.f32 %v3363, 0.1
        %v3370 = vmul.f32 %v3364, 0.1
        %v3371 = vsel %vm3365, %v3362, %v3368
        %v3372 = vsel %vm3366, %v3363, %v3369
        %v3373 = vsel %vm3367, %v3364, %v3370
        %v3374 = vsel %vm3357, %v3371, 0.0
        %v3375 = vsel %vm3358, %v3372, 0.0
        %v3376 = vsel %vm3359, %v3373, 0.0
        %s3377 = sld [smem:[#allocation8 + $0x1]]
        %v3378 = vstv %s3377
        %v3379 = vadd.f32 %v3284, %v3378
        %v3380 = vadd.f32 %v3285, %v3378
        %v3381 = vadd.f32 %v3286, %v3378
        %vm3382 = vcmp.ge.f32.partialorder %v3379, 0.0
        %vm3383 = vcmp.ge.f32.partialorder %v3380, 0.0
        %vm3384 = vcmp.ge.f32.partialorder %v3381, 0.0
        %v3385 = vmul.f32 %v3379, 0.1
        %v3386 = vmul.f32 %v3380, 0.1
        %v3387 = vmul.f32 %v3381, 0.1
        %v3388 = vsel %vm3382, %v3379, %v3385
        %v3389 = vsel %vm3383, %v3380, %v3386
        %v3390 = vsel %vm3384, %v3381, %v3387
        %v3391 = vsel %vm3357, %v3388, 0.0
        %v3392 = vsel %vm3358, %v3389, 0.0
        %v3393 = vsel %vm3359, %v3390, 0.0
        %s3394 = sld [smem:[#allocation8 + $0x2]]
        %v3395 = vstv %s3394
        %v3396 = vadd.f32 %v3309, %v3395
        %v3397 = vadd.f32 %v3310, %v3395
        %v3398 = vadd.f32 %v3311, %v3395
        %vm3399 = vcmp.ge.f32.partialorder %v3396, 0.0
        %vm3400 = vcmp.ge.f32.partialorder %v3397, 0.0
        %vm3401 = vcmp.ge.f32.partialorder %v3398, 0.0
        %v3402 = vmul.f32 %v3396, 0.1
        %v3403 = vmul.f32 %v3397, 0.1
        %v3404 = vmul.f32 %v3398, 0.1
        %v3405 = vsel %vm3399, %v3396, %v3402
        %v3406 = vsel %vm3400, %v3397, %v3403
        %v3407 = vsel %vm3401, %v3398, %v3404
        %v3408 = vsel %vm3357, %v3405, 0.0
        %v3409 = vsel %vm3358, %v3406, 0.0
        %v3410 = vsel %vm3359, %v3407, 0.0
        %s3411 = sld [smem:[#allocation8 + $0x3]]
        %v3412 = vstv %s3411
        %v3413 = vadd.f32 %v3334, %v3412
        %v3414 = vadd.f32 %v3335, %v3412
        %v3415 = vadd.f32 %v3336, %v3412
        %vm3416 = vcmp.ge.f32.partialorder %v3413, 0.0
        %vm3417 = vcmp.ge.f32.partialorder %v3414, 0.0
        %vm3418 = vcmp.ge.f32.partialorder %v3415, 0.0
        %v3419 = vmul.f32 %v3413, 0.1
        %v3420 = vmul.f32 %v3414, 0.1
        %v3421 = vmul.f32 %v3415, 0.1
        %v3422 = vsel %vm3416, %v3413, %v3419
        %v3423 = vsel %vm3417, %v3414, %v3420
        %v3424 = vsel %vm3418, %v3415, %v3421
        %v3425 = vsel %vm3357, %v3422, 0.0
        %v3426 = vsel %vm3358, %v3423, 0.0
        %v3427 = vsel %vm3359, %v3424, 0.0
        %s3428 = sld [smem:[#allocation9]]
        %v3429 = vstv %s3428
        %v3430 = vmul.f32 %v3429, %v3374
        %v3431 = vmul.f32 %v3429, %v3375
        %s3432 = sld [smem:[#allocation9 + $0x1]]
        %v3433 = vstv %s3432
        %v3434 = vmul.f32 %v3433, %v3374
        %v3435 = vmul.f32 %v3433, %v3375
        %s3436 = sld [smem:[#allocation9 + $0x2]]
        %v3437 = vstv %s3436
        %v3438 = vmul.f32 %v3437, %v3374
        %v3439 = vmul.f32 %v3437, %v3375
        %s3440 = sld [smem:[#allocation9 + $0x3]]
        %v3441 = vstv %s3440
        %v3442 = vmul.f32 %v3441, %v3374
        %v3443 = vmul.f32 %v3441, %v3375
        %s3444 = sld [smem:[#allocation9 + $0x4]]
        %v3445 = vstv %s3444
        %v3446 = vmul.f32 %v3445, %v3391
        %v3447 = vmul.f32 %v3445, %v3392
        %v3448 = vadd.f32 %v3430, %v3446
        %v3449 = vadd.f32 %v3431, %v3447
        %s3450 = sld [smem:[#allocation9 + $0x5]]
        %v3451 = vstv %s3450
        %v3452 = vmul.f32 %v3451, %v3391
        %v3453 = vmul.f32 %v3451, %v3392
        %v3454 = vadd.f32 %v3434, %v3452
        %v3455 = vadd.f32 %v3435, %v3453
        %s3456 = sld [smem:[#allocation9 + $0x6]]
        %v3457 = vstv %s3456
        %v3458 = vmul.f32 %v3457, %v3391
        %v3459 = vmul.f32 %v3457, %v3392
        %v3460 = vadd.f32 %v3438, %v3458
        %v3461 = vadd.f32 %v3439, %v3459
        %s3462 = sld [smem:[#allocation9 + $0x7]]
        %v3463 = vstv %s3462
        %v3464 = vmul.f32 %v3463, %v3391
        %v3465 = vmul.f32 %v3463, %v3392
        %v3466 = vadd.f32 %v3442, %v3464
        %v3467 = vadd.f32 %v3443, %v3465
        %s3468 = sld [smem:[#allocation9 + $0x8]]
        %v3469 = vstv %s3468
        %v3470 = vmul.f32 %v3469, %v3408
        %v3471 = vmul.f32 %v3469, %v3409
        %v3472 = vadd.f32 %v3448, %v3470
        %v3473 = vadd.f32 %v3449, %v3471
        %s3474 = sld [smem:[#allocation9 + $0x9]]
        %v3475 = vstv %s3474
        %v3476 = vmul.f32 %v3475, %v3408
        %v3477 = vmul.f32 %v3475, %v3409
        %v3478 = vadd.f32 %v3454, %v3476
        %v3479 = vadd.f32 %v3455, %v3477
        %s3480 = sld [smem:[#allocation9 + $0xa]]
        %v3481 = vstv %s3480
        %v3482 = vmul.f32 %v3481, %v3408
        %v3483 = vmul.f32 %v3481, %v3409
        %v3484 = vadd.f32 %v3460, %v3482
        %v3485 = vadd.f32 %v3461, %v3483
        %s3486 = sld [smem:[#allocation9 + $0xb]]
        %v3487 = vstv %s3486
        %v3488 = vmul.f32 %v3487, %v3408
        %v3489 = vmul.f32 %v3487, %v3409
        %v3490 = vadd.f32 %v3466, %v3488
        %v3491 = vadd.f32 %v3467, %v3489
        %s3492 = sld [smem:[#allocation9 + $0xc]]
        %v3493 = vstv %s3492
        %v3494 = vmul.f32 %v3493, %v3425
        %v3495 = vmul.f32 %v3493, %v3426
        %v3496 = vadd.f32 %v3472, %v3494
        %v3497 = vadd.f32 %v3473, %v3495
        %s3498 = sld [smem:[#allocation9 + $0xd]]
        %v3499 = vstv %s3498
        %v3500 = vmul.f32 %v3499, %v3425
        %v3501 = vmul.f32 %v3499, %v3426
        %v3502 = vadd.f32 %v3478, %v3500
        %v3503 = vadd.f32 %v3479, %v3501
        %s3504 = sld [smem:[#allocation9 + $0xe]]
        %v3505 = vstv %s3504
        %v3506 = vmul.f32 %v3505, %v3425
        %v3507 = vmul.f32 %v3505, %v3426
        %v3508 = vadd.f32 %v3484, %v3506
        %v3509 = vadd.f32 %v3485, %v3507
        %s3510 = sld [smem:[#allocation9 + $0xf]]
        %v3511 = vstv %s3510
        %v3512 = vmul.f32 %v3511, %v3425
        %v3513 = vmul.f32 %v3511, %v3426
        %v3514 = vadd.f32 %v3490, %v3512
        %v3515 = vadd.f32 %v3491, %v3513
        %s3516 = sld [smem:[#allocation9 + $0x10]]
        %v3517 = vstv %s3516
        %v3518 = vmul.f32 %v3517, %v3374
        %v3519 = vmul.f32 %v3517, %v3375
        %3522 = vrot.lane.b32.xlu0 %v3518, 126
        %v3523 = vpop.permute.xlu0 %3522
        %3524 = vrot.lane.b32.xlu0 %v3519, 126
        %v3525 = vpop.permute.xlu0 %3524
        %v3528 = vadd.f32 %v3496, %v3523
        %v3529 = vadd.f32 %v3497, %v3525
        %s3530 = sld [smem:[#allocation9 + $0x11]]
        %v3531 = vstv %s3530
        %v3532 = vmul.f32 %v3531, %v3374
        %v3533 = vmul.f32 %v3531, %v3375
        %3536 = vrot.lane.b32.xlu0 %v3532, 126
        %v3537 = vpop.permute.xlu0 %3536
        %3538 = vrot.lane.b32.xlu0 %v3533, 126
        %v3539 = vpop.permute.xlu0 %3538
        %v3542 = vadd.f32 %v3502, %v3537
        %v3543 = vadd.f32 %v3503, %v3539
        %s3544 = sld [smem:[#allocation9 + $0x12]]
        %v3545 = vstv %s3544
        %v3546 = vmul.f32 %v3545, %v3374
        %v3547 = vmul.f32 %v3545, %v3375
        %3550 = vrot.lane.b32.xlu0 %v3546, 126
        %v3551 = vpop.permute.xlu0 %3550
        %3552 = vrot.lane.b32.xlu0 %v3547, 126
        %v3553 = vpop.permute.xlu0 %3552
        %v3556 = vadd.f32 %v3508, %v3551
        %v3557 = vadd.f32 %v3509, %v3553
        %s3558 = sld [smem:[#allocation9 + $0x13]]
        %v3559 = vstv %s3558
        %v3560 = vmul.f32 %v3559, %v3374
        %v3561 = vmul.f32 %v3559, %v3375
        %3564 = vrot.lane.b32.xlu0 %v3560, 126
        %v3565 = vpop.permute.xlu0 %3564
        %3566 = vrot.lane.b32.xlu0 %v3561, 126
        %v3567 = vpop.permute.xlu0 %3566
        %v3570 = vadd.f32 %v3514, %v3565
        %v3571 = vadd.f32 %v3515, %v3567
        %s3572 = sld [smem:[#allocation9 + $0x14]]
        %v3573 = vstv %s3572
        %v3574 = vmul.f32 %v3573, %v3391
        %v3575 = vmul.f32 %v3573, %v3392
        %3578 = vrot.lane.b32.xlu0 %v3574, 126
        %v3579 = vpop.permute.xlu0 %3578
        %3580 = vrot.lane.b32.xlu0 %v3575, 126
        %v3581 = vpop.permute.xlu0 %3580
        %v3584 = vadd.f32 %v3528, %v3579
        %v3585 = vadd.f32 %v3529, %v3581
        %s3586 = sld [smem:[#allocation9 + $0x15]]
        %v3587 = vstv %s3586
        %v3588 = vmul.f32 %v3587, %v3391
        %v3589 = vmul.f32 %v3587, %v3392
        %3592 = vrot.lane.b32.xlu0 %v3588, 126
        %v3593 = vpop.permute.xlu0 %3592
        %3594 = vrot.lane.b32.xlu0 %v3589, 126
        %v3595 = vpop.permute.xlu0 %3594
        %v3598 = vadd.f32 %v3542, %v3593
        %v3599 = vadd.f32 %v3543, %v3595
        %s3600 = sld [smem:[#allocation9 + $0x16]]
        %v3601 = vstv %s3600
        %v3602 = vmul.f32 %v3601, %v3391
        %v3603 = vmul.f32 %v3601, %v3392
        %3606 = vrot.lane.b32.xlu0 %v3602, 126
        %v3607 = vpop.permute.xlu0 %3606
        %3608 = vrot.lane.b32.xlu0 %v3603, 126
        %v3609 = vpop.permute.xlu0 %3608
        %v3612 = vadd.f32 %v3556, %v3607
        %v3613 = vadd.f32 %v3557, %v3609
        %s3614 = sld [smem:[#allocation9 + $0x17]]
        %v3615 = vstv %s3614
        %v3616 = vmul.f32 %v3615, %v3391
        %v3617 = vmul.f32 %v3615, %v3392
        %3620 = vrot.lane.b32.xlu0 %v3616, 126
        %v3621 = vpop.permute.xlu0 %3620
        %3622 = vrot.lane.b32.xlu0 %v3617, 126
        %v3623 = vpop.permute.xlu0 %3622
        %v3626 = vadd.f32 %v3570, %v3621
        %v3627 = vadd.f32 %v3571, %v3623
        %s3628 = sld [smem:[#allocation9 + $0x18]]
        %v3629 = vstv %s3628
        %v3630 = vmul.f32 %v3629, %v3408
        %v3631 = vmul.f32 %v3629, %v3409
        %3634 = vrot.lane.b32.xlu0 %v3630, 126
        %v3635 = vpop.permute.xlu0 %3634
        %3636 = vrot.lane.b32.xlu0 %v3631, 126
        %v3637 = vpop.permute.xlu0 %3636
        %v3640 = vadd.f32 %v3584, %v3635
        %v3641 = vadd.f32 %v3585, %v3637
        %s3642 = sld [smem:[#allocation9 + $0x19]]
        %v3643 = vstv %s3642
        %v3644 = vmul.f32 %v3643, %v3408
        %v3645 = vmul.f32 %v3643, %v3409
        %3648 = vrot.lane.b32.xlu0 %v3644, 126
        %v3649 = vpop.permute.xlu0 %3648
        %3650 = vrot.lane.b32.xlu0 %v3645, 126
        %v3651 = vpop.permute.xlu0 %3650
        %v3654 = vadd.f32 %v3598, %v3649
        %v3655 = vadd.f32 %v3599, %v3651
        %s3656 = sld [smem:[#allocation9 + $0x1a]]
        %v3657 = vstv %s3656
        %v3658 = vmul.f32 %v3657, %v3408
        %v3659 = vmul.f32 %v3657, %v3409
        %3662 = vrot.lane.b32.xlu0 %v3658, 126
        %v3663 = vpop.permute.xlu0 %3662
        %3664 = vrot.lane.b32.xlu0 %v3659, 126
        %v3665 = vpop.permute.xlu0 %3664
        %v3668 = vadd.f32 %v3612, %v3663
        %v3669 = vadd.f32 %v3613, %v3665
        %s3670 = sld [smem:[#allocation9 + $0x1b]]
        %v3671 = vstv %s3670
        %v3672 = vmul.f32 %v3671, %v3408
        %v3673 = vmul.f32 %v3671, %v3409
        %3676 = vrot.lane.b32.xlu0 %v3672, 126
        %v3677 = vpop.permute.xlu0 %3676
        %3678 = vrot.lane.b32.xlu0 %v3673, 126
        %v3679 = vpop.permute.xlu0 %3678
        %v3682 = vadd.f32 %v3626, %v3677
        %v3683 = vadd.f32 %v3627, %v3679
        %s3684 = sld [smem:[#allocation9 + $0x1c]]
        %v3685 = vstv %s3684
        %v3686 = vmul.f32 %v3685, %v3425
        %v3687 = vmul.f32 %v3685, %v3426
        %3690 = vrot.lane.b32.xlu0 %v3686, 126
        %v3691 = vpop.permute.xlu0 %3690
        %3692 = vrot.lane.b32.xlu0 %v3687, 126
        %v3693 = vpop.permute.xlu0 %3692
        %v3696 = vadd.f32 %v3640, %v3691
        %v3697 = vadd.f32 %v3641, %v3693
        %s3698 = sld [smem:[#allocation9 + $0x1d]]
        %v3699 = vstv %s3698
        %v3700 = vmul.f32 %v3699, %v3425
        %v3701 = vmul.f32 %v3699, %v3426
        %3704 = vrot.lane.b32.xlu0 %v3700, 126
        %v3705 = vpop.permute.xlu0 %3704
        %3706 = vrot.lane.b32.xlu0 %v3701, 126
        %v3707 = vpop.permute.xlu0 %3706
        %v3710 = vadd.f32 %v3654, %v3705
        %v3711 = vadd.f32 %v3655, %v3707
        %s3712 = sld [smem:[#allocation9 + $0x1e]]
        %v3713 = vstv %s3712
        %v3714 = vmul.f32 %v3713, %v3425
        %v3715 = vmul.f32 %v3713, %v3426
        %3718 = vrot.lane.b32.xlu0 %v3714, 126
        %v3719 = vpop.permute.xlu0 %3718
        %3720 = vrot.lane.b32.xlu0 %v3715, 126
        %v3721 = vpop.permute.xlu0 %3720
        %v3724 = vadd.f32 %v3668, %v3719
        %v3725 = vadd.f32 %v3669, %v3721
        %s3726 = sld [smem:[#allocation9 + $0x1f]]
        %v3727 = vstv %s3726
        %v3728 = vmul.f32 %v3727, %v3425
        %v3729 = vmul.f32 %v3727, %v3426
        %3732 = vrot.lane.b32.xlu0 %v3728, 126
        %v3733 = vpop.permute.xlu0 %3732
        %3734 = vrot.lane.b32.xlu0 %v3729, 126
        %v3735 = vpop.permute.xlu0 %3734
        %v3738 = vadd.f32 %v3682, %v3733
        %v3739 = vadd.f32 %v3683, %v3735
        %s3740 = sld [smem:[#allocation9 + $0x20]]
        %v3741 = vstv %s3740
        %v3742 = vmul.f32 %v3741, %v3374
        %v3743 = vmul.f32 %v3741, %v3375
        %3746 = vrot.lane.b32.xlu0 %v3742, 124
        %v3747 = vpop.permute.xlu0 %3746
        %3748 = vrot.lane.b32.xlu0 %v3743, 124
        %v3749 = vpop.permute.xlu0 %3748
        %v3752 = vadd.f32 %v3696, %v3747
        %v3753 = vadd.f32 %v3697, %v3749
        %s3754 = sld [smem:[#allocation9 + $0x21]]
        %v3755 = vstv %s3754
        %v3756 = vmul.f32 %v3755, %v3374
        %v3757 = vmul.f32 %v3755, %v3375
        %3760 = vrot.lane.b32.xlu0 %v3756, 124
        %v3761 = vpop.permute.xlu0 %3760
        %3762 = vrot.lane.b32.xlu0 %v3757, 124
        %v3763 = vpop.permute.xlu0 %3762
        %v3766 = vadd.f32 %v3710, %v3761
        %v3767 = vadd.f32 %v3711, %v3763
        %s3768 = sld [smem:[#allocation9 + $0x22]]
        %v3769 = vstv %s3768
        %v3770 = vmul.f32 %v3769, %v3374
        %v3771 = vmul.f32 %v3769, %v3375
        %3774 = vrot.lane.b32.xlu0 %v3770, 124
        %v3775 = vpop.permute.xlu0 %3774
        %3776 = vrot.lane.b32.xlu0 %v3771, 124
        %v3777 = vpop.permute.xlu0 %3776
        %v3780 = vadd.f32 %v3724, %v3775
        %v3781 = vadd.f32 %v3725, %v3777
        %s3782 = sld [smem:[#allocation9 + $0x23]]
        %v3783 = vstv %s3782
        %v3784 = vmul.f32 %v3783, %v3374
        %v3785 = vmul.f32 %v3783, %v3375
        %3788 = vrot.lane.b32.xlu0 %v3784, 124
        %v3789 = vpop.permute.xlu0 %3788
        %3790 = vrot.lane.b32.xlu0 %v3785, 124
        %v3791 = vpop.permute.xlu0 %3790
        %v3794 = vadd.f32 %v3738, %v3789
        %v3795 = vadd.f32 %v3739, %v3791
        %s3796 = sld [smem:[#allocation9 + $0x24]]
        %v3797 = vstv %s3796
        %v3798 = vmul.f32 %v3797, %v3391
        %v3799 = vmul.f32 %v3797, %v3392
        %3802 = vrot.lane.b32.xlu0 %v3798, 124
        %v3803 = vpop.permute.xlu0 %3802
        %3804 = vrot.lane.b32.xlu0 %v3799, 124
        %v3805 = vpop.permute.xlu0 %3804
        %v3808 = vadd.f32 %v3752, %v3803
        %v3809 = vadd.f32 %v3753, %v3805
        %s3810 = sld [smem:[#allocation9 + $0x25]]
        %v3811 = vstv %s3810
        %v3812 = vmul.f32 %v3811, %v3391
        %v3813 = vmul.f32 %v3811, %v3392
        %3816 = vrot.lane.b32.xlu0 %v3812, 124
        %v3817 = vpop.permute.xlu0 %3816
        %3818 = vrot.lane.b32.xlu0 %v3813, 124
        %v3819 = vpop.permute.xlu0 %3818
        %v3822 = vadd.f32 %v3766, %v3817
        %v3823 = vadd.f32 %v3767, %v3819
        %s3824 = sld [smem:[#allocation9 + $0x26]]
        %v3825 = vstv %s3824
        %v3826 = vmul.f32 %v3825, %v3391
        %v3827 = vmul.f32 %v3825, %v3392
        %3830 = vrot.lane.b32.xlu0 %v3826, 124
        %v3831 = vpop.permute.xlu0 %3830
        %3832 = vrot.lane.b32.xlu0 %v3827, 124
        %v3833 = vpop.permute.xlu0 %3832
        %v3836 = vadd.f32 %v3780, %v3831
        %v3837 = vadd.f32 %v3781, %v3833
        %s3838 = sld [smem:[#allocation9 + $0x27]]
        %v3839 = vstv %s3838
        %v3840 = vmul.f32 %v3839, %v3391
        %v3841 = vmul.f32 %v3839, %v3392
        %3844 = vrot.lane.b32.xlu0 %v3840, 124
        %v3845 = vpop.permute.xlu0 %3844
        %3846 = vrot.lane.b32.xlu0 %v3841, 124
        %v3847 = vpop.permute.xlu0 %3846
        %v3850 = vadd.f32 %v3794, %v3845
        %v3851 = vadd.f32 %v3795, %v3847
        %s3852 = sld [smem:[#allocation9 + $0x28]]
        %v3853 = vstv %s3852
        %v3854 = vmul.f32 %v3853, %v3408
        %v3855 = vmul.f32 %v3853, %v3409
        %3858 = vrot.lane.b32.xlu0 %v3854, 124
        %v3859 = vpop.permute.xlu0 %3858
        %3860 = vrot.lane.b32.xlu0 %v3855, 124
        %v3861 = vpop.permute.xlu0 %3860
        %v3864 = vadd.f32 %v3808, %v3859
        %v3865 = vadd.f32 %v3809, %v3861
        %s3866 = sld [smem:[#allocation9 + $0x29]]
        %v3867 = vstv %s3866
        %v3868 = vmul.f32 %v3867, %v3408
        %v3869 = vmul.f32 %v3867, %v3409
        %3872 = vrot.lane.b32.xlu0 %v3868, 124
        %v3873 = vpop.permute.xlu0 %3872
        %3874 = vrot.lane.b32.xlu0 %v3869, 124
        %v3875 = vpop.permute.xlu0 %3874
        %v3878 = vadd.f32 %v3822, %v3873
        %v3879 = vadd.f32 %v3823, %v3875
        %s3880 = sld [smem:[#allocation9 + $0x2a]]
        %v3881 = vstv %s3880
        %v3882 = vmul.f32 %v3881, %v3408
        %v3883 = vmul.f32 %v3881, %v3409
        %3886 = vrot.lane.b32.xlu0 %v3882, 124
        %v3887 = vpop.permute.xlu0 %3886
        %3888 = vrot.lane.b32.xlu0 %v3883, 124
        %v3889 = vpop.permute.xlu0 %3888
        %v3892 = vadd.f32 %v3836, %v3887
        %v3893 = vadd.f32 %v3837, %v3889
        %s3894 = sld [smem:[#allocation9 + $0x2b]]
        %v3895 = vstv %s3894
        %v3896 = vmul.f32 %v3895, %v3408
        %v3897 = vmul.f32 %v3895, %v3409
        %3900 = vrot.lane.b32.xlu0 %v3896, 124
        %v3901 = vpop.permute.xlu0 %3900
        %3902 = vrot.lane.b32.xlu0 %v3897, 124
        %v3903 = vpop.permute.xlu0 %3902
        %v3906 = vadd.f32 %v3850, %v3901
        %v3907 = vadd.f32 %v3851, %v3903
        %s3908 = sld [smem:[#allocation9 + $0x2c]]
        %v3909 = vstv %s3908
        %v3910 = vmul.f32 %v3909, %v3425
        %v3911 = vmul.f32 %v3909, %v3426
        %3914 = vrot.lane.b32.xlu0 %v3910, 124
        %v3915 = vpop.permute.xlu0 %3914
        %3916 = vrot.lane.b32.xlu0 %v3911, 124
        %v3917 = vpop.permute.xlu0 %3916
        %v3920 = vadd.f32 %v3864, %v3915
        %v3921 = vadd.f32 %v3865, %v3917
        %s3922 = sld [smem:[#allocation9 + $0x2d]]
        %v3923 = vstv %s3922
        %v3924 = vmul.f32 %v3923, %v3425
        %v3925 = vmul.f32 %v3923, %v3426
        %3928 = vrot.lane.b32.xlu0 %v3924, 124
        %v3929 = vpop.permute.xlu0 %3928
        %3930 = vrot.lane.b32.xlu0 %v3925, 124
        %v3931 = vpop.permute.xlu0 %3930
        %v3934 = vadd.f32 %v3878, %v3929
        %v3935 = vadd.f32 %v3879, %v3931
        %s3936 = sld [smem:[#allocation9 + $0x2e]]
        %v3937 = vstv %s3936
        %v3938 = vmul.f32 %v3937, %v3425
        %v3939 = vmul.f32 %v3937, %v3426
        %3942 = vrot.lane.b32.xlu0 %v3938, 124
        %v3943 = vpop.permute.xlu0 %3942
        %3944 = vrot.lane.b32.xlu0 %v3939, 124
        %v3945 = vpop.permute.xlu0 %3944
        %v3948 = vadd.f32 %v3892, %v3943
        %v3949 = vadd.f32 %v3893, %v3945
        %s3950 = sld [smem:[#allocation9 + $0x2f]]
        %v3951 = vstv %s3950
        %v3952 = vmul.f32 %v3951, %v3425
        %v3953 = vmul.f32 %v3951, %v3426
        %3956 = vrot.lane.b32.xlu0 %v3952, 124
        %v3957 = vpop.permute.xlu0 %3956
        %3958 = vrot.lane.b32.xlu0 %v3953, 124
        %v3959 = vpop.permute.xlu0 %3958
        %v3962 = vadd.f32 %v3906, %v3957
        %v3963 = vadd.f32 %v3907, %v3959
        %s3964 = sld [smem:[#allocation9 + $0x30]]
        %v3965 = vstv %s3964
        %v3966 = vmul.f32 %v3965, %v3374
        %v3967 = vmul.f32 %v3965, %v3375
        %v3968 = vmul.f32 %v3965, %v3376
        %v3972 = vrot.slane %v3966, 2
        %v3973 = vrot.slane %v3967, 2
        %v3974 = vsel %vm2240, %v3972, %v3973
        %v3975 = vrot.slane %v3968, 2
        %v3976 = vsel %vm2240, %v3973, %v3975
        %v3979 = vadd.f32 %v3920, %v3974
        %v3980 = vadd.f32 %v3921, %v3976
        %s3981 = sld [smem:[#allocation9 + $0x31]]
        %v3982 = vstv %s3981
        %v3983 = vmul.f32 %v3982, %v3374
        %v3984 = vmul.f32 %v3982, %v3375
        %v3985 = vmul.f32 %v3982, %v3376
        %v3989 = vrot.slane %v3983, 2
        %v3990 = vrot.slane %v3984, 2
        %v3991 = vsel %vm2240, %v3989, %v3990
        %v3992 = vrot.slane %v3985, 2
        %v3993 = vsel %vm2240, %v3990, %v3992
        %v3996 = vadd.f32 %v3934, %v3991
        %v3997 = vadd.f32 %v3935, %v3993
        %s3998 = sld [smem:[#allocation9 + $0x32]]
        %v3999 = vstv %s3998
        %v4000 = vmul.f32 %v3999, %v3374
        %v4001 = vmul.f32 %v3999, %v3375
        %v4002 = vmul.f32 %v3999, %v3376
        %v4006 = vrot.slane %v4000, 2
        %v4007 = vrot.slane %v4001, 2
        %v4008 = vsel %vm2240, %v4006, %v4007
        %v4009 = vrot.slane %v4002, 2
        %v4010 = vsel %vm2240, %v4007, %v4009
        %v4013 = vadd.f32 %v3948, %v4008
        %v4014 = vadd.f32 %v3949, %v4010
        %s4015 = sld [smem:[#allocation9 + $0x33]]
        %v4016 = vstv %s4015
        %v4017 = vmul.f32 %v4016, %v3374
        %v4018 = vmul.f32 %v4016, %v3375
        %v4019 = vmul.f32 %v4016, %v3376
        %v4023 = vrot.slane %v4017, 2
        %v4024 = vrot.slane %v4018, 2
        %v4025 = vsel %vm2240, %v4023, %v4024
        %v4026 = vrot.slane %v4019, 2
        %v4027 = vsel %vm2240, %v4024, %v4026
        %v4030 = vadd.f32 %v3962, %v4025
        %v4031 = vadd.f32 %v3963, %v4027
        %s4032 = sld [smem:[#allocation9 + $0x34]]
        %v4033 = vstv %s4032
        %v4034 = vmul.f32 %v4033, %v3391
        %v4035 = vmul.f32 %v4033, %v3392
        %v4036 = vmul.f32 %v4033, %v3393
        %v4040 = vrot.slane %v4034, 2
        %v4041 = vrot.slane %v4035, 2
        %v4042 = vsel %vm2240, %v4040, %v4041
        %v4043 = vrot.slane %v4036, 2
        %v4044 = vsel %vm2240, %v4041, %v4043
        %v4047 = vadd.f32 %v3979, %v4042
        %v4048 = vadd.f32 %v3980, %v4044
        %s4049 = sld [smem:[#allocation9 + $0x35]]
        %v4050 = vstv %s4049
        %v4051 = vmul.f32 %v4050, %v3391
        %v4052 = vmul.f32 %v4050, %v3392
        %v4053 = vmul.f32 %v4050, %v3393
        %v4057 = vrot.slane %v4051, 2
        %v4058 = vrot.slane %v4052, 2
        %v4059 = vsel %vm2240, %v4057, %v4058
        %v4060 = vrot.slane %v4053, 2
        %v4061 = vsel %vm2240, %v4058, %v4060
        %v4064 = vadd.f32 %v3996, %v4059
        %v4065 = vadd.f32 %v3997, %v4061
        %s4066 = sld [smem:[#allocation9 + $0x36]]
        %v4067 = vstv %s4066
        %v4068 = vmul.f32 %v4067, %v3391
        %v4069 = vmul.f32 %v4067, %v3392
        %v4070 = vmul.f32 %v4067, %v3393
        %v4074 = vrot.slane %v4068, 2
        %v4075 = vrot.slane %v4069, 2
        %v4076 = vsel %vm2240, %v4074, %v4075
        %v4077 = vrot.slane %v4070, 2
        %v4078 = vsel %vm2240, %v4075, %v4077
        %v4081 = vadd.f32 %v4013, %v4076
        %v4082 = vadd.f32 %v4014, %v4078
        %s4083 = sld [smem:[#allocation9 + $0x37]]
        %v4084 = vstv %s4083
        %v4085 = vmul.f32 %v4084, %v3391
        %v4086 = vmul.f32 %v4084, %v3392
        %v4087 = vmul.f32 %v4084, %v3393
        %v4091 = vrot.slane %v4085, 2
        %v4092 = vrot.slane %v4086, 2
        %v4093 = vsel %vm2240, %v4091, %v4092
        %v4094 = vrot.slane %v4087, 2
        %v4095 = vsel %vm2240, %v4092, %v4094
        %v4098 = vadd.f32 %v4030, %v4093
        %v4099 = vadd.f32 %v4031, %v4095
        %s4100 = sld [smem:[#allocation9 + $0x38]]
        %v4101 = vstv %s4100
        %v4102 = vmul.f32 %v4101, %v3408
        %v4103 = vmul.f32 %v4101, %v3409
        %v4104 = vmul.f32 %v4101, %v3410
        %v4108 = vrot.slane %v4102, 2
        %v4109 = vrot.slane %v4103, 2
        %v4110 = vsel %vm2240, %v4108, %v4109
        %v4111 = vrot.slane %v4104, 2
        %v4112 = vsel %vm2240, %v4109, %v4111
        %v4115 = vadd.f32 %v4047, %v4110
        %v4116 = vadd.f32 %v4048, %v4112
        %s4117 = sld [smem:[#allocation9 + $0x39]]
        %v4118 = vstv %s4117
        %v4119 = vmul.f32 %v4118, %v3408
        %v4120 = vmul.f32 %v4118, %v3409
        %v4121 = vmul.f32 %v4118, %v3410
        %v4125 = vrot.slane %v4119, 2
        %v4126 = vrot.slane %v4120, 2
        %v4127 = vsel %vm2240, %v4125, %v4126
        %v4128 = vrot.slane %v4121, 2
        %v4129 = vsel %vm2240, %v4126, %v4128
        %v4132 = vadd.f32 %v4064, %v4127
        %v4133 = vadd.f32 %v4065, %v4129
        %s4134 = sld [smem:[#allocation9 + $0x3a]]
        %v4135 = vstv %s4134
        %v4136 = vmul.f32 %v4135, %v3408
        %v4137 = vmul.f32 %v4135, %v3409
        %v4138 = vmul.f32 %v4135, %v3410
        %v4142 = vrot.slane %v4136, 2
        %v4143 = vrot.slane %v4137, 2
        %v4144 = vsel %vm2240, %v4142, %v4143
        %v4145 = vrot.slane %v4138, 2
        %v4146 = vsel %vm2240, %v4143, %v4145
        %v4149 = vadd.f32 %v4081, %v4144
        %v4150 = vadd.f32 %v4082, %v4146
        %s4151 = sld [smem:[#allocation9 + $0x3b]]
        %v4152 = vstv %s4151
        %v4153 = vmul.f32 %v4152, %v3408
        %v4154 = vmul.f32 %v4152, %v3409
        %v4155 = vmul.f32 %v4152, %v3410
        %v4159 = vrot.slane %v4153, 2
        %v4160 = vrot.slane %v4154, 2
        %v4161 = vsel %vm2240, %v4159, %v4160
        %v4162 = vrot.slane %v4155, 2
        %v4163 = vsel %vm2240, %v4160, %v4162
        %v4166 = vadd.f32 %v4098, %v4161
        %v4167 = vadd.f32 %v4099, %v4163
        %s4168 = sld [smem:[#allocation9 + $0x3c]]
        %v4169 = vstv %s4168
        %v4170 = vmul.f32 %v4169, %v3425
        %v4171 = vmul.f32 %v4169, %v3426
        %v4172 = vmul.f32 %v4169, %v3427
        %v4176 = vrot.slane %v4170, 2
        %v4177 = vrot.slane %v4171, 2
        %v4178 = vsel %vm2240, %v4176, %v4177
        %v4179 = vrot.slane %v4172, 2
        %v4180 = vsel %vm2240, %v4177, %v4179
        %v4183 = vadd.f32 %v4115, %v4178
        %v4184 = vadd.f32 %v4116, %v4180
        %s4185 = sld [smem:[#allocation9 + $0x3d]]
        %v4186 = vstv %s4185
        %v4187 = vmul.f32 %v4186, %v3425
        %v4188 = vmul.f32 %v4186, %v3426
        %v4189 = vmul.f32 %v4186, %v3427
        %v4193 = vrot.slane %v4187, 2
        %v4194 = vrot.slane %v4188, 2
        %v4195 = vsel %vm2240, %v4193, %v4194
        %v4196 = vrot.slane %v4189, 2
        %v4197 = vsel %vm2240, %v4194, %v4196
        %v4200 = vadd.f32 %v4132, %v4195
        %v4201 = vadd.f32 %v4133, %v4197
        %s4202 = sld [smem:[#allocation9 + $0x3e]]
        %v4203 = vstv %s4202
        %v4204 = vmul.f32 %v4203, %v3425
        %v4205 = vmul.f32 %v4203, %v3426
        %v4206 = vmul.f32 %v4203, %v3427
        %v4210 = vrot.slane %v4204, 2
        %v4211 = vrot.slane %v4205, 2
        %v4212 = vsel %vm2240, %v4210, %v4211
        %v4213 = vrot.slane %v4206, 2
        %v4214 = vsel %vm2240, %v4211, %v4213
        %v4217 = vadd.f32 %v4149, %v4212
        %v4218 = vadd.f32 %v4150, %v4214
        %s4219 = sld [smem:[#allocation9 + $0x3f]]
        %v4220 = vstv %s4219
        %v4221 = vmul.f32 %v4220, %v3425
        %v4222 = vmul.f32 %v4220, %v3426
        %v4223 = vmul.f32 %v4220, %v3427
        %v4227 = vrot.slane %v4221, 2
        %v4228 = vrot.slane %v4222, 2
        %v4229 = vsel %vm2240, %v4227, %v4228
        %v4230 = vrot.slane %v4223, 2
        %v4231 = vsel %vm2240, %v4228, %v4230
        %v4234 = vadd.f32 %v4166, %v4229
        %v4235 = vadd.f32 %v4167, %v4231
        %s4236 = sld [smem:[#allocation9 + $0x40]]
        %v4237 = vstv %s4236
        %v4238 = vmul.f32 %v4237, %v3374
        %v4239 = vmul.f32 %v4237, %v3375
        %v4240 = vmul.f32 %v4237, %v3376
        %v4244 = vrot.slane %v4238, 2
        %v4245 = vrot.slane %v4239, 2
        %v4246 = vsel %vm2240, %v4244, %v4245
        %v4247 = vrot.slane %v4240, 2
        %v4248 = vsel %vm2240, %v4245, %v4247
        %4249 = vrot.lane.b32.xlu0 %v4246, 126
        %v4250 = vpop.permute.xlu0 %4249
        %4251 = vrot.lane.b32.xlu0 %v4248, 126
        %v4252 = vpop.permute.xlu0 %4251
        %v4255 = vadd.f32 %v4183, %v4250
        %v4256 = vadd.f32 %v4184, %v4252
        %s4257 = sld [smem:[#allocation9 + $0x41]]
        %v4258 = vstv %s4257
        %v4259 = vmul.f32 %v4258, %v3374
        %v4260 = vmul.f32 %v4258, %v3375
        %v4261 = vmul.f32 %v4258, %v3376
        %v4265 = vrot.slane %v4259, 2
        %v4266 = vrot.slane %v4260, 2
        %v4267 = vsel %vm2240, %v4265, %v4266
        %v4268 = vrot.slane %v4261, 2
        %v4269 = vsel %vm2240, %v4266, %v4268
        %4270 = vrot.lane.b32.xlu0 %v4267, 126
        %v4271 = vpop.permute.xlu0 %4270
        %4272 = vrot.lane.b32.xlu0 %v4269, 126
        %v4273 = vpop.permute.xlu0 %4272
        %v4276 = vadd.f32 %v4200, %v4271
        %v4277 = vadd.f32 %v4201, %v4273
        %s4278 = sld [smem:[#allocation9 + $0x42]]
        %v4279 = vstv %s4278
        %v4280 = vmul.f32 %v4279, %v3374
        %v4281 = vmul.f32 %v4279, %v3375
        %v4282 = vmul.f32 %v4279, %v3376
        %v4286 = vrot.slane %v4280, 2
        %v4287 = vrot.slane %v4281, 2
        %v4288 = vsel %vm2240, %v4286, %v4287
        %v4289 = vrot.slane %v4282, 2
        %v4290 = vsel %vm2240, %v4287, %v4289
        %4291 = vrot.lane.b32.xlu0 %v4288, 126
        %v4292 = vpop.permute.xlu0 %4291
        %4293 = vrot.lane.b32.xlu0 %v4290, 126
        %v4294 = vpop.permute.xlu0 %4293
        %v4297 = vadd.f32 %v4217, %v4292
        %v4298 = vadd.f32 %v4218, %v4294
        %s4299 = sld [smem:[#allocation9 + $0x43]]
        %v4300 = vstv %s4299
        %v4301 = vmul.f32 %v4300, %v3374
        %v4302 = vmul.f32 %v4300, %v3375
        %v4303 = vmul.f32 %v4300, %v3376
        %v4307 = vrot.slane %v4301, 2
        %v4308 = vrot.slane %v4302, 2
        %v4309 = vsel %vm2240, %v4307, %v4308
        %v4310 = vrot.slane %v4303, 2
        %v4311 = vsel %vm2240, %v4308, %v4310
        %4312 = vrot.lane.b32.xlu0 %v4309, 126
        %v4313 = vpop.permute.xlu0 %4312
        %4314 = vrot.lane.b32.xlu0 %v4311, 126
        %v4315 = vpop.permute.xlu0 %4314
        %v4318 = vadd.f32 %v4234, %v4313
        %v4319 = vadd.f32 %v4235, %v4315
        %s4320 = sld [smem:[#allocation9 + $0x44]]
        %v4321 = vstv %s4320
        %v4322 = vmul.f32 %v4321, %v3391
        %v4323 = vmul.f32 %v4321, %v3392
        %v4324 = vmul.f32 %v4321, %v3393
        %v4328 = vrot.slane %v4322, 2
        %v4329 = vrot.slane %v4323, 2
        %v4330 = vsel %vm2240, %v4328, %v4329
        %v4331 = vrot.slane %v4324, 2
        %v4332 = vsel %vm2240, %v4329, %v4331
        %4333 = vrot.lane.b32.xlu0 %v4330, 126
        %v4334 = vpop.permute.xlu0 %4333
        %4335 = vrot.lane.b32.xlu0 %v4332, 126
        %v4336 = vpop.permute.xlu0 %4335
        %v4339 = vadd.f32 %v4255, %v4334
        %v4340 = vadd.f32 %v4256, %v4336
        %s4341 = sld [smem:[#allocation9 + $0x45]]
        %v4342 = vstv %s4341
        %v4343 = vmul.f32 %v4342, %v3391
        %v4344 = vmul.f32 %v4342, %v3392
        %v4345 = vmul.f32 %v4342, %v3393
        %v4349 = vrot.slane %v4343, 2
        %v4350 = vrot.slane %v4344, 2
        %v4351 = vsel %vm2240, %v4349, %v4350
        %v4352 = vrot.slane %v4345, 2
        %v4353 = vsel %vm2240, %v4350, %v4352
        %4354 = vrot.lane.b32.xlu0 %v4351, 126
        %v4355 = vpop.permute.xlu0 %4354
        %4356 = vrot.lane.b32.xlu0 %v4353, 126
        %v4357 = vpop.permute.xlu0 %4356
        %v4360 = vadd.f32 %v4276, %v4355
        %v4361 = vadd.f32 %v4277, %v4357
        %s4362 = sld [smem:[#allocation9 + $0x46]]
        %v4363 = vstv %s4362
        %v4364 = vmul.f32 %v4363, %v3391
        %v4365 = vmul.f32 %v4363, %v3392
        %v4366 = vmul.f32 %v4363, %v3393
        %v4370 = vrot.slane %v4364, 2
        %v4371 = vrot.slane %v4365, 2
        %v4372 = vsel %vm2240, %v4370, %v4371
        %v4373 = vrot.slane %v4366, 2
        %v4374 = vsel %vm2240, %v4371, %v4373
        %4375 = vrot.lane.b32.xlu0 %v4372, 126
        %v4376 = vpop.permute.xlu0 %4375
        %4377 = vrot.lane.b32.xlu0 %v4374, 126
        %v4378 = vpop.permute.xlu0 %4377
        %v4381 = vadd.f32 %v4297, %v4376
        %v4382 = vadd.f32 %v4298, %v4378
        %s4383 = sld [smem:[#allocation9 + $0x47]]
        %v4384 = vstv %s4383
        %v4385 = vmul.f32 %v4384, %v3391
        %v4386 = vmul.f32 %v4384, %v3392
        %v4387 = vmul.f32 %v4384, %v3393
        %v4391 = vrot.slane %v4385, 2
        %v4392 = vrot.slane %v4386, 2
        %v4393 = vsel %vm2240, %v4391, %v4392
        %v4394 = vrot.slane %v4387, 2
        %v4395 = vsel %vm2240, %v4392, %v4394
        %4396 = vrot.lane.b32.xlu0 %v4393, 126
        %v4397 = vpop.permute.xlu0 %4396
        %4398 = vrot.lane.b32.xlu0 %v4395, 126
        %v4399 = vpop.permute.xlu0 %4398
        %v4402 = vadd.f32 %v4318, %v4397
        %v4403 = vadd.f32 %v4319, %v4399
        %s4404 = sld [smem:[#allocation9 + $0x48]]
        %v4405 = vstv %s4404
        %v4406 = vmul.f32 %v4405, %v3408
        %v4407 = vmul.f32 %v4405, %v3409
        %v4408 = vmul.f32 %v4405, %v3410
        %v4412 = vrot.slane %v4406, 2
        %v4413 = vrot.slane %v4407, 2
        %v4414 = vsel %vm2240, %v4412, %v4413
        %v4415 = vrot.slane %v4408, 2
        %v4416 = vsel %vm2240, %v4413, %v4415
        %4417 = vrot.lane.b32.xlu0 %v4414, 126
        %v4418 = vpop.permute.xlu0 %4417
        %4419 = vrot.lane.b32.xlu0 %v4416, 126
        %v4420 = vpop.permute.xlu0 %4419
        %v4423 = vadd.f32 %v4339, %v4418
        %v4424 = vadd.f32 %v4340, %v4420
        %s4425 = sld [smem:[#allocation9 + $0x49]]
        %v4426 = vstv %s4425
        %v4427 = vmul.f32 %v4426, %v3408
        %v4428 = vmul.f32 %v4426, %v3409
        %v4429 = vmul.f32 %v4426, %v3410
        %v4433 = vrot.slane %v4427, 2
        %v4434 = vrot.slane %v4428, 2
        %v4435 = vsel %vm2240, %v4433, %v4434
        %v4436 = vrot.slane %v4429, 2
        %v4437 = vsel %vm2240, %v4434, %v4436
        %4438 = vrot.lane.b32.xlu0 %v4435, 126
        %v4439 = vpop.permute.xlu0 %4438
        %4440 = vrot.lane.b32.xlu0 %v4437, 126
        %v4441 = vpop.permute.xlu0 %4440
        %v4444 = vadd.f32 %v4360, %v4439
        %v4445 = vadd.f32 %v4361, %v4441
        %s4446 = sld [smem:[#allocation9 + $0x4a]]
        %v4447 = vstv %s4446
        %v4448 = vmul.f32 %v4447, %v3408
        %v4449 = vmul.f32 %v4447, %v3409
        %v4450 = vmul.f32 %v4447, %v3410
        %v4454 = vrot.slane %v4448, 2
        %v4455 = vrot.slane %v4449, 2
        %v4456 = vsel %vm2240, %v4454, %v4455
        %v4457 = vrot.slane %v4450, 2
        %v4458 = vsel %vm2240, %v4455, %v4457
        %4459 = vrot.lane.b32.xlu0 %v4456, 126
        %v4460 = vpop.permute.xlu0 %4459
        %4461 = vrot.lane.b32.xlu0 %v4458, 126
        %v4462 = vpop.permute.xlu0 %4461
        %v4465 = vadd.f32 %v4381, %v4460
        %v4466 = vadd.f32 %v4382, %v4462
        %s4467 = sld [smem:[#allocation9 + $0x4b]]
        %v4468 = vstv %s4467
        %v4469 = vmul.f32 %v4468, %v3408
        %v4470 = vmul.f32 %v4468, %v3409
        %v4471 = vmul.f32 %v4468, %v3410
        %v4475 = vrot.slane %v4469, 2
        %v4476 = vrot.slane %v4470, 2
        %v4477 = vsel %vm2240, %v4475, %v4476
        %v4478 = vrot.slane %v4471, 2
        %v4479 = vsel %vm2240, %v4476, %v4478
        %4480 = vrot.lane.b32.xlu0 %v4477, 126
        %v4481 = vpop.permute.xlu0 %4480
        %4482 = vrot.lane.b32.xlu0 %v4479, 126
        %v4483 = vpop.permute.xlu0 %4482
        %v4486 = vadd.f32 %v4402, %v4481
        %v4487 = vadd.f32 %v4403, %v4483
        %s4488 = sld [smem:[#allocation9 + $0x4c]]
        %v4489 = vstv %s4488
        %v4490 = vmul.f32 %v4489, %v3425
        %v4491 = vmul.f32 %v4489, %v3426
        %v4492 = vmul.f32 %v4489, %v3427
        %v4496 = vrot.slane %v4490, 2
        %v4497 = vrot.slane %v4491, 2
        %v4498 = vsel %vm2240, %v4496, %v4497
        %v4499 = vrot.slane %v4492, 2
        %v4500 = vsel %vm2240, %v4497, %v4499
        %4501 = vrot.lane.b32.xlu0 %v4498, 126
        %v4502 = vpop.permute.xlu0 %4501
        %4503 = vrot.lane.b32.xlu0 %v4500, 126
        %v4504 = vpop.permute.xlu0 %4503
        %v4507 = vadd.f32 %v4423, %v4502
        %v4508 = vadd.f32 %v4424, %v4504
        %s4509 = sld [smem:[#allocation9 + $0x4d]]
        %v4510 = vstv %s4509
        %v4511 = vmul.f32 %v4510, %v3425
        %v4512 = vmul.f32 %v4510, %v3426
        %v4513 = vmul.f32 %v4510, %v3427
        %v4517 = vrot.slane %v4511, 2
        %v4518 = vrot.slane %v4512, 2
        %v4519 = vsel %vm2240, %v4517, %v4518
        %v4520 = vrot.slane %v4513, 2
        %v4521 = vsel %vm2240, %v4518, %v4520
        %4522 = vrot.lane.b32.xlu0 %v4519, 126
        %v4523 = vpop.permute.xlu0 %4522
        %4524 = vrot.lane.b32.xlu0 %v4521, 126
        %v4525 = vpop.permute.xlu0 %4524
        %v4528 = vadd.f32 %v4444, %v4523
        %v4529 = vadd.f32 %v4445, %v4525
        %s4530 = sld [smem:[#allocation9 + $0x4e]]
        %v4531 = vstv %s4530
        %v4532 = vmul.f32 %v4531, %v3425
        %v4533 = vmul.f32 %v4531, %v3426
        %v4534 = vmul.f32 %v4531, %v3427
        %v4538 = vrot.slane %v4532, 2
        %v4539 = vrot.slane %v4533, 2
        %v4540 = vsel %vm2240, %v4538, %v4539
        %v4541 = vrot.slane %v4534, 2
        %v4542 = vsel %vm2240, %v4539, %v4541
        %4543 = vrot.lane.b32.xlu0 %v4540, 126
        %v4544 = vpop.permute.xlu0 %4543
        %4545 = vrot.lane.b32.xlu0 %v4542, 126
        %v4546 = vpop.permute.xlu0 %4545
        %v4549 = vadd.f32 %v4465, %v4544
        %v4550 = vadd.f32 %v4466, %v4546
        %s4551 = sld [smem:[#allocation9 + $0x4f]]
        %v4552 = vstv %s4551
        %v4553 = vmul.f32 %v4552, %v3425
        %v4554 = vmul.f32 %v4552, %v3426
        %v4555 = vmul.f32 %v4552, %v3427
        %v4559 = vrot.slane %v4553, 2
        %v4560 = vrot.slane %v4554, 2
        %v4561 = vsel %vm2240, %v4559, %v4560
        %v4562 = vrot.slane %v4555, 2
        %v4563 = vsel %vm2240, %v4560, %v4562
        %4564 = vrot.lane.b32.xlu0 %v4561, 126
        %v4565 = vpop.permute.xlu0 %4564
        %4566 = vrot.lane.b32.xlu0 %v4563, 126
        %v4567 = vpop.permute.xlu0 %4566
        %v4570 = vadd.f32 %v4486, %v4565
        %v4571 = vadd.f32 %v4487, %v4567
        %s4572 = sld [smem:[#allocation9 + $0x50]]
        %v4573 = vstv %s4572
        %v4574 = vmul.f32 %v4573, %v3374
        %v4575 = vmul.f32 %v4573, %v3375
        %v4576 = vmul.f32 %v4573, %v3376
        %v4580 = vrot.slane %v4574, 2
        %v4581 = vrot.slane %v4575, 2
        %v4582 = vsel %vm2240, %v4580, %v4581
        %v4583 = vrot.slane %v4576, 2
        %v4584 = vsel %vm2240, %v4581, %v4583
        %4585 = vrot.lane.b32.xlu0 %v4582, 124
        %v4586 = vpop.permute.xlu0 %4585
        %4587 = vrot.lane.b32.xlu0 %v4584, 124
        %v4588 = vpop.permute.xlu0 %4587
        %v4591 = vadd.f32 %v4507, %v4586
        %v4592 = vadd.f32 %v4508, %v4588
        %s4593 = sld [smem:[#allocation9 + $0x51]]
        %v4594 = vstv %s4593
        %v4595 = vmul.f32 %v4594, %v3374
        %v4596 = vmul.f32 %v4594, %v3375
        %v4597 = vmul.f32 %v4594, %v3376
        %v4601 = vrot.slane %v4595, 2
        %v4602 = vrot.slane %v4596, 2
        %v4603 = vsel %vm2240, %v4601, %v4602
        %v4604 = vrot.slane %v4597, 2
        %v4605 = vsel %vm2240, %v4602, %v4604
        %4606 = vrot.lane.b32.xlu0 %v4603, 124
        %v4607 = vpop.permute.xlu0 %4606
        %4608 = vrot.lane.b32.xlu0 %v4605, 124
        %v4609 = vpop.permute.xlu0 %4608
        %v4612 = vadd.f32 %v4528, %v4607
        %v4613 = vadd.f32 %v4529, %v4609
        %s4614 = sld [smem:[#allocation9 + $0x52]]
        %v4615 = vstv %s4614
        %v4616 = vmul.f32 %v4615, %v3374
        %v4617 = vmul.f32 %v4615, %v3375
        %v4618 = vmul.f32 %v4615, %v3376
        %v4622 = vrot.slane %v4616, 2
        %v4623 = vrot.slane %v4617, 2
        %v4624 = vsel %vm2240, %v4622, %v4623
        %v4625 = vrot.slane %v4618, 2
        %v4626 = vsel %vm2240, %v4623, %v4625
        %4627 = vrot.lane.b32.xlu0 %v4624, 124
        %v4628 = vpop.permute.xlu0 %4627
        %4629 = vrot.lane.b32.xlu0 %v4626, 124
        %v4630 = vpop.permute.xlu0 %4629
        %v4633 = vadd.f32 %v4549, %v4628
        %v4634 = vadd.f32 %v4550, %v4630
        %s4635 = sld [smem:[#allocation9 + $0x53]]
        %v4636 = vstv %s4635
        %v4637 = vmul.f32 %v4636, %v3374
        %v4638 = vmul.f32 %v4636, %v3375
        %v4639 = vmul.f32 %v4636, %v3376
        %v4643 = vrot.slane %v4637, 2
        %v4644 = vrot.slane %v4638, 2
        %v4645 = vsel %vm2240, %v4643, %v4644
        %v4646 = vrot.slane %v4639, 2
        %v4647 = vsel %vm2240, %v4644, %v4646
        %4648 = vrot.lane.b32.xlu0 %v4645, 124
        %v4649 = vpop.permute.xlu0 %4648
        %4650 = vrot.lane.b32.xlu0 %v4647, 124
        %v4651 = vpop.permute.xlu0 %4650
        %v4654 = vadd.f32 %v4570, %v4649
        %v4655 = vadd.f32 %v4571, %v4651
        %s4656 = sld [smem:[#allocation9 + $0x54]]
        %v4657 = vstv %s4656
        %v4658 = vmul.f32 %v4657, %v3391
        %v4659 = vmul.f32 %v4657, %v3392
        %v4660 = vmul.f32 %v4657, %v3393
        %v4664 = vrot.slane %v4658, 2
        %v4665 = vrot.slane %v4659, 2
        %v4666 = vsel %vm2240, %v4664, %v4665
        %v4667 = vrot.slane %v4660, 2
        %v4668 = vsel %vm2240, %v4665, %v4667
        %4669 = vrot.lane.b32.xlu0 %v4666, 124
        %v4670 = vpop.permute.xlu0 %4669
        %4671 = vrot.lane.b32.xlu0 %v4668, 124
        %v4672 = vpop.permute.xlu0 %4671
        %v4675 = vadd.f32 %v4591, %v4670
        %v4676 = vadd.f32 %v4592, %v4672
        %s4677 = sld [smem:[#allocation9 + $0x55]]
        %v4678 = vstv %s4677
        %v4679 = vmul.f32 %v4678, %v3391
        %v4680 = vmul.f32 %v4678, %v3392
        %v4681 = vmul.f32 %v4678, %v3393
        %v4685 = vrot.slane %v4679, 2
        %v4686 = vrot.slane %v4680, 2
        %v4687 = vsel %vm2240, %v4685, %v4686
        %v4688 = vrot.slane %v4681, 2
        %v4689 = vsel %vm2240, %v4686, %v4688
        %4690 = vrot.lane.b32.xlu0 %v4687, 124
        %v4691 = vpop.permute.xlu0 %4690
        %4692 = vrot.lane.b32.xlu0 %v4689, 124
        %v4693 = vpop.permute.xlu0 %4692
        %v4696 = vadd.f32 %v4612, %v4691
        %v4697 = vadd.f32 %v4613, %v4693
        %s4698 = sld [smem:[#allocation9 + $0x56]]
        %v4699 = vstv %s4698
        %v4700 = vmul.f32 %v4699, %v3391
        %v4701 = vmul.f32 %v4699, %v3392
        %v4702 = vmul.f32 %v4699, %v3393
        %v4706 = vrot.slane %v4700, 2
        %v4707 = vrot.slane %v4701, 2
        %v4708 = vsel %vm2240, %v4706, %v4707
        %v4709 = vrot.slane %v4702, 2
        %v4710 = vsel %vm2240, %v4707, %v4709
        %4711 = vrot.lane.b32.xlu0 %v4708, 124
        %v4712 = vpop.permute.xlu0 %4711
        %4713 = vrot.lane.b32.xlu0 %v4710, 124
        %v4714 = vpop.permute.xlu0 %4713
        %v4717 = vadd.f32 %v4633, %v4712
        %v4718 = vadd.f32 %v4634, %v4714
        %s4719 = sld [smem:[#allocation9 + $0x57]]
        %v4720 = vstv %s4719
        %v4721 = vmul.f32 %v4720, %v3391
        %v4722 = vmul.f32 %v4720, %v3392
        %v4723 = vmul.f32 %v4720, %v3393
        %v4727 = vrot.slane %v4721, 2
        %v4728 = vrot.slane %v4722, 2
        %v4729 = vsel %vm2240, %v4727, %v4728
        %v4730 = vrot.slane %v4723, 2
        %v4731 = vsel %vm2240, %v4728, %v4730
        %4732 = vrot.lane.b32.xlu0 %v4729, 124
        %v4733 = vpop.permute.xlu0 %4732
        %4734 = vrot.lane.b32.xlu0 %v4731, 124
        %v4735 = vpop.permute.xlu0 %4734
        %v4738 = vadd.f32 %v4654, %v4733
        %v4739 = vadd.f32 %v4655, %v4735
        %s4740 = sld [smem:[#allocation9 + $0x58]]
        %v4741 = vstv %s4740
        %v4742 = vmul.f32 %v4741, %v3408
        %v4743 = vmul.f32 %v4741, %v3409
        %v4744 = vmul.f32 %v4741, %v3410
        %v4748 = vrot.slane %v4742, 2
        %v4749 = vrot.slane %v4743, 2
        %v4750 = vsel %vm2240, %v4748, %v4749
        %v4751 = vrot.slane %v4744, 2
        %v4752 = vsel %vm2240, %v4749, %v4751
        %4753 = vrot.lane.b32.xlu0 %v4750, 124
        %v4754 = vpop.permute.xlu0 %4753
        %4755 = vrot.lane.b32.xlu0 %v4752, 124
        %v4756 = vpop.permute.xlu0 %4755
        %v4759 = vadd.f32 %v4675, %v4754
        %v4760 = vadd.f32 %v4676, %v4756
        %s4761 = sld [smem:[#allocation9 + $0x59]]
        %v4762 = vstv %s4761
        %v4763 = vmul.f32 %v4762, %v3408
        %v4764 = vmul.f32 %v4762, %v3409
        %v4765 = vmul.f32 %v4762, %v3410
        %v4769 = vrot.slane %v4763, 2
        %v4770 = vrot.slane %v4764, 2
        %v4771 = vsel %vm2240, %v4769, %v4770
        %v4772 = vrot.slane %v4765, 2
        %v4773 = vsel %vm2240, %v4770, %v4772
        %4774 = vrot.lane.b32.xlu0 %v4771, 124
        %v4775 = vpop.permute.xlu0 %4774
        %4776 = vrot.lane.b32.xlu0 %v4773, 124
        %v4777 = vpop.permute.xlu0 %4776
        %v4780 = vadd.f32 %v4696, %v4775
        %v4781 = vadd.f32 %v4697, %v4777
        %s4782 = sld [smem:[#allocation9 + $0x5a]]
        %v4783 = vstv %s4782
        %v4784 = vmul.f32 %v4783, %v3408
        %v4785 = vmul.f32 %v4783, %v3409
        %v4786 = vmul.f32 %v4783, %v3410
        %v4790 = vrot.slane %v4784, 2
        %v4791 = vrot.slane %v4785, 2
        %v4792 = vsel %vm2240, %v4790, %v4791
        %v4793 = vrot.slane %v4786, 2
        %v4794 = vsel %vm2240, %v4791, %v4793
        %4795 = vrot.lane.b32.xlu0 %v4792, 124
        %v4796 = vpop.permute.xlu0 %4795
        %4797 = vrot.lane.b32.xlu0 %v4794, 124
        %v4798 = vpop.permute.xlu0 %4797
        %v4801 = vadd.f32 %v4717, %v4796
        %v4802 = vadd.f32 %v4718, %v4798
        %s4803 = sld [smem:[#allocation9 + $0x5b]]
        %v4804 = vstv %s4803
        %v4805 = vmul.f32 %v4804, %v3408
        %v4806 = vmul.f32 %v4804, %v3409
        %v4807 = vmul.f32 %v4804, %v3410
        %v4811 = vrot.slane %v4805, 2
        %v4812 = vrot.slane %v4806, 2
        %v4813 = vsel %vm2240, %v4811, %v4812
        %v4814 = vrot.slane %v4807, 2
        %v4815 = vsel %vm2240, %v4812, %v4814
        %4816 = vrot.lane.b32.xlu0 %v4813, 124
        %v4817 = vpop.permute.xlu0 %4816
        %4818 = vrot.lane.b32.xlu0 %v4815, 124
        %v4819 = vpop.permute.xlu0 %4818
        %v4822 = vadd.f32 %v4738, %v4817
        %v4823 = vadd.f32 %v4739, %v4819
        %s4824 = sld [smem:[#allocation9 + $0x5c]]
        %v4825 = vstv %s4824
        %v4826 = vmul.f32 %v4825, %v3425
        %v4827 = vmul.f32 %v4825, %v3426
        %v4828 = vmul.f32 %v4825, %v3427
        %v4832 = vrot.slane %v4826, 2
        %v4833 = vrot.slane %v4827, 2
        %v4834 = vsel %vm2240, %v4832, %v4833
        %v4835 = vrot.slane %v4828, 2
        %v4836 = vsel %vm2240, %v4833, %v4835
        %4837 = vrot.lane.b32.xlu0 %v4834, 124
        %v4838 = vpop.permute.xlu0 %4837
        %4839 = vrot.lane.b32.xlu0 %v4836, 124
        %v4840 = vpop.permute.xlu0 %4839
        %v4843 = vadd.f32 %v4759, %v4838
        %v4844 = vadd.f32 %v4760, %v4840
        %s4845 = sld [smem:[#allocation9 + $0x5d]]
        %v4846 = vstv %s4845
        %v4847 = vmul.f32 %v4846, %v3425
        %v4848 = vmul.f32 %v4846, %v3426
        %v4849 = vmul.f32 %v4846, %v3427
        %v4853 = vrot.slane %v4847, 2
        %v4854 = vrot.slane %v4848, 2
        %v4855 = vsel %vm2240, %v4853, %v4854
        %v4856 = vrot.slane %v4849, 2
        %v4857 = vsel %vm2240, %v4854, %v4856
        %4858 = vrot.lane.b32.xlu0 %v4855, 124
        %v4859 = vpop.permute.xlu0 %4858
        %4860 = vrot.lane.b32.xlu0 %v4857, 124
        %v4861 = vpop.permute.xlu0 %4860
        %v4864 = vadd.f32 %v4780, %v4859
        %v4865 = vadd.f32 %v4781, %v4861
        %s4866 = sld [smem:[#allocation9 + $0x5e]]
        %v4867 = vstv %s4866
        %v4868 = vmul.f32 %v4867, %v3425
        %v4869 = vmul.f32 %v4867, %v3426
        %v4870 = vmul.f32 %v4867, %v3427
        %v4874 = vrot.slane %v4868, 2
        %v4875 = vrot.slane %v4869, 2
        %v4876 = vsel %vm2240, %v4874, %v4875
        %v4877 = vrot.slane %v4870, 2
        %v4878 = vsel %vm2240, %v4875, %v4877
        %4879 = vrot.lane.b32.xlu0 %v4876, 124
        %v4880 = vpop.permute.xlu0 %4879
        %4881 = vrot.lane.b32.xlu0 %v4878, 124
        %v4882 = vpop.permute.xlu0 %4881
        %v4885 = vadd.f32 %v4801, %v4880
        %v4886 = vadd.f32 %v4802, %v4882
        %s4887 = sld [smem:[#allocation9 + $0x5f]]
        %v4888 = vstv %s4887
        %v4889 = vmul.f32 %v4888, %v3425
        %v4890 = vmul.f32 %v4888, %v3426
        %v4891 = vmul.f32 %v4888, %v3427
        %v4895 = vrot.slane %v4889, 2
        %v4896 = vrot.slane %v4890, 2
        %v4897 = vsel %vm2240, %v4895, %v4896
        %v4898 = vrot.slane %v4891, 2
        %v4899 = vsel %vm2240, %v4896, %v4898
        %4900 = vrot.lane.b32.xlu0 %v4897, 124
        %v4901 = vpop.permute.xlu0 %4900
        %4902 = vrot.lane.b32.xlu0 %v4899, 124
        %v4903 = vpop.permute.xlu0 %4902
        %v4906 = vadd.f32 %v4822, %v4901
        %v4907 = vadd.f32 %v4823, %v4903
        %s4908 = sld [smem:[#allocation9 + $0x60]]
        %v4909 = vstv %s4908
        %v4910 = vmul.f32 %v4909, %v3374
        %v4911 = vmul.f32 %v4909, %v3375
        %v4912 = vmul.f32 %v4909, %v3376
        %vm4916 = vcmask 1043456
        %v4917 = vrot.slane %v4910, 4
        %v4918 = vrot.slane %v4911, 4
        %v4919 = vsel %vm4916, %v4917, %v4918
        %v4920 = vrot.slane %v4912, 4
        %v4921 = vsel %vm4916, %v4918, %v4920
        %v4924 = vadd.f32 %v4843, %v4919
        %v4925 = vadd.f32 %v4844, %v4921
        %s4926 = sld [smem:[#allocation9 + $0x61]]
        %v4927 = vstv %s4926
        %v4928 = vmul.f32 %v4927, %v3374
        %v4929 = vmul.f32 %v4927, %v3375
        %v4930 = vmul.f32 %v4927, %v3376
        %v4934 = vrot.slane %v4928, 4
        %v4935 = vrot.slane %v4929, 4
        %v4936 = vsel %vm4916, %v4934, %v4935
        %v4937 = vrot.slane %v4930, 4
        %v4938 = vsel %vm4916, %v4935, %v4937
        %v4941 = vadd.f32 %v4864, %v4936
        %v4942 = vadd.f32 %v4865, %v4938
        %s4943 = sld [smem:[#allocation9 + $0x62]]
        %v4944 = vstv %s4943
        %v4945 = vmul.f32 %v4944, %v3374
        %v4946 = vmul.f32 %v4944, %v3375
        %v4947 = vmul.f32 %v4944, %v3376
        %v4951 = vrot.slane %v4945, 4
        %v4952 = vrot.slane %v4946, 4
        %v4953 = vsel %vm4916, %v4951, %v4952
        %v4954 = vrot.slane %v4947, 4
        %v4955 = vsel %vm4916, %v4952, %v4954
        %v4958 = vadd.f32 %v4885, %v4953
        %v4959 = vadd.f32 %v4886, %v4955
        %s4960 = sld [smem:[#allocation9 + $0x63]]
        %v4961 = vstv %s4960
        %v4962 = vmul.f32 %v4961, %v3374
        %v4963 = vmul.f32 %v4961, %v3375
        %v4964 = vmul.f32 %v4961, %v3376
        %v4968 = vrot.slane %v4962, 4
        %v4969 = vrot.slane %v4963, 4
        %v4970 = vsel %vm4916, %v4968, %v4969
        %v4971 = vrot.slane %v4964, 4
        %v4972 = vsel %vm4916, %v4969, %v4971
        %v4975 = vadd.f32 %v4906, %v4970
        %v4976 = vadd.f32 %v4907, %v4972
        %s4977 = sld [smem:[#allocation9 + $0x64]]
        %v4978 = vstv %s4977
        %v4979 = vmul.f32 %v4978, %v3391
        %v4980 = vmul.f32 %v4978, %v3392
        %v4981 = vmul.f32 %v4978, %v3393
        %v4985 = vrot.slane %v4979, 4
        %v4986 = vrot.slane %v4980, 4
        %v4987 = vsel %vm4916, %v4985, %v4986
        %v4988 = vrot.slane %v4981, 4
        %v4989 = vsel %vm4916, %v4986, %v4988
        %v4992 = vadd.f32 %v4924, %v4987
        %v4993 = vadd.f32 %v4925, %v4989
        %s4994 = sld [smem:[#allocation9 + $0x65]]
        %v4995 = vstv %s4994
        %v4996 = vmul.f32 %v4995, %v3391
        %v4997 = vmul.f32 %v4995, %v3392
        %v4998 = vmul.f32 %v4995, %v3393
        %v5002 = vrot.slane %v4996, 4
        %v5003 = vrot.slane %v4997, 4
        %v5004 = vsel %vm4916, %v5002, %v5003
        %v5005 = vrot.slane %v4998, 4
        %v5006 = vsel %vm4916, %v5003, %v5005
        %v5009 = vadd.f32 %v4941, %v5004
        %v5010 = vadd.f32 %v4942, %v5006
        %s5011 = sld [smem:[#allocation9 + $0x66]]
        %v5012 = vstv %s5011
        %v5013 = vmul.f32 %v5012, %v3391
        %v5014 = vmul.f32 %v5012, %v3392
        %v5015 = vmul.f32 %v5012, %v3393
        %v5019 = vrot.slane %v5013, 4
        %v5020 = vrot.slane %v5014, 4
        %v5021 = vsel %vm4916, %v5019, %v5020
        %v5022 = vrot.slane %v5015, 4
        %v5023 = vsel %vm4916, %v5020, %v5022
        %v5026 = vadd.f32 %v4958, %v5021
        %v5027 = vadd.f32 %v4959, %v5023
        %s5028 = sld [smem:[#allocation9 + $0x67]]
        %v5029 = vstv %s5028
        %v5030 = vmul.f32 %v5029, %v3391
        %v5031 = vmul.f32 %v5029, %v3392
        %v5032 = vmul.f32 %v5029, %v3393
        %v5036 = vrot.slane %v5030, 4
        %v5037 = vrot.slane %v5031, 4
        %v5038 = vsel %vm4916, %v5036, %v5037
        %v5039 = vrot.slane %v5032, 4
        %v5040 = vsel %vm4916, %v5037, %v5039
        %v5043 = vadd.f32 %v4975, %v5038
        %v5044 = vadd.f32 %v4976, %v5040
        %s5045 = sld [smem:[#allocation9 + $0x68]]
        %v5046 = vstv %s5045
        %v5047 = vmul.f32 %v5046, %v3408
        %v5048 = vmul.f32 %v5046, %v3409
        %v5049 = vmul.f32 %v5046, %v3410
        %v5053 = vrot.slane %v5047, 4
        %v5054 = vrot.slane %v5048, 4
        %v5055 = vsel %vm4916, %v5053, %v5054
        %v5056 = vrot.slane %v5049, 4
        %v5057 = vsel %vm4916, %v5054, %v5056
        %v5060 = vadd.f32 %v4992, %v5055
        %v5061 = vadd.f32 %v4993, %v5057
        %s5062 = sld [smem:[#allocation9 + $0x69]]
        %v5063 = vstv %s5062
        %v5064 = vmul.f32 %v5063, %v3408
        %v5065 = vmul.f32 %v5063, %v3409
        %v5066 = vmul.f32 %v5063, %v3410
        %v5070 = vrot.slane %v5064, 4
        %v5071 = vrot.slane %v5065, 4
        %v5072 = vsel %vm4916, %v5070, %v5071
        %v5073 = vrot.slane %v5066, 4
        %v5074 = vsel %vm4916, %v5071, %v5073
        %v5077 = vadd.f32 %v5009, %v5072
        %v5078 = vadd.f32 %v5010, %v5074
        %s5079 = sld [smem:[#allocation9 + $0x6a]]
        %v5080 = vstv %s5079
        %v5081 = vmul.f32 %v5080, %v3408
        %v5082 = vmul.f32 %v5080, %v3409
        %v5083 = vmul.f32 %v5080, %v3410
        %v5087 = vrot.slane %v5081, 4
        %v5088 = vrot.slane %v5082, 4
        %v5089 = vsel %vm4916, %v5087, %v5088
        %v5090 = vrot.slane %v5083, 4
        %v5091 = vsel %vm4916, %v5088, %v5090
        %v5094 = vadd.f32 %v5026, %v5089
        %v5095 = vadd.f32 %v5027, %v5091
        %s5096 = sld [smem:[#allocation9 + $0x6b]]
        %v5097 = vstv %s5096
        %v5098 = vmul.f32 %v5097, %v3408
        %v5099 = vmul.f32 %v5097, %v3409
        %v5100 = vmul.f32 %v5097, %v3410
        %v5104 = vrot.slane %v5098, 4
        %v5105 = vrot.slane %v5099, 4
        %v5106 = vsel %vm4916, %v5104, %v5105
        %v5107 = vrot.slane %v5100, 4
        %v5108 = vsel %vm4916, %v5105, %v5107
        %v5111 = vadd.f32 %v5043, %v5106
        %v5112 = vadd.f32 %v5044, %v5108
        %s5113 = sld [smem:[#allocation9 + $0x6c]]
        %v5114 = vstv %s5113
        %v5115 = vmul.f32 %v5114, %v3425
        %v5116 = vmul.f32 %v5114, %v3426
        %v5117 = vmul.f32 %v5114, %v3427
        %v5121 = vrot.slane %v5115, 4
        %v5122 = vrot.slane %v5116, 4
        %v5123 = vsel %vm4916, %v5121, %v5122
        %v5124 = vrot.slane %v5117, 4
        %v5125 = vsel %vm4916, %v5122, %v5124
        %v5128 = vadd.f32 %v5060, %v5123
        %v5129 = vadd.f32 %v5061, %v5125
        %s5130 = sld [smem:[#allocation9 + $0x6d]]
        %v5131 = vstv %s5130
        %v5132 = vmul.f32 %v5131, %v3425
        %v5133 = vmul.f32 %v5131, %v3426
        %v5134 = vmul.f32 %v5131, %v3427
        %v5138 = vrot.slane %v5132, 4
        %v5139 = vrot.slane %v5133, 4
        %v5140 = vsel %vm4916, %v5138, %v5139
        %v5141 = vrot.slane %v5134, 4
        %v5142 = vsel %vm4916, %v5139, %v5141
        %v5145 = vadd.f32 %v5077, %v5140
        %v5146 = vadd.f32 %v5078, %v5142
        %s5147 = sld [smem:[#allocation9 + $0x6e]]
        %v5148 = vstv %s5147
        %v5149 = vmul.f32 %v5148, %v3425
        %v5150 = vmul.f32 %v5148, %v3426
        %v5151 = vmul.f32 %v5148, %v3427
        %v5155 = vrot.slane %v5149, 4
        %v5156 = vrot.slane %v5150, 4
        %v5157 = vsel %vm4916, %v5155, %v5156
        %v5158 = vrot.slane %v5151, 4
        %v5159 = vsel %vm4916, %v5156, %v5158
        %v5162 = vadd.f32 %v5094, %v5157
        %v5163 = vadd.f32 %v5095, %v5159
        %s5164 = sld [smem:[#allocation9 + $0x6f]]
        %v5165 = vstv %s5164
        %v5166 = vmul.f32 %v5165, %v3425
        %v5167 = vmul.f32 %v5165, %v3426
        %v5168 = vmul.f32 %v5165, %v3427
        %v5172 = vrot.slane %v5166, 4
        %v5173 = vrot.slane %v5167, 4
        %v5174 = vsel %vm4916, %v5172, %v5173
        %v5175 = vrot.slane %v5168, 4
        %v5176 = vsel %vm4916, %v5173, %v5175
        %v5179 = vadd.f32 %v5111, %v5174
        %v5180 = vadd.f32 %v5112, %v5176
        %s5181 = sld [smem:[#allocation9 + $0x70]]
        %v5182 = vstv %s5181
        %v5183 = vmul.f32 %v5182, %v3374
        %v5184 = vmul.f32 %v5182, %v3375
        %v5185 = vmul.f32 %v5182, %v3376
        %v5189 = vrot.slane %v5183, 4
        %v5190 = vrot.slane %v5184, 4
        %v5191 = vsel %vm4916, %v5189, %v5190
        %v5192 = vrot.slane %v5185, 4
        %v5193 = vsel %vm4916, %v5190, %v5192
        %5194 = vrot.lane.b32.xlu0 %v5191, 126
        %v5195 = vpop.permute.xlu0 %5194
        %5196 = vrot.lane.b32.xlu0 %v5193, 126
        %v5197 = vpop.permute.xlu0 %5196
        %v5200 = vadd.f32 %v5128, %v5195
        %v5201 = vadd.f32 %v5129, %v5197
        %s5202 = sld [smem:[#allocation9 + $0x71]]
        %v5203 = vstv %s5202
        %v5204 = vmul.f32 %v5203, %v3374
        %v5205 = vmul.f32 %v5203, %v3375
        %v5206 = vmul.f32 %v5203, %v3376
        %v5210 = vrot.slane %v5204, 4
        %v5211 = vrot.slane %v5205, 4
        %v5212 = vsel %vm4916, %v5210, %v5211
        %v5213 = vrot.slane %v5206, 4
        %v5214 = vsel %vm4916, %v5211, %v5213
        %5215 = vrot.lane.b32.xlu0 %v5212, 126
        %v5216 = vpop.permute.xlu0 %5215
        %5217 = vrot.lane.b32.xlu0 %v5214, 126
        %v5218 = vpop.permute.xlu0 %5217
        %v5221 = vadd.f32 %v5145, %v5216
        %v5222 = vadd.f32 %v5146, %v5218
        %s5223 = sld [smem:[#allocation9 + $0x72]]
        %v5224 = vstv %s5223
        %v5225 = vmul.f32 %v5224, %v3374
        %v5226 = vmul.f32 %v5224, %v3375
        %v5227 = vmul.f32 %v5224, %v3376
        %v5231 = vrot.slane %v5225, 4
        %v5232 = vrot.slane %v5226, 4
        %v5233 = vsel %vm4916, %v5231, %v5232
        %v5234 = vrot.slane %v5227, 4
        %v5235 = vsel %vm4916, %v5232, %v5234
        %5236 = vrot.lane.b32.xlu0 %v5233, 126
        %v5237 = vpop.permute.xlu0 %5236
        %5238 = vrot.lane.b32.xlu0 %v5235, 126
        %v5239 = vpop.permute.xlu0 %5238
        %v5242 = vadd.f32 %v5162, %v5237
        %v5243 = vadd.f32 %v5163, %v5239
        %s5244 = sld [smem:[#allocation9 + $0x73]]
        %v5245 = vstv %s5244
        %v5246 = vmul.f32 %v5245, %v3374
        %v5247 = vmul.f32 %v5245, %v3375
        %v5248 = vmul.f32 %v5245, %v3376
        %v5252 = vrot.slane %v5246, 4
        %v5253 = vrot.slane %v5247, 4
        %v5254 = vsel %vm4916, %v5252, %v5253
        %v5255 = vrot.slane %v5248, 4
        %v5256 = vsel %vm4916, %v5253, %v5255
        %5257 = vrot.lane.b32.xlu0 %v5254, 126
        %v5258 = vpop.permute.xlu0 %5257
        %5259 = vrot.lane.b32.xlu0 %v5256, 126
        %v5260 = vpop.permute.xlu0 %5259
        %v5263 = vadd.f32 %v5179, %v5258
        %v5264 = vadd.f32 %v5180, %v5260
        %s5265 = sld [smem:[#allocation9 + $0x74]]
        %v5266 = vstv %s5265
        %v5267 = vmul.f32 %v5266, %v3391
        %v5268 = vmul.f32 %v5266, %v3392
        %v5269 = vmul.f32 %v5266, %v3393
        %v5273 = vrot.slane %v5267, 4
        %v5274 = vrot.slane %v5268, 4
        %v5275 = vsel %vm4916, %v5273, %v5274
        %v5276 = vrot.slane %v5269, 4
        %v5277 = vsel %vm4916, %v5274, %v5276
        %5278 = vrot.lane.b32.xlu0 %v5275, 126
        %v5279 = vpop.permute.xlu0 %5278
        %5280 = vrot.lane.b32.xlu0 %v5277, 126
        %v5281 = vpop.permute.xlu0 %5280
        %v5284 = vadd.f32 %v5200, %v5279
        %v5285 = vadd.f32 %v5201, %v5281
        %s5286 = sld [smem:[#allocation9 + $0x75]]
        %v5287 = vstv %s5286
        %v5288 = vmul.f32 %v5287, %v3391
        %v5289 = vmul.f32 %v5287, %v3392
        %v5290 = vmul.f32 %v5287, %v3393
        %v5294 = vrot.slane %v5288, 4
        %v5295 = vrot.slane %v5289, 4
        %v5296 = vsel %vm4916, %v5294, %v5295
        %v5297 = vrot.slane %v5290, 4
        %v5298 = vsel %vm4916, %v5295, %v5297
        %5299 = vrot.lane.b32.xlu0 %v5296, 126
        %v5300 = vpop.permute.xlu0 %5299
        %5301 = vrot.lane.b32.xlu0 %v5298, 126
        %v5302 = vpop.permute.xlu0 %5301
        %v5305 = vadd.f32 %v5221, %v5300
        %v5306 = vadd.f32 %v5222, %v5302
        %s5307 = sld [smem:[#allocation9 + $0x76]]
        %v5308 = vstv %s5307
        %v5309 = vmul.f32 %v5308, %v3391
        %v5310 = vmul.f32 %v5308, %v3392
        %v5311 = vmul.f32 %v5308, %v3393
        %v5315 = vrot.slane %v5309, 4
        %v5316 = vrot.slane %v5310, 4
        %v5317 = vsel %vm4916, %v5315, %v5316
        %v5318 = vrot.slane %v5311, 4
        %v5319 = vsel %vm4916, %v5316, %v5318
        %5320 = vrot.lane.b32.xlu0 %v5317, 126
        %v5321 = vpop.permute.xlu0 %5320
        %5322 = vrot.lane.b32.xlu0 %v5319, 126
        %v5323 = vpop.permute.xlu0 %5322
        %v5326 = vadd.f32 %v5242, %v5321
        %v5327 = vadd.f32 %v5243, %v5323
        %s5328 = sld [smem:[#allocation9 + $0x77]]
        %v5329 = vstv %s5328
        %v5330 = vmul.f32 %v5329, %v3391
        %v5331 = vmul.f32 %v5329, %v3392
        %v5332 = vmul.f32 %v5329, %v3393
        %v5336 = vrot.slane %v5330, 4
        %v5337 = vrot.slane %v5331, 4
        %v5338 = vsel %vm4916, %v5336, %v5337
        %v5339 = vrot.slane %v5332, 4
        %v5340 = vsel %vm4916, %v5337, %v5339
        %5341 = vrot.lane.b32.xlu0 %v5338, 126
        %v5342 = vpop.permute.xlu0 %5341
        %5343 = vrot.lane.b32.xlu0 %v5340, 126
        %v5344 = vpop.permute.xlu0 %5343
        %v5347 = vadd.f32 %v5263, %v5342
        %v5348 = vadd.f32 %v5264, %v5344
        %s5349 = sld [smem:[#allocation9 + $0x78]]
        %v5350 = vstv %s5349
        %v5351 = vmul.f32 %v5350, %v3408
        %v5352 = vmul.f32 %v5350, %v3409
        %v5353 = vmul.f32 %v5350, %v3410
        %v5357 = vrot.slane %v5351, 4
        %v5358 = vrot.slane %v5352, 4
        %v5359 = vsel %vm4916, %v5357, %v5358
        %v5360 = vrot.slane %v5353, 4
        %v5361 = vsel %vm4916, %v5358, %v5360
        %5362 = vrot.lane.b32.xlu0 %v5359, 126
        %v5363 = vpop.permute.xlu0 %5362
        %5364 = vrot.lane.b32.xlu0 %v5361, 126
        %v5365 = vpop.permute.xlu0 %5364
        %v5368 = vadd.f32 %v5284, %v5363
        %v5369 = vadd.f32 %v5285, %v5365
        %s5370 = sld [smem:[#allocation9 + $0x79]]
        %v5371 = vstv %s5370
        %v5372 = vmul.f32 %v5371, %v3408
        %v5373 = vmul.f32 %v5371, %v3409
        %v5374 = vmul.f32 %v5371, %v3410
        %v5378 = vrot.slane %v5372, 4
        %v5379 = vrot.slane %v5373, 4
        %v5380 = vsel %vm4916, %v5378, %v5379
        %v5381 = vrot.slane %v5374, 4
        %v5382 = vsel %vm4916, %v5379, %v5381
        %5383 = vrot.lane.b32.xlu0 %v5380, 126
        %v5384 = vpop.permute.xlu0 %5383
        %5385 = vrot.lane.b32.xlu0 %v5382, 126
        %v5386 = vpop.permute.xlu0 %5385
        %v5389 = vadd.f32 %v5305, %v5384
        %v5390 = vadd.f32 %v5306, %v5386
        %s5391 = sld [smem:[#allocation9 + $0x7a]]
        %v5392 = vstv %s5391
        %v5393 = vmul.f32 %v5392, %v3408
        %v5394 = vmul.f32 %v5392, %v3409
        %v5395 = vmul.f32 %v5392, %v3410
        %v5399 = vrot.slane %v5393, 4
        %v5400 = vrot.slane %v5394, 4
        %v5401 = vsel %vm4916, %v5399, %v5400
        %v5402 = vrot.slane %v5395, 4
        %v5403 = vsel %vm4916, %v5400, %v5402
        %5404 = vrot.lane.b32.xlu0 %v5401, 126
        %v5405 = vpop.permute.xlu0 %5404
        %5406 = vrot.lane.b32.xlu0 %v5403, 126
        %v5407 = vpop.permute.xlu0 %5406
        %v5410 = vadd.f32 %v5326, %v5405
        %v5411 = vadd.f32 %v5327, %v5407
        %s5412 = sld [smem:[#allocation9 + $0x7b]]
        %v5413 = vstv %s5412
        %v5414 = vmul.f32 %v5413, %v3408
        %v5415 = vmul.f32 %v5413, %v3409
        %v5416 = vmul.f32 %v5413, %v3410
        %v5420 = vrot.slane %v5414, 4
        %v5421 = vrot.slane %v5415, 4
        %v5422 = vsel %vm4916, %v5420, %v5421
        %v5423 = vrot.slane %v5416, 4
        %v5424 = vsel %vm4916, %v5421, %v5423
        %5425 = vrot.lane.b32.xlu0 %v5422, 126
        %v5426 = vpop.permute.xlu0 %5425
        %5427 = vrot.lane.b32.xlu0 %v5424, 126
        %v5428 = vpop.permute.xlu0 %5427
        %v5431 = vadd.f32 %v5347, %v5426
        %v5432 = vadd.f32 %v5348, %v5428
        %s5433 = sld [smem:[#allocation9 + $0x7c]]
        %v5434 = vstv %s5433
        %v5435 = vmul.f32 %v5434, %v3425
        %v5436 = vmul.f32 %v5434, %v3426
        %v5437 = vmul.f32 %v5434, %v3427
        %v5441 = vrot.slane %v5435, 4
        %v5442 = vrot.slane %v5436, 4
        %v5443 = vsel %vm4916, %v5441, %v5442
        %v5444 = vrot.slane %v5437, 4
        %v5445 = vsel %vm4916, %v5442, %v5444
        %5446 = vrot.lane.b32.xlu0 %v5443, 126
        %v5447 = vpop.permute.xlu0 %5446
        %5448 = vrot.lane.b32.xlu0 %v5445, 126
        %v5449 = vpop.permute.xlu0 %5448
        %v5452 = vadd.f32 %v5368, %v5447
        %v5453 = vadd.f32 %v5369, %v5449
        %s5454 = sld [smem:[#allocation9 + $0x7d]]
        %v5455 = vstv %s5454
        %v5456 = vmul.f32 %v5455, %v3425
        %v5457 = vmul.f32 %v5455, %v3426
        %v5458 = vmul.f32 %v5455, %v3427
        %v5462 = vrot.slane %v5456, 4
        %v5463 = vrot.slane %v5457, 4
        %v5464 = vsel %vm4916, %v5462, %v5463
        %v5465 = vrot.slane %v5458, 4
        %v5466 = vsel %vm4916, %v5463, %v5465
        %5467 = vrot.lane.b32.xlu0 %v5464, 126
        %v5468 = vpop.permute.xlu0 %5467
        %5469 = vrot.lane.b32.xlu0 %v5466, 126
        %v5470 = vpop.permute.xlu0 %5469
        %v5473 = vadd.f32 %v5389, %v5468
        %v5474 = vadd.f32 %v5390, %v5470
        %s5475 = sld [smem:[#allocation9 + $0x7e]]
        %v5476 = vstv %s5475
        %v5477 = vmul.f32 %v5476, %v3425
        %v5478 = vmul.f32 %v5476, %v3426
        %v5479 = vmul.f32 %v5476, %v3427
        %v5483 = vrot.slane %v5477, 4
        %v5484 = vrot.slane %v5478, 4
        %v5485 = vsel %vm4916, %v5483, %v5484
        %v5486 = vrot.slane %v5479, 4
        %v5487 = vsel %vm4916, %v5484, %v5486
        %5488 = vrot.lane.b32.xlu0 %v5485, 126
        %v5489 = vpop.permute.xlu0 %5488
        %5490 = vrot.lane.b32.xlu0 %v5487, 126
        %v5491 = vpop.permute.xlu0 %5490
        %v5494 = vadd.f32 %v5410, %v5489
        %v5495 = vadd.f32 %v5411, %v5491
        %s5496 = sld [smem:[#allocation9 + $0x7f]]
        %v5497 = vstv %s5496
        %v5498 = vmul.f32 %v5497, %v3425
        %v5499 = vmul.f32 %v5497, %v3426
        %v5500 = vmul.f32 %v5497, %v3427
        %v5504 = vrot.slane %v5498, 4
        %v5505 = vrot.slane %v5499, 4
        %v5506 = vsel %vm4916, %v5504, %v5505
        %v5507 = vrot.slane %v5500, 4
        %v5508 = vsel %vm4916, %v5505, %v5507
        %5509 = vrot.lane.b32.xlu0 %v5506, 126
        %v5510 = vpop.permute.xlu0 %5509
        %5511 = vrot.lane.b32.xlu0 %v5508, 126
        %v5512 = vpop.permute.xlu0 %5511
        %v5515 = vadd.f32 %v5431, %v5510
        %v5516 = vadd.f32 %v5432, %v5512
        %s5517 = sld [smem:[#allocation9 + $0x80]]
        %v5518 = vstv %s5517
        %v5519 = vmul.f32 %v5518, %v3374
        %v5520 = vmul.f32 %v5518, %v3375
        %v5521 = vmul.f32 %v5518, %v3376
        %v5525 = vrot.slane %v5519, 4
        %v5526 = vrot.slane %v5520, 4
        %v5527 = vsel %vm4916, %v5525, %v5526
        %v5528 = vrot.slane %v5521, 4
        %v5529 = vsel %vm4916, %v5526, %v5528
        %5530 = vrot.lane.b32.xlu0 %v5527, 124
        %v5531 = vpop.permute.xlu0 %5530
        %5532 = vrot.lane.b32.xlu0 %v5529, 124
        %v5533 = vpop.permute.xlu0 %5532
        %v5536 = vadd.f32 %v5452, %v5531
        %v5537 = vadd.f32 %v5453, %v5533
        %s5538 = sld [smem:[#allocation9 + $0x81]]
        %v5539 = vstv %s5538
        %v5540 = vmul.f32 %v5539, %v3374
        %v5541 = vmul.f32 %v5539, %v3375
        %v5542 = vmul.f32 %v5539, %v3376
        %v5546 = vrot.slane %v5540, 4
        %v5547 = vrot.slane %v5541, 4
        %v5548 = vsel %vm4916, %v5546, %v5547
        %v5549 = vrot.slane %v5542, 4
        %v5550 = vsel %vm4916, %v5547, %v5549
        %5551 = vrot.lane.b32.xlu0 %v5548, 124
        %v5552 = vpop.permute.xlu0 %5551
        %5553 = vrot.lane.b32.xlu0 %v5550, 124
        %v5554 = vpop.permute.xlu0 %5553
        %v5557 = vadd.f32 %v5473, %v5552
        %v5558 = vadd.f32 %v5474, %v5554
        %s5559 = sld [smem:[#allocation9 + $0x82]]
        %v5560 = vstv %s5559
        %v5561 = vmul.f32 %v5560, %v3374
        %v5562 = vmul.f32 %v5560, %v3375
        %v5563 = vmul.f32 %v5560, %v3376
        %v5567 = vrot.slane %v5561, 4
        %v5568 = vrot.slane %v5562, 4
        %v5569 = vsel %vm4916, %v5567, %v5568
        %v5570 = vrot.slane %v5563, 4
        %v5571 = vsel %vm4916, %v5568, %v5570
        %5572 = vrot.lane.b32.xlu0 %v5569, 124
        %v5573 = vpop.permute.xlu0 %5572
        %5574 = vrot.lane.b32.xlu0 %v5571, 124
        %v5575 = vpop.permute.xlu0 %5574
        %v5578 = vadd.f32 %v5494, %v5573
        %v5579 = vadd.f32 %v5495, %v5575
        %s5580 = sld [smem:[#allocation9 + $0x83]]
        %v5581 = vstv %s5580
        %v5582 = vmul.f32 %v5581, %v3374
        %v5583 = vmul.f32 %v5581, %v3375
        %v5584 = vmul.f32 %v5581, %v3376
        %v5588 = vrot.slane %v5582, 4
        %v5589 = vrot.slane %v5583, 4
        %v5590 = vsel %vm4916, %v5588, %v5589
        %v5591 = vrot.slane %v5584, 4
        %v5592 = vsel %vm4916, %v5589, %v5591
        %5593 = vrot.lane.b32.xlu0 %v5590, 124
        %v5594 = vpop.permute.xlu0 %5593
        %5595 = vrot.lane.b32.xlu0 %v5592, 124
        %v5596 = vpop.permute.xlu0 %5595
        %v5599 = vadd.f32 %v5515, %v5594
        %v5600 = vadd.f32 %v5516, %v5596
        %s5601 = sld [smem:[#allocation9 + $0x84]]
        %v5602 = vstv %s5601
        %v5603 = vmul.f32 %v5602, %v3391
        %v5604 = vmul.f32 %v5602, %v3392
        %v5605 = vmul.f32 %v5602, %v3393
        %v5609 = vrot.slane %v5603, 4
        %v5610 = vrot.slane %v5604, 4
        %v5611 = vsel %vm4916, %v5609, %v5610
        %v5612 = vrot.slane %v5605, 4
        %v5613 = vsel %vm4916, %v5610, %v5612
        %5614 = vrot.lane.b32.xlu0 %v5611, 124
        %v5615 = vpop.permute.xlu0 %5614
        %5616 = vrot.lane.b32.xlu0 %v5613, 124
        %v5617 = vpop.permute.xlu0 %5616
        %v5620 = vadd.f32 %v5536, %v5615
        %v5621 = vadd.f32 %v5537, %v5617
        %s5622 = sld [smem:[#allocation9 + $0x85]]
        %v5623 = vstv %s5622
        %v5624 = vmul.f32 %v5623, %v3391
        %v5625 = vmul.f32 %v5623, %v3392
        %v5626 = vmul.f32 %v5623, %v3393
        %v5630 = vrot.slane %v5624, 4
        %v5631 = vrot.slane %v5625, 4
        %v5632 = vsel %vm4916, %v5630, %v5631
        %v5633 = vrot.slane %v5626, 4
        %v5634 = vsel %vm4916, %v5631, %v5633
        %5635 = vrot.lane.b32.xlu0 %v5632, 124
        %v5636 = vpop.permute.xlu0 %5635
        %5637 = vrot.lane.b32.xlu0 %v5634, 124
        %v5638 = vpop.permute.xlu0 %5637
        %v5641 = vadd.f32 %v5557, %v5636
        %v5642 = vadd.f32 %v5558, %v5638
        %s5643 = sld [smem:[#allocation9 + $0x86]]
        %v5644 = vstv %s5643
        %v5645 = vmul.f32 %v5644, %v3391
        %v5646 = vmul.f32 %v5644, %v3392
        %v5647 = vmul.f32 %v5644, %v3393
        %v5651 = vrot.slane %v5645, 4
        %v5652 = vrot.slane %v5646, 4
        %v5653 = vsel %vm4916, %v5651, %v5652
        %v5654 = vrot.slane %v5647, 4
        %v5655 = vsel %vm4916, %v5652, %v5654
        %5656 = vrot.lane.b32.xlu0 %v5653, 124
        %v5657 = vpop.permute.xlu0 %5656
        %5658 = vrot.lane.b32.xlu0 %v5655, 124
        %v5659 = vpop.permute.xlu0 %5658
        %v5662 = vadd.f32 %v5578, %v5657
        %v5663 = vadd.f32 %v5579, %v5659
        %s5664 = sld [smem:[#allocation9 + $0x87]]
        %v5665 = vstv %s5664
        %v5666 = vmul.f32 %v5665, %v3391
        %v5667 = vmul.f32 %v5665, %v3392
        %v5668 = vmul.f32 %v5665, %v3393
        %v5672 = vrot.slane %v5666, 4
        %v5673 = vrot.slane %v5667, 4
        %v5674 = vsel %vm4916, %v5672, %v5673
        %v5675 = vrot.slane %v5668, 4
        %v5676 = vsel %vm4916, %v5673, %v5675
        %5677 = vrot.lane.b32.xlu0 %v5674, 124
        %v5678 = vpop.permute.xlu0 %5677
        %5679 = vrot.lane.b32.xlu0 %v5676, 124
        %v5680 = vpop.permute.xlu0 %5679
        %v5683 = vadd.f32 %v5599, %v5678
        %v5684 = vadd.f32 %v5600, %v5680
        %s5685 = sld [smem:[#allocation9 + $0x88]]
        %v5686 = vstv %s5685
        %v5687 = vmul.f32 %v5686, %v3408
        %v5688 = vmul.f32 %v5686, %v3409
        %v5689 = vmul.f32 %v5686, %v3410
        %v5693 = vrot.slane %v5687, 4
        %v5694 = vrot.slane %v5688, 4
        %v5695 = vsel %vm4916, %v5693, %v5694
        %v5696 = vrot.slane %v5689, 4
        %v5697 = vsel %vm4916, %v5694, %v5696
        %5698 = vrot.lane.b32.xlu0 %v5695, 124
        %v5699 = vpop.permute.xlu0 %5698
        %5700 = vrot.lane.b32.xlu0 %v5697, 124
        %v5701 = vpop.permute.xlu0 %5700
        %v5704 = vadd.f32 %v5620, %v5699
        %v5705 = vadd.f32 %v5621, %v5701
        %s5706 = sld [smem:[#allocation9 + $0x89]]
        %v5707 = vstv %s5706
        %v5708 = vmul.f32 %v5707, %v3408
        %v5709 = vmul.f32 %v5707, %v3409
        %v5710 = vmul.f32 %v5707, %v3410
        %v5714 = vrot.slane %v5708, 4
        %v5715 = vrot.slane %v5709, 4
        %v5716 = vsel %vm4916, %v5714, %v5715
        %v5717 = vrot.slane %v5710, 4
        %v5718 = vsel %vm4916, %v5715, %v5717
        %5719 = vrot.lane.b32.xlu0 %v5716, 124
        %v5720 = vpop.permute.xlu0 %5719
        %5721 = vrot.lane.b32.xlu0 %v5718, 124
        %v5722 = vpop.permute.xlu0 %5721
        %v5725 = vadd.f32 %v5641, %v5720
        %v5726 = vadd.f32 %v5642, %v5722
        %s5727 = sld [smem:[#allocation9 + $0x8a]]
        %v5728 = vstv %s5727
        %v5729 = vmul.f32 %v5728, %v3408
        %v5730 = vmul.f32 %v5728, %v3409
        %v5731 = vmul.f32 %v5728, %v3410
        %v5735 = vrot.slane %v5729, 4
        %v5736 = vrot.slane %v5730, 4
        %v5737 = vsel %vm4916, %v5735, %v5736
        %v5738 = vrot.slane %v5731, 4
        %v5739 = vsel %vm4916, %v5736, %v5738
        %5740 = vrot.lane.b32.xlu0 %v5737, 124
        %v5741 = vpop.permute.xlu0 %5740
        %5742 = vrot.lane.b32.xlu0 %v5739, 124
        %v5743 = vpop.permute.xlu0 %5742
        %v5746 = vadd.f32 %v5662, %v5741
        %v5747 = vadd.f32 %v5663, %v5743
        %s5748 = sld [smem:[#allocation9 + $0x8b]]
        %v5749 = vstv %s5748
        %v5750 = vmul.f32 %v5749, %v3408
        %v5751 = vmul.f32 %v5749, %v3409
        %v5752 = vmul.f32 %v5749, %v3410
        %v5756 = vrot.slane %v5750, 4
        %v5757 = vrot.slane %v5751, 4
        %v5758 = vsel %vm4916, %v5756, %v5757
        %v5759 = vrot.slane %v5752, 4
        %v5760 = vsel %vm4916, %v5757, %v5759
        %5761 = vrot.lane.b32.xlu0 %v5758, 124
        %v5762 = vpop.permute.xlu0 %5761
        %5763 = vrot.lane.b32.xlu0 %v5760, 124
        %v5764 = vpop.permute.xlu0 %5763
        %v5767 = vadd.f32 %v5683, %v5762
        %v5768 = vadd.f32 %v5684, %v5764
        %s5769 = sld [smem:[#allocation9 + $0x8c]]
        %v5770 = vstv %s5769
        %v5771 = vmul.f32 %v5770, %v3425
        %v5772 = vmul.f32 %v5770, %v3426
        %v5773 = vmul.f32 %v5770, %v3427
        %v5777 = vrot.slane %v5771, 4
        %v5778 = vrot.slane %v5772, 4
        %v5779 = vsel %vm4916, %v5777, %v5778
        %v5780 = vrot.slane %v5773, 4
        %v5781 = vsel %vm4916, %v5778, %v5780
        %5782 = vrot.lane.b32.xlu0 %v5779, 124
        %v5783 = vpop.permute.xlu0 %5782
        %5784 = vrot.lane.b32.xlu0 %v5781, 124
        %v5785 = vpop.permute.xlu0 %5784
        %v5788 = vadd.f32 %v5704, %v5783
        %v5789 = vadd.f32 %v5705, %v5785
        %s5790 = sld [smem:[#allocation9 + $0x8d]]
        %v5791 = vstv %s5790
        %v5792 = vmul.f32 %v5791, %v3425
        %v5793 = vmul.f32 %v5791, %v3426
        %v5794 = vmul.f32 %v5791, %v3427
        %v5798 = vrot.slane %v5792, 4
        %v5799 = vrot.slane %v5793, 4
        %v5800 = vsel %vm4916, %v5798, %v5799
        %v5801 = vrot.slane %v5794, 4
        %v5802 = vsel %vm4916, %v5799, %v5801
        %5803 = vrot.lane.b32.xlu0 %v5800, 124
        %v5804 = vpop.permute.xlu0 %5803
        %5805 = vrot.lane.b32.xlu0 %v5802, 124
        %v5806 = vpop.permute.xlu0 %5805
        %v5809 = vadd.f32 %v5725, %v5804
        %v5810 = vadd.f32 %v5726, %v5806
        %s5811 = sld [smem:[#allocation9 + $0x8e]]
        %v5812 = vstv %s5811
        %v5813 = vmul.f32 %v5812, %v3425
        %v5814 = vmul.f32 %v5812, %v3426
        %v5815 = vmul.f32 %v5812, %v3427
        %v5819 = vrot.slane %v5813, 4
        %v5820 = vrot.slane %v5814, 4
        %v5821 = vsel %vm4916, %v5819, %v5820
        %v5822 = vrot.slane %v5815, 4
        %v5823 = vsel %vm4916, %v5820, %v5822
        %5824 = vrot.lane.b32.xlu0 %v5821, 124
        %v5825 = vpop.permute.xlu0 %5824
        %5826 = vrot.lane.b32.xlu0 %v5823, 124
        %v5827 = vpop.permute.xlu0 %5826
        %v5830 = vadd.f32 %v5746, %v5825
        %v5831 = vadd.f32 %v5747, %v5827
        %s5832 = sld [smem:[#allocation9 + $0x8f]]
        %v5833 = vstv %s5832
        %v5834 = vmul.f32 %v5833, %v3425
        %v5835 = vmul.f32 %v5833, %v3426
        %v5836 = vmul.f32 %v5833, %v3427
        %v5840 = vrot.slane %v5834, 4
        %v5841 = vrot.slane %v5835, 4
        %v5842 = vsel %vm4916, %v5840, %v5841
        %v5843 = vrot.slane %v5836, 4
        %v5844 = vsel %vm4916, %v5841, %v5843
        %5845 = vrot.lane.b32.xlu0 %v5842, 124
        %v5846 = vpop.permute.xlu0 %5845
        %5847 = vrot.lane.b32.xlu0 %v5844, 124
        %v5848 = vpop.permute.xlu0 %5847
        %v5851 = vadd.f32 %v5767, %v5846
        %v5852 = vadd.f32 %v5768, %v5848
        %v5853 = vld [vmem:[%s265] sm:$0xff]
        %v5854 = vld [vmem:[%s265 + $0x8] sm:$0xff]
        %s5855 = sld [smem:[#allocation11]]
        %v5856 = vstv %s5855
        %v5857 = vadd.f32 %v5788, %v5856
        %v5858 = vadd.f32 %v5789, %v5856
        %v5859 = vadd.f32 %v5857, %v5853
        %v5860 = vadd.f32 %v5858, %v5854
        %vm5861 = vcmask 130048
        %5862 = vst.msk [vmem:[%s292] sm:$0xff] %vm5861, %v5859
        %5863 = vst.msk [vmem:[%s292 + $0x8] sm:$0xff] %vm5861, %v5860
        %s5864 = scalar_lea.vmem %s265, 16 [#allocation12]
        %v5865 = vld [vmem:[%s5864] sm:$0xff]
        %v5866 = vld [vmem:[%s5864 + $0x8] sm:$0xff]
        %s5867 = sld [smem:[#allocation11 + $0x1]]
        %v5868 = vstv %s5867
        %v5869 = vadd.f32 %v5809, %v5868
        %v5870 = vadd.f32 %v5810, %v5868
        %v5871 = vadd.f32 %v5869, %v5865
        %v5872 = vadd.f32 %v5870, %v5866
        %s5873 = scalar_lea.vmem %s292, 16 [#allocation13]
        %5874 = vst.msk [vmem:[%s5873] sm:$0xff] %vm5861, %v5871
        %5875 = vst.msk [vmem:[%s5873 + $0x8] sm:$0xff] %vm5861, %v5872
        %s5876 = scalar_lea.vmem %s265, 32 [#allocation12]
        %v5877 = vld [vmem:[%s5876] sm:$0xff]
        %v5878 = vld [vmem:[%s5876 + $0x8] sm:$0xff]
        %s5879 = sld [smem:[#allocation11 + $0x2]]
        %v5880 = vstv %s5879
        %v5881 = vadd.f32 %v5830, %v5880
        %v5882 = vadd.f32 %v5831, %v5880
        %v5883 = vadd.f32 %v5881, %v5877
        %v5884 = vadd.f32 %v5882, %v5878
        %s5885 = scalar_lea.vmem %s292, 32 [#allocation13]
        %5886 = vst.msk [vmem:[%s5885] sm:$0xff] %vm5861, %v5883
        %5887 = vst.msk [vmem:[%s5885 + $0x8] sm:$0xff] %vm5861, %v5884
        %s5888 = scalar_lea.vmem %s265, 48 [#allocation12]
        %v5889 = vld [vmem:[%s5888] sm:$0xff]
        %v5890 = vld [vmem:[%s5888 + $0x8] sm:$0xff]
        %s5891 = sld [smem:[#allocation11 + $0x3]]
        %v5892 = vstv %s5891
        %v5893 = vadd.f32 %v5851, %v5892
        %v5894 = vadd.f32 %v5852, %v5892
        %v5895 = vadd.f32 %v5893, %v5889
        %v5896 = vadd.f32 %v5894, %v5890
        %s5897 = scalar_lea.vmem %s292, 48 [#allocation13]
        %5898 = vst.msk [vmem:[%s5897] sm:$0xff] %vm5861, %v5895
        %5899 = vst.msk [vmem:[%s5897 + $0x8] sm:$0xff] %vm5861, %v5896
        %s5900 = sand.u32 %s143, 1
        %s5901 = scalar_lea.sflag [#allocation5], %s5900
        %s5902 = sand.u32 %s143, 1
        %s5903 = smul.addr %s5902, 64
        %s5904 = scalar_lea.vmem [#allocation13], %s5903
        // Predicated region
        $region61: #{tpu_custom_call.1} parent=39 // pred_check
          %p5905 = pneg %p153
        $region62: #{tpu_custom_call.1} parent=39 // pred_check_branch
          %5907 = sbr.rel (%p5905) target = $region64
        $region63: #{tpu_custom_call.1} parent=39 // pred_region
          %s5909 = ssub.s32 1024, 1024
          %5910 = vsyncadd %s5901, %s5909
          %s5911 = smul.addr %s25, 8
          %s5912 = smul.addr %s5911, 128
          %s5913 = scalar_lea.hbm %s5, %s5912
          %s5914 = sshll.u32 %s5904, 4
          %s5915 = int_to_ptr.vmem [resolvable:$true] %s5914
          %5920 = dma.vmem_to_hbm [thread:$0]  %s5915, 1024, %s5913, %s5901, 128, 128, 8
        $region64: #{tpu_custom_call.1} parent=39 // pred_fallthru
          _
      $region40: #{tpu_custom_call.1} parent=5 // pred_fallthru
        _
      %p5921 = scmp.le.s32.totalorder 2, %s20
      // Predicated region
      $region65: #{tpu_custom_call.1} parent=5 // pred_check
        %p5922 = pneg %p5921
      $region66: #{tpu_custom_call.1} parent=5 // pred_check_branch
        %5924 = sbr.rel (%p5922) target = $region68
      $region67: #{tpu_custom_call.1} parent=5 // pred_region
        %s5925 = ssub.s32 %s20, 2
        // Predicated region
        $region69: #{tpu_custom_call.1} parent=67 // pred_check
          %p5926 = pneg %p159
        $region70: #{tpu_custom_call.1} parent=67 // pred_check_branch
          %5928 = sbr.rel (%p5926) target = $region72
        $region71: #{tpu_custom_call.1} parent=67 // pred_region
          %s5929 = sand.u32 %s144, 1
          %s5930 = scalar_lea.sflag [#allocation5], %s5929
          %s5931 = sand.u32 %s144, 1
          %s5932 = smul.addr %s5931, 64
          %s5933 = scalar_lea.vmem [#allocation13], %s5932
          %5934 = dma.done %s5930, 1024
        $region72: #{tpu_custom_call.1} parent=67 // pred_fallthru
          _
      $region68: #{tpu_custom_call.1} parent=5 // pred_fallthru
        _
    $region6: #{tpu_custom_call.1} parent=1 // loop_footer
      %s24 = sadd.s32 1, %s20
    $region7: #{tpu_custom_call.1} parent=1 // loop_footer_branch
      %19 = sbr.rel target = $region3
    $region8: #{tpu_custom_call.1} parent=1 // loop_exit
      _
    %5935 = vsyncpa [#allocation4], 1
    %s5936 = scalar_lea.sflag [#allocation4], 1
    %5937 = vsyncpa %s5936, 1
    %5938 = vsyncpa [#allocation5], 1
    %s5939 = scalar_lea.sflag [#allocation5], 1
    %5940 = vsyncpa %s5939, 1
    %5941 = vsyncpa [#allocation6], 1
    %s5942 = scalar_lea.sflag [#allocation6], 1
    %5943 = vsyncpa %s5942, 1
    %5944 = vsyncpa [#allocation7], 1
    %s5945 = scalar_lea.sflag [#allocation7], 1
    %5946 = vsyncpa %s5945, 1
    %5947 = vsyncpa [#allocation10], 1

</llo_original>
